<compile_context>
chip_gen: v5e
topology: v5e:2x2
jax: 0.10.0
libtpu: 0.0.40
codegen_flags: <defaults>
</compile_context>

<pallas_src>
import jax
import jax.numpy as jnp
from jax import lax
from jax.experimental import pallas as pl
from jax.experimental.pallas import tpu as pltpu

UNI_DIM = 64          # stands in for args.uni_dimension
BN_EPS = 1e-5
LANE = 128


def _round_up(x, m):
    return (x + m - 1) // m * m


def _fs(shape):
    """Full-array BlockSpec for a grid=(1,) pallas_call (no (8,128) constraint)."""
    return pl.BlockSpec(shape, lambda i: (0,) * len(shape))


_CP = pltpu.CompilerParams(dimension_semantics=("arbitrary",))


# ----------------------------------------------------------------------------
# Pallas kernels.  Every conv is one MXU matmul in (C_out, K) @ (K, M)
# orientation (lane dim = M -> lane-dense stores).  The conv bias rides in the
# padded-K ones row of the patches, so the epilogue is just
#     relu(acc) * bn_scale + bn_shift          (BatchNorm eval, affine)
# ----------------------------------------------------------------------------
def _mm_relu_bn(w_ref, p_ref, e_ref):
    acc = jnp.dot(w_ref[...], p_ref[...], preferred_element_type=jnp.float32)
    acc = jnp.maximum(acc, 0.0)                       # conv(+bias) -> ReLU
    return acc * e_ref[:, 0:1] + e_ref[:, 1:2]        # BN (eval) scale/shift


def _stage1_kernel(w1_ref, p1_ref, e1_ref, x1_ref):
    x1_ref[...] = _mm_relu_bn(w1_ref, p1_ref, e1_ref)                 # hsi_step1


def _stage2_kernel(w2_ref, p2_ref, e2_ref, wc1_ref, pc1_ref, ec1_ref,
                   x2_ref, X1_ref):
    x2_ref[...] = _mm_relu_bn(w2_ref, p2_ref, e2_ref)                 # hsi_step2
    X1_ref[...] = _mm_relu_bn(wc1_ref, pc1_ref, ec1_ref)              # hsi_conv1


def _stage3_kernel(w3_ref, p3_ref, e3_ref, wc2_ref, pc2_ref, ec2_ref,
                   wc3_ref, ec3_ref, X2_ref, X3_ref):
    # hsi_step3 -- stays in VMEM/vregs, never written back to HBM.
    x3 = _mm_relu_bn(w3_ref, p3_ref, e3_ref)          # (32, 12 * N*3*3)
    # hsi_conv2
    X2_ref[...] = _mm_relu_bn(wc2_ref, pc2_ref, ec2_ref)
    # hsi_conv3 (1x1) fused behind step3: the 2D-conv channels are (c3, d) and
    # x3's lane dim is ordered (d, n, y, x), so each depth's channel block is a
    # contiguous column slice -> 12 tiny MXU dots, no reshape / relayout.
    n_d = wc3_ref.shape[0]
    m = X3_ref.shape[1]
    acc = jnp.zeros(X3_ref.shape, jnp.float32)
    for d in range(n_d):
        acc = acc + jnp.dot(wc3_ref[d], x3[:, d * m:(d + 1) * m],
                            preferred_element_type=jnp.float32)
    acc = jnp.maximum(acc + ec3_ref[:, 0:1], 0.0)     # conv3 bias + ReLU
    X3_ref[...] = acc * ec3_ref[:, 1:2] + ec3_ref[:, 2:3]


# ----------------------------------------------------------------------------
# pallas_call wrappers (grid=(1,), full-array blocks, everything VMEM-resident)
# ----------------------------------------------------------------------------
def _stage1_call(w, e, p):
    c_out, m = w.shape[0], p.shape[1]
    cost = pl.CostEstimate(
        flops=2 * c_out * w.shape[1] * m, transcendentals=0,
        bytes_accessed=4 * (w.size + p.size + e.size + c_out * m))
    return pl.pallas_call(
        _stage1_kernel,
        out_shape=jax.ShapeDtypeStruct((c_out, m), jnp.float32),
        grid=(1,),
        in_specs=[_fs(w.shape), _fs(p.shape), _fs(e.shape)],
        out_specs=_fs((c_out, m)),
        compiler_params=_CP,
        cost_estimate=cost,
    )(w, p, e)


def _stage2_call(w2, e2, p2, wc1, ec1, pc1):
    c2, m2 = w2.shape[0], p2.shape[1]
    c1, m1 = wc1.shape[0], pc1.shape[1]
    cost = pl.CostEstimate(
        flops=2 * (c2 * w2.shape[1] * m2 + c1 * wc1.shape[1] * m1),
        transcendentals=0,
        bytes_accessed=4 * (w2.size + p2.size + e2.size + wc1.size + pc1.size
                            + ec1.size + c2 * m2 + c1 * m1))
    return pl.pallas_call(
        _stage2_kernel,
        out_shape=(jax.ShapeDtypeStruct((c2, m2), jnp.float32),
                   jax.ShapeDtypeStruct((c1, m1), jnp.float32)),
        grid=(1,),
        in_specs=[_fs(w2.shape), _fs(p2.shape), _fs(e2.shape),
                  _fs(wc1.shape), _fs(pc1.shape), _fs(ec1.shape)],
        out_specs=[_fs((c2, m2)), _fs((c1, m1))],
        compiler_params=_CP,
        cost_estimate=cost,
    )(w2, p2, e2, wc1, pc1, ec1)


def _stage3_call(w3, e3, p3, wc2, ec2, pc2, wc3, ec3):
    c3, m3 = w3.shape[0], p3.shape[1]
    c2, m2 = wc2.shape[0], pc2.shape[1]
    n_d = wc3.shape[0]
    mo = m3 // n_d                                    # = N * 3 * 3
    cost = pl.CostEstimate(
        flops=2 * (c3 * w3.shape[1] * m3 + c2 * wc2.shape[1] * m2
                   + n_d * wc3.shape[1] * wc3.shape[2] * mo),
        transcendentals=0,
        bytes_accessed=4 * (w3.size + p3.size + e3.size + wc2.size + pc2.size
                            + ec2.size + wc3.size + ec3.size
                            + c2 * m2 + wc3.shape[1] * mo))
    return pl.pallas_call(
        _stage3_kernel,
        out_shape=(jax.ShapeDtypeStruct((c2, m2), jnp.float32),
                   jax.ShapeDtypeStruct((wc3.shape[1], mo), jnp.float32)),
        grid=(1,),
        in_specs=[_fs(w3.shape), _fs(p3.shape), _fs(e3.shape),
                  _fs(wc2.shape), _fs(pc2.shape), _fs(ec2.shape),
                  _fs(wc3.shape), _fs(ec3.shape)],
        out_specs=[_fs((c2, m2)), _fs((wc3.shape[1], mo))],
        compiler_params=_CP,
        cost_estimate=cost,
    )(w3, p3, e3, wc2, pc2, ec2, wc3, ec3)


# ----------------------------------------------------------------------------
# XLA glue: one channel-first im2col op per conv (no transposes), K padding
# with a ones row (carries the folded conv bias).
# ----------------------------------------------------------------------------
def _patches(x, filter_shape, lhs_spec, out_spec):
    """Single-op im2col emitting a channel-first (K, ...) layout.

    Feature ordering of K is input-channel-major / kernel-offset-minor, which
    matches torch_weight.reshape(C_out, -1)."""
    nsp = len(filter_shape)
    rhs_spec = "OI" + "DHW"[-nsp:]
    dn = lax.conv_dimension_numbers(
        x.shape, (1, 1) + tuple(filter_shape), (lhs_spec, rhs_spec, out_spec))
    return lax.conv_general_dilated_patches(
        x, tuple(filter_shape), (1,) * nsp, "VALID", dimension_numbers=dn)


def _pad_ones_row(p, kp):
    """Pad the K (row) dim of (K, M) patches up to kp: one ones row (bias) then
    zeros; the matching weight columns hold the conv bias / zeros."""
    k, m = p.shape
    parts = [p, jnp.ones((1, m), p.dtype)]
    if kp > k + 1:
        parts.append(jnp.zeros((kp - k - 1, m), p.dtype))
    return jnp.concatenate(parts, axis=0)


# ----------------------------------------------------------------------------
# Parameters (shapes from hsi_e.__init__) and one-time folding for the kernels
# ----------------------------------------------------------------------------
def _make_conv_block(key, c_out, c_in, *kshape):
    kw_, kb_, kg_, kbeta_, km_, kv_ = jax.random.split(key, 6)
    weight = 0.05 * jax.random.normal(kw_, (c_out, c_in, *kshape), jnp.float32)
    bias = 0.01 * jax.random.normal(kb_, (c_out,), jnp.float32)
    gamma = 1.0 + 0.1 * jax.random.normal(kg_, (c_out,), jnp.float32)
    beta = 0.1 * jax.random.normal(kbeta_, (c_out,), jnp.float32)
    mean = 0.1 * jax.random.normal(km_, (c_out,), jnp.float32)
    var = 1.0 + 0.1 * jax.random.uniform(kv_, (c_out,), jnp.float32)
    return (weight, bias, gamma, beta, mean, var)


def init_params(key):
    keys = jax.random.split(key, 6)
    return {
        "step1": _make_conv_block(keys[0], 8, 1, 5, 5, 5),
        "step2": _make_conv_block(keys[1], 16, 8, 3, 3, 3),
        "step3": _make_conv_block(keys[2], 32, 16, 3, 3, 3),
        "conv1": _make_conv_block(keys[3], UNI_DIM, 128, 5, 5),
        "conv2": _make_conv_block(keys[4], UNI_DIM, 224, 3, 3),
        "conv3": _make_conv_block(keys[5], UNI_DIM, 384, 1, 1),
    }


def prepare_params(params):
    """One-time (outside jit) fold of conv bias / BN into matmul-ready tensors."""
    def prep(block):
        weight, bias, gamma, beta, mean, var = block
        c_out = weight.shape[0]
        k = weight.size // c_out
        kp = _round_up(k + 1, LANE)                   # room for the bias column
        w2d = weight.reshape(c_out, k)
        w_pad = jnp.concatenate(
            [w2d, bias[:, None], jnp.zeros((c_out, kp - k - 1), w2d.dtype)],
            axis=1)
        scale = gamma * lax.rsqrt(var + BN_EPS)
        shift = beta - mean * scale
        return {"w": w_pad, "epi": jnp.stack([scale, shift], axis=1)}

    pp = {name: prep(params[name])
          for name in ("step1", "step2", "step3", "conv1", "conv2")}

    # conv3 (1x1): reorganised into 12 per-depth (64, 32) weight slices so it
    # can be fused behind hsi_step3 inside the stage-3 kernel.  Its bias stays
    # explicit in the epilogue (its input never goes through K padding).
    weight, bias, gamma, beta, mean, var = params["conv3"]
    scale = gamma * lax.rsqrt(var + BN_EPS)
    shift = beta - mean * scale
    w3 = jnp.transpose(weight.reshape(weight.shape[0], 32, 12), (2, 0, 1))
    pp["conv3"] = {"w": w3, "epi": jnp.stack([bias, scale, shift], axis=1)}
    return pp


# ----------------------------------------------------------------------------
# Forward pass (mirrors hsi_e.forward) — 3 fused pallas_calls total
# ----------------------------------------------------------------------------
def hsi_e_forward(pp, x):
    # x: (N, 1, D=20, H, W) NCDHW  ->  [X1, X2, X3], each (N, 64, H-8, W-8)
    N, _, D, H, W = x.shape
    d1, h1, w1 = D - 4, H - 4, W - 4
    d2, h2, w2 = d1 - 2, h1 - 2, w1 - 2
    d3, h3, w3 = d2 - 2, h2 - 2, w2 - 2

    # ---- stage 1: hsi_step1 -------------------------------------------------
    p1 = _patches(x, (5, 5, 5), "NCDHW", "CDNHW")            # (125, d1, N, h1, w1)
    p1 = _pad_ones_row(p1.reshape(p1.shape[0], d1 * N * h1 * w1),
                       pp["step1"]["w"].shape[1])
    x1 = _stage1_call(pp["step1"]["w"], pp["step1"]["epi"], p1)   # (8, d1*N*h1*w1)
    x1_5d = x1.reshape(x1.shape[0], d1, N, h1, w1)           # free "CDNHW" view

    # ---- stage 2: hsi_step2 + hsi_conv1 (one pallas_call) -------------------
    p2 = _patches(x1_5d, (3, 3, 3), "CDNHW", "CDNHW")        # (216, d2, N, h2, w2)
    p2 = _pad_ones_row(p2.reshape(p2.shape[0], d2 * N * h2 * w2),
                       pp["step2"]["w"].shape[1])
    pc1 = _patches(x1_5d.reshape(x1.shape[0] * d1, N, h1, w1),   # 128 = 8*16 chans
                   (5, 5), "CNHW", "CNHW")                   # (3200, N, 3, 3)
    pc1 = _pad_ones_row(pc1.reshape(pc1.shape[0], N * (h1 - 4) * (w1 - 4)),
                        pp["conv1"]["w"].shape[1])
    x2, X1 = _stage2_call(pp["step2"]["w"], pp["step2"]["epi"], p2,
                          pp["conv1"]["w"], pp["conv1"]["epi"], pc1)
    x2_5d = x2.reshape(x2.shape[0], d2, N, h2, w2)

    # ---- stage 3: hsi_step3 + hsi_conv2 + hsi_conv3 (one pallas_call) -------
    p3 = _patches(x2_5d, (3, 3, 3), "CDNHW", "CDNHW")        # (432, d3, N, h3, w3)
    p3 = _pad_ones_row(p3.reshape(p3.shape[0], d3 * N * h3 * w3),
                       pp["step3"]["w"].shape[1])
    pc2 = _patches(x2_5d.reshape(x2.shape[0] * d2, N, h2, w2),   # 224 = 16*14 chans
                   (3, 3), "CNHW", "CNHW")                   # (2016, N, 3, 3)
    pc2 = _pad_ones_row(pc2.reshape(pc2.shape[0], N * (h2 - 2) * (w2 - 2)),
                        pp["conv2"]["w"].shape[1])
    X2, X3 = _stage3_call(pp["step3"]["w"], pp["step3"]["epi"], p3,
                          pp["conv2"]["w"], pp["conv2"]["epi"], pc2,
                          pp["conv3"]["w"], pp["conv3"]["epi"])

    # (64, N*3*3) -> NCHW (three tiny final transposes)
    def to_nchw(Xm, ho, wo):
        return jnp.transpose(Xm.reshape(Xm.shape[0], N, ho, wo), (1, 0, 2, 3))

    return [to_nchw(X1, h1 - 4, w1 - 4),
            to_nchw(X2, h2 - 2, w2 - 2),
            to_nchw(X3, h3, w3)]


# ----------------------------------------------------------------------------
# Pure-XLA reference (Conv -> +bias -> ReLU -> BN eval), for numerical check
# ----------------------------------------------------------------------------
def _layer_ref(x, weight, bias, gamma, beta, mean, var):
    nsp = weight.ndim - 2
    dn = ("NCDHW", "OIDHW", "NCDHW") if nsp == 3 else ("NCHW", "OIHW", "NCHW")
    y = lax.conv_general_dilated(x, weight, (1,) * nsp, "VALID",
                                 dimension_numbers=dn,
                                 precision=lax.Precision.HIGHEST)
    y = jnp.maximum(y + bias.reshape((1, -1) + (1,) * nsp), 0.0)
    scale = gamma * lax.rsqrt(var + BN_EPS)
    shift = beta - mean * scale
    return (y * scale.reshape((1, -1) + (1,) * nsp)
            + shift.reshape((1, -1) + (1,) * nsp))


def hsi_e_reference(params, x):
    x1 = _layer_ref(x, *params["step1"])
    X1 = _layer_ref(x1.reshape(x1.shape[0], 8 * 16, x1.shape[3], x1.shape[4]),
                    *params["conv1"])
    x2 = _layer_ref(x1, *params["step2"])
    X2 = _layer_ref(x2.reshape(x2.shape[0], 16 * 14, x2.shape[3], x2.shape[4]),
                    *params["conv2"])
    x3 = _layer_ref(x2, *params["step3"])
    X3 = _layer_ref(x3.reshape(x3.shape[0], 32 * 12, x3.shape[3], x3.shape[4]),
                    *params["conv3"])
    return [X1, X2, X3]


if __name__ == "__main__":
    key = jax.random.PRNGKey(0)
    k_in, k_param = jax.random.split(key)
    # Input: batch=2, 1 channel, 20 spectral bands, 11x11 spatial patch (NCDHW).
    x = jax.random.normal(k_in, (2, 1, 20, 11, 11), jnp.float32)
    params = init_params(k_param)
    prepped = prepare_params(params)                  # one-time, outside jit

    fwd = jax.jit(hsi_e_forward)
    outs = fwd(prepped, x)
    outs = [jax.block_until_ready(o) for o in outs]

    # Expected: X1, X2, X3 all (2, 64, 3, 3)
    assert outs[0].shape == (2, UNI_DIM, 3, 3)
    assert outs[1].shape == (2, UNI_DIM, 3, 3)
    assert outs[2].shape == (2, UNI_DIM, 3, 3)
    assert all(bool(jnp.all(jnp.isfinite(o))) for o in outs)

    # Numerical check against a pure-XLA conv reference (catches any im2col
    # feature-ordering mistake; tolerance covers MXU rounding).
    refs = hsi_e_reference(params, x)
    for o, r in zip(outs, refs):
        assert bool(jnp.allclose(o, r, rtol=5e-2, atol=5e-2)), \
            float(jnp.max(jnp.abs(o - r)))

    print("KERNEL_OK")
</pallas_src>

<mosaic_0001>
module attributes {stable_mosaic.version = 11 : i64} {
  func.func @_stage1_kernel(%arg0: i32, %arg1: memref<8x128xf32, #tpu.memory_space<vmem>>, %arg2: memref<128x1568xf32, #tpu.memory_space<vmem>>, %arg3: memref<8x2xf32, #tpu.memory_space<vmem>>, %arg4: memref<8x1568xf32, #tpu.memory_space<vmem>>) attributes {dimension_semantics = [#tpu.dimension_semantics<arbitrary>], iteration_bounds = array<i64: 1>, scalar_prefetch = 0 : i64, scratch_operands = 0 : i64, tpu.core_type = #tpu.core_type<tc>, window_params = [{pipeline_mode = #tpu.pipeline_mode<synchronous>, transform_indices = @transform_0, window_bounds = array<i64: 8, 128>}, {pipeline_mode = #tpu.pipeline_mode<synchronous>, transform_indices = @transform_1, window_bounds = array<i64: 128, 1568>}, {pipeline_mode = #tpu.pipeline_mode<synchronous>, transform_indices = @transform_2, window_bounds = array<i64: 8, 2>}, {pipeline_mode = #tpu.pipeline_mode<synchronous>, transform_indices = @transform_3, window_bounds = array<i64: 8, 1568>}]} {
    %c0 = arith.constant 0 : index
    %c0_0 = arith.constant 0 : index
    %0 = vector.load %arg1[%c0, %c0_0] : memref<8x128xf32, #tpu.memory_space<vmem>>, vector<8x128xf32>
    %c0_1 = arith.constant 0 : index
    %c0_2 = arith.constant 0 : index
    %1 = vector.load %arg2[%c0_1, %c0_2] : memref<128x1568xf32, #tpu.memory_space<vmem>>, vector<128x1568xf32>
    %cst = arith.constant dense<0.000000e+00> : vector<8x1568xf32>
    %2 = tpu.matmul %0, %1, %cst {dimension_numbers = #tpu.dot_dimension_numbers<[1], [0], [0], [1], [0, 0, 1, 1], [], []>} : vector<8x128xf32>, vector<128x1568xf32>, vector<8x1568xf32> -> vector<8x1568xf32>
    %cst_3 = arith.constant 0.000000e+00 : f32
    %3 = vector.broadcast %cst_3 : f32 to vector<8x1568xf32>
    %4 = arith.maximumf %2, %3 : vector<8x1568xf32>
    %c0_4 = arith.constant 0 : index
    %c0_5 = arith.constant 0 : index
    %5 = vector.load %arg3[%c0_4, %c0_5] : memref<8x2xf32, #tpu.memory_space<vmem>>, vector<8x1xf32>
    %6 = vector.broadcast %5 : vector<8x1xf32> to vector<8x1568xf32>
    %7 = arith.mulf %4, %6 : vector<8x1568xf32>
    %c0_6 = arith.constant 0 : index
    %c1 = arith.constant 1 : index
    %8 = vector.load %arg3[%c0_6, %c1] : memref<8x2xf32, #tpu.memory_space<vmem>>, vector<8x1xf32>
    %9 = vector.broadcast %8 : vector<8x1xf32> to vector<8x1568xf32>
    %10 = arith.addf %7, %9 : vector<8x1568xf32>
    %c0_7 = arith.constant 0 : index
    %c0_8 = arith.constant 0 : index
    %11 = vector.load %arg4[%c0_7, %c0_8] : memref<8x1568xf32, #tpu.memory_space<vmem>>, vector<8x1568xf32>
    tpu.vector_store %arg4[%c0_7, %c0_8], %10 {strides = array<i32>} : memref<8x1568xf32, #tpu.memory_space<vmem>>, vector<8x1568xf32>,
    return
  }
  func.func @transform_0(%arg0: i32) -> (i32, i32) {
    %c0_i32 = arith.constant 0 : i32
    %c0_i32_0 = arith.constant 0 : i32
    %c0_i32_1 = arith.constant 0 : i32
    return %c0_i32, %c0_i32_0 : i32, i32
  }
  func.func @transform_1(%arg0: i32) -> (i32, i32) {
    %c0_i32 = arith.constant 0 : i32
    %c0_i32_0 = arith.constant 0 : i32
    %c0_i32_1 = arith.constant 0 : i32
    return %c0_i32, %c0_i32_0 : i32, i32
  }
  func.func @transform_2(%arg0: i32) -> (i32, i32) {
    %c0_i32 = arith.constant 0 : i32
    %c0_i32_0 = arith.constant 0 : i32
    %c0_i32_1 = arith.constant 0 : i32
    return %c0_i32, %c0_i32_0 : i32, i32
  }
  func.func @transform_3(%arg0: i32) -> (i32, i32) {
    %c0_i32 = arith.constant 0 : i32
    %c0_i32_0 = arith.constant 0 : i32
    %c0_i32_1 = arith.constant 0 : i32
    return %c0_i32, %c0_i32_0 : i32, i32
  }
}

module attributes {stable_mosaic.version = 11 : i64} {
  func.func @_stage2_kernel(%arg0: i32, %arg1: memref<16x256xf32, #tpu.memory_space<vmem>>, %arg2: memref<256x700xf32, #tpu.memory_space<vmem>>, %arg3: memref<16x2xf32, #tpu.memory_space<vmem>>, %arg4: memref<64x3328xf32, #tpu.memory_space<vmem>>, %arg5: memref<3328x18xf32, #tpu.memory_space<vmem>>, %arg6: memref<64x2xf32, #tpu.memory_space<vmem>>, %arg7: memref<16x700xf32, #tpu.memory_space<vmem>>, %arg8: memref<64x18xf32, #tpu.memory_space<vmem>>) attributes {dimension_semantics = [#tpu.dimension_semantics<arbitrary>], iteration_bounds = array<i64: 1>, scalar_prefetch = 0 : i64, scratch_operands = 0 : i64, tpu.core_type = #tpu.core_type<tc>, window_params = [{pipeline_mode = #tpu.pipeline_mode<synchronous>, transform_indices = @transform_0, window_bounds = array<i64: 16, 256>}, {pipeline_mode = #tpu.pipeline_mode<synchronous>, transform_indices = @transform_1, window_bounds = array<i64: 256, 700>}, {pipeline_mode = #tpu.pipeline_mode<synchronous>, transform_indices = @transform_2, window_bounds = array<i64: 16, 2>}, {pipeline_mode = #tpu.pipeline_mode<synchronous>, transform_indices = @transform_3, window_bounds = array<i64: 64, 3328>}, {pipeline_mode = #tpu.pipeline_mode<synchronous>, transform_indices = @transform_4, window_bounds = array<i64: 3328, 18>}, {pipeline_mode = #tpu.pipeline_mode<synchronous>, transform_indices = @transform_5, window_bounds = array<i64: 64, 2>}, {pipeline_mode = #tpu.pipeline_mode<synchronous>, transform_indices = @transform_6, window_bounds = array<i64: 16, 700>}, {pipeline_mode = #tpu.pipeline_mode<synchronous>, transform_indices = @transform_7, window_bounds = array<i64: 64, 18>}]} {
    %c0 = arith.constant 0 : index
    %c0_0 = arith.constant 0 : index
    %0 = vector.load %arg1[%c0, %c0_0] : memref<16x256xf32, #tpu.memory_space<vmem>>, vector<16x256xf32>
    %c0_1 = arith.constant 0 : index
    %c0_2 = arith.constant 0 : index
    %1 = vector.load %arg2[%c0_1, %c0_2] : memref<256x700xf32, #tpu.memory_space<vmem>>, vector<256x700xf32>
    %cst = arith.constant dense<0.000000e+00> : vector<16x700xf32>
    %2 = tpu.matmul %0, %1, %cst {dimension_numbers = #tpu.dot_dimension_numbers<[1], [0], [0], [1], [0, 0, 1, 1], [], []>} : vector<16x256xf32>, vector<256x700xf32>, vector<16x700xf32> -> vector<16x700xf32>
    %cst_3 = arith.constant 0.000000e+00 : f32
    %3 = vector.broadcast %cst_3 : f32 to vector<16x700xf32>
    %4 = arith.maximumf %2, %3 : vector<16x700xf32>
    %c0_4 = arith.constant 0 : index
    %c0_5 = arith.constant 0 : index
    %5 = vector.load %arg3[%c0_4, %c0_5] : memref<16x2xf32, #tpu.memory_space<vmem>>, vector<16x1xf32>
    %6 = vector.broadcast %5 : vector<16x1xf32> to vector<16x700xf32>
    %7 = arith.mulf %4, %6 : vector<16x700xf32>
    %c0_6 = arith.constant 0 : index
    %c1 = arith.constant 1 : index
    %8 = vector.load %arg3[%c0_6, %c1] : memref<16x2xf32, #tpu.memory_space<vmem>>, vector<16x1xf32>
    %9 = vector.broadcast %8 : vector<16x1xf32> to vector<16x700xf32>
    %10 = arith.addf %7, %9 : vector<16x700xf32>
    %c0_7 = arith.constant 0 : index
    %c0_8 = arith.constant 0 : index
    %11 = vector.load %arg7[%c0_7, %c0_8] : memref<16x700xf32, #tpu.memory_space<vmem>>, vector<16x700xf32>
    tpu.vector_store %arg7[%c0_7, %c0_8], %10 {strides = array<i32>} : memref<16x700xf32, #tpu.memory_space<vmem>>, vector<16x700xf32>,
    %c0_9 = arith.constant 0 : index
    %c0_10 = arith.constant 0 : index
    %12 = vector.load %arg4[%c0_9, %c0_10] : memref<64x3328xf32, #tpu.memory_space<vmem>>, vector<64x3328xf32>
    %c0_11 = arith.constant 0 : index
    %c0_12 = arith.constant 0 : index
    %13 = vector.load %arg5[%c0_11, %c0_12] : memref<3328x18xf32, #tpu.memory_space<vmem>>, vector<3328x18xf32>
    %cst_13 = arith.constant dense<0.000000e+00> : vector<64x18xf32>
    %14 = tpu.matmul %12, %13, %cst_13 {dimension_numbers = #tpu.dot_dimension_numbers<[1], [0], [0], [1], [0, 0, 1, 1], [], []>} : vector<64x3328xf32>, vector<3328x18xf32>, vector<64x18xf32> -> vector<64x18xf32>
    %cst_14 = arith.constant 0.000000e+00 : f32
    %15 = vector.broadcast %cst_14 : f32 to vector<64x18xf32>
    %16 = arith.maximumf %14, %15 : vector<64x18xf32>
    %c0_15 = arith.constant 0 : index
    %c0_16 = arith.constant 0 : index
    %17 = vector.load %arg6[%c0_15, %c0_16] : memref<64x2xf32, #tpu.memory_space<vmem>>, vector<64x1xf32>
    %18 = vector.broadcast %17 : vector<64x1xf32> to vector<64x18xf32>
    %19 = arith.mulf %16, %18 : vector<64x18xf32>
    %c0_17 = arith.constant 0 : index
    %c1_18 = arith.constant 1 : index
    %20 = vector.load %arg6[%c0_17, %c1_18] : memref<64x2xf32, #tpu.memory_space<vmem>>, vector<64x1xf32>
    %21 = vector.broadcast %20 : vector<64x1xf32> to vector<64x18xf32>
    %22 = arith.addf %19, %21 : vector<64x18xf32>
    %c0_19 = arith.constant 0 : index
    %c0_20 = arith.constant 0 : index
    %23 = vector.load %arg8[%c0_19, %c0_20] : memref<64x18xf32, #tpu.memory_space<vmem>>, vector<64x18xf32>
    tpu.vector_store %arg8[%c0_19, %c0_20], %22 {strides = array<i32>} : memref<64x18xf32, #tpu.memory_space<vmem>>, vector<64x18xf32>,
    return
  }
  func.func @transform_0(%arg0: i32) -> (i32, i32) {
    %c0_i32 = arith.constant 0 : i32
    %c0_i32_0 = arith.constant 0 : i32
    %c0_i32_1 = arith.constant 0 : i32
    return %c0_i32, %c0_i32_0 : i32, i32
  }
  func.func @transform_1(%arg0: i32) -> (i32, i32) {
    %c0_i32 = arith.constant 0 : i32
    %c0_i32_0 = arith.constant 0 : i32
    %c0_i32_1 = arith.constant 0 : i32
    return %c0_i32, %c0_i32_0 : i32, i32
  }
  func.func @transform_2(%arg0: i32) -> (i32, i32) {
    %c0_i32 = arith.constant 0 : i32
    %c0_i32_0 = arith.constant 0 : i32
    %c0_i32_1 = arith.constant 0 : i32
    return %c0_i32, %c0_i32_0 : i32, i32
  }
  func.func @transform_3(%arg0: i32) -> (i32, i32) {
    %c0_i32 = arith.constant 0 : i32
    %c0_i32_0 = arith.constant 0 : i32
    %c0_i32_1 = arith.constant 0 : i32
    return %c0_i32, %c0_i32_0 : i32, i32
  }
  func.func @transform_4(%arg0: i32) -> (i32, i32) {
    %c0_i32 = arith.constant 0 : i32
    %c0_i32_0 = arith.constant 0 : i32
    %c0_i32_1 = arith.constant 0 : i32
    return %c0_i32, %c0_i32_0 : i32, i32
  }
  func.func @transform_5(%arg0: i32) -> (i32, i32) {
    %c0_i32 = arith.constant 0 : i32
    %c0_i32_0 = arith.constant 0 : i32
    %c0_i32_1 = arith.constant 0 : i32
    return %c0_i32, %c0_i32_0 : i32, i32
  }
  func.func @transform_6(%arg0: i32) -> (i32, i32) {
    %c0_i32 = arith.constant 0 : i32
    %c0_i32_0 = arith.constant 0 : i32
    %c0_i32_1 = arith.constant 0 : i32
    return %c0_i32, %c0_i32_0 : i32, i32
  }
  func.func @transform_7(%arg0: i32) -> (i32, i32) {
    %c0_i32 = arith.constant 0 : i32
    %c0_i32_0 = arith.constant 0 : i32
    %c0_i32_1 = arith.constant 0 : i32
    return %c0_i32, %c0_i32_0 : i32, i32
  }
}

module attributes {stable_mosaic.version = 11 : i64} {
  func.func @_stage3_kernel(%arg0: i32, %arg1: memref<32x512xf32, #tpu.memory_space<vmem>>, %arg2: memref<512x216xf32, #tpu.memory_space<vmem>>, %arg3: memref<32x2xf32, #tpu.memory_space<vmem>>, %arg4: memref<64x2048xf32, #tpu.memory_space<vmem>>, %arg5: memref<2048x18xf32, #tpu.memory_space<vmem>>, %arg6: memref<64x2xf32, #tpu.memory_space<vmem>>, %arg7: memref<12x64x32xf32, #tpu.memory_space<vmem>>, %arg8: memref<64x3xf32, #tpu.memory_space<vmem>>, %arg9: memref<64x18xf32, #tpu.memory_space<vmem>>, %arg10: memref<64x18xf32, #tpu.memory_space<vmem>>) attributes {dimension_semantics = [#tpu.dimension_semantics<arbitrary>], iteration_bounds = array<i64: 1>, scalar_prefetch = 0 : i64, scratch_operands = 0 : i64, tpu.core_type = #tpu.core_type<tc>, window_params = [{pipeline_mode = #tpu.pipeline_mode<synchronous>, transform_indices = @transform_0, window_bounds = array<i64: 32, 512>}, {pipeline_mode = #tpu.pipeline_mode<synchronous>, transform_indices = @transform_1, window_bounds = array<i64: 512, 216>}, {pipeline_mode = #tpu.pipeline_mode<synchronous>, transform_indices = @transform_2, window_bounds = array<i64: 32, 2>}, {pipeline_mode = #tpu.pipeline_mode<synchronous>, transform_indices = @transform_3, window_bounds = array<i64: 64, 2048>}, {pipeline_mode = #tpu.pipeline_mode<synchronous>, transform_indices = @transform_4, window_bounds = array<i64: 2048, 18>}, {pipeline_mode = #tpu.pipeline_mode<synchronous>, transform_indices = @transform_5, window_bounds = array<i64: 64, 2>}, {pipeline_mode = #tpu.pipeline_mode<synchronous>, transform_indices = @transform_6, window_bounds = array<i64: 12, 64, 32>}, {pipeline_mode = #tpu.pipeline_mode<synchronous>, transform_indices = @transform_7, window_bounds = array<i64: 64, 3>}, {pipeline_mode = #tpu.pipeline_mode<synchronous>, transform_indices = @transform_8, window_bounds = array<i64: 64, 18>}, {pipeline_mode = #tpu.pipeline_mode<synchronous>, transform_indices = @transform_9, window_bounds = array<i64: 64, 18>}]} {
    %c0 = arith.constant 0 : index
    %c0_0 = arith.constant 0 : index
    %0 = vector.load %arg1[%c0, %c0_0] : memref<32x512xf32, #tpu.memory_space<vmem>>, vector<32x512xf32>
    %c0_1 = arith.constant 0 : index
    %c0_2 = arith.constant 0 : index
    %1 = vector.load %arg2[%c0_1, %c0_2] : memref<512x216xf32, #tpu.memory_space<vmem>>, vector<512x216xf32>
    %cst = arith.constant dense<0.000000e+00> : vector<32x216xf32>
    %2 = tpu.matmul %0, %1, %cst {dimension_numbers = #tpu.dot_dimension_numbers<[1], [0], [0], [1], [0, 0, 1, 1], [], []>} : vector<32x512xf32>, vector<512x216xf32>, vector<32x216xf32> -> vector<32x216xf32>
    %cst_3 = arith.constant 0.000000e+00 : f32
    %3 = vector.broadcast %cst_3 : f32 to vector<32x216xf32>
    %4 = arith.maximumf %2, %3 : vector<32x216xf32>
    %c0_4 = arith.constant 0 : index
    %c0_5 = arith.constant 0 : index
    %5 = vector.load %arg3[%c0_4, %c0_5] : memref<32x2xf32, #tpu.memory_space<vmem>>, vector<32x1xf32>
    %6 = vector.broadcast %5 : vector<32x1xf32> to vector<32x216xf32>
    %7 = arith.mulf %4, %6 : vector<32x216xf32>
    %c0_6 = arith.constant 0 : index
    %c1 = arith.constant 1 : index
    %8 = vector.load %arg3[%c0_6, %c1] : memref<32x2xf32, #tpu.memory_space<vmem>>, vector<32x1xf32>
    %9 = vector.broadcast %8 : vector<32x1xf32> to vector<32x216xf32>
    %10 = arith.addf %7, %9 : vector<32x216xf32>
    %c0_7 = arith.constant 0 : index
    %c0_8 = arith.constant 0 : index
    %11 = vector.load %arg4[%c0_7, %c0_8] : memref<64x2048xf32, #tpu.memory_space<vmem>>, vector<64x2048xf32>
    %c0_9 = arith.constant 0 : index
    %c0_10 = arith.constant 0 : index
    %12 = vector.load %arg5[%c0_9, %c0_10] : memref<2048x18xf32, #tpu.memory_space<vmem>>, vector<2048x18xf32>
    %cst_11 = arith.constant dense<0.000000e+00> : vector<64x18xf32>
    %13 = tpu.matmul %11, %12, %cst_11 {dimension_numbers = #tpu.dot_dimension_numbers<[1], [0], [0], [1], [0, 0, 1, 1], [], []>} : vector<64x2048xf32>, vector<2048x18xf32>, vector<64x18xf32> -> vector<64x18xf32>
    %cst_12 = arith.constant 0.000000e+00 : f32
    %14 = vector.broadcast %cst_12 : f32 to vector<64x18xf32>
    %15 = arith.maximumf %13, %14 : vector<64x18xf32>
    %c0_13 = arith.constant 0 : index
    %c0_14 = arith.constant 0 : index
    %16 = vector.load %arg6[%c0_13, %c0_14] : memref<64x2xf32, #tpu.memory_space<vmem>>, vector<64x1xf32>
    %17 = vector.broadcast %16 : vector<64x1xf32> to vector<64x18xf32>
    %18 = arith.mulf %15, %17 : vector<64x18xf32>
    %c0_15 = arith.constant 0 : index
    %c1_16 = arith.constant 1 : index
    %19 = vector.load %arg6[%c0_15, %c1_16] : memref<64x2xf32, #tpu.memory_space<vmem>>, vector<64x1xf32>
    %20 = vector.broadcast %19 : vector<64x1xf32> to vector<64x18xf32>
    %21 = arith.addf %18, %20 : vector<64x18xf32>
    %c0_17 = arith.constant 0 : index
    %c0_18 = arith.constant 0 : index
    %22 = vector.load %arg9[%c0_17, %c0_18] : memref<64x18xf32, #tpu.memory_space<vmem>>, vector<64x18xf32>
    tpu.vector_store %arg9[%c0_17, %c0_18], %21 {strides = array<i32>} : memref<64x18xf32, #tpu.memory_space<vmem>>, vector<64x18xf32>,
    %cst_19 = arith.constant 0.000000e+00 : f32
    %23 = vector.broadcast %cst_19 : f32 to vector<64x18xf32>
    %c0_20 = arith.constant 0 : index
    %c0_21 = arith.constant 0 : index
    %c0_22 = arith.constant 0 : index
    %24 = vector.load %arg7[%c0_20, %c0_21, %c0_22] : memref<12x64x32xf32, #tpu.memory_space<vmem>>, vector<1x64x32xf32>
    %25 = vector.shape_cast %24 : vector<1x64x32xf32> to vector<64x32xf32>
    %26 = vector.extract_strided_slice %10 {offsets = [0, 0], sizes = [32, 18], strides = [1, 1]} : vector<32x216xf32> to vector<32x18xf32>
    %cst_23 = arith.constant dense<0.000000e+00> : vector<64x18xf32>
    %27 = tpu.matmul %25, %26, %cst_23 {dimension_numbers = #tpu.dot_dimension_numbers<[1], [0], [0], [1], [0, 0, 1, 1], [], []>} : vector<64x32xf32>, vector<32x18xf32>, vector<64x18xf32> -> vector<64x18xf32>
    %28 = arith.addf %23, %27 : vector<64x18xf32>
    %c1_24 = arith.constant 1 : index
    %c0_25 = arith.constant 0 : index
    %c0_26 = arith.constant 0 : index
    %29 = vector.load %arg7[%c1_24, %c0_25, %c0_26] : memref<12x64x32xf32, #tpu.memory_space<vmem>>, vector<1x64x32xf32>
    %30 = vector.shape_cast %29 : vector<1x64x32xf32> to vector<64x32xf32>
    %31 = vector.extract_strided_slice %10 {offsets = [0, 18], sizes = [32, 18], strides = [1, 1]} : vector<32x216xf32> to vector<32x18xf32>
    %cst_27 = arith.constant dense<0.000000e+00> : vector<64x18xf32>
    %32 = tpu.matmul %30, %31, %cst_27 {dimension_numbers = #tpu.dot_dimension_numbers<[1], [0], [0], [1], [0, 0, 1, 1], [], []>} : vector<64x32xf32>, vector<32x18xf32>, vector<64x18xf32> -> vector<64x18xf32>
    %33 = arith.addf %28, %32 : vector<64x18xf32>
    %c2 = arith.constant 2 : index
    %c0_28 = arith.constant 0 : index
    %c0_29 = arith.constant 0 : index
    %34 = vector.load %arg7[%c2, %c0_28, %c0_29] : memref<12x64x32xf32, #tpu.memory_space<vmem>>, vector<1x64x32xf32>
    %35 = vector.shape_cast %34 : vector<1x64x32xf32> to vector<64x32xf32>
    %36 = vector.extract_strided_slice %10 {offsets = [0, 36], sizes = [32, 18], strides = [1, 1]} : vector<32x216xf32> to vector<32x18xf32>
    %cst_30 = arith.constant dense<0.000000e+00> : vector<64x18xf32>
    %37 = tpu.matmul %35, %36, %cst_30 {dimension_numbers = #tpu.dot_dimension_numbers<[1], [0], [0], [1], [0, 0, 1, 1], [], []>} : vector<64x32xf32>, vector<32x18xf32>, vector<64x18xf32> -> vector<64x18xf32>
    %38 = arith.addf %33, %37 : vector<64x18xf32>
    %c3 = arith.constant 3 : index
    %c0_31 = arith.constant 0 : index
    %c0_32 = arith.constant 0 : index
    %39 = vector.load %arg7[%c3, %c0_31, %c0_32] : memref<12x64x32xf32, #tpu.memory_space<vmem>>, vector<1x64x32xf32>
    %40 = vector.shape_cast %39 : vector<1x64x32xf32> to vector<64x32xf32>
    %41 = vector.extract_strided_slice %10 {offsets = [0, 54], sizes = [32, 18], strides = [1, 1]} : vector<32x216xf32> to vector<32x18xf32>
    %cst_33 = arith.constant dense<0.000000e+00> : vector<64x18xf32>
    %42 = tpu.matmul %40, %41, %cst_33 {dimension_numbers = #tpu.dot_dimension_numbers<[1], [0], [0], [1], [0, 0, 1, 1], [], []>} : vector<64x32xf32>, vector<32x18xf32>, vector<64x18xf32> -> vector<64x18xf32>
    %43 = arith.addf %38, %42 : vector<64x18xf32>
    %c4 = arith.constant 4 : index
    %c0_34 = arith.constant 0 : index
    %c0_35 = arith.constant 0 : index
    %44 = vector.load %arg7[%c4, %c0_34, %c0_35] : memref<12x64x32xf32, #tpu.memory_space<vmem>>, vector<1x64x32xf32>
    %45 = vector.shape_cast %44 : vector<1x64x32xf32> to vector<64x32xf32>
    %46 = vector.extract_strided_slice %10 {offsets = [0, 72], sizes = [32, 18], strides = [1, 1]} : vector<32x216xf32> to vector<32x18xf32>
    %cst_36 = arith.constant dense<0.000000e+00> : vector<64x18xf32>
    %47 = tpu.matmul %45, %46, %cst_36 {dimension_numbers = #tpu.dot_dimension_numbers<[1], [0], [0], [1], [0, 0, 1, 1], [], []>} : vector<64x32xf32>, vector<32x18xf32>, vector<64x18xf32> -> vector<64x18xf32>
    %48 = arith.addf %43, %47 : vector<64x18xf32>
    %c5 = arith.constant 5 : index
    %c0_37 = arith.constant 0 : index
    %c0_38 = arith.constant 0 : index
    %49 = vector.load %arg7[%c5, %c0_37, %c0_38] : memref<12x64x32xf32, #tpu.memory_space<vmem>>, vector<1x64x32xf32>
    %50 = vector.shape_cast %49 : vector<1x64x32xf32> to vector<64x32xf32>
    %51 = vector.extract_strided_slice %10 {offsets = [0, 90], sizes = [32, 18], strides = [1, 1]} : vector<32x216xf32> to vector<32x18xf32>
    %cst_39 = arith.constant dense<0.000000e+00> : vector<64x18xf32>
    %52 = tpu.matmul %50, %51, %cst_39 {dimension_numbers = #tpu.dot_dimension_numbers<[1], [0], [0], [1], [0, 0, 1, 1], [], []>} : vector<64x32xf32>, vector<32x18xf32>, vector<64x18xf32> -> vector<64x18xf32>
    %53 = arith.addf %48, %52 : vector<64x18xf32>
    %c6 = arith.constant 6 : index
    %c0_40 = arith.constant 0 : index
    %c0_41 = arith.constant 0 : index
    %54 = vector.load %arg7[%c6, %c0_40, %c0_41] : memref<12x64x32xf32, #tpu.memory_space<vmem>>, vector<1x64x32xf32>
    %55 = vector.shape_cast %54 : vector<1x64x32xf32> to vector<64x32xf32>
    %56 = vector.extract_strided_slice %10 {offsets = [0, 108], sizes = [32, 18], strides = [1, 1]} : vector<32x216xf32> to vector<32x18xf32>
    %cst_42 = arith.constant dense<0.000000e+00> : vector<64x18xf32>
    %57 = tpu.matmul %55, %56, %cst_42 {dimension_numbers = #tpu.dot_dimension_numbers<[1], [0], [0], [1], [0, 0, 1, 1], [], []>} : vector<64x32xf32>, vector<32x18xf32>, vector<64x18xf32> -> vector<64x18xf32>
    %58 = arith.addf %53, %57 : vector<64x18xf32>
    %c7 = arith.constant 7 : index
    %c0_43 = arith.constant 0 : index
    %c0_44 = arith.constant 0 : index
    %59 = vector.load %arg7[%c7, %c0_43, %c0_44] : memref<12x64x32xf32, #tpu.memory_space<vmem>>, vector<1x64x32xf32>
    %60 = vector.shape_cast %59 : vector<1x64x32xf32> to vector<64x32xf32>
    %61 = vector.extract_strided_slice %10 {offsets = [0, 126], sizes = [32, 18], strides = [1, 1]} : vector<32x216xf32> to vector<32x18xf32>
    %cst_45 = arith.constant dense<0.000000e+00> : vector<64x18xf32>
    %62 = tpu.matmul %60, %61, %cst_45 {dimension_numbers = #tpu.dot_dimension_numbers<[1], [0], [0], [1], [0, 0, 1, 1], [], []>} : vector<64x32xf32>, vector<32x18xf32>, vector<64x18xf32> -> vector<64x18xf32>
    %63 = arith.addf %58, %62 : vector<64x18xf32>
    %c8 = arith.constant 8 : index
    %c0_46 = arith.constant 0 : index
    %c0_47 = arith.constant 0 : index
    %64 = vector.load %arg7[%c8, %c0_46, %c0_47] : memref<12x64x32xf32, #tpu.memory_space<vmem>>, vector<1x64x32xf32>
    %65 = vector.shape_cast %64 : vector<1x64x32xf32> to vector<64x32xf32>
    %66 = vector.extract_strided_slice %10 {offsets = [0, 144], sizes = [32, 18], strides = [1, 1]} : vector<32x216xf32> to vector<32x18xf32>
    %cst_48 = arith.constant dense<0.000000e+00> : vector<64x18xf32>
    %67 = tpu.matmul %65, %66, %cst_48 {dimension_numbers = #tpu.dot_dimension_numbers<[1], [0], [0], [1], [0, 0, 1, 1], [], []>} : vector<64x32xf32>, vector<32x18xf32>, vector<64x18xf32> -> vector<64x18xf32>
    %68 = arith.addf %63, %67 : vector<64x18xf32>
    %c9 = arith.constant 9 : index
    %c0_49 = arith.constant 0 : index
    %c0_50 = arith.constant 0 : index
    %69 = vector.load %arg7[%c9, %c0_49, %c0_50] : memref<12x64x32xf32, #tpu.memory_space<vmem>>, vector<1x64x32xf32>
    %70 = vector.shape_cast %69 : vector<1x64x32xf32> to vector<64x32xf32>
    %71 = vector.extract_strided_slice %10 {offsets = [0, 162], sizes = [32, 18], strides = [1, 1]} : vector<32x216xf32> to vector<32x18xf32>
    %cst_51 = arith.constant dense<0.000000e+00> : vector<64x18xf32>
    %72 = tpu.matmul %70, %71, %cst_51 {dimension_numbers = #tpu.dot_dimension_numbers<[1], [0], [0], [1], [0, 0, 1, 1], [], []>} : vector<64x32xf32>, vector<32x18xf32>, vector<64x18xf32> -> vector<64x18xf32>
    %73 = arith.addf %68, %72 : vector<64x18xf32>
    %c10 = arith.constant 10 : index
    %c0_52 = arith.constant 0 : index
    %c0_53 = arith.constant 0 : index
    %74 = vector.load %arg7[%c10, %c0_52, %c0_53] : memref<12x64x32xf32, #tpu.memory_space<vmem>>, vector<1x64x32xf32>
    %75 = vector.shape_cast %74 : vector<1x64x32xf32> to vector<64x32xf32>
    %76 = vector.extract_strided_slice %10 {offsets = [0, 180], sizes = [32, 18], strides = [1, 1]} : vector<32x216xf32> to vector<32x18xf32>
    %cst_54 = arith.constant dense<0.000000e+00> : vector<64x18xf32>
    %77 = tpu.matmul %75, %76, %cst_54 {dimension_numbers = #tpu.dot_dimension_numbers<[1], [0], [0], [1], [0, 0, 1, 1], [], []>} : vector<64x32xf32>, vector<32x18xf32>, vector<64x18xf32> -> vector<64x18xf32>
    %78 = arith.addf %73, %77 : vector<64x18xf32>
    %c11 = arith.constant 11 : index
    %c0_55 = arith.constant 0 : index
    %c0_56 = arith.constant 0 : index
    %79 = vector.load %arg7[%c11, %c0_55, %c0_56] : memref<12x64x32xf32, #tpu.memory_space<vmem>>, vector<1x64x32xf32>
    %80 = vector.shape_cast %79 : vector<1x64x32xf32> to vector<64x32xf32>
    %81 = vector.extract_strided_slice %10 {offsets = [0, 198], sizes = [32, 18], strides = [1, 1]} : vector<32x216xf32> to vector<32x18xf32>
    %cst_57 = arith.constant dense<0.000000e+00> : vector<64x18xf32>
    %82 = tpu.matmul %80, %81, %cst_57 {dimension_numbers = #tpu.dot_dimension_numbers<[1], [0], [0], [1], [0, 0, 1, 1], [], []>} : vector<64x32xf32>, vector<32x18xf32>, vector<64x18xf32> -> vector<64x18xf32>
    %83 = arith.addf %78, %82 : vector<64x18xf32>
    %c0_58 = arith.constant 0 : index
    %c0_59 = arith.constant 0 : index
    %84 = vector.load %arg8[%c0_58, %c0_59] : memref<64x3xf32, #tpu.memory_space<vmem>>, vector<64x1xf32>
    %85 = vector.broadcast %84 : vector<64x1xf32> to vector<64x18xf32>
    %86 = arith.addf %83, %85 : vector<64x18xf32>
    %cst_60 = arith.constant 0.000000e+00 : f32
    %87 = vector.broadcast %cst_60 : f32 to vector<64x18xf32>
    %88 = arith.maximumf %86, %87 : vector<64x18xf32>
    %c0_61 = arith.constant 0 : index
    %c1_62 = arith.constant 1 : index
    %89 = vector.load %arg8[%c0_61, %c1_62] : memref<64x3xf32, #tpu.memory_space<vmem>>, vector<64x1xf32>
    %90 = vector.broadcast %89 : vector<64x1xf32> to vector<64x18xf32>
    %91 = arith.mulf %88, %90 : vector<64x18xf32>
    %c0_63 = arith.constant 0 : index
    %c2_64 = arith.constant 2 : index
    %92 = vector.load %arg8[%c0_63, %c2_64] : memref<64x3xf32, #tpu.memory_space<vmem>>, vector<64x1xf32>
    %93 = vector.broadcast %92 : vector<64x1xf32> to vector<64x18xf32>
    %94 = arith.addf %91, %93 : vector<64x18xf32>
    %c0_65 = arith.constant 0 : index
    %c0_66 = arith.constant 0 : index
    %95 = vector.load %arg10[%c0_65, %c0_66] : memref<64x18xf32, #tpu.memory_space<vmem>>, vector<64x18xf32>
    tpu.vector_store %arg10[%c0_65, %c0_66], %94 {strides = array<i32>} : memref<64x18xf32, #tpu.memory_space<vmem>>, vector<64x18xf32>,
    return
  }
  func.func @transform_0(%arg0: i32) -> (i32, i32) {
    %c0_i32 = arith.constant 0 : i32
    %c0_i32_0 = arith.constant 0 : i32
    %c0_i32_1 = arith.constant 0 : i32
    return %c0_i32, %c0_i32_0 : i32, i32
  }
  func.func @transform_1(%arg0: i32) -> (i32, i32) {
    %c0_i32 = arith.constant 0 : i32
    %c0_i32_0 = arith.constant 0 : i32
    %c0_i32_1 = arith.constant 0 : i32
    return %c0_i32, %c0_i32_0 : i32, i32
  }
  func.func @transform_2(%arg0: i32) -> (i32, i32) {
    %c0_i32 = arith.constant 0 : i32
    %c0_i32_0 = arith.constant 0 : i32
    %c0_i32_1 = arith.constant 0 : i32
    return %c0_i32, %c0_i32_0 : i32, i32
  }
  func.func @transform_3(%arg0: i32) -> (i32, i32) {
    %c0_i32 = arith.constant 0 : i32
    %c0_i32_0 = arith.constant 0 : i32
    %c0_i32_1 = arith.constant 0 : i32
    return %c0_i32, %c0_i32_0 : i32, i32
  }
  func.func @transform_4(%arg0: i32) -> (i32, i32) {
    %c0_i32 = arith.constant 0 : i32
    %c0_i32_0 = arith.constant 0 : i32
    %c0_i32_1 = arith.constant 0 : i32
    return %c0_i32, %c0_i32_0 : i32, i32
  }
  func.func @transform_5(%arg0: i32) -> (i32, i32) {
    %c0_i32 = arith.constant 0 : i32
    %c0_i32_0 = arith.constant 0 : i32
    %c0_i32_1 = arith.constant 0 : i32
    return %c0_i32, %c0_i32_0 : i32, i32
  }
  func.func @transform_6(%arg0: i32) -> (i32, i32, i32) {
    %c0_i32 = arith.constant 0 : i32
    %c0_i32_0 = arith.constant 0 : i32
    %c0_i32_1 = arith.constant 0 : i32
    %c0_i32_2 = arith.constant 0 : i32
    return %c0_i32, %c0_i32_0, %c0_i32_1 : i32, i32, i32
  }
  func.func @transform_7(%arg0: i32) -> (i32, i32) {
    %c0_i32 = arith.constant 0 : i32
    %c0_i32_0 = arith.constant 0 : i32
    %c0_i32_1 = arith.constant 0 : i32
    return %c0_i32, %c0_i32_0 : i32, i32
  }
  func.func @transform_8(%arg0: i32) -> (i32, i32) {
    %c0_i32 = arith.constant 0 : i32
    %c0_i32_0 = arith.constant 0 : i32
    %c0_i32_1 = arith.constant 0 : i32
    return %c0_i32, %c0_i32_0 : i32, i32
  }
  func.func @transform_9(%arg0: i32) -> (i32, i32) {
    %c0_i32 = arith.constant 0 : i32
    %c0_i32_0 = arith.constant 0 : i32
    %c0_i32_1 = arith.constant 0 : i32
    return %c0_i32, %c0_i32_0 : i32, i32
  }
}

</mosaic_0001>

<llo_original>
// kernel: hsi_e_forward.3
$region0: #{hsi_e_forward.3}
  #allocation0 [shape = 'u32[]', space=smem, size = 0x4, offset = 0x4, fixed_abs, tag = 'smem constant byte address 0x4 - core index']
  #allocation1 [shape = 'u32[72,128]{1,0:T(1,128)}', space=vmem, size = 0x9000, scoped, tag = 'internal scratch']
  %s0 = inlined_call_operand.vmem [shape: f32[8,128], index: 0, kind: input, shape index: {}]
  %s1 = inlined_call_operand.vmem [shape: f32[128,1568], index: 1, kind: input, shape index: {}]
  %s2 = inlined_call_operand.vmem [shape: f32[8,2], index: 2, kind: input, shape index: {}]
  %s3 = inlined_call_operand.vmem [shape: f32[8,1568], index: 3, kind: output, shape index: {}]
  %s4 = sld [smem:[#allocation0]]
  $region22: #{hsi_e_forward.3} parent=0
    _
  %s6 = ssub.s32 1, %s4
  %s7 = scalar_select 0, %s6, %s4
  // Predicated region
  $region2: #{hsi_e_forward.3} parent=0 // pred_check
    _
  $region3: #{hsi_e_forward.3} parent=0 // pred_check_branch
    %9 = sbr.rel (0) target = $region5
  $region4: #{hsi_e_forward.3} parent=0 // pred_region
    _
  $region5: #{hsi_e_forward.3} parent=0 // pred_fallthru
    _
  // Predicated region
  $region6: #{hsi_e_forward.3} parent=0 // pred_check
    _
  $region7: #{hsi_e_forward.3} parent=0 // pred_check_branch
    %11 = sbr.rel (0) target = $region9
  $region8: #{hsi_e_forward.3} parent=0 // pred_region
    _
  $region9: #{hsi_e_forward.3} parent=0 // pred_fallthru
    _
  // Predicated region
  $region10: #{hsi_e_forward.3} parent=0 // pred_check
    _
  $region11: #{hsi_e_forward.3} parent=0 // pred_check_branch
    %13 = sbr.rel (0) target = $region13
  $region12: #{hsi_e_forward.3} parent=0 // pred_region
    _
  $region13: #{hsi_e_forward.3} parent=0 // pred_fallthru
    _
  %v14 = vld [vmem:[%s0] sm:$0xff]
  %v15 = vld [vmem:[%s1] sm:$0xff]
  %v16 = vld [vmem:[%s1 + $0x8] sm:$0xff]
  %v17 = vld [vmem:[%s1 + $0x10] sm:$0xff]
  %v18 = vld [vmem:[%s1 + $0x18] sm:$0xff]
  %v19 = vld [vmem:[%s1 + $0x20] sm:$0xff]
  %v20 = vld [vmem:[%s1 + $0x28] sm:$0xff]
  %v21 = vld [vmem:[%s1 + $0x30] sm:$0xff]
  %v22 = vld [vmem:[%s1 + $0x38] sm:$0xff]
  %v23 = vld [vmem:[%s1 + $0x40] sm:$0xff]
  %v24 = vld [vmem:[%s1 + $0x48] sm:$0xff]
  %v25 = vld [vmem:[%s1 + $0x50] sm:$0xff]
  %v26 = vld [vmem:[%s1 + $0x58] sm:$0xff]
  %v27 = vld [vmem:[%s1 + $0x60] sm:$0xff]
  %v28 = vld [vmem:[%s1 + $0x68] sm:$0xff]
  %v29 = vld [vmem:[%s1 + $0x70] sm:$0xff]
  %v30 = vld [vmem:[%s1 + $0x78] sm:$0xff]
  %v31 = vld [vmem:[%s1 + $0x80] sm:$0xff]
  %v32 = vld [vmem:[%s1 + $0x88] sm:$0xff]
  %v33 = vld [vmem:[%s1 + $0x90] sm:$0xff]
  %v34 = vld [vmem:[%s1 + $0x98] sm:$0xff]
  %v35 = vld [vmem:[%s1 + $0xa0] sm:$0xff]
  %v36 = vld [vmem:[%s1 + $0xa8] sm:$0xff]
  %v37 = vld [vmem:[%s1 + $0xb0] sm:$0xff]
  %v38 = vld [vmem:[%s1 + $0xb8] sm:$0xff]
  %v39 = vld [vmem:[%s1 + $0xc0] sm:$0xff]
  %v40 = vld [vmem:[%s1 + $0xc8] sm:$0xff]
  %v41 = vld [vmem:[%s1 + $0xd0] sm:$0xff]
  %v42 = vld [vmem:[%s1 + $0xd8] sm:$0xff]
  %v43 = vld [vmem:[%s1 + $0xe0] sm:$0xff]
  %v44 = vld [vmem:[%s1 + $0xe8] sm:$0xff]
  %v45 = vld [vmem:[%s1 + $0xf0] sm:$0xff]
  %v46 = vld [vmem:[%s1 + $0xf8] sm:$0xff]
  %v47 = vld [vmem:[%s1 + $0x100] sm:$0xff]
  %v48 = vld [vmem:[%s1 + $0x108] sm:$0xff]
  %v49 = vld [vmem:[%s1 + $0x110] sm:$0xff]
  %v50 = vld [vmem:[%s1 + $0x118] sm:$0xff]
  %v51 = vld [vmem:[%s1 + $0x120] sm:$0xff]
  %v52 = vld [vmem:[%s1 + $0x128] sm:$0xff]
  %v53 = vld [vmem:[%s1 + $0x130] sm:$0xff]
  %v54 = vld [vmem:[%s1 + $0x138] sm:$0xff]
  %v55 = vld [vmem:[%s1 + $0x140] sm:$0xff]
  %v56 = vld [vmem:[%s1 + $0x148] sm:$0xff]
  %v57 = vld [vmem:[%s1 + $0x150] sm:$0xff]
  %v58 = vld [vmem:[%s1 + $0x158] sm:$0xff]
  %v59 = vld [vmem:[%s1 + $0x160] sm:$0xff]
  %v60 = vld [vmem:[%s1 + $0x168] sm:$0xff]
  %v61 = vld [vmem:[%s1 + $0x170] sm:$0xff]
  %v62 = vld [vmem:[%s1 + $0x178] sm:$0xff]
  %v63 = vld [vmem:[%s1 + $0x180] sm:$0xff]
  %v64 = vld [vmem:[%s1 + $0x188] sm:$0xff]
  %v65 = vld [vmem:[%s1 + $0x190] sm:$0xff]
  %v66 = vld [vmem:[%s1 + $0x198] sm:$0xff]
  %v67 = vld [vmem:[%s1 + $0x1a0] sm:$0xff]
  %v68 = vld [vmem:[%s1 + $0x1a8] sm:$0xff]
  %v69 = vld [vmem:[%s1 + $0x1b0] sm:$0xff]
  %v70 = vld [vmem:[%s1 + $0x1b8] sm:$0xff]
  %v71 = vld [vmem:[%s1 + $0x1c0] sm:$0xff]
  %v72 = vld [vmem:[%s1 + $0x1c8] sm:$0xff]
  %v73 = vld [vmem:[%s1 + $0x1d0] sm:$0xff]
  %v74 = vld [vmem:[%s1 + $0x1d8] sm:$0xff]
  %v75 = vld [vmem:[%s1 + $0x1e0] sm:$0xff]
  %v76 = vld [vmem:[%s1 + $0x1e8] sm:$0xff]
  %v77 = vld [vmem:[%s1 + $0x1f0] sm:$0xff]
  %v78 = vld [vmem:[%s1 + $0x1f8] sm:$0xff]
  %v79 = vld [vmem:[%s1 + $0x200] sm:$0xff]
  %v80 = vld [vmem:[%s1 + $0x208] sm:$0xff]
  %v81 = vld [vmem:[%s1 + $0x210] sm:$0xff]
  %v82 = vld [vmem:[%s1 + $0x218] sm:$0xff]
  %v83 = vld [vmem:[%s1 + $0x220] sm:$0xff]
  %v84 = vld [vmem:[%s1 + $0x228] sm:$0xff]
  %v85 = vld [vmem:[%s1 + $0x230] sm:$0xff]
  %v86 = vld [vmem:[%s1 + $0x238] sm:$0xff]
  %v87 = vld [vmem:[%s1 + $0x240] sm:$0xff]
  %v88 = vld [vmem:[%s1 + $0x248] sm:$0xff]
  %v89 = vld [vmem:[%s1 + $0x250] sm:$0xff]
  %v90 = vld [vmem:[%s1 + $0x258] sm:$0xff]
  %v91 = vld [vmem:[%s1 + $0x260] sm:$0xff]
  %v92 = vld [vmem:[%s1 + $0x268] sm:$0xff]
  %v93 = vld [vmem:[%s1 + $0x270] sm:$0xff]
  %v94 = vld [vmem:[%s1 + $0x278] sm:$0xff]
  %v95 = vld [vmem:[%s1 + $0x280] sm:$0xff]
  %v96 = vld [vmem:[%s1 + $0x288] sm:$0xff]
  %v97 = vld [vmem:[%s1 + $0x290] sm:$0xff]
  %v98 = vld [vmem:[%s1 + $0x298] sm:$0xff]
  %v99 = vld [vmem:[%s1 + $0x2a0] sm:$0xff]
  %v100 = vld [vmem:[%s1 + $0x2a8] sm:$0xff]
  %v101 = vld [vmem:[%s1 + $0x2b0] sm:$0xff]
  %v102 = vld [vmem:[%s1 + $0x2b8] sm:$0xff]
  %v103 = vld [vmem:[%s1 + $0x2c0] sm:$0xff]
  %v104 = vld [vmem:[%s1 + $0x2c8] sm:$0xff]
  %v105 = vld [vmem:[%s1 + $0x2d0] sm:$0xff]
  %v106 = vld [vmem:[%s1 + $0x2d8] sm:$0xff]
  %v107 = vld [vmem:[%s1 + $0x2e0] sm:$0xff]
  %v108 = vld [vmem:[%s1 + $0x2e8] sm:$0xff]
  %v109 = vld [vmem:[%s1 + $0x2f0] sm:$0xff]
  %v110 = vld [vmem:[%s1 + $0x2f8] sm:$0xff]
  %v111 = vld [vmem:[%s1 + $0x300] sm:$0xff]
  %v112 = vld [vmem:[%s1 + $0x308] sm:$0xff]
  %v113 = vld [vmem:[%s1 + $0x310] sm:$0xff]
  %v114 = vld [vmem:[%s1 + $0x318] sm:$0xff]
  %v115 = vld [vmem:[%s1 + $0x320] sm:$0xff]
  %v116 = vld [vmem:[%s1 + $0x328] sm:$0xff]
  %v117 = vld [vmem:[%s1 + $0x330] sm:$0xff]
  %v118 = vld [vmem:[%s1 + $0x338] sm:$0xff]
  %v119 = vld [vmem:[%s1 + $0x340] sm:$0xff]
  %v120 = vld [vmem:[%s1 + $0x348] sm:$0xff]
  %v121 = vld [vmem:[%s1 + $0x350] sm:$0xff]
  %v122 = vld [vmem:[%s1 + $0x358] sm:$0xff]
  %v123 = vld [vmem:[%s1 + $0x360] sm:$0xff]
  %v124 = vld [vmem:[%s1 + $0x368] sm:$0xff]
  %v125 = vld [vmem:[%s1 + $0x370] sm:$0xff]
  %v126 = vld [vmem:[%s1 + $0x378] sm:$0xff]
  %v127 = vld [vmem:[%s1 + $0x380] sm:$0xff]
  %v128 = vld [vmem:[%s1 + $0x388] sm:$0xff]
  %v129 = vld [vmem:[%s1 + $0x390] sm:$0xff]
  %v130 = vld [vmem:[%s1 + $0x398] sm:$0xff]
  %v131 = vld [vmem:[%s1 + $0x3a0] sm:$0xff]
  %v132 = vld [vmem:[%s1 + $0x3a8] sm:$0xff]
  %v133 = vld [vmem:[%s1 + $0x3b0] sm:$0xff]
  %v134 = vld [vmem:[%s1 + $0x3b8] sm:$0xff]
  %v135 = vld [vmem:[%s1 + $0x3c0] sm:$0xff]
  %v136 = vld [vmem:[%s1 + $0x3c8] sm:$0xff]
  %v137 = vld [vmem:[%s1 + $0x3d0] sm:$0xff]
  %v138 = vld [vmem:[%s1 + $0x3d8] sm:$0xff]
  %v139 = vld [vmem:[%s1 + $0x3e0] sm:$0xff]
  %v140 = vld [vmem:[%s1 + $0x3e8] sm:$0xff]
  %v141 = vld [vmem:[%s1 + $0x3f0] sm:$0xff]
  %v142 = vld [vmem:[%s1 + $0x3f8] sm:$0xff]
  %v143 = vld [vmem:[%s1 + $0x400] sm:$0xff]
  %v144 = vld [vmem:[%s1 + $0x408] sm:$0xff]
  %v145 = vld [vmem:[%s1 + $0x410] sm:$0xff]
  %v146 = vld [vmem:[%s1 + $0x418] sm:$0xff]
  %v147 = vld [vmem:[%s1 + $0x420] sm:$0xff]
  %v148 = vld [vmem:[%s1 + $0x428] sm:$0xff]
  %v149 = vld [vmem:[%s1 + $0x430] sm:$0xff]
  %v150 = vld [vmem:[%s1 + $0x438] sm:$0xff]
  %v151 = vld [vmem:[%s1 + $0x440] sm:$0xff]
  %v152 = vld [vmem:[%s1 + $0x448] sm:$0xff]
  %v153 = vld [vmem:[%s1 + $0x450] sm:$0xff]
  %v154 = vld [vmem:[%s1 + $0x458] sm:$0xff]
  %v155 = vld [vmem:[%s1 + $0x460] sm:$0xff]
  %v156 = vld [vmem:[%s1 + $0x468] sm:$0xff]
  %v157 = vld [vmem:[%s1 + $0x470] sm:$0xff]
  %v158 = vld [vmem:[%s1 + $0x478] sm:$0xff]
  %v159 = vld [vmem:[%s1 + $0x480] sm:$0xff]
  %v160 = vld [vmem:[%s1 + $0x488] sm:$0xff]
  %v161 = vld [vmem:[%s1 + $0x490] sm:$0xff]
  %v162 = vld [vmem:[%s1 + $0x498] sm:$0xff]
  %v163 = vld [vmem:[%s1 + $0x4a0] sm:$0xff]
  %v164 = vld [vmem:[%s1 + $0x4a8] sm:$0xff]
  %v165 = vld [vmem:[%s1 + $0x4b0] sm:$0xff]
  %v166 = vld [vmem:[%s1 + $0x4b8] sm:$0xff]
  %v167 = vld [vmem:[%s1 + $0x4c0] sm:$0xff]
  %v168 = vld [vmem:[%s1 + $0x4c8] sm:$0xff]
  %v169 = vld [vmem:[%s1 + $0x4d0] sm:$0xff]
  %v170 = vld [vmem:[%s1 + $0x4d8] sm:$0xff]
  %v171 = vld [vmem:[%s1 + $0x4e0] sm:$0xff]
  %v172 = vld [vmem:[%s1 + $0x4e8] sm:$0xff]
  %v173 = vld [vmem:[%s1 + $0x4f0] sm:$0xff]
  %v174 = vld [vmem:[%s1 + $0x4f8] sm:$0xff]
  %v175 = vld [vmem:[%s1 + $0x500] sm:$0xff]
  %v176 = vld [vmem:[%s1 + $0x508] sm:$0xff]
  %v177 = vld [vmem:[%s1 + $0x510] sm:$0xff]
  %v178 = vld [vmem:[%s1 + $0x518] sm:$0xff]
  %v179 = vld [vmem:[%s1 + $0x520] sm:$0xff]
  %v180 = vld [vmem:[%s1 + $0x528] sm:$0xff]
  %v181 = vld [vmem:[%s1 + $0x530] sm:$0xff]
  %v182 = vld [vmem:[%s1 + $0x538] sm:$0xff]
  %v183 = vld [vmem:[%s1 + $0x540] sm:$0xff]
  %v184 = vld [vmem:[%s1 + $0x548] sm:$0xff]
  %v185 = vld [vmem:[%s1 + $0x550] sm:$0xff]
  %v186 = vld [vmem:[%s1 + $0x558] sm:$0xff]
  %v187 = vld [vmem:[%s1 + $0x560] sm:$0xff]
  %v188 = vld [vmem:[%s1 + $0x568] sm:$0xff]
  %v189 = vld [vmem:[%s1 + $0x570] sm:$0xff]
  %v190 = vld [vmem:[%s1 + $0x578] sm:$0xff]
  %v191 = vld [vmem:[%s1 + $0x580] sm:$0xff]
  %v192 = vld [vmem:[%s1 + $0x588] sm:$0xff]
  %v193 = vld [vmem:[%s1 + $0x590] sm:$0xff]
  %v194 = vld [vmem:[%s1 + $0x598] sm:$0xff]
  %v195 = vld [vmem:[%s1 + $0x5a0] sm:$0xff]
  %v196 = vld [vmem:[%s1 + $0x5a8] sm:$0xff]
  %v197 = vld [vmem:[%s1 + $0x5b0] sm:$0xff]
  %v198 = vld [vmem:[%s1 + $0x5b8] sm:$0xff]
  %v199 = vld [vmem:[%s1 + $0x5c0] sm:$0xff]
  %v200 = vld [vmem:[%s1 + $0x5c8] sm:$0xff]
  %v201 = vld [vmem:[%s1 + $0x5d0] sm:$0xff]
  %v202 = vld [vmem:[%s1 + $0x5d8] sm:$0xff]
  %v203 = vld [vmem:[%s1 + $0x5e0] sm:$0xff]
  %v204 = vld [vmem:[%s1 + $0x5e8] sm:$0xff]
  %v205 = vld [vmem:[%s1 + $0x5f0] sm:$0xff]
  %v206 = vld [vmem:[%s1 + $0x5f8] sm:$0xff]
  %v207 = vld [vmem:[%s1 + $0x600] sm:$0xff]
  %v208 = vld [vmem:[%s1 + $0x608] sm:$0xff]
  %v209 = vld [vmem:[%s1 + $0x610] sm:$0xff]
  %v210 = vld [vmem:[%s1 + $0x618] sm:$0xff]
  %v211 = vld [vmem:[%s1 + $0x620] sm:$0xff]
  %v212 = vld [vmem:[%s1 + $0x628] sm:$0xff]
  %v213 = vld [vmem:[%s1 + $0x630] sm:$0xff]
  %v214 = vld [vmem:[%s1 + $0x638] sm:$0xff]
  %v215 = vld [vmem:[%s1 + $0x640] sm:$0xff]
  %v216 = vld [vmem:[%s1 + $0x648] sm:$0xff]
  %v217 = vld [vmem:[%s1 + $0x650] sm:$0xff]
  %v218 = vld [vmem:[%s1 + $0x658] sm:$0xff]
  %v219 = vld [vmem:[%s1 + $0x660] sm:$0xff]
  %v220 = vld [vmem:[%s1 + $0x668] sm:$0xff]
  %v221 = vld [vmem:[%s1 + $0x670] sm:$0xff]
  %v222 = vld [vmem:[%s1 + $0x678] sm:$0xff]
  %223 = vmatpush.msra.mxu0 %v210
  %224 = vmatpush.msra.mxu0 %v197
  %225 = vmatpush.msra.mxu0 %v184
  %226 = vmatpush.msra.mxu0 %v171
  %227 = vmatpush.msra.mxu0 %v158
  %228 = vmatpush.msra.mxu0 %v145
  %229 = vmatpush.msra.mxu0 %v132
  %230 = vmatpush.msra.mxu0 %v119
  %231 = vmatpush.msra.mxu0 %v106
  %232 = vmatpush.msra.mxu0 %v93
  %233 = vmatpush.msra.mxu0 %v80
  %234 = vmatpush.msra.mxu0 %v67
  %235 = vmatpush.msra.mxu0 %v54
  %236 = vmatpush.msra.mxu0 %v41
  %237 = vmatpush.msra.mxu0 %v28
  %238 = vmatpush.msra.mxu0 %v15
  %239 = vmatmul.f32.gmra.mxu0 %v14
  %v240 = vpop.f32.mrf.mxu0
  %v241 = vadd.f32 0.0, %v240
  %242 = vdwg.mxu0
  %243 = vmatpush.msra.mxu0 %v211
  %244 = vmatpush.msra.mxu0 %v198
  %245 = vmatpush.msra.mxu0 %v185
  %246 = vmatpush.msra.mxu0 %v172
  %247 = vmatpush.msra.mxu0 %v159
  %248 = vmatpush.msra.mxu0 %v146
  %249 = vmatpush.msra.mxu0 %v133
  %250 = vmatpush.msra.mxu0 %v120
  %251 = vmatpush.msra.mxu0 %v107
  %252 = vmatpush.msra.mxu0 %v94
  %253 = vmatpush.msra.mxu0 %v81
  %254 = vmatpush.msra.mxu0 %v68
  %255 = vmatpush.msra.mxu0 %v55
  %256 = vmatpush.msra.mxu0 %v42
  %257 = vmatpush.msra.mxu0 %v29
  %258 = vmatpush.msra.mxu0 %v16
  %259 = vmatmul.f32.gmra.mxu0 %v14
  %v260 = vpop.f32.mrf.mxu0
  %v261 = vadd.f32 0.0, %v260
  %262 = vdwg.mxu0
  %263 = vmatpush.msra.mxu0 %v212
  %264 = vmatpush.msra.mxu0 %v199
  %265 = vmatpush.msra.mxu0 %v186
  %266 = vmatpush.msra.mxu0 %v173
  %267 = vmatpush.msra.mxu0 %v160
  %268 = vmatpush.msra.mxu0 %v147
  %269 = vmatpush.msra.mxu0 %v134
  %270 = vmatpush.msra.mxu0 %v121
  %271 = vmatpush.msra.mxu0 %v108
  %272 = vmatpush.msra.mxu0 %v95
  %273 = vmatpush.msra.mxu0 %v82
  %274 = vmatpush.msra.mxu0 %v69
  %275 = vmatpush.msra.mxu0 %v56
  %276 = vmatpush.msra.mxu0 %v43
  %277 = vmatpush.msra.mxu0 %v30
  %278 = vmatpush.msra.mxu0 %v17
  %279 = vmatmul.f32.gmra.mxu0 %v14
  %v280 = vpop.f32.mrf.mxu0
  %v281 = vadd.f32 0.0, %v280
  %282 = vdwg.mxu0
  %283 = vmatpush.msra.mxu0 %v213
  %284 = vmatpush.msra.mxu0 %v200
  %285 = vmatpush.msra.mxu0 %v187
  %286 = vmatpush.msra.mxu0 %v174
  %287 = vmatpush.msra.mxu0 %v161
  %288 = vmatpush.msra.mxu0 %v148
  %289 = vmatpush.msra.mxu0 %v135
  %290 = vmatpush.msra.mxu0 %v122
  %291 = vmatpush.msra.mxu0 %v109
  %292 = vmatpush.msra.mxu0 %v96
  %293 = vmatpush.msra.mxu0 %v83
  %294 = vmatpush.msra.mxu0 %v70
  %295 = vmatpush.msra.mxu0 %v57
  %296 = vmatpush.msra.mxu0 %v44
  %297 = vmatpush.msra.mxu0 %v31
  %298 = vmatpush.msra.mxu0 %v18
  %299 = vmatmul.f32.gmra.mxu0 %v14
  %v300 = vpop.f32.mrf.mxu0
  %v301 = vadd.f32 0.0, %v300
  %302 = vdwg.mxu0
  %303 = vmatpush.msra.mxu0 %v214
  %304 = vmatpush.msra.mxu0 %v201
  %305 = vmatpush.msra.mxu0 %v188
  %306 = vmatpush.msra.mxu0 %v175
  %307 = vmatpush.msra.mxu0 %v162
  %308 = vmatpush.msra.mxu0 %v149
  %309 = vmatpush.msra.mxu0 %v136
  %310 = vmatpush.msra.mxu0 %v123
  %311 = vmatpush.msra.mxu0 %v110
  %312 = vmatpush.msra.mxu0 %v97
  %313 = vmatpush.msra.mxu0 %v84
  %314 = vmatpush.msra.mxu0 %v71
  %315 = vmatpush.msra.mxu0 %v58
  %316 = vmatpush.msra.mxu0 %v45
  %317 = vmatpush.msra.mxu0 %v32
  %318 = vmatpush.msra.mxu0 %v19
  %319 = vmatmul.f32.gmra.mxu0 %v14
  %v320 = vpop.f32.mrf.mxu0
  %v321 = vadd.f32 0.0, %v320
  %322 = vdwg.mxu0
  %323 = vmatpush.msra.mxu0 %v215
  %324 = vmatpush.msra.mxu0 %v202
  %325 = vmatpush.msra.mxu0 %v189
  %326 = vmatpush.msra.mxu0 %v176
  %327 = vmatpush.msra.mxu0 %v163
  %328 = vmatpush.msra.mxu0 %v150
  %329 = vmatpush.msra.mxu0 %v137
  %330 = vmatpush.msra.mxu0 %v124
  %331 = vmatpush.msra.mxu0 %v111
  %332 = vmatpush.msra.mxu0 %v98
  %333 = vmatpush.msra.mxu0 %v85
  %334 = vmatpush.msra.mxu0 %v72
  %335 = vmatpush.msra.mxu0 %v59
  %336 = vmatpush.msra.mxu0 %v46
  %337 = vmatpush.msra.mxu0 %v33
  %338 = vmatpush.msra.mxu0 %v20
  %339 = vmatmul.f32.gmra.mxu0 %v14
  %v340 = vpop.f32.mrf.mxu0
  %v341 = vadd.f32 0.0, %v340
  %342 = vdwg.mxu0
  %343 = vmatpush.msra.mxu0 %v216
  %344 = vmatpush.msra.mxu0 %v203
  %345 = vmatpush.msra.mxu0 %v190
  %346 = vmatpush.msra.mxu0 %v177
  %347 = vmatpush.msra.mxu0 %v164
  %348 = vmatpush.msra.mxu0 %v151
  %349 = vmatpush.msra.mxu0 %v138
  %350 = vmatpush.msra.mxu0 %v125
  %351 = vmatpush.msra.mxu0 %v112
  %352 = vmatpush.msra.mxu0 %v99
  %353 = vmatpush.msra.mxu0 %v86
  %354 = vmatpush.msra.mxu0 %v73
  %355 = vmatpush.msra.mxu0 %v60
  %356 = vmatpush.msra.mxu0 %v47
  %357 = vmatpush.msra.mxu0 %v34
  %358 = vmatpush.msra.mxu0 %v21
  %359 = vmatmul.f32.gmra.mxu0 %v14
  %v360 = vpop.f32.mrf.mxu0
  %v361 = vadd.f32 0.0, %v360
  %362 = vdwg.mxu0
  %363 = vmatpush.msra.mxu0 %v217
  %364 = vmatpush.msra.mxu0 %v204
  %365 = vmatpush.msra.mxu0 %v191
  %366 = vmatpush.msra.mxu0 %v178
  %367 = vmatpush.msra.mxu0 %v165
  %368 = vmatpush.msra.mxu0 %v152
  %369 = vmatpush.msra.mxu0 %v139
  %370 = vmatpush.msra.mxu0 %v126
  %371 = vmatpush.msra.mxu0 %v113
  %372 = vmatpush.msra.mxu0 %v100
  %373 = vmatpush.msra.mxu0 %v87
  %374 = vmatpush.msra.mxu0 %v74
  %375 = vmatpush.msra.mxu0 %v61
  %376 = vmatpush.msra.mxu0 %v48
  %377 = vmatpush.msra.mxu0 %v35
  %378 = vmatpush.msra.mxu0 %v22
  %379 = vmatmul.f32.gmra.mxu0 %v14
  %v380 = vpop.f32.mrf.mxu0
  %v381 = vadd.f32 0.0, %v380
  %382 = vdwg.mxu0
  %383 = vmatpush.msra.mxu0 %v218
  %384 = vmatpush.msra.mxu0 %v205
  %385 = vmatpush.msra.mxu0 %v192
  %386 = vmatpush.msra.mxu0 %v179
  %387 = vmatpush.msra.mxu0 %v166
  %388 = vmatpush.msra.mxu0 %v153
  %389 = vmatpush.msra.mxu0 %v140
  %390 = vmatpush.msra.mxu0 %v127
  %391 = vmatpush.msra.mxu0 %v114
  %392 = vmatpush.msra.mxu0 %v101
  %393 = vmatpush.msra.mxu0 %v88
  %394 = vmatpush.msra.mxu0 %v75
  %395 = vmatpush.msra.mxu0 %v62
  %396 = vmatpush.msra.mxu0 %v49
  %397 = vmatpush.msra.mxu0 %v36
  %398 = vmatpush.msra.mxu0 %v23
  %399 = vmatmul.f32.gmra.mxu0 %v14
  %v400 = vpop.f32.mrf.mxu0
  %v401 = vadd.f32 0.0, %v400
  %402 = vdwg.mxu0
  %403 = vmatpush.msra.mxu0 %v219
  %404 = vmatpush.msra.mxu0 %v206
  %405 = vmatpush.msra.mxu0 %v193
  %406 = vmatpush.msra.mxu0 %v180
  %407 = vmatpush.msra.mxu0 %v167
  %408 = vmatpush.msra.mxu0 %v154
  %409 = vmatpush.msra.mxu0 %v141
  %410 = vmatpush.msra.mxu0 %v128
  %411 = vmatpush.msra.mxu0 %v115
  %412 = vmatpush.msra.mxu0 %v102
  %413 = vmatpush.msra.mxu0 %v89
  %414 = vmatpush.msra.mxu0 %v76
  %415 = vmatpush.msra.mxu0 %v63
  %416 = vmatpush.msra.mxu0 %v50
  %417 = vmatpush.msra.mxu0 %v37
  %418 = vmatpush.msra.mxu0 %v24
  %419 = vmatmul.f32.gmra.mxu0 %v14
  %v420 = vpop.f32.mrf.mxu0
  %v421 = vadd.f32 0.0, %v420
  %422 = vdwg.mxu0
  %423 = vmatpush.msra.mxu0 %v220
  %424 = vmatpush.msra.mxu0 %v207
  %425 = vmatpush.msra.mxu0 %v194
  %426 = vmatpush.msra.mxu0 %v181
  %427 = vmatpush.msra.mxu0 %v168
  %428 = vmatpush.msra.mxu0 %v155
  %429 = vmatpush.msra.mxu0 %v142
  %430 = vmatpush.msra.mxu0 %v129
  %431 = vmatpush.msra.mxu0 %v116
  %432 = vmatpush.msra.mxu0 %v103
  %433 = vmatpush.msra.mxu0 %v90
  %434 = vmatpush.msra.mxu0 %v77
  %435 = vmatpush.msra.mxu0 %v64
  %436 = vmatpush.msra.mxu0 %v51
  %437 = vmatpush.msra.mxu0 %v38
  %438 = vmatpush.msra.mxu0 %v25
  %439 = vmatmul.f32.gmra.mxu0 %v14
  %v440 = vpop.f32.mrf.mxu0
  %v441 = vadd.f32 0.0, %v440
  %442 = vdwg.mxu0
  %443 = vmatpush.msra.mxu0 %v221
  %444 = vmatpush.msra.mxu0 %v208
  %445 = vmatpush.msra.mxu0 %v195
  %446 = vmatpush.msra.mxu0 %v182
  %447 = vmatpush.msra.mxu0 %v169
  %448 = vmatpush.msra.mxu0 %v156
  %449 = vmatpush.msra.mxu0 %v143
  %450 = vmatpush.msra.mxu0 %v130
  %451 = vmatpush.msra.mxu0 %v117
  %452 = vmatpush.msra.mxu0 %v104
  %453 = vmatpush.msra.mxu0 %v91
  %454 = vmatpush.msra.mxu0 %v78
  %455 = vmatpush.msra.mxu0 %v65
  %456 = vmatpush.msra.mxu0 %v52
  %457 = vmatpush.msra.mxu0 %v39
  %458 = vmatpush.msra.mxu0 %v26
  %459 = vmatmul.f32.gmra.mxu0 %v14
  %v460 = vpop.f32.mrf.mxu0
  %v461 = vadd.f32 0.0, %v460
  %462 = vdwg.mxu0
  %463 = vmatpush.msra.mxu0 %v222
  %464 = vmatpush.msra.mxu0 %v209
  %465 = vmatpush.msra.mxu0 %v196
  %466 = vmatpush.msra.mxu0 %v183
  %467 = vmatpush.msra.mxu0 %v170
  %468 = vmatpush.msra.mxu0 %v157
  %469 = vmatpush.msra.mxu0 %v144
  %470 = vmatpush.msra.mxu0 %v131
  %471 = vmatpush.msra.mxu0 %v118
  %472 = vmatpush.msra.mxu0 %v105
  %473 = vmatpush.msra.mxu0 %v92
  %474 = vmatpush.msra.mxu0 %v79
  %475 = vmatpush.msra.mxu0 %v66
  %476 = vmatpush.msra.mxu0 %v53
  %477 = vmatpush.msra.mxu0 %v40
  %478 = vmatpush.msra.mxu0 %v27
  %479 = vmatmul.f32.gmra.mxu0 %v14
  %v480 = vpop.f32.mrf.mxu0
  %v481 = vadd.f32 0.0, %v480
  %482 = vdwg.mxu0
  %v483 = vmax.f32 %v241, 0.0
  %v484 = vmax.f32 %v261, 0.0
  %v485 = vmax.f32 %v281, 0.0
  %v486 = vmax.f32 %v301, 0.0
  %v487 = vmax.f32 %v321, 0.0
  %v488 = vmax.f32 %v341, 0.0
  %v489 = vmax.f32 %v361, 0.0
  %v490 = vmax.f32 %v381, 0.0
  %v491 = vmax.f32 %v401, 0.0
  %v492 = vmax.f32 %v421, 0.0
  %v493 = vmax.f32 %v441, 0.0
  %v494 = vmax.f32 %v461, 0.0
  %v495 = vmax.f32 %v481, 0.0
  %v496 = vld [vmem:[%s2] sm:$0xff]
  %498 = vset.pattern.permute.xlu0 0
  %499 = vperm.xlu0 %498, %v496
  %v500 = vpop.permute.xlu0 %499
  %v502 = vmul.f32 %v483, %v500
  %v503 = vmul.f32 %v484, %v500
  %v504 = vmul.f32 %v485, %v500
  %v505 = vmul.f32 %v486, %v500
  %v506 = vmul.f32 %v487, %v500
  %v507 = vmul.f32 %v488, %v500
  %v508 = vmul.f32 %v489, %v500
  %v509 = vmul.f32 %v490, %v500
  %v510 = vmul.f32 %v491, %v500
  %v511 = vmul.f32 %v492, %v500
  %v512 = vmul.f32 %v493, %v500
  %v513 = vmul.f32 %v494, %v500
  %v514 = vmul.f32 %v495, %v500
  %515 = vset.pattern.permute.xlu0 1
  %516 = vperm.xlu0 %515, %v496
  %v517 = vpop.permute.xlu0 %516
  %v519 = vadd.f32 %v502, %v517
  %v520 = vadd.f32 %v503, %v517
  %v521 = vadd.f32 %v504, %v517
  %v522 = vadd.f32 %v505, %v517
  %v523 = vadd.f32 %v506, %v517
  %v524 = vadd.f32 %v507, %v517
  %v525 = vadd.f32 %v508, %v517
  %v526 = vadd.f32 %v509, %v517
  %v527 = vadd.f32 %v510, %v517
  %v528 = vadd.f32 %v511, %v517
  %v529 = vadd.f32 %v512, %v517
  %v530 = vadd.f32 %v513, %v517
  %v531 = vadd.f32 %v514, %v517
  %532 = vst [vmem:[%s3] sm:$0xff] %v519
  %533 = vst [vmem:[%s3 + $0x8] sm:$0xff] %v520
  %534 = vst [vmem:[%s3 + $0x10] sm:$0xff] %v521
  %535 = vst [vmem:[%s3 + $0x18] sm:$0xff] %v522
  %536 = vst [vmem:[%s3 + $0x20] sm:$0xff] %v523
  %537 = vst [vmem:[%s3 + $0x28] sm:$0xff] %v524
  %538 = vst [vmem:[%s3 + $0x30] sm:$0xff] %v525
  %539 = vst [vmem:[%s3 + $0x38] sm:$0xff] %v526
  %540 = vst [vmem:[%s3 + $0x40] sm:$0xff] %v527
  %541 = vst [vmem:[%s3 + $0x48] sm:$0xff] %v528
  %542 = vst [vmem:[%s3 + $0x50] sm:$0xff] %v529
  %543 = vst [vmem:[%s3 + $0x58] sm:$0xff] %v530
  %vm544 = vcmask 261120
  %545 = vst.msk [vmem:[%s3 + $0x60] sm:$0xff] %vm544, %v531
  // Predicated region
  $region14: #{hsi_e_forward.3} parent=0 // pred_check
    _
  $region15: #{hsi_e_forward.3} parent=0 // pred_check_branch
    %547 = sbr.rel (0) target = $region17
  $region16: #{hsi_e_forward.3} parent=0 // pred_region
    _
  $region17: #{hsi_e_forward.3} parent=0 // pred_fallthru
    _
  // Predicated region
  $region18: #{hsi_e_forward.3} parent=0 // pred_check
    _
  $region19: #{hsi_e_forward.3} parent=0 // pred_check_branch
    %549 = sbr.rel (0) target = $region21
  $region20: #{hsi_e_forward.3} parent=0 // pred_region
    _
  $region21: #{hsi_e_forward.3} parent=0 // pred_fallthru
    _

// kernel: hsi_e_forward.4
$region0: #{hsi_e_forward.4}
  #allocation0 [shape = 'u32[]', space=smem, size = 0x4, offset = 0x4, fixed_abs, tag = 'smem constant byte address 0x4 - core index']
  #allocation1 [shape = 'u32[72,128]{1,0:T(1,128)}', space=vmem, size = 0x9000, scoped, tag = 'internal scratch']
  %s0 = inlined_call_operand.vmem [shape: f32[16,256], index: 0, kind: input, shape index: {}]
  %s1 = inlined_call_operand.vmem [shape: f32[256,700], index: 1, kind: input, shape index: {}]
  %s2 = inlined_call_operand.vmem [shape: f32[16,2], index: 2, kind: input, shape index: {}]
  %s3 = inlined_call_operand.vmem [shape: f32[64,3328], index: 3, kind: input, shape index: {}]
  %s4 = inlined_call_operand.vmem [shape: f32[3328,18], index: 4, kind: input, shape index: {}]
  %s5 = inlined_call_operand.vmem [shape: f32[64,2], index: 5, kind: input, shape index: {}]
  %s6 = inlined_call_operand.vmem [shape: f32[16,700], index: 6, kind: output, shape index: {0}]
  %s7 = inlined_call_operand.vmem [shape: f32[64,18], index: 7, kind: output, shape index: {1}]
  %8 = xla_tuple %s6, %s7
  %s9 = sld [smem:[#allocation0]]
  $region42: #{hsi_e_forward.4} parent=0
    _
  %s11 = ssub.s32 1, %s9
  %s12 = scalar_select 0, %s11, %s9
  // Predicated region
  $region2: #{hsi_e_forward.4} parent=0 // pred_check
    _
  $region3: #{hsi_e_forward.4} parent=0 // pred_check_branch
    %14 = sbr.rel (0) target = $region5
  $region4: #{hsi_e_forward.4} parent=0 // pred_region
    _
  $region5: #{hsi_e_forward.4} parent=0 // pred_fallthru
    _
  // Predicated region
  $region6: #{hsi_e_forward.4} parent=0 // pred_check
    _
  $region7: #{hsi_e_forward.4} parent=0 // pred_check_branch
    %16 = sbr.rel (0) target = $region9
  $region8: #{hsi_e_forward.4} parent=0 // pred_region
    _
  $region9: #{hsi_e_forward.4} parent=0 // pred_fallthru
    _
  // Predicated region
  $region10: #{hsi_e_forward.4} parent=0 // pred_check
    _
  $region11: #{hsi_e_forward.4} parent=0 // pred_check_branch
    %18 = sbr.rel (0) target = $region13
  $region12: #{hsi_e_forward.4} parent=0 // pred_region
    _
  $region13: #{hsi_e_forward.4} parent=0 // pred_fallthru
    _
  // Predicated region
  $region14: #{hsi_e_forward.4} parent=0 // pred_check
    _
  $region15: #{hsi_e_forward.4} parent=0 // pred_check_branch
    %20 = sbr.rel (0) target = $region17
  $region16: #{hsi_e_forward.4} parent=0 // pred_region
    _
  $region17: #{hsi_e_forward.4} parent=0 // pred_fallthru
    _
  // Predicated region
  $region18: #{hsi_e_forward.4} parent=0 // pred_check
    _
  $region19: #{hsi_e_forward.4} parent=0 // pred_check_branch
    %22 = sbr.rel (0) target = $region21
  $region20: #{hsi_e_forward.4} parent=0 // pred_region
    _
  $region21: #{hsi_e_forward.4} parent=0 // pred_fallthru
    _
  // Predicated region
  $region22: #{hsi_e_forward.4} parent=0 // pred_check
    _
  $region23: #{hsi_e_forward.4} parent=0 // pred_check_branch
    %24 = sbr.rel (0) target = $region25
  $region24: #{hsi_e_forward.4} parent=0 // pred_region
    _
  $region25: #{hsi_e_forward.4} parent=0 // pred_fallthru
    _
  %v25 = vld [vmem:[%s0] sm:$0xff]
  %v26 = vld [vmem:[%s0 + $0x8] sm:$0xff]
  %v27 = vld [vmem:[%s0 + $0x10] sm:$0xff]
  %v28 = vld [vmem:[%s0 + $0x18] sm:$0xff]
  %v29 = vld [vmem:[%s1] sm:$0xff]
  %v30 = vld [vmem:[%s1 + $0x8] sm:$0xff]
  %v31 = vld [vmem:[%s1 + $0x10] sm:$0xff]
  %v32 = vld [vmem:[%s1 + $0x18] sm:$0xff]
  %v33 = vld [vmem:[%s1 + $0x20] sm:$0xff]
  %v34 = vld [vmem:[%s1 + $0x28] sm:$0xff]
  %v35 = vld [vmem:[%s1 + $0x30] sm:$0xff]
  %v36 = vld [vmem:[%s1 + $0x38] sm:$0xff]
  %v37 = vld [vmem:[%s1 + $0x40] sm:$0xff]
  %v38 = vld [vmem:[%s1 + $0x48] sm:$0xff]
  %v39 = vld [vmem:[%s1 + $0x50] sm:$0xff]
  %v40 = vld [vmem:[%s1 + $0x58] sm:$0xff]
  %v41 = vld [vmem:[%s1 + $0x60] sm:$0xff]
  %v42 = vld [vmem:[%s1 + $0x68] sm:$0xff]
  %v43 = vld [vmem:[%s1 + $0x70] sm:$0xff]
  %v44 = vld [vmem:[%s1 + $0x78] sm:$0xff]
  %v45 = vld [vmem:[%s1 + $0x80] sm:$0xff]
  %v46 = vld [vmem:[%s1 + $0x88] sm:$0xff]
  %v47 = vld [vmem:[%s1 + $0x90] sm:$0xff]
  %v48 = vld [vmem:[%s1 + $0x98] sm:$0xff]
  %v49 = vld [vmem:[%s1 + $0xa0] sm:$0xff]
  %v50 = vld [vmem:[%s1 + $0xa8] sm:$0xff]
  %v51 = vld [vmem:[%s1 + $0xb0] sm:$0xff]
  %v52 = vld [vmem:[%s1 + $0xb8] sm:$0xff]
  %v53 = vld [vmem:[%s1 + $0xc0] sm:$0xff]
  %v54 = vld [vmem:[%s1 + $0xc8] sm:$0xff]
  %v55 = vld [vmem:[%s1 + $0xd0] sm:$0xff]
  %v56 = vld [vmem:[%s1 + $0xd8] sm:$0xff]
  %v57 = vld [vmem:[%s1 + $0xe0] sm:$0xff]
  %v58 = vld [vmem:[%s1 + $0xe8] sm:$0xff]
  %v59 = vld [vmem:[%s1 + $0xf0] sm:$0xff]
  %v60 = vld [vmem:[%s1 + $0xf8] sm:$0xff]
  %v61 = vld [vmem:[%s1 + $0x100] sm:$0xff]
  %v62 = vld [vmem:[%s1 + $0x108] sm:$0xff]
  %v63 = vld [vmem:[%s1 + $0x110] sm:$0xff]
  %v64 = vld [vmem:[%s1 + $0x118] sm:$0xff]
  %v65 = vld [vmem:[%s1 + $0x120] sm:$0xff]
  %v66 = vld [vmem:[%s1 + $0x128] sm:$0xff]
  %v67 = vld [vmem:[%s1 + $0x130] sm:$0xff]
  %v68 = vld [vmem:[%s1 + $0x138] sm:$0xff]
  %v69 = vld [vmem:[%s1 + $0x140] sm:$0xff]
  %v70 = vld [vmem:[%s1 + $0x148] sm:$0xff]
  %v71 = vld [vmem:[%s1 + $0x150] sm:$0xff]
  %v72 = vld [vmem:[%s1 + $0x158] sm:$0xff]
  %v73 = vld [vmem:[%s1 + $0x160] sm:$0xff]
  %v74 = vld [vmem:[%s1 + $0x168] sm:$0xff]
  %v75 = vld [vmem:[%s1 + $0x170] sm:$0xff]
  %v76 = vld [vmem:[%s1 + $0x178] sm:$0xff]
  %v77 = vld [vmem:[%s1 + $0x180] sm:$0xff]
  %v78 = vld [vmem:[%s1 + $0x188] sm:$0xff]
  %v79 = vld [vmem:[%s1 + $0x190] sm:$0xff]
  %v80 = vld [vmem:[%s1 + $0x198] sm:$0xff]
  %v81 = vld [vmem:[%s1 + $0x1a0] sm:$0xff]
  %v82 = vld [vmem:[%s1 + $0x1a8] sm:$0xff]
  %v83 = vld [vmem:[%s1 + $0x1b0] sm:$0xff]
  %v84 = vld [vmem:[%s1 + $0x1b8] sm:$0xff]
  %v85 = vld [vmem:[%s1 + $0x1c0] sm:$0xff]
  %v86 = vld [vmem:[%s1 + $0x1c8] sm:$0xff]
  %v87 = vld [vmem:[%s1 + $0x1d0] sm:$0xff]
  %v88 = vld [vmem:[%s1 + $0x1d8] sm:$0xff]
  %v89 = vld [vmem:[%s1 + $0x1e0] sm:$0xff]
  %v90 = vld [vmem:[%s1 + $0x1e8] sm:$0xff]
  %v91 = vld [vmem:[%s1 + $0x1f0] sm:$0xff]
  %v92 = vld [vmem:[%s1 + $0x1f8] sm:$0xff]
  %v93 = vld [vmem:[%s1 + $0x200] sm:$0xff]
  %v94 = vld [vmem:[%s1 + $0x208] sm:$0xff]
  %v95 = vld [vmem:[%s1 + $0x210] sm:$0xff]
  %v96 = vld [vmem:[%s1 + $0x218] sm:$0xff]
  %v97 = vld [vmem:[%s1 + $0x220] sm:$0xff]
  %v98 = vld [vmem:[%s1 + $0x228] sm:$0xff]
  %v99 = vld [vmem:[%s1 + $0x230] sm:$0xff]
  %v100 = vld [vmem:[%s1 + $0x238] sm:$0xff]
  %v101 = vld [vmem:[%s1 + $0x240] sm:$0xff]
  %v102 = vld [vmem:[%s1 + $0x248] sm:$0xff]
  %v103 = vld [vmem:[%s1 + $0x250] sm:$0xff]
  %v104 = vld [vmem:[%s1 + $0x258] sm:$0xff]
  %v105 = vld [vmem:[%s1 + $0x260] sm:$0xff]
  %v106 = vld [vmem:[%s1 + $0x268] sm:$0xff]
  %v107 = vld [vmem:[%s1 + $0x270] sm:$0xff]
  %v108 = vld [vmem:[%s1 + $0x278] sm:$0xff]
  %v109 = vld [vmem:[%s1 + $0x280] sm:$0xff]
  %v110 = vld [vmem:[%s1 + $0x288] sm:$0xff]
  %v111 = vld [vmem:[%s1 + $0x290] sm:$0xff]
  %v112 = vld [vmem:[%s1 + $0x298] sm:$0xff]
  %v113 = vld [vmem:[%s1 + $0x2a0] sm:$0xff]
  %v114 = vld [vmem:[%s1 + $0x2a8] sm:$0xff]
  %v115 = vld [vmem:[%s1 + $0x2b0] sm:$0xff]
  %v116 = vld [vmem:[%s1 + $0x2b8] sm:$0xff]
  %v117 = vld [vmem:[%s1 + $0x2c0] sm:$0xff]
  %v118 = vld [vmem:[%s1 + $0x2c8] sm:$0xff]
  %v119 = vld [vmem:[%s1 + $0x2d0] sm:$0xff]
  %v120 = vld [vmem:[%s1 + $0x2d8] sm:$0xff]
  %v121 = vld [vmem:[%s1 + $0x2e0] sm:$0xff]
  %v122 = vld [vmem:[%s1 + $0x2e8] sm:$0xff]
  %v123 = vld [vmem:[%s1 + $0x2f0] sm:$0xff]
  %v124 = vld [vmem:[%s1 + $0x2f8] sm:$0xff]
  %v125 = vld [vmem:[%s1 + $0x300] sm:$0xff]
  %v126 = vld [vmem:[%s1 + $0x308] sm:$0xff]
  %v127 = vld [vmem:[%s1 + $0x310] sm:$0xff]
  %v128 = vld [vmem:[%s1 + $0x318] sm:$0xff]
  %v129 = vld [vmem:[%s1 + $0x320] sm:$0xff]
  %v130 = vld [vmem:[%s1 + $0x328] sm:$0xff]
  %v131 = vld [vmem:[%s1 + $0x330] sm:$0xff]
  %v132 = vld [vmem:[%s1 + $0x338] sm:$0xff]
  %v133 = vld [vmem:[%s1 + $0x340] sm:$0xff]
  %v134 = vld [vmem:[%s1 + $0x348] sm:$0xff]
  %v135 = vld [vmem:[%s1 + $0x350] sm:$0xff]
  %v136 = vld [vmem:[%s1 + $0x358] sm:$0xff]
  %v137 = vld [vmem:[%s1 + $0x360] sm:$0xff]
  %v138 = vld [vmem:[%s1 + $0x368] sm:$0xff]
  %v139 = vld [vmem:[%s1 + $0x370] sm:$0xff]
  %v140 = vld [vmem:[%s1 + $0x378] sm:$0xff]
  %v141 = vld [vmem:[%s1 + $0x380] sm:$0xff]
  %v142 = vld [vmem:[%s1 + $0x388] sm:$0xff]
  %v143 = vld [vmem:[%s1 + $0x390] sm:$0xff]
  %v144 = vld [vmem:[%s1 + $0x398] sm:$0xff]
  %v145 = vld [vmem:[%s1 + $0x3a0] sm:$0xff]
  %v146 = vld [vmem:[%s1 + $0x3a8] sm:$0xff]
  %v147 = vld [vmem:[%s1 + $0x3b0] sm:$0xff]
  %v148 = vld [vmem:[%s1 + $0x3b8] sm:$0xff]
  %v149 = vld [vmem:[%s1 + $0x3c0] sm:$0xff]
  %v150 = vld [vmem:[%s1 + $0x3c8] sm:$0xff]
  %v151 = vld [vmem:[%s1 + $0x3d0] sm:$0xff]
  %v152 = vld [vmem:[%s1 + $0x3d8] sm:$0xff]
  %v153 = vld [vmem:[%s1 + $0x3e0] sm:$0xff]
  %v154 = vld [vmem:[%s1 + $0x3e8] sm:$0xff]
  %v155 = vld [vmem:[%s1 + $0x3f0] sm:$0xff]
  %v156 = vld [vmem:[%s1 + $0x3f8] sm:$0xff]
  %v157 = vld [vmem:[%s1 + $0x400] sm:$0xff]
  %v158 = vld [vmem:[%s1 + $0x408] sm:$0xff]
  %v159 = vld [vmem:[%s1 + $0x410] sm:$0xff]
  %v160 = vld [vmem:[%s1 + $0x418] sm:$0xff]
  %v161 = vld [vmem:[%s1 + $0x420] sm:$0xff]
  %v162 = vld [vmem:[%s1 + $0x428] sm:$0xff]
  %v163 = vld [vmem:[%s1 + $0x430] sm:$0xff]
  %v164 = vld [vmem:[%s1 + $0x438] sm:$0xff]
  %v165 = vld [vmem:[%s1 + $0x440] sm:$0xff]
  %v166 = vld [vmem:[%s1 + $0x448] sm:$0xff]
  %v167 = vld [vmem:[%s1 + $0x450] sm:$0xff]
  %v168 = vld [vmem:[%s1 + $0x458] sm:$0xff]
  %v169 = vld [vmem:[%s1 + $0x460] sm:$0xff]
  %v170 = vld [vmem:[%s1 + $0x468] sm:$0xff]
  %v171 = vld [vmem:[%s1 + $0x470] sm:$0xff]
  %v172 = vld [vmem:[%s1 + $0x478] sm:$0xff]
  %v173 = vld [vmem:[%s1 + $0x480] sm:$0xff]
  %v174 = vld [vmem:[%s1 + $0x488] sm:$0xff]
  %v175 = vld [vmem:[%s1 + $0x490] sm:$0xff]
  %v176 = vld [vmem:[%s1 + $0x498] sm:$0xff]
  %v177 = vld [vmem:[%s1 + $0x4a0] sm:$0xff]
  %v178 = vld [vmem:[%s1 + $0x4a8] sm:$0xff]
  %v179 = vld [vmem:[%s1 + $0x4b0] sm:$0xff]
  %v180 = vld [vmem:[%s1 + $0x4b8] sm:$0xff]
  %v181 = vld [vmem:[%s1 + $0x4c0] sm:$0xff]
  %v182 = vld [vmem:[%s1 + $0x4c8] sm:$0xff]
  %v183 = vld [vmem:[%s1 + $0x4d0] sm:$0xff]
  %v184 = vld [vmem:[%s1 + $0x4d8] sm:$0xff]
  %v185 = vld [vmem:[%s1 + $0x4e0] sm:$0xff]
  %v186 = vld [vmem:[%s1 + $0x4e8] sm:$0xff]
  %v187 = vld [vmem:[%s1 + $0x4f0] sm:$0xff]
  %v188 = vld [vmem:[%s1 + $0x4f8] sm:$0xff]
  %v189 = vld [vmem:[%s1 + $0x500] sm:$0xff]
  %v190 = vld [vmem:[%s1 + $0x508] sm:$0xff]
  %v191 = vld [vmem:[%s1 + $0x510] sm:$0xff]
  %v192 = vld [vmem:[%s1 + $0x518] sm:$0xff]
  %v193 = vld [vmem:[%s1 + $0x520] sm:$0xff]
  %v194 = vld [vmem:[%s1 + $0x528] sm:$0xff]
  %v195 = vld [vmem:[%s1 + $0x530] sm:$0xff]
  %v196 = vld [vmem:[%s1 + $0x538] sm:$0xff]
  %v197 = vld [vmem:[%s1 + $0x540] sm:$0xff]
  %v198 = vld [vmem:[%s1 + $0x548] sm:$0xff]
  %v199 = vld [vmem:[%s1 + $0x550] sm:$0xff]
  %v200 = vld [vmem:[%s1 + $0x558] sm:$0xff]
  %v201 = vld [vmem:[%s1 + $0x560] sm:$0xff]
  %v202 = vld [vmem:[%s1 + $0x568] sm:$0xff]
  %v203 = vld [vmem:[%s1 + $0x570] sm:$0xff]
  %v204 = vld [vmem:[%s1 + $0x578] sm:$0xff]
  %v205 = vld [vmem:[%s1 + $0x580] sm:$0xff]
  %v206 = vld [vmem:[%s1 + $0x588] sm:$0xff]
  %v207 = vld [vmem:[%s1 + $0x590] sm:$0xff]
  %v208 = vld [vmem:[%s1 + $0x598] sm:$0xff]
  %v209 = vld [vmem:[%s1 + $0x5a0] sm:$0xff]
  %v210 = vld [vmem:[%s1 + $0x5a8] sm:$0xff]
  %v211 = vld [vmem:[%s1 + $0x5b0] sm:$0xff]
  %v212 = vld [vmem:[%s1 + $0x5b8] sm:$0xff]
  %v213 = vld [vmem:[%s1 + $0x5c0] sm:$0xff]
  %v214 = vld [vmem:[%s1 + $0x5c8] sm:$0xff]
  %v215 = vld [vmem:[%s1 + $0x5d0] sm:$0xff]
  %v216 = vld [vmem:[%s1 + $0x5d8] sm:$0xff]
  %v217 = vld [vmem:[%s1 + $0x5e0] sm:$0xff]
  %v218 = vld [vmem:[%s1 + $0x5e8] sm:$0xff]
  %v219 = vld [vmem:[%s1 + $0x5f0] sm:$0xff]
  %v220 = vld [vmem:[%s1 + $0x5f8] sm:$0xff]
  %221 = vmatpush.msra.mxu0 %v119
  %222 = vmatpush.msra.mxu0 %v113
  %223 = vmatpush.msra.mxu0 %v107
  %224 = vmatpush.msra.mxu0 %v101
  %225 = vmatpush.msra.mxu0 %v95
  %226 = vmatpush.msra.mxu0 %v89
  %227 = vmatpush.msra.mxu0 %v83
  %228 = vmatpush.msra.mxu0 %v77
  %229 = vmatpush.msra.mxu0 %v71
  %230 = vmatpush.msra.mxu0 %v65
  %231 = vmatpush.msra.mxu0 %v59
  %232 = vmatpush.msra.mxu0 %v53
  %233 = vmatpush.msra.mxu0 %v47
  %234 = vmatpush.msra.mxu0 %v41
  %235 = vmatpush.msra.mxu0 %v35
  %236 = vmatpush.msra.mxu0 %v29
  %237 = vmatmul.f32.gmra.mxu0 %v25
  %v238 = vpop.f32.mrf.mxu0
  %v239 = vadd.f32 0.0, %v238
  %240 = vmatmul.f32.gmra.mxu0 %v27
  %v241 = vpop.f32.mrf.mxu0
  %v242 = vadd.f32 0.0, %v241
  %243 = vdwg.mxu0
  %244 = vmatpush.msra.mxu0 %v215
  %245 = vmatpush.msra.mxu0 %v209
  %246 = vmatpush.msra.mxu0 %v203
  %247 = vmatpush.msra.mxu0 %v197
  %248 = vmatpush.msra.mxu0 %v191
  %249 = vmatpush.msra.mxu0 %v185
  %250 = vmatpush.msra.mxu0 %v179
  %251 = vmatpush.msra.mxu0 %v173
  %252 = vmatpush.msra.mxu0 %v167
  %253 = vmatpush.msra.mxu0 %v161
  %254 = vmatpush.msra.mxu0 %v155
  %255 = vmatpush.msra.mxu0 %v149
  %256 = vmatpush.msra.mxu0 %v143
  %257 = vmatpush.msra.mxu0 %v137
  %258 = vmatpush.msra.mxu0 %v131
  %259 = vmatpush.msra.mxu0 %v125
  %260 = vmatmul.f32.gmra.mxu0 %v26
  %v261 = vpop.f32.mrf.mxu0
  %v262 = vadd.f32 %v239, %v261
  %263 = vmatmul.f32.gmra.mxu0 %v28
  %v264 = vpop.f32.mrf.mxu0
  %v265 = vadd.f32 %v242, %v264
  %266 = vdwg.mxu0
  %267 = vmatpush.msra.mxu0 %v120
  %268 = vmatpush.msra.mxu0 %v114
  %269 = vmatpush.msra.mxu0 %v108
  %270 = vmatpush.msra.mxu0 %v102
  %271 = vmatpush.msra.mxu0 %v96
  %272 = vmatpush.msra.mxu0 %v90
  %273 = vmatpush.msra.mxu0 %v84
  %274 = vmatpush.msra.mxu0 %v78
  %275 = vmatpush.msra.mxu0 %v72
  %276 = vmatpush.msra.mxu0 %v66
  %277 = vmatpush.msra.mxu0 %v60
  %278 = vmatpush.msra.mxu0 %v54
  %279 = vmatpush.msra.mxu0 %v48
  %280 = vmatpush.msra.mxu0 %v42
  %281 = vmatpush.msra.mxu0 %v36
  %282 = vmatpush.msra.mxu0 %v30
  %283 = vmatmul.f32.gmra.mxu0 %v25
  %v284 = vpop.f32.mrf.mxu0
  %v285 = vadd.f32 0.0, %v284
  %286 = vmatmul.f32.gmra.mxu0 %v27
  %v287 = vpop.f32.mrf.mxu0
  %v288 = vadd.f32 0.0, %v287
  %289 = vdwg.mxu0
  %290 = vmatpush.msra.mxu0 %v216
  %291 = vmatpush.msra.mxu0 %v210
  %292 = vmatpush.msra.mxu0 %v204
  %293 = vmatpush.msra.mxu0 %v198
  %294 = vmatpush.msra.mxu0 %v192
  %295 = vmatpush.msra.mxu0 %v186
  %296 = vmatpush.msra.mxu0 %v180
  %297 = vmatpush.msra.mxu0 %v174
  %298 = vmatpush.msra.mxu0 %v168
  %299 = vmatpush.msra.mxu0 %v162
  %300 = vmatpush.msra.mxu0 %v156
  %301 = vmatpush.msra.mxu0 %v150
  %302 = vmatpush.msra.mxu0 %v144
  %303 = vmatpush.msra.mxu0 %v138
  %304 = vmatpush.msra.mxu0 %v132
  %305 = vmatpush.msra.mxu0 %v126
  %306 = vmatmul.f32.gmra.mxu0 %v26
  %v307 = vpop.f32.mrf.mxu0
  %v308 = vadd.f32 %v285, %v307
  %309 = vmatmul.f32.gmra.mxu0 %v28
  %v310 = vpop.f32.mrf.mxu0
  %v311 = vadd.f32 %v288, %v310
  %312 = vdwg.mxu0
  %313 = vmatpush.msra.mxu0 %v121
  %314 = vmatpush.msra.mxu0 %v115
  %315 = vmatpush.msra.mxu0 %v109
  %316 = vmatpush.msra.mxu0 %v103
  %317 = vmatpush.msra.mxu0 %v97
  %318 = vmatpush.msra.mxu0 %v91
  %319 = vmatpush.msra.mxu0 %v85
  %320 = vmatpush.msra.mxu0 %v79
  %321 = vmatpush.msra.mxu0 %v73
  %322 = vmatpush.msra.mxu0 %v67
  %323 = vmatpush.msra.mxu0 %v61
  %324 = vmatpush.msra.mxu0 %v55
  %325 = vmatpush.msra.mxu0 %v49
  %326 = vmatpush.msra.mxu0 %v43
  %327 = vmatpush.msra.mxu0 %v37
  %328 = vmatpush.msra.mxu0 %v31
  %329 = vmatmul.f32.gmra.mxu0 %v25
  %v330 = vpop.f32.mrf.mxu0
  %v331 = vadd.f32 0.0, %v330
  %332 = vmatmul.f32.gmra.mxu0 %v27
  %v333 = vpop.f32.mrf.mxu0
  %v334 = vadd.f32 0.0, %v333
  %335 = vdwg.mxu0
  %336 = vmatpush.msra.mxu0 %v217
  %337 = vmatpush.msra.mxu0 %v211
  %338 = vmatpush.msra.mxu0 %v205
  %339 = vmatpush.msra.mxu0 %v199
  %340 = vmatpush.msra.mxu0 %v193
  %341 = vmatpush.msra.mxu0 %v187
  %342 = vmatpush.msra.mxu0 %v181
  %343 = vmatpush.msra.mxu0 %v175
  %344 = vmatpush.msra.mxu0 %v169
  %345 = vmatpush.msra.mxu0 %v163
  %346 = vmatpush.msra.mxu0 %v157
  %347 = vmatpush.msra.mxu0 %v151
  %348 = vmatpush.msra.mxu0 %v145
  %349 = vmatpush.msra.mxu0 %v139
  %350 = vmatpush.msra.mxu0 %v133
  %351 = vmatpush.msra.mxu0 %v127
  %352 = vmatmul.f32.gmra.mxu0 %v26
  %v353 = vpop.f32.mrf.mxu0
  %v354 = vadd.f32 %v331, %v353
  %355 = vmatmul.f32.gmra.mxu0 %v28
  %v356 = vpop.f32.mrf.mxu0
  %v357 = vadd.f32 %v334, %v356
  %358 = vdwg.mxu0
  %359 = vmatpush.msra.mxu0 %v122
  %360 = vmatpush.msra.mxu0 %v116
  %361 = vmatpush.msra.mxu0 %v110
  %362 = vmatpush.msra.mxu0 %v104
  %363 = vmatpush.msra.mxu0 %v98
  %364 = vmatpush.msra.mxu0 %v92
  %365 = vmatpush.msra.mxu0 %v86
  %366 = vmatpush.msra.mxu0 %v80
  %367 = vmatpush.msra.mxu0 %v74
  %368 = vmatpush.msra.mxu0 %v68
  %369 = vmatpush.msra.mxu0 %v62
  %370 = vmatpush.msra.mxu0 %v56
  %371 = vmatpush.msra.mxu0 %v50
  %372 = vmatpush.msra.mxu0 %v44
  %373 = vmatpush.msra.mxu0 %v38
  %374 = vmatpush.msra.mxu0 %v32
  %375 = vmatmul.f32.gmra.mxu0 %v25
  %v376 = vpop.f32.mrf.mxu0
  %v377 = vadd.f32 0.0, %v376
  %378 = vmatmul.f32.gmra.mxu0 %v27
  %v379 = vpop.f32.mrf.mxu0
  %v380 = vadd.f32 0.0, %v379
  %381 = vdwg.mxu0
  %382 = vmatpush.msra.mxu0 %v218
  %383 = vmatpush.msra.mxu0 %v212
  %384 = vmatpush.msra.mxu0 %v206
  %385 = vmatpush.msra.mxu0 %v200
  %386 = vmatpush.msra.mxu0 %v194
  %387 = vmatpush.msra.mxu0 %v188
  %388 = vmatpush.msra.mxu0 %v182
  %389 = vmatpush.msra.mxu0 %v176
  %390 = vmatpush.msra.mxu0 %v170
  %391 = vmatpush.msra.mxu0 %v164
  %392 = vmatpush.msra.mxu0 %v158
  %393 = vmatpush.msra.mxu0 %v152
  %394 = vmatpush.msra.mxu0 %v146
  %395 = vmatpush.msra.mxu0 %v140
  %396 = vmatpush.msra.mxu0 %v134
  %397 = vmatpush.msra.mxu0 %v128
  %398 = vmatmul.f32.gmra.mxu0 %v26
  %v399 = vpop.f32.mrf.mxu0
  %v400 = vadd.f32 %v377, %v399
  %401 = vmatmul.f32.gmra.mxu0 %v28
  %v402 = vpop.f32.mrf.mxu0
  %v403 = vadd.f32 %v380, %v402
  %404 = vdwg.mxu0
  %405 = vmatpush.msra.mxu0 %v123
  %406 = vmatpush.msra.mxu0 %v117
  %407 = vmatpush.msra.mxu0 %v111
  %408 = vmatpush.msra.mxu0 %v105
  %409 = vmatpush.msra.mxu0 %v99
  %410 = vmatpush.msra.mxu0 %v93
  %411 = vmatpush.msra.mxu0 %v87
  %412 = vmatpush.msra.mxu0 %v81
  %413 = vmatpush.msra.mxu0 %v75
  %414 = vmatpush.msra.mxu0 %v69
  %415 = vmatpush.msra.mxu0 %v63
  %416 = vmatpush.msra.mxu0 %v57
  %417 = vmatpush.msra.mxu0 %v51
  %418 = vmatpush.msra.mxu0 %v45
  %419 = vmatpush.msra.mxu0 %v39
  %420 = vmatpush.msra.mxu0 %v33
  %421 = vmatmul.f32.gmra.mxu0 %v25
  %v422 = vpop.f32.mrf.mxu0
  %v423 = vadd.f32 0.0, %v422
  %424 = vmatmul.f32.gmra.mxu0 %v27
  %v425 = vpop.f32.mrf.mxu0
  %v426 = vadd.f32 0.0, %v425
  %427 = vdwg.mxu0
  %428 = vmatpush.msra.mxu0 %v219
  %429 = vmatpush.msra.mxu0 %v213
  %430 = vmatpush.msra.mxu0 %v207
  %431 = vmatpush.msra.mxu0 %v201
  %432 = vmatpush.msra.mxu0 %v195
  %433 = vmatpush.msra.mxu0 %v189
  %434 = vmatpush.msra.mxu0 %v183
  %435 = vmatpush.msra.mxu0 %v177
  %436 = vmatpush.msra.mxu0 %v171
  %437 = vmatpush.msra.mxu0 %v165
  %438 = vmatpush.msra.mxu0 %v159
  %439 = vmatpush.msra.mxu0 %v153
  %440 = vmatpush.msra.mxu0 %v147
  %441 = vmatpush.msra.mxu0 %v141
  %442 = vmatpush.msra.mxu0 %v135
  %443 = vmatpush.msra.mxu0 %v129
  %444 = vmatmul.f32.gmra.mxu0 %v26
  %v445 = vpop.f32.mrf.mxu0
  %v446 = vadd.f32 %v423, %v445
  %447 = vmatmul.f32.gmra.mxu0 %v28
  %v448 = vpop.f32.mrf.mxu0
  %v449 = vadd.f32 %v426, %v448
  %450 = vdwg.mxu0
  %451 = vmatpush.msra.mxu0 %v124
  %452 = vmatpush.msra.mxu0 %v118
  %453 = vmatpush.msra.mxu0 %v112
  %454 = vmatpush.msra.mxu0 %v106
  %455 = vmatpush.msra.mxu0 %v100
  %456 = vmatpush.msra.mxu0 %v94
  %457 = vmatpush.msra.mxu0 %v88
  %458 = vmatpush.msra.mxu0 %v82
  %459 = vmatpush.msra.mxu0 %v76
  %460 = vmatpush.msra.mxu0 %v70
  %461 = vmatpush.msra.mxu0 %v64
  %462 = vmatpush.msra.mxu0 %v58
  %463 = vmatpush.msra.mxu0 %v52
  %464 = vmatpush.msra.mxu0 %v46
  %465 = vmatpush.msra.mxu0 %v40
  %466 = vmatpush.msra.mxu0 %v34
  %467 = vmatmul.f32.gmra.mxu0 %v25
  %v468 = vpop.f32.mrf.mxu0
  %v469 = vadd.f32 0.0, %v468
  %470 = vmatmul.f32.gmra.mxu0 %v27
  %v471 = vpop.f32.mrf.mxu0
  %v472 = vadd.f32 0.0, %v471
  %473 = vdwg.mxu0
  %474 = vmatpush.msra.mxu0 %v220
  %475 = vmatpush.msra.mxu0 %v214
  %476 = vmatpush.msra.mxu0 %v208
  %477 = vmatpush.msra.mxu0 %v202
  %478 = vmatpush.msra.mxu0 %v196
  %479 = vmatpush.msra.mxu0 %v190
  %480 = vmatpush.msra.mxu0 %v184
  %481 = vmatpush.msra.mxu0 %v178
  %482 = vmatpush.msra.mxu0 %v172
  %483 = vmatpush.msra.mxu0 %v166
  %484 = vmatpush.msra.mxu0 %v160
  %485 = vmatpush.msra.mxu0 %v154
  %486 = vmatpush.msra.mxu0 %v148
  %487 = vmatpush.msra.mxu0 %v142
  %488 = vmatpush.msra.mxu0 %v136
  %489 = vmatpush.msra.mxu0 %v130
  %490 = vmatmul.f32.gmra.mxu0 %v26
  %v491 = vpop.f32.mrf.mxu0
  %v492 = vadd.f32 %v469, %v491
  %493 = vmatmul.f32.gmra.mxu0 %v28
  %v494 = vpop.f32.mrf.mxu0
  %v495 = vadd.f32 %v472, %v494
  %496 = vdwg.mxu0
  %v497 = vmax.f32 %v262, 0.0
  %v498 = vmax.f32 %v308, 0.0
  %v499 = vmax.f32 %v354, 0.0
  %v500 = vmax.f32 %v400, 0.0
  %v501 = vmax.f32 %v446, 0.0
  %v502 = vmax.f32 %v492, 0.0
  %v503 = vmax.f32 %v265, 0.0
  %v504 = vmax.f32 %v311, 0.0
  %v505 = vmax.f32 %v357, 0.0
  %v506 = vmax.f32 %v403, 0.0
  %v507 = vmax.f32 %v449, 0.0
  %v508 = vmax.f32 %v495, 0.0
  %v509 = vld [vmem:[%s2] sm:$0xff]
  %v510 = vld [vmem:[%s2 + $0x8] sm:$0xff]
  %512 = vset.pattern.permute.xlu0 0
  %513 = vperm.xlu0 %512, %v509
  %v514 = vpop.permute.xlu0 %513
  %517 = vset.pattern.permute.xlu0 0
  %518 = vperm.xlu0 %517, %v510
  %v519 = vpop.permute.xlu0 %518
  %v521 = vmul.f32 %v497, %v514
  %v522 = vmul.f32 %v498, %v514
  %v523 = vmul.f32 %v499, %v514
  %v524 = vmul.f32 %v500, %v514
  %v525 = vmul.f32 %v501, %v514
  %v526 = vmul.f32 %v502, %v514
  %v527 = vmul.f32 %v503, %v519
  %v528 = vmul.f32 %v504, %v519
  %v529 = vmul.f32 %v505, %v519
  %v530 = vmul.f32 %v506, %v519
  %v531 = vmul.f32 %v507, %v519
  %v532 = vmul.f32 %v508, %v519
  %533 = vset.pattern.permute.xlu0 1
  %534 = vperm.xlu0 %533, %v509
  %v535 = vpop.permute.xlu0 %534
  %537 = vset.pattern.permute.xlu0 1
  %538 = vperm.xlu0 %537, %v510
  %v539 = vpop.permute.xlu0 %538
  %v541 = vadd.f32 %v521, %v535
  %v542 = vadd.f32 %v522, %v535
  %v543 = vadd.f32 %v523, %v535
  %v544 = vadd.f32 %v524, %v535
  %v545 = vadd.f32 %v525, %v535
  %v546 = vadd.f32 %v526, %v535
  %v547 = vadd.f32 %v527, %v539
  %v548 = vadd.f32 %v528, %v539
  %v549 = vadd.f32 %v529, %v539
  %v550 = vadd.f32 %v530, %v539
  %v551 = vadd.f32 %v531, %v539
  %v552 = vadd.f32 %v532, %v539
  %553 = vst [vmem:[%s6] sm:$0xff] %v541
  %554 = vst [vmem:[%s6 + $0x8] sm:$0xff] %v542
  %555 = vst [vmem:[%s6 + $0x10] sm:$0xff] %v543
  %556 = vst [vmem:[%s6 + $0x18] sm:$0xff] %v544
  %557 = vst [vmem:[%s6 + $0x20] sm:$0xff] %v545
  %vm558 = vcmask 490496
  %559 = vst.msk [vmem:[%s6 + $0x28] sm:$0xff] %vm558, %v546
  %560 = vst [vmem:[%s6 + $0x30] sm:$0xff] %v547
  %561 = vst [vmem:[%s6 + $0x38] sm:$0xff] %v548
  %562 = vst [vmem:[%s6 + $0x40] sm:$0xff] %v549
  %563 = vst [vmem:[%s6 + $0x48] sm:$0xff] %v550
  %564 = vst [vmem:[%s6 + $0x50] sm:$0xff] %v551
  %565 = vst.msk [vmem:[%s6 + $0x58] sm:$0xff] %vm558, %v552
  %v566 = vld [vmem:[%s3] sm:$0xff]
  %v567 = vld [vmem:[%s3 + $0x8] sm:$0xff]
  %v568 = vld [vmem:[%s3 + $0x10] sm:$0xff]
  %v569 = vld [vmem:[%s3 + $0x18] sm:$0xff]
  %v570 = vld [vmem:[%s3 + $0x20] sm:$0xff]
  %v571 = vld [vmem:[%s3 + $0x28] sm:$0xff]
  %v572 = vld [vmem:[%s3 + $0x30] sm:$0xff]
  %v573 = vld [vmem:[%s3 + $0x38] sm:$0xff]
  %v574 = vld [vmem:[%s3 + $0x40] sm:$0xff]
  %v575 = vld [vmem:[%s3 + $0x48] sm:$0xff]
  %v576 = vld [vmem:[%s3 + $0x50] sm:$0xff]
  %v577 = vld [vmem:[%s3 + $0x58] sm:$0xff]
  %v578 = vld [vmem:[%s3 + $0x60] sm:$0xff]
  %v579 = vld [vmem:[%s3 + $0x68] sm:$0xff]
  %v580 = vld [vmem:[%s3 + $0x70] sm:$0xff]
  %v581 = vld [vmem:[%s3 + $0x78] sm:$0xff]
  %v582 = vld [vmem:[%s3 + $0x80] sm:$0xff]
  %v583 = vld [vmem:[%s3 + $0x88] sm:$0xff]
  %v584 = vld [vmem:[%s3 + $0x90] sm:$0xff]
  %v585 = vld [vmem:[%s3 + $0x98] sm:$0xff]
  %v586 = vld [vmem:[%s3 + $0xa0] sm:$0xff]
  %v587 = vld [vmem:[%s3 + $0xa8] sm:$0xff]
  %v588 = vld [vmem:[%s3 + $0xb0] sm:$0xff]
  %v589 = vld [vmem:[%s3 + $0xb8] sm:$0xff]
  %v590 = vld [vmem:[%s3 + $0xc0] sm:$0xff]
  %v591 = vld [vmem:[%s3 + $0xc8] sm:$0xff]
  %v592 = vld [vmem:[%s3 + $0xd0] sm:$0xff]
  %v593 = vld [vmem:[%s3 + $0xd8] sm:$0xff]
  %v594 = vld [vmem:[%s3 + $0xe0] sm:$0xff]
  %v595 = vld [vmem:[%s3 + $0xe8] sm:$0xff]
  %v596 = vld [vmem:[%s3 + $0xf0] sm:$0xff]
  %v597 = vld [vmem:[%s3 + $0xf8] sm:$0xff]
  %v598 = vld [vmem:[%s3 + $0x100] sm:$0xff]
  %v599 = vld [vmem:[%s3 + $0x108] sm:$0xff]
  %v600 = vld [vmem:[%s3 + $0x110] sm:$0xff]
  %v601 = vld [vmem:[%s3 + $0x118] sm:$0xff]
  %v602 = vld [vmem:[%s3 + $0x120] sm:$0xff]
  %v603 = vld [vmem:[%s3 + $0x128] sm:$0xff]
  %v604 = vld [vmem:[%s3 + $0x130] sm:$0xff]
  %v605 = vld [vmem:[%s3 + $0x138] sm:$0xff]
  %v606 = vld [vmem:[%s3 + $0x140] sm:$0xff]
  %v607 = vld [vmem:[%s3 + $0x148] sm:$0xff]
  %v608 = vld [vmem:[%s3 + $0x150] sm:$0xff]
  %v609 = vld [vmem:[%s3 + $0x158] sm:$0xff]
  %v610 = vld [vmem:[%s3 + $0x160] sm:$0xff]
  %v611 = vld [vmem:[%s3 + $0x168] sm:$0xff]
  %v612 = vld [vmem:[%s3 + $0x170] sm:$0xff]
  %v613 = vld [vmem:[%s3 + $0x178] sm:$0xff]
  %v614 = vld [vmem:[%s3 + $0x180] sm:$0xff]
  %v615 = vld [vmem:[%s3 + $0x188] sm:$0xff]
  %v616 = vld [vmem:[%s3 + $0x190] sm:$0xff]
  %v617 = vld [vmem:[%s3 + $0x198] sm:$0xff]
  %v618 = vld [vmem:[%s3 + $0x1a0] sm:$0xff]
  %v619 = vld [vmem:[%s3 + $0x1a8] sm:$0xff]
  %v620 = vld [vmem:[%s3 + $0x1b0] sm:$0xff]
  %v621 = vld [vmem:[%s3 + $0x1b8] sm:$0xff]
  %v622 = vld [vmem:[%s3 + $0x1c0] sm:$0xff]
  %v623 = vld [vmem:[%s3 + $0x1c8] sm:$0xff]
  %v624 = vld [vmem:[%s3 + $0x1d0] sm:$0xff]
  %v625 = vld [vmem:[%s3 + $0x1d8] sm:$0xff]
  %v626 = vld [vmem:[%s3 + $0x1e0] sm:$0xff]
  %v627 = vld [vmem:[%s3 + $0x1e8] sm:$0xff]
  %v628 = vld [vmem:[%s3 + $0x1f0] sm:$0xff]
  %v629 = vld [vmem:[%s3 + $0x1f8] sm:$0xff]
  %v630 = vld [vmem:[%s3 + $0x200] sm:$0xff]
  %v631 = vld [vmem:[%s3 + $0x208] sm:$0xff]
  %v632 = vld [vmem:[%s3 + $0x210] sm:$0xff]
  %v633 = vld [vmem:[%s3 + $0x218] sm:$0xff]
  %v634 = vld [vmem:[%s3 + $0x220] sm:$0xff]
  %v635 = vld [vmem:[%s3 + $0x228] sm:$0xff]
  %v636 = vld [vmem:[%s3 + $0x230] sm:$0xff]
  %v637 = vld [vmem:[%s3 + $0x238] sm:$0xff]
  %v638 = vld [vmem:[%s3 + $0x240] sm:$0xff]
  %v639 = vld [vmem:[%s3 + $0x248] sm:$0xff]
  %v640 = vld [vmem:[%s3 + $0x250] sm:$0xff]
  %v641 = vld [vmem:[%s3 + $0x258] sm:$0xff]
  %v642 = vld [vmem:[%s3 + $0x260] sm:$0xff]
  %v643 = vld [vmem:[%s3 + $0x268] sm:$0xff]
  %v644 = vld [vmem:[%s3 + $0x270] sm:$0xff]
  %v645 = vld [vmem:[%s3 + $0x278] sm:$0xff]
  %v646 = vld [vmem:[%s3 + $0x280] sm:$0xff]
  %v647 = vld [vmem:[%s3 + $0x288] sm:$0xff]
  %v648 = vld [vmem:[%s3 + $0x290] sm:$0xff]
  %v649 = vld [vmem:[%s3 + $0x298] sm:$0xff]
  %v650 = vld [vmem:[%s3 + $0x2a0] sm:$0xff]
  %v651 = vld [vmem:[%s3 + $0x2a8] sm:$0xff]
  %v652 = vld [vmem:[%s3 + $0x2b0] sm:$0xff]
  %v653 = vld [vmem:[%s3 + $0x2b8] sm:$0xff]
  %v654 = vld [vmem:[%s3 + $0x2c0] sm:$0xff]
  %v655 = vld [vmem:[%s3 + $0x2c8] sm:$0xff]
  %v656 = vld [vmem:[%s3 + $0x2d0] sm:$0xff]
  %v657 = vld [vmem:[%s3 + $0x2d8] sm:$0xff]
  %v658 = vld [vmem:[%s3 + $0x2e0] sm:$0xff]
  %v659 = vld [vmem:[%s3 + $0x2e8] sm:$0xff]
  %v660 = vld [vmem:[%s3 + $0x2f0] sm:$0xff]
  %v661 = vld [vmem:[%s3 + $0x2f8] sm:$0xff]
  %v662 = vld [vmem:[%s3 + $0x300] sm:$0xff]
  %v663 = vld [vmem:[%s3 + $0x308] sm:$0xff]
  %v664 = vld [vmem:[%s3 + $0x310] sm:$0xff]
  %v665 = vld [vmem:[%s3 + $0x318] sm:$0xff]
  %v666 = vld [vmem:[%s3 + $0x320] sm:$0xff]
  %v667 = vld [vmem:[%s3 + $0x328] sm:$0xff]
  %v668 = vld [vmem:[%s3 + $0x330] sm:$0xff]
  %v669 = vld [vmem:[%s3 + $0x338] sm:$0xff]
  %v670 = vld [vmem:[%s3 + $0x340] sm:$0xff]
  %v671 = vld [vmem:[%s3 + $0x348] sm:$0xff]
  %v672 = vld [vmem:[%s3 + $0x350] sm:$0xff]
  %v673 = vld [vmem:[%s3 + $0x358] sm:$0xff]
  %v674 = vld [vmem:[%s3 + $0x360] sm:$0xff]
  %v675 = vld [vmem:[%s3 + $0x368] sm:$0xff]
  %v676 = vld [vmem:[%s3 + $0x370] sm:$0xff]
  %v677 = vld [vmem:[%s3 + $0x378] sm:$0xff]
  %v678 = vld [vmem:[%s3 + $0x380] sm:$0xff]
  %v679 = vld [vmem:[%s3 + $0x388] sm:$0xff]
  %v680 = vld [vmem:[%s3 + $0x390] sm:$0xff]
  %v681 = vld [vmem:[%s3 + $0x398] sm:$0xff]
  %v682 = vld [vmem:[%s3 + $0x3a0] sm:$0xff]
  %v683 = vld [vmem:[%s3 + $0x3a8] sm:$0xff]
  %v684 = vld [vmem:[%s3 + $0x3b0] sm:$0xff]
  %v685 = vld [vmem:[%s3 + $0x3b8] sm:$0xff]
  %v686 = vld [vmem:[%s3 + $0x3c0] sm:$0xff]
  %v687 = vld [vmem:[%s3 + $0x3c8] sm:$0xff]
  %v688 = vld [vmem:[%s3 + $0x3d0] sm:$0xff]
  %v689 = vld [vmem:[%s3 + $0x3d8] sm:$0xff]
  %v690 = vld [vmem:[%s3 + $0x3e0] sm:$0xff]
  %v691 = vld [vmem:[%s3 + $0x3e8] sm:$0xff]
  %v692 = vld [vmem:[%s3 + $0x3f0] sm:$0xff]
  %v693 = vld [vmem:[%s3 + $0x3f8] sm:$0xff]
  %v694 = vld [vmem:[%s3 + $0x400] sm:$0xff]
  %v695 = vld [vmem:[%s3 + $0x408] sm:$0xff]
  %v696 = vld [vmem:[%s3 + $0x410] sm:$0xff]
  %v697 = vld [vmem:[%s3 + $0x418] sm:$0xff]
  %v698 = vld [vmem:[%s3 + $0x420] sm:$0xff]
  %v699 = vld [vmem:[%s3 + $0x428] sm:$0xff]
  %v700 = vld [vmem:[%s3 + $0x430] sm:$0xff]
  %v701 = vld [vmem:[%s3 + $0x438] sm:$0xff]
  %v702 = vld [vmem:[%s3 + $0x440] sm:$0xff]
  %v703 = vld [vmem:[%s3 + $0x448] sm:$0xff]
  %v704 = vld [vmem:[%s3 + $0x450] sm:$0xff]
  %v705 = vld [vmem:[%s3 + $0x458] sm:$0xff]
  %v706 = vld [vmem:[%s3 + $0x460] sm:$0xff]
  %v707 = vld [vmem:[%s3 + $0x468] sm:$0xff]
  %v708 = vld [vmem:[%s3 + $0x470] sm:$0xff]
  %v709 = vld [vmem:[%s3 + $0x478] sm:$0xff]
  %v710 = vld [vmem:[%s3 + $0x480] sm:$0xff]
  %v711 = vld [vmem:[%s3 + $0x488] sm:$0xff]
  %v712 = vld [vmem:[%s3 + $0x490] sm:$0xff]
  %v713 = vld [vmem:[%s3 + $0x498] sm:$0xff]
  %v714 = vld [vmem:[%s3 + $0x4a0] sm:$0xff]
  %v715 = vld [vmem:[%s3 + $0x4a8] sm:$0xff]
  %v716 = vld [vmem:[%s3 + $0x4b0] sm:$0xff]
  %v717 = vld [vmem:[%s3 + $0x4b8] sm:$0xff]
  %v718 = vld [vmem:[%s3 + $0x4c0] sm:$0xff]
  %v719 = vld [vmem:[%s3 + $0x4c8] sm:$0xff]
  %v720 = vld [vmem:[%s3 + $0x4d0] sm:$0xff]
  %v721 = vld [vmem:[%s3 + $0x4d8] sm:$0xff]
  %v722 = vld [vmem:[%s3 + $0x4e0] sm:$0xff]
  %v723 = vld [vmem:[%s3 + $0x4e8] sm:$0xff]
  %v724 = vld [vmem:[%s3 + $0x4f0] sm:$0xff]
  %v725 = vld [vmem:[%s3 + $0x4f8] sm:$0xff]
  %v726 = vld [vmem:[%s3 + $0x500] sm:$0xff]
  %v727 = vld [vmem:[%s3 + $0x508] sm:$0xff]
  %v728 = vld [vmem:[%s3 + $0x510] sm:$0xff]
  %v729 = vld [vmem:[%s3 + $0x518] sm:$0xff]
  %v730 = vld [vmem:[%s3 + $0x520] sm:$0xff]
  %v731 = vld [vmem:[%s3 + $0x528] sm:$0xff]
  %v732 = vld [vmem:[%s3 + $0x530] sm:$0xff]
  %v733 = vld [vmem:[%s3 + $0x538] sm:$0xff]
  %v734 = vld [vmem:[%s3 + $0x540] sm:$0xff]
  %v735 = vld [vmem:[%s3 + $0x548] sm:$0xff]
  %v736 = vld [vmem:[%s3 + $0x550] sm:$0xff]
  %v737 = vld [vmem:[%s3 + $0x558] sm:$0xff]
  %v738 = vld [vmem:[%s3 + $0x560] sm:$0xff]
  %v739 = vld [vmem:[%s3 + $0x568] sm:$0xff]
  %v740 = vld [vmem:[%s3 + $0x570] sm:$0xff]
  %v741 = vld [vmem:[%s3 + $0x578] sm:$0xff]
  %v742 = vld [vmem:[%s3 + $0x580] sm:$0xff]
  %v743 = vld [vmem:[%s3 + $0x588] sm:$0xff]
  %v744 = vld [vmem:[%s3 + $0x590] sm:$0xff]
  %v745 = vld [vmem:[%s3 + $0x598] sm:$0xff]
  %v746 = vld [vmem:[%s3 + $0x5a0] sm:$0xff]
  %v747 = vld [vmem:[%s3 + $0x5a8] sm:$0xff]
  %v748 = vld [vmem:[%s3 + $0x5b0] sm:$0xff]
  %v749 = vld [vmem:[%s3 + $0x5b8] sm:$0xff]
  %v750 = vld [vmem:[%s3 + $0x5c0] sm:$0xff]
  %v751 = vld [vmem:[%s3 + $0x5c8] sm:$0xff]
  %v752 = vld [vmem:[%s3 + $0x5d0] sm:$0xff]
  %v753 = vld [vmem:[%s3 + $0x5d8] sm:$0xff]
  %v754 = vld [vmem:[%s3 + $0x5e0] sm:$0xff]
  %v755 = vld [vmem:[%s3 + $0x5e8] sm:$0xff]
  %v756 = vld [vmem:[%s3 + $0x5f0] sm:$0xff]
  %v757 = vld [vmem:[%s3 + $0x5f8] sm:$0xff]
  %v758 = vld [vmem:[%s3 + $0x600] sm:$0xff]
  %v759 = vld [vmem:[%s3 + $0x608] sm:$0xff]
  %v760 = vld [vmem:[%s3 + $0x610] sm:$0xff]
  %v761 = vld [vmem:[%s3 + $0x618] sm:$0xff]
  %v762 = vld [vmem:[%s3 + $0x620] sm:$0xff]
  %v763 = vld [vmem:[%s3 + $0x628] sm:$0xff]
  %v764 = vld [vmem:[%s3 + $0x630] sm:$0xff]
  %v765 = vld [vmem:[%s3 + $0x638] sm:$0xff]
  %v766 = vld [vmem:[%s3 + $0x640] sm:$0xff]
  %v767 = vld [vmem:[%s3 + $0x648] sm:$0xff]
  %v768 = vld [vmem:[%s3 + $0x650] sm:$0xff]
  %v769 = vld [vmem:[%s3 + $0x658] sm:$0xff]
  %v770 = vld [vmem:[%s3 + $0x660] sm:$0xff]
  %v771 = vld [vmem:[%s3 + $0x668] sm:$0xff]
  %v772 = vld [vmem:[%s3 + $0x670] sm:$0xff]
  %v773 = vld [vmem:[%s3 + $0x678] sm:$0xff]
  %v774 = vld [vmem:[%s4] sm:$0xff]
  %v775 = vld [vmem:[%s4 + $0x8] sm:$0xff]
  %v776 = vld [vmem:[%s4 + $0x10] sm:$0xff]
  %v777 = vld [vmem:[%s4 + $0x18] sm:$0xff]
  %v778 = vld [vmem:[%s4 + $0x20] sm:$0xff]
  %v779 = vld [vmem:[%s4 + $0x28] sm:$0xff]
  %v780 = vld [vmem:[%s4 + $0x30] sm:$0xff]
  %v781 = vld [vmem:[%s4 + $0x38] sm:$0xff]
  %v782 = vld [vmem:[%s4 + $0x40] sm:$0xff]
  %v783 = vld [vmem:[%s4 + $0x48] sm:$0xff]
  %v784 = vld [vmem:[%s4 + $0x50] sm:$0xff]
  %v785 = vld [vmem:[%s4 + $0x58] sm:$0xff]
  %v786 = vld [vmem:[%s4 + $0x60] sm:$0xff]
  %v787 = vld [vmem:[%s4 + $0x68] sm:$0xff]
  %v788 = vld [vmem:[%s4 + $0x70] sm:$0xff]
  %v789 = vld [vmem:[%s4 + $0x78] sm:$0xff]
  %v790 = vld [vmem:[%s4 + $0x80] sm:$0xff]
  %v791 = vld [vmem:[%s4 + $0x88] sm:$0xff]
  %v792 = vld [vmem:[%s4 + $0x90] sm:$0xff]
  %v793 = vld [vmem:[%s4 + $0x98] sm:$0xff]
  %v794 = vld [vmem:[%s4 + $0xa0] sm:$0xff]
  %v795 = vld [vmem:[%s4 + $0xa8] sm:$0xff]
  %v796 = vld [vmem:[%s4 + $0xb0] sm:$0xff]
  %v797 = vld [vmem:[%s4 + $0xb8] sm:$0xff]
  %v798 = vld [vmem:[%s4 + $0xc0] sm:$0xff]
  %v799 = vld [vmem:[%s4 + $0xc8] sm:$0xff]
  %v800 = vld [vmem:[%s4 + $0xd0] sm:$0xff]
  %v801 = vld [vmem:[%s4 + $0xd8] sm:$0xff]
  %v802 = vld [vmem:[%s4 + $0xe0] sm:$0xff]
  %v803 = vld [vmem:[%s4 + $0xe8] sm:$0xff]
  %v804 = vld [vmem:[%s4 + $0xf0] sm:$0xff]
  %v805 = vld [vmem:[%s4 + $0xf8] sm:$0xff]
  %v806 = vld [vmem:[%s4 + $0x100] sm:$0xff]
  %v807 = vld [vmem:[%s4 + $0x108] sm:$0xff]
  %v808 = vld [vmem:[%s4 + $0x110] sm:$0xff]
  %v809 = vld [vmem:[%s4 + $0x118] sm:$0xff]
  %v810 = vld [vmem:[%s4 + $0x120] sm:$0xff]
  %v811 = vld [vmem:[%s4 + $0x128] sm:$0xff]
  %v812 = vld [vmem:[%s4 + $0x130] sm:$0xff]
  %v813 = vld [vmem:[%s4 + $0x138] sm:$0xff]
  %v814 = vld [vmem:[%s4 + $0x140] sm:$0xff]
  %v815 = vld [vmem:[%s4 + $0x148] sm:$0xff]
  %v816 = vld [vmem:[%s4 + $0x150] sm:$0xff]
  %v817 = vld [vmem:[%s4 + $0x158] sm:$0xff]
  %v818 = vld [vmem:[%s4 + $0x160] sm:$0xff]
  %v819 = vld [vmem:[%s4 + $0x168] sm:$0xff]
  %v820 = vld [vmem:[%s4 + $0x170] sm:$0xff]
  %v821 = vld [vmem:[%s4 + $0x178] sm:$0xff]
  %v822 = vld [vmem:[%s4 + $0x180] sm:$0xff]
  %v823 = vld [vmem:[%s4 + $0x188] sm:$0xff]
  %v824 = vld [vmem:[%s4 + $0x190] sm:$0xff]
  %v825 = vld [vmem:[%s4 + $0x198] sm:$0xff]
  %v826 = vld [vmem:[%s4 + $0x1a0] sm:$0xff]
  %v827 = vld [vmem:[%s4 + $0x1a8] sm:$0xff]
  %v828 = vld [vmem:[%s4 + $0x1b0] sm:$0xff]
  %v829 = vld [vmem:[%s4 + $0x1b8] sm:$0xff]
  %v830 = vld [vmem:[%s4 + $0x1c0] sm:$0xff]
  %v831 = vld [vmem:[%s4 + $0x1c8] sm:$0xff]
  %v832 = vld [vmem:[%s4 + $0x1d0] sm:$0xff]
  %v833 = vld [vmem:[%s4 + $0x1d8] sm:$0xff]
  %v834 = vld [vmem:[%s4 + $0x1e0] sm:$0xff]
  %v835 = vld [vmem:[%s4 + $0x1e8] sm:$0xff]
  %v836 = vld [vmem:[%s4 + $0x1f0] sm:$0xff]
  %v837 = vld [vmem:[%s4 + $0x1f8] sm:$0xff]
  %v838 = vld [vmem:[%s4 + $0x200] sm:$0xff]
  %v839 = vld [vmem:[%s4 + $0x208] sm:$0xff]
  %v840 = vld [vmem:[%s4 + $0x210] sm:$0xff]
  %v841 = vld [vmem:[%s4 + $0x218] sm:$0xff]
  %v842 = vld [vmem:[%s4 + $0x220] sm:$0xff]
  %v843 = vld [vmem:[%s4 + $0x228] sm:$0xff]
  %v844 = vld [vmem:[%s4 + $0x230] sm:$0xff]
  %v845 = vld [vmem:[%s4 + $0x238] sm:$0xff]
  %v846 = vld [vmem:[%s4 + $0x240] sm:$0xff]
  %v847 = vld [vmem:[%s4 + $0x248] sm:$0xff]
  %v848 = vld [vmem:[%s4 + $0x250] sm:$0xff]
  %v849 = vld [vmem:[%s4 + $0x258] sm:$0xff]
  %v850 = vld [vmem:[%s4 + $0x260] sm:$0xff]
  %v851 = vld [vmem:[%s4 + $0x268] sm:$0xff]
  %v852 = vld [vmem:[%s4 + $0x270] sm:$0xff]
  %v853 = vld [vmem:[%s4 + $0x278] sm:$0xff]
  %v854 = vld [vmem:[%s4 + $0x280] sm:$0xff]
  %v855 = vld [vmem:[%s4 + $0x288] sm:$0xff]
  %v856 = vld [vmem:[%s4 + $0x290] sm:$0xff]
  %v857 = vld [vmem:[%s4 + $0x298] sm:$0xff]
  %v858 = vld [vmem:[%s4 + $0x2a0] sm:$0xff]
  %v859 = vld [vmem:[%s4 + $0x2a8] sm:$0xff]
  %v860 = vld [vmem:[%s4 + $0x2b0] sm:$0xff]
  %v861 = vld [vmem:[%s4 + $0x2b8] sm:$0xff]
  %v862 = vld [vmem:[%s4 + $0x2c0] sm:$0xff]
  %v863 = vld [vmem:[%s4 + $0x2c8] sm:$0xff]
  %v864 = vld [vmem:[%s4 + $0x2d0] sm:$0xff]
  %v865 = vld [vmem:[%s4 + $0x2d8] sm:$0xff]
  %v866 = vld [vmem:[%s4 + $0x2e0] sm:$0xff]
  %v867 = vld [vmem:[%s4 + $0x2e8] sm:$0xff]
  %v868 = vld [vmem:[%s4 + $0x2f0] sm:$0xff]
  %v869 = vld [vmem:[%s4 + $0x2f8] sm:$0xff]
  %v870 = vld [vmem:[%s4 + $0x300] sm:$0xff]
  %v871 = vld [vmem:[%s4 + $0x308] sm:$0xff]
  %v872 = vld [vmem:[%s4 + $0x310] sm:$0xff]
  %v873 = vld [vmem:[%s4 + $0x318] sm:$0xff]
  %v874 = vld [vmem:[%s4 + $0x320] sm:$0xff]
  %v875 = vld [vmem:[%s4 + $0x328] sm:$0xff]
  %v876 = vld [vmem:[%s4 + $0x330] sm:$0xff]
  %v877 = vld [vmem:[%s4 + $0x338] sm:$0xff]
  %v878 = vld [vmem:[%s4 + $0x340] sm:$0xff]
  %v879 = vld [vmem:[%s4 + $0x348] sm:$0xff]
  %v880 = vld [vmem:[%s4 + $0x350] sm:$0xff]
  %v881 = vld [vmem:[%s4 + $0x358] sm:$0xff]
  %v882 = vld [vmem:[%s4 + $0x360] sm:$0xff]
  %v883 = vld [vmem:[%s4 + $0x368] sm:$0xff]
  %v884 = vld [vmem:[%s4 + $0x370] sm:$0xff]
  %v885 = vld [vmem:[%s4 + $0x378] sm:$0xff]
  %v886 = vld [vmem:[%s4 + $0x380] sm:$0xff]
  %v887 = vld [vmem:[%s4 + $0x388] sm:$0xff]
  %v888 = vld [vmem:[%s4 + $0x390] sm:$0xff]
  %v889 = vld [vmem:[%s4 + $0x398] sm:$0xff]
  %v890 = vld [vmem:[%s4 + $0x3a0] sm:$0xff]
  %v891 = vld [vmem:[%s4 + $0x3a8] sm:$0xff]
  %v892 = vld [vmem:[%s4 + $0x3b0] sm:$0xff]
  %v893 = vld [vmem:[%s4 + $0x3b8] sm:$0xff]
  %v894 = vld [vmem:[%s4 + $0x3c0] sm:$0xff]
  %v895 = vld [vmem:[%s4 + $0x3c8] sm:$0xff]
  %v896 = vld [vmem:[%s4 + $0x3d0] sm:$0xff]
  %v897 = vld [vmem:[%s4 + $0x3d8] sm:$0xff]
  %v898 = vld [vmem:[%s4 + $0x3e0] sm:$0xff]
  %v899 = vld [vmem:[%s4 + $0x3e8] sm:$0xff]
  %v900 = vld [vmem:[%s4 + $0x3f0] sm:$0xff]
  %v901 = vld [vmem:[%s4 + $0x3f8] sm:$0xff]
  %v902 = vld [vmem:[%s4 + $0x400] sm:$0xff]
  %v903 = vld [vmem:[%s4 + $0x408] sm:$0xff]
  %v904 = vld [vmem:[%s4 + $0x410] sm:$0xff]
  %v905 = vld [vmem:[%s4 + $0x418] sm:$0xff]
  %v906 = vld [vmem:[%s4 + $0x420] sm:$0xff]
  %v907 = vld [vmem:[%s4 + $0x428] sm:$0xff]
  %v908 = vld [vmem:[%s4 + $0x430] sm:$0xff]
  %v909 = vld [vmem:[%s4 + $0x438] sm:$0xff]
  %v910 = vld [vmem:[%s4 + $0x440] sm:$0xff]
  %v911 = vld [vmem:[%s4 + $0x448] sm:$0xff]
  %v912 = vld [vmem:[%s4 + $0x450] sm:$0xff]
  %v913 = vld [vmem:[%s4 + $0x458] sm:$0xff]
  %v914 = vld [vmem:[%s4 + $0x460] sm:$0xff]
  %v915 = vld [vmem:[%s4 + $0x468] sm:$0xff]
  %v916 = vld [vmem:[%s4 + $0x470] sm:$0xff]
  %v917 = vld [vmem:[%s4 + $0x478] sm:$0xff]
  %v918 = vld [vmem:[%s4 + $0x480] sm:$0xff]
  %v919 = vld [vmem:[%s4 + $0x488] sm:$0xff]
  %v920 = vld [vmem:[%s4 + $0x490] sm:$0xff]
  %v921 = vld [vmem:[%s4 + $0x498] sm:$0xff]
  %v922 = vld [vmem:[%s4 + $0x4a0] sm:$0xff]
  %v923 = vld [vmem:[%s4 + $0x4a8] sm:$0xff]
  %v924 = vld [vmem:[%s4 + $0x4b0] sm:$0xff]
  %v925 = vld [vmem:[%s4 + $0x4b8] sm:$0xff]
  %v926 = vld [vmem:[%s4 + $0x4c0] sm:$0xff]
  %v927 = vld [vmem:[%s4 + $0x4c8] sm:$0xff]
  %v928 = vld [vmem:[%s4 + $0x4d0] sm:$0xff]
  %v929 = vld [vmem:[%s4 + $0x4d8] sm:$0xff]
  %v930 = vld [vmem:[%s4 + $0x4e0] sm:$0xff]
  %v931 = vld [vmem:[%s4 + $0x4e8] sm:$0xff]
  %v932 = vld [vmem:[%s4 + $0x4f0] sm:$0xff]
  %v933 = vld [vmem:[%s4 + $0x4f8] sm:$0xff]
  %v934 = vld [vmem:[%s4 + $0x500] sm:$0xff]
  %v935 = vld [vmem:[%s4 + $0x508] sm:$0xff]
  %v936 = vld [vmem:[%s4 + $0x510] sm:$0xff]
  %v937 = vld [vmem:[%s4 + $0x518] sm:$0xff]
  %v938 = vld [vmem:[%s4 + $0x520] sm:$0xff]
  %v939 = vld [vmem:[%s4 + $0x528] sm:$0xff]
  %v940 = vld [vmem:[%s4 + $0x530] sm:$0xff]
  %v941 = vld [vmem:[%s4 + $0x538] sm:$0xff]
  %v942 = vld [vmem:[%s4 + $0x540] sm:$0xff]
  %v943 = vld [vmem:[%s4 + $0x548] sm:$0xff]
  %v944 = vld [vmem:[%s4 + $0x550] sm:$0xff]
  %v945 = vld [vmem:[%s4 + $0x558] sm:$0xff]
  %v946 = vld [vmem:[%s4 + $0x560] sm:$0xff]
  %v947 = vld [vmem:[%s4 + $0x568] sm:$0xff]
  %v948 = vld [vmem:[%s4 + $0x570] sm:$0xff]
  %v949 = vld [vmem:[%s4 + $0x578] sm:$0xff]
  %v950 = vld [vmem:[%s4 + $0x580] sm:$0xff]
  %v951 = vld [vmem:[%s4 + $0x588] sm:$0xff]
  %v952 = vld [vmem:[%s4 + $0x590] sm:$0xff]
  %v953 = vld [vmem:[%s4 + $0x598] sm:$0xff]
  %v954 = vld [vmem:[%s4 + $0x5a0] sm:$0xff]
  %v955 = vld [vmem:[%s4 + $0x5a8] sm:$0xff]
  %v956 = vld [vmem:[%s4 + $0x5b0] sm:$0xff]
  %v957 = vld [vmem:[%s4 + $0x5b8] sm:$0xff]
  %v958 = vld [vmem:[%s4 + $0x5c0] sm:$0xff]
  %v959 = vld [vmem:[%s4 + $0x5c8] sm:$0xff]
  %v960 = vld [vmem:[%s4 + $0x5d0] sm:$0xff]
  %v961 = vld [vmem:[%s4 + $0x5d8] sm:$0xff]
  %v962 = vld [vmem:[%s4 + $0x5e0] sm:$0xff]
  %v963 = vld [vmem:[%s4 + $0x5e8] sm:$0xff]
  %v964 = vld [vmem:[%s4 + $0x5f0] sm:$0xff]
  %v965 = vld [vmem:[%s4 + $0x5f8] sm:$0xff]
  %v966 = vld [vmem:[%s4 + $0x600] sm:$0xff]
  %v967 = vld [vmem:[%s4 + $0x608] sm:$0xff]
  %v968 = vld [vmem:[%s4 + $0x610] sm:$0xff]
  %v969 = vld [vmem:[%s4 + $0x618] sm:$0xff]
  %v970 = vld [vmem:[%s4 + $0x620] sm:$0xff]
  %v971 = vld [vmem:[%s4 + $0x628] sm:$0xff]
  %v972 = vld [vmem:[%s4 + $0x630] sm:$0xff]
  %v973 = vld [vmem:[%s4 + $0x638] sm:$0xff]
  %v974 = vld [vmem:[%s4 + $0x640] sm:$0xff]
  %v975 = vld [vmem:[%s4 + $0x648] sm:$0xff]
  %v976 = vld [vmem:[%s4 + $0x650] sm:$0xff]
  %v977 = vld [vmem:[%s4 + $0x658] sm:$0xff]
  %v978 = vld [vmem:[%s4 + $0x660] sm:$0xff]
  %v979 = vld [vmem:[%s4 + $0x668] sm:$0xff]
  %v980 = vld [vmem:[%s4 + $0x670] sm:$0xff]
  %v981 = vld [vmem:[%s4 + $0x678] sm:$0xff]
  %v982 = vld [vmem:[%s4 + $0x680] sm:$0xff]
  %v983 = vld [vmem:[%s4 + $0x688] sm:$0xff]
  %v984 = vld [vmem:[%s4 + $0x690] sm:$0xff]
  %v985 = vld [vmem:[%s4 + $0x698] sm:$0xff]
  %v986 = vld [vmem:[%s4 + $0x6a0] sm:$0xff]
  %v987 = vld [vmem:[%s4 + $0x6a8] sm:$0xff]
  %v988 = vld [vmem:[%s4 + $0x6b0] sm:$0xff]
  %v989 = vld [vmem:[%s4 + $0x6b8] sm:$0xff]
  %v990 = vld [vmem:[%s4 + $0x6c0] sm:$0xff]
  %v991 = vld [vmem:[%s4 + $0x6c8] sm:$0xff]
  %v992 = vld [vmem:[%s4 + $0x6d0] sm:$0xff]
  %v993 = vld [vmem:[%s4 + $0x6d8] sm:$0xff]
  %v994 = vld [vmem:[%s4 + $0x6e0] sm:$0xff]
  %v995 = vld [vmem:[%s4 + $0x6e8] sm:$0xff]
  %v996 = vld [vmem:[%s4 + $0x6f0] sm:$0xff]
  %v997 = vld [vmem:[%s4 + $0x6f8] sm:$0xff]
  %v998 = vld [vmem:[%s4 + $0x700] sm:$0xff]
  %v999 = vld [vmem:[%s4 + $0x708] sm:$0xff]
  %v1000 = vld [vmem:[%s4 + $0x710] sm:$0xff]
  %v1001 = vld [vmem:[%s4 + $0x718] sm:$0xff]
  %v1002 = vld [vmem:[%s4 + $0x720] sm:$0xff]
  %v1003 = vld [vmem:[%s4 + $0x728] sm:$0xff]
  %v1004 = vld [vmem:[%s4 + $0x730] sm:$0xff]
  %v1005 = vld [vmem:[%s4 + $0x738] sm:$0xff]
  %v1006 = vld [vmem:[%s4 + $0x740] sm:$0xff]
  %v1007 = vld [vmem:[%s4 + $0x748] sm:$0xff]
  %v1008 = vld [vmem:[%s4 + $0x750] sm:$0xff]
  %v1009 = vld [vmem:[%s4 + $0x758] sm:$0xff]
  %v1010 = vld [vmem:[%s4 + $0x760] sm:$0xff]
  %v1011 = vld [vmem:[%s4 + $0x768] sm:$0xff]
  %v1012 = vld [vmem:[%s4 + $0x770] sm:$0xff]
  %v1013 = vld [vmem:[%s4 + $0x778] sm:$0xff]
  %v1014 = vld [vmem:[%s4 + $0x780] sm:$0xff]
  %v1015 = vld [vmem:[%s4 + $0x788] sm:$0xff]
  %v1016 = vld [vmem:[%s4 + $0x790] sm:$0xff]
  %v1017 = vld [vmem:[%s4 + $0x798] sm:$0xff]
  %v1018 = vld [vmem:[%s4 + $0x7a0] sm:$0xff]
  %v1019 = vld [vmem:[%s4 + $0x7a8] sm:$0xff]
  %v1020 = vld [vmem:[%s4 + $0x7b0] sm:$0xff]
  %v1021 = vld [vmem:[%s4 + $0x7b8] sm:$0xff]
  %v1022 = vld [vmem:[%s4 + $0x7c0] sm:$0xff]
  %v1023 = vld [vmem:[%s4 + $0x7c8] sm:$0xff]
  %v1024 = vld [vmem:[%s4 + $0x7d0] sm:$0xff]
  %v1025 = vld [vmem:[%s4 + $0x7d8] sm:$0xff]
  %v1026 = vld [vmem:[%s4 + $0x7e0] sm:$0xff]
  %v1027 = vld [vmem:[%s4 + $0x7e8] sm:$0xff]
  %v1028 = vld [vmem:[%s4 + $0x7f0] sm:$0xff]
  %v1029 = vld [vmem:[%s4 + $0x7f8] sm:$0xff]
  %v1030 = vld [vmem:[%s4 + $0x800] sm:$0xff]
  %v1031 = vld [vmem:[%s4 + $0x808] sm:$0xff]
  %v1032 = vld [vmem:[%s4 + $0x810] sm:$0xff]
  %v1033 = vld [vmem:[%s4 + $0x818] sm:$0xff]
  %v1034 = vld [vmem:[%s4 + $0x820] sm:$0xff]
  %v1035 = vld [vmem:[%s4 + $0x828] sm:$0xff]
  %v1036 = vld [vmem:[%s4 + $0x830] sm:$0xff]
  %v1037 = vld [vmem:[%s4 + $0x838] sm:$0xff]
  %v1038 = vld [vmem:[%s4 + $0x840] sm:$0xff]
  %v1039 = vld [vmem:[%s4 + $0x848] sm:$0xff]
  %v1040 = vld [vmem:[%s4 + $0x850] sm:$0xff]
  %v1041 = vld [vmem:[%s4 + $0x858] sm:$0xff]
  %v1042 = vld [vmem:[%s4 + $0x860] sm:$0xff]
  %v1043 = vld [vmem:[%s4 + $0x868] sm:$0xff]
  %v1044 = vld [vmem:[%s4 + $0x870] sm:$0xff]
  %v1045 = vld [vmem:[%s4 + $0x878] sm:$0xff]
  %v1046 = vld [vmem:[%s4 + $0x880] sm:$0xff]
  %v1047 = vld [vmem:[%s4 + $0x888] sm:$0xff]
  %v1048 = vld [vmem:[%s4 + $0x890] sm:$0xff]
  %v1049 = vld [vmem:[%s4 + $0x898] sm:$0xff]
  %v1050 = vld [vmem:[%s4 + $0x8a0] sm:$0xff]
  %v1051 = vld [vmem:[%s4 + $0x8a8] sm:$0xff]
  %v1052 = vld [vmem:[%s4 + $0x8b0] sm:$0xff]
  %v1053 = vld [vmem:[%s4 + $0x8b8] sm:$0xff]
  %v1054 = vld [vmem:[%s4 + $0x8c0] sm:$0xff]
  %v1055 = vld [vmem:[%s4 + $0x8c8] sm:$0xff]
  %v1056 = vld [vmem:[%s4 + $0x8d0] sm:$0xff]
  %v1057 = vld [vmem:[%s4 + $0x8d8] sm:$0xff]
  %v1058 = vld [vmem:[%s4 + $0x8e0] sm:$0xff]
  %v1059 = vld [vmem:[%s4 + $0x8e8] sm:$0xff]
  %v1060 = vld [vmem:[%s4 + $0x8f0] sm:$0xff]
  %v1061 = vld [vmem:[%s4 + $0x8f8] sm:$0xff]
  %v1062 = vld [vmem:[%s4 + $0x900] sm:$0xff]
  %v1063 = vld [vmem:[%s4 + $0x908] sm:$0xff]
  %v1064 = vld [vmem:[%s4 + $0x910] sm:$0xff]
  %v1065 = vld [vmem:[%s4 + $0x918] sm:$0xff]
  %v1066 = vld [vmem:[%s4 + $0x920] sm:$0xff]
  %v1067 = vld [vmem:[%s4 + $0x928] sm:$0xff]
  %v1068 = vld [vmem:[%s4 + $0x930] sm:$0xff]
  %v1069 = vld [vmem:[%s4 + $0x938] sm:$0xff]
  %v1070 = vld [vmem:[%s4 + $0x940] sm:$0xff]
  %v1071 = vld [vmem:[%s4 + $0x948] sm:$0xff]
  %v1072 = vld [vmem:[%s4 + $0x950] sm:$0xff]
  %v1073 = vld [vmem:[%s4 + $0x958] sm:$0xff]
  %v1074 = vld [vmem:[%s4 + $0x960] sm:$0xff]
  %v1075 = vld [vmem:[%s4 + $0x968] sm:$0xff]
  %v1076 = vld [vmem:[%s4 + $0x970] sm:$0xff]
  %v1077 = vld [vmem:[%s4 + $0x978] sm:$0xff]
  %v1078 = vld [vmem:[%s4 + $0x980] sm:$0xff]
  %v1079 = vld [vmem:[%s4 + $0x988] sm:$0xff]
  %v1080 = vld [vmem:[%s4 + $0x990] sm:$0xff]
  %v1081 = vld [vmem:[%s4 + $0x998] sm:$0xff]
  %v1082 = vld [vmem:[%s4 + $0x9a0] sm:$0xff]
  %v1083 = vld [vmem:[%s4 + $0x9a8] sm:$0xff]
  %v1084 = vld [vmem:[%s4 + $0x9b0] sm:$0xff]
  %v1085 = vld [vmem:[%s4 + $0x9b8] sm:$0xff]
  %v1086 = vld [vmem:[%s4 + $0x9c0] sm:$0xff]
  %v1087 = vld [vmem:[%s4 + $0x9c8] sm:$0xff]
  %v1088 = vld [vmem:[%s4 + $0x9d0] sm:$0xff]
  %v1089 = vld [vmem:[%s4 + $0x9d8] sm:$0xff]
  %v1090 = vld [vmem:[%s4 + $0x9e0] sm:$0xff]
  %v1091 = vld [vmem:[%s4 + $0x9e8] sm:$0xff]
  %v1092 = vld [vmem:[%s4 + $0x9f0] sm:$0xff]
  %v1093 = vld [vmem:[%s4 + $0x9f8] sm:$0xff]
  %v1094 = vld [vmem:[%s4 + $0xa00] sm:$0xff]
  %v1095 = vld [vmem:[%s4 + $0xa08] sm:$0xff]
  %v1096 = vld [vmem:[%s4 + $0xa10] sm:$0xff]
  %v1097 = vld [vmem:[%s4 + $0xa18] sm:$0xff]
  %v1098 = vld [vmem:[%s4 + $0xa20] sm:$0xff]
  %v1099 = vld [vmem:[%s4 + $0xa28] sm:$0xff]
  %v1100 = vld [vmem:[%s4 + $0xa30] sm:$0xff]
  %v1101 = vld [vmem:[%s4 + $0xa38] sm:$0xff]
  %v1102 = vld [vmem:[%s4 + $0xa40] sm:$0xff]
  %v1103 = vld [vmem:[%s4 + $0xa48] sm:$0xff]
  %v1104 = vld [vmem:[%s4 + $0xa50] sm:$0xff]
  %v1105 = vld [vmem:[%s4 + $0xa58] sm:$0xff]
  %v1106 = vld [vmem:[%s4 + $0xa60] sm:$0xff]
  %v1107 = vld [vmem:[%s4 + $0xa68] sm:$0xff]
  %v1108 = vld [vmem:[%s4 + $0xa70] sm:$0xff]
  %v1109 = vld [vmem:[%s4 + $0xa78] sm:$0xff]
  %v1110 = vld [vmem:[%s4 + $0xa80] sm:$0xff]
  %v1111 = vld [vmem:[%s4 + $0xa88] sm:$0xff]
  %v1112 = vld [vmem:[%s4 + $0xa90] sm:$0xff]
  %v1113 = vld [vmem:[%s4 + $0xa98] sm:$0xff]
  %v1114 = vld [vmem:[%s4 + $0xaa0] sm:$0xff]
  %v1115 = vld [vmem:[%s4 + $0xaa8] sm:$0xff]
  %v1116 = vld [vmem:[%s4 + $0xab0] sm:$0xff]
  %v1117 = vld [vmem:[%s4 + $0xab8] sm:$0xff]
  %v1118 = vld [vmem:[%s4 + $0xac0] sm:$0xff]
  %v1119 = vld [vmem:[%s4 + $0xac8] sm:$0xff]
  %v1120 = vld [vmem:[%s4 + $0xad0] sm:$0xff]
  %v1121 = vld [vmem:[%s4 + $0xad8] sm:$0xff]
  %v1122 = vld [vmem:[%s4 + $0xae0] sm:$0xff]
  %v1123 = vld [vmem:[%s4 + $0xae8] sm:$0xff]
  %v1124 = vld [vmem:[%s4 + $0xaf0] sm:$0xff]
  %v1125 = vld [vmem:[%s4 + $0xaf8] sm:$0xff]
  %v1126 = vld [vmem:[%s4 + $0xb00] sm:$0xff]
  %v1127 = vld [vmem:[%s4 + $0xb08] sm:$0xff]
  %v1128 = vld [vmem:[%s4 + $0xb10] sm:$0xff]
  %v1129 = vld [vmem:[%s4 + $0xb18] sm:$0xff]
  %v1130 = vld [vmem:[%s4 + $0xb20] sm:$0xff]
  %v1131 = vld [vmem:[%s4 + $0xb28] sm:$0xff]
  %v1132 = vld [vmem:[%s4 + $0xb30] sm:$0xff]
  %v1133 = vld [vmem:[%s4 + $0xb38] sm:$0xff]
  %v1134 = vld [vmem:[%s4 + $0xb40] sm:$0xff]
  %v1135 = vld [vmem:[%s4 + $0xb48] sm:$0xff]
  %v1136 = vld [vmem:[%s4 + $0xb50] sm:$0xff]
  %v1137 = vld [vmem:[%s4 + $0xb58] sm:$0xff]
  %v1138 = vld [vmem:[%s4 + $0xb60] sm:$0xff]
  %v1139 = vld [vmem:[%s4 + $0xb68] sm:$0xff]
  %v1140 = vld [vmem:[%s4 + $0xb70] sm:$0xff]
  %v1141 = vld [vmem:[%s4 + $0xb78] sm:$0xff]
  %v1142 = vld [vmem:[%s4 + $0xb80] sm:$0xff]
  %v1143 = vld [vmem:[%s4 + $0xb88] sm:$0xff]
  %v1144 = vld [vmem:[%s4 + $0xb90] sm:$0xff]
  %v1145 = vld [vmem:[%s4 + $0xb98] sm:$0xff]
  %v1146 = vld [vmem:[%s4 + $0xba0] sm:$0xff]
  %v1147 = vld [vmem:[%s4 + $0xba8] sm:$0xff]
  %v1148 = vld [vmem:[%s4 + $0xbb0] sm:$0xff]
  %v1149 = vld [vmem:[%s4 + $0xbb8] sm:$0xff]
  %v1150 = vld [vmem:[%s4 + $0xbc0] sm:$0xff]
  %v1151 = vld [vmem:[%s4 + $0xbc8] sm:$0xff]
  %v1152 = vld [vmem:[%s4 + $0xbd0] sm:$0xff]
  %v1153 = vld [vmem:[%s4 + $0xbd8] sm:$0xff]
  %v1154 = vld [vmem:[%s4 + $0xbe0] sm:$0xff]
  %v1155 = vld [vmem:[%s4 + $0xbe8] sm:$0xff]
  %v1156 = vld [vmem:[%s4 + $0xbf0] sm:$0xff]
  %v1157 = vld [vmem:[%s4 + $0xbf8] sm:$0xff]
  %v1158 = vld [vmem:[%s4 + $0xc00] sm:$0xff]
  %v1159 = vld [vmem:[%s4 + $0xc08] sm:$0xff]
  %v1160 = vld [vmem:[%s4 + $0xc10] sm:$0xff]
  %v1161 = vld [vmem:[%s4 + $0xc18] sm:$0xff]
  %v1162 = vld [vmem:[%s4 + $0xc20] sm:$0xff]
  %v1163 = vld [vmem:[%s4 + $0xc28] sm:$0xff]
  %v1164 = vld [vmem:[%s4 + $0xc30] sm:$0xff]
  %v1165 = vld [vmem:[%s4 + $0xc38] sm:$0xff]
  %v1166 = vld [vmem:[%s4 + $0xc40] sm:$0xff]
  %v1167 = vld [vmem:[%s4 + $0xc48] sm:$0xff]
  %v1168 = vld [vmem:[%s4 + $0xc50] sm:$0xff]
  %v1169 = vld [vmem:[%s4 + $0xc58] sm:$0xff]
  %v1170 = vld [vmem:[%s4 + $0xc60] sm:$0xff]
  %v1171 = vld [vmem:[%s4 + $0xc68] sm:$0xff]
  %v1172 = vld [vmem:[%s4 + $0xc70] sm:$0xff]
  %v1173 = vld [vmem:[%s4 + $0xc78] sm:$0xff]
  %v1174 = vld [vmem:[%s4 + $0xc80] sm:$0xff]
  %v1175 = vld [vmem:[%s4 + $0xc88] sm:$0xff]
  %v1176 = vld [vmem:[%s4 + $0xc90] sm:$0xff]
  %v1177 = vld [vmem:[%s4 + $0xc98] sm:$0xff]
  %v1178 = vld [vmem:[%s4 + $0xca0] sm:$0xff]
  %v1179 = vld [vmem:[%s4 + $0xca8] sm:$0xff]
  %v1180 = vld [vmem:[%s4 + $0xcb0] sm:$0xff]
  %v1181 = vld [vmem:[%s4 + $0xcb8] sm:$0xff]
  %v1182 = vld [vmem:[%s4 + $0xcc0] sm:$0xff]
  %v1183 = vld [vmem:[%s4 + $0xcc8] sm:$0xff]
  %v1184 = vld [vmem:[%s4 + $0xcd0] sm:$0xff]
  %v1185 = vld [vmem:[%s4 + $0xcd8] sm:$0xff]
  %v1186 = vld [vmem:[%s4 + $0xce0] sm:$0xff]
  %v1187 = vld [vmem:[%s4 + $0xce8] sm:$0xff]
  %v1188 = vld [vmem:[%s4 + $0xcf0] sm:$0xff]
  %v1189 = vld [vmem:[%s4 + $0xcf8] sm:$0xff]
  %1190 = vmatpush.msra.mxu0 %v789
  %1191 = vmatpush.msra.mxu0 %v788
  %1192 = vmatpush.msra.mxu0 %v787
  %1193 = vmatpush.msra.mxu0 %v786
  %1194 = vmatpush.msra.mxu0 %v785
  %1195 = vmatpush.msra.mxu0 %v784
  %1196 = vmatpush.msra.mxu0 %v783
  %1197 = vmatpush.msra.mxu0 %v782
  %1198 = vmatpush.msra.mxu0 %v781
  %1199 = vmatpush.msra.mxu0 %v780
  %1200 = vmatpush.msra.mxu0 %v779
  %1201 = vmatpush.msra.mxu0 %v778
  %1202 = vmatpush.msra.mxu0 %v777
  %1203 = vmatpush.msra.mxu0 %v776
  %1204 = vmatpush.msra.mxu0 %v775
  %1205 = vmatpush.msra.mxu0 %v774
  %1206 = vmatmul.f32.gmra.mxu0 %v566
  %v1207 = vpop.f32.mrf.mxu0
  %v1208 = vadd.f32 0.0, %v1207
  %1209 = vmatmul.f32.gmra.mxu0 %v592
  %v1210 = vpop.f32.mrf.mxu0
  %v1211 = vadd.f32 0.0, %v1210
  %1212 = vmatmul.f32.gmra.mxu0 %v618
  %v1213 = vpop.f32.mrf.mxu0
  %v1214 = vadd.f32 0.0, %v1213
  %1215 = vmatmul.f32.gmra.mxu0 %v644
  %v1216 = vpop.f32.mrf.mxu0
  %v1217 = vadd.f32 0.0, %v1216
  %1218 = vmatmul.f32.gmra.mxu0 %v670
  %v1219 = vpop.f32.mrf.mxu0
  %v1220 = vadd.f32 0.0, %v1219
  %1221 = vmatmul.f32.gmra.mxu0 %v696
  %v1222 = vpop.f32.mrf.mxu0
  %v1223 = vadd.f32 0.0, %v1222
  %1224 = vmatmul.f32.gmra.mxu0 %v722
  %v1225 = vpop.f32.mrf.mxu0
  %v1226 = vadd.f32 0.0, %v1225
  %1227 = vmatmul.f32.gmra.mxu0 %v748
  %v1228 = vpop.f32.mrf.mxu0
  %v1229 = vadd.f32 0.0, %v1228
  %1230 = vdwg.mxu0
  %1231 = vmatpush.msra.mxu0 %v805
  %1232 = vmatpush.msra.mxu0 %v804
  %1233 = vmatpush.msra.mxu0 %v803
  %1234 = vmatpush.msra.mxu0 %v802
  %1235 = vmatpush.msra.mxu0 %v801
  %1236 = vmatpush.msra.mxu0 %v800
  %1237 = vmatpush.msra.mxu0 %v799
  %1238 = vmatpush.msra.mxu0 %v798
  %1239 = vmatpush.msra.mxu0 %v797
  %1240 = vmatpush.msra.mxu0 %v796
  %1241 = vmatpush.msra.mxu0 %v795
  %1242 = vmatpush.msra.mxu0 %v794
  %1243 = vmatpush.msra.mxu0 %v793
  %1244 = vmatpush.msra.mxu0 %v792
  %1245 = vmatpush.msra.mxu0 %v791
  %1246 = vmatpush.msra.mxu0 %v790
  %1247 = vmatmul.f32.gmra.mxu0 %v567
  %v1248 = vpop.f32.mrf.mxu0
  %v1249 = vadd.f32 %v1208, %v1248
  %1250 = vmatmul.f32.gmra.mxu0 %v593
  %v1251 = vpop.f32.mrf.mxu0
  %v1252 = vadd.f32 %v1211, %v1251
  %1253 = vmatmul.f32.gmra.mxu0 %v619
  %v1254 = vpop.f32.mrf.mxu0
  %v1255 = vadd.f32 %v1214, %v1254
  %1256 = vmatmul.f32.gmra.mxu0 %v645
  %v1257 = vpop.f32.mrf.mxu0
  %v1258 = vadd.f32 %v1217, %v1257
  %1259 = vmatmul.f32.gmra.mxu0 %v671
  %v1260 = vpop.f32.mrf.mxu0
  %v1261 = vadd.f32 %v1220, %v1260
  %1262 = vmatmul.f32.gmra.mxu0 %v697
  %v1263 = vpop.f32.mrf.mxu0
  %v1264 = vadd.f32 %v1223, %v1263
  %1265 = vmatmul.f32.gmra.mxu0 %v723
  %v1266 = vpop.f32.mrf.mxu0
  %v1267 = vadd.f32 %v1226, %v1266
  %1268 = vmatmul.f32.gmra.mxu0 %v749
  %v1269 = vpop.f32.mrf.mxu0
  %v1270 = vadd.f32 %v1229, %v1269
  %1271 = vdwg.mxu0
  %1272 = vmatpush.msra.mxu0 %v821
  %1273 = vmatpush.msra.mxu0 %v820
  %1274 = vmatpush.msra.mxu0 %v819
  %1275 = vmatpush.msra.mxu0 %v818
  %1276 = vmatpush.msra.mxu0 %v817
  %1277 = vmatpush.msra.mxu0 %v816
  %1278 = vmatpush.msra.mxu0 %v815
  %1279 = vmatpush.msra.mxu0 %v814
  %1280 = vmatpush.msra.mxu0 %v813
  %1281 = vmatpush.msra.mxu0 %v812
  %1282 = vmatpush.msra.mxu0 %v811
  %1283 = vmatpush.msra.mxu0 %v810
  %1284 = vmatpush.msra.mxu0 %v809
  %1285 = vmatpush.msra.mxu0 %v808
  %1286 = vmatpush.msra.mxu0 %v807
  %1287 = vmatpush.msra.mxu0 %v806
  %1288 = vmatmul.f32.gmra.mxu0 %v568
  %v1289 = vpop.f32.mrf.mxu0
  %v1290 = vadd.f32 %v1249, %v1289
  %1291 = vmatmul.f32.gmra.mxu0 %v594
  %v1292 = vpop.f32.mrf.mxu0
  %v1293 = vadd.f32 %v1252, %v1292
  %1294 = vmatmul.f32.gmra.mxu0 %v620
  %v1295 = vpop.f32.mrf.mxu0
  %v1296 = vadd.f32 %v1255, %v1295
  %1297 = vmatmul.f32.gmra.mxu0 %v646
  %v1298 = vpop.f32.mrf.mxu0
  %v1299 = vadd.f32 %v1258, %v1298
  %1300 = vmatmul.f32.gmra.mxu0 %v672
  %v1301 = vpop.f32.mrf.mxu0
  %v1302 = vadd.f32 %v1261, %v1301
  %1303 = vmatmul.f32.gmra.mxu0 %v698
  %v1304 = vpop.f32.mrf.mxu0
  %v1305 = vadd.f32 %v1264, %v1304
  %1306 = vmatmul.f32.gmra.mxu0 %v724
  %v1307 = vpop.f32.mrf.mxu0
  %v1308 = vadd.f32 %v1267, %v1307
  %1309 = vmatmul.f32.gmra.mxu0 %v750
  %v1310 = vpop.f32.mrf.mxu0
  %v1311 = vadd.f32 %v1270, %v1310
  %1312 = vdwg.mxu0
  %1313 = vmatpush.msra.mxu0 %v837
  %1314 = vmatpush.msra.mxu0 %v836
  %1315 = vmatpush.msra.mxu0 %v835
  %1316 = vmatpush.msra.mxu0 %v834
  %1317 = vmatpush.msra.mxu0 %v833
  %1318 = vmatpush.msra.mxu0 %v832
  %1319 = vmatpush.msra.mxu0 %v831
  %1320 = vmatpush.msra.mxu0 %v830
  %1321 = vmatpush.msra.mxu0 %v829
  %1322 = vmatpush.msra.mxu0 %v828
  %1323 = vmatpush.msra.mxu0 %v827
  %1324 = vmatpush.msra.mxu0 %v826
  %1325 = vmatpush.msra.mxu0 %v825
  %1326 = vmatpush.msra.mxu0 %v824
  %1327 = vmatpush.msra.mxu0 %v823
  %1328 = vmatpush.msra.mxu0 %v822
  %1329 = vmatmul.f32.gmra.mxu0 %v569
  %v1330 = vpop.f32.mrf.mxu0
  %v1331 = vadd.f32 %v1290, %v1330
  %1332 = vmatmul.f32.gmra.mxu0 %v595
  %v1333 = vpop.f32.mrf.mxu0
  %v1334 = vadd.f32 %v1293, %v1333
  %1335 = vmatmul.f32.gmra.mxu0 %v621
  %v1336 = vpop.f32.mrf.mxu0
  %v1337 = vadd.f32 %v1296, %v1336
  %1338 = vmatmul.f32.gmra.mxu0 %v647
  %v1339 = vpop.f32.mrf.mxu0
  %v1340 = vadd.f32 %v1299, %v1339
  %1341 = vmatmul.f32.gmra.mxu0 %v673
  %v1342 = vpop.f32.mrf.mxu0
  %v1343 = vadd.f32 %v1302, %v1342
  %1344 = vmatmul.f32.gmra.mxu0 %v699
  %v1345 = vpop.f32.mrf.mxu0
  %v1346 = vadd.f32 %v1305, %v1345
  %1347 = vmatmul.f32.gmra.mxu0 %v725
  %v1348 = vpop.f32.mrf.mxu0
  %v1349 = vadd.f32 %v1308, %v1348
  %1350 = vmatmul.f32.gmra.mxu0 %v751
  %v1351 = vpop.f32.mrf.mxu0
  %v1352 = vadd.f32 %v1311, %v1351
  %1353 = vdwg.mxu0
  %1354 = vmatpush.msra.mxu0 %v853
  %1355 = vmatpush.msra.mxu0 %v852
  %1356 = vmatpush.msra.mxu0 %v851
  %1357 = vmatpush.msra.mxu0 %v850
  %1358 = vmatpush.msra.mxu0 %v849
  %1359 = vmatpush.msra.mxu0 %v848
  %1360 = vmatpush.msra.mxu0 %v847
  %1361 = vmatpush.msra.mxu0 %v846
  %1362 = vmatpush.msra.mxu0 %v845
  %1363 = vmatpush.msra.mxu0 %v844
  %1364 = vmatpush.msra.mxu0 %v843
  %1365 = vmatpush.msra.mxu0 %v842
  %1366 = vmatpush.msra.mxu0 %v841
  %1367 = vmatpush.msra.mxu0 %v840
  %1368 = vmatpush.msra.mxu0 %v839
  %1369 = vmatpush.msra.mxu0 %v838
  %1370 = vmatmul.f32.gmra.mxu0 %v570
  %v1371 = vpop.f32.mrf.mxu0
  %v1372 = vadd.f32 %v1331, %v1371
  %1373 = vmatmul.f32.gmra.mxu0 %v596
  %v1374 = vpop.f32.mrf.mxu0
  %v1375 = vadd.f32 %v1334, %v1374
  %1376 = vmatmul.f32.gmra.mxu0 %v622
  %v1377 = vpop.f32.mrf.mxu0
  %v1378 = vadd.f32 %v1337, %v1377
  %1379 = vmatmul.f32.gmra.mxu0 %v648
  %v1380 = vpop.f32.mrf.mxu0
  %v1381 = vadd.f32 %v1340, %v1380
  %1382 = vmatmul.f32.gmra.mxu0 %v674
  %v1383 = vpop.f32.mrf.mxu0
  %v1384 = vadd.f32 %v1343, %v1383
  %1385 = vmatmul.f32.gmra.mxu0 %v700
  %v1386 = vpop.f32.mrf.mxu0
  %v1387 = vadd.f32 %v1346, %v1386
  %1388 = vmatmul.f32.gmra.mxu0 %v726
  %v1389 = vpop.f32.mrf.mxu0
  %v1390 = vadd.f32 %v1349, %v1389
  %1391 = vmatmul.f32.gmra.mxu0 %v752
  %v1392 = vpop.f32.mrf.mxu0
  %v1393 = vadd.f32 %v1352, %v1392
  %1394 = vdwg.mxu0
  %1395 = vmatpush.msra.mxu0 %v869
  %1396 = vmatpush.msra.mxu0 %v868
  %1397 = vmatpush.msra.mxu0 %v867
  %1398 = vmatpush.msra.mxu0 %v866
  %1399 = vmatpush.msra.mxu0 %v865
  %1400 = vmatpush.msra.mxu0 %v864
  %1401 = vmatpush.msra.mxu0 %v863
  %1402 = vmatpush.msra.mxu0 %v862
  %1403 = vmatpush.msra.mxu0 %v861
  %1404 = vmatpush.msra.mxu0 %v860
  %1405 = vmatpush.msra.mxu0 %v859
  %1406 = vmatpush.msra.mxu0 %v858
  %1407 = vmatpush.msra.mxu0 %v857
  %1408 = vmatpush.msra.mxu0 %v856
  %1409 = vmatpush.msra.mxu0 %v855
  %1410 = vmatpush.msra.mxu0 %v854
  %1411 = vmatmul.f32.gmra.mxu0 %v571
  %v1412 = vpop.f32.mrf.mxu0
  %v1413 = vadd.f32 %v1372, %v1412
  %1414 = vmatmul.f32.gmra.mxu0 %v597
  %v1415 = vpop.f32.mrf.mxu0
  %v1416 = vadd.f32 %v1375, %v1415
  %1417 = vmatmul.f32.gmra.mxu0 %v623
  %v1418 = vpop.f32.mrf.mxu0
  %v1419 = vadd.f32 %v1378, %v1418
  %1420 = vmatmul.f32.gmra.mxu0 %v649
  %v1421 = vpop.f32.mrf.mxu0
  %v1422 = vadd.f32 %v1381, %v1421
  %1423 = vmatmul.f32.gmra.mxu0 %v675
  %v1424 = vpop.f32.mrf.mxu0
  %v1425 = vadd.f32 %v1384, %v1424
  %1426 = vmatmul.f32.gmra.mxu0 %v701
  %v1427 = vpop.f32.mrf.mxu0
  %v1428 = vadd.f32 %v1387, %v1427
  %1429 = vmatmul.f32.gmra.mxu0 %v727
  %v1430 = vpop.f32.mrf.mxu0
  %v1431 = vadd.f32 %v1390, %v1430
  %1432 = vmatmul.f32.gmra.mxu0 %v753
  %v1433 = vpop.f32.mrf.mxu0
  %v1434 = vadd.f32 %v1393, %v1433
  %1435 = vdwg.mxu0
  %1436 = vmatpush.msra.mxu0 %v885
  %1437 = vmatpush.msra.mxu0 %v884
  %1438 = vmatpush.msra.mxu0 %v883
  %1439 = vmatpush.msra.mxu0 %v882
  %1440 = vmatpush.msra.mxu0 %v881
  %1441 = vmatpush.msra.mxu0 %v880
  %1442 = vmatpush.msra.mxu0 %v879
  %1443 = vmatpush.msra.mxu0 %v878
  %1444 = vmatpush.msra.mxu0 %v877
  %1445 = vmatpush.msra.mxu0 %v876
  %1446 = vmatpush.msra.mxu0 %v875
  %1447 = vmatpush.msra.mxu0 %v874
  %1448 = vmatpush.msra.mxu0 %v873
  %1449 = vmatpush.msra.mxu0 %v872
  %1450 = vmatpush.msra.mxu0 %v871
  %1451 = vmatpush.msra.mxu0 %v870
  %1452 = vmatmul.f32.gmra.mxu0 %v572
  %v1453 = vpop.f32.mrf.mxu0
  %v1454 = vadd.f32 %v1413, %v1453
  %1455 = vmatmul.f32.gmra.mxu0 %v598
  %v1456 = vpop.f32.mrf.mxu0
  %v1457 = vadd.f32 %v1416, %v1456
  %1458 = vmatmul.f32.gmra.mxu0 %v624
  %v1459 = vpop.f32.mrf.mxu0
  %v1460 = vadd.f32 %v1419, %v1459
  %1461 = vmatmul.f32.gmra.mxu0 %v650
  %v1462 = vpop.f32.mrf.mxu0
  %v1463 = vadd.f32 %v1422, %v1462
  %1464 = vmatmul.f32.gmra.mxu0 %v676
  %v1465 = vpop.f32.mrf.mxu0
  %v1466 = vadd.f32 %v1425, %v1465
  %1467 = vmatmul.f32.gmra.mxu0 %v702
  %v1468 = vpop.f32.mrf.mxu0
  %v1469 = vadd.f32 %v1428, %v1468
  %1470 = vmatmul.f32.gmra.mxu0 %v728
  %v1471 = vpop.f32.mrf.mxu0
  %v1472 = vadd.f32 %v1431, %v1471
  %1473 = vmatmul.f32.gmra.mxu0 %v754
  %v1474 = vpop.f32.mrf.mxu0
  %v1475 = vadd.f32 %v1434, %v1474
  %1476 = vdwg.mxu0
  %1477 = vmatpush.msra.mxu0 %v901
  %1478 = vmatpush.msra.mxu0 %v900
  %1479 = vmatpush.msra.mxu0 %v899
  %1480 = vmatpush.msra.mxu0 %v898
  %1481 = vmatpush.msra.mxu0 %v897
  %1482 = vmatpush.msra.mxu0 %v896
  %1483 = vmatpush.msra.mxu0 %v895
  %1484 = vmatpush.msra.mxu0 %v894
  %1485 = vmatpush.msra.mxu0 %v893
  %1486 = vmatpush.msra.mxu0 %v892
  %1487 = vmatpush.msra.mxu0 %v891
  %1488 = vmatpush.msra.mxu0 %v890
  %1489 = vmatpush.msra.mxu0 %v889
  %1490 = vmatpush.msra.mxu0 %v888
  %1491 = vmatpush.msra.mxu0 %v887
  %1492 = vmatpush.msra.mxu0 %v886
  %1493 = vmatmul.f32.gmra.mxu0 %v573
  %v1494 = vpop.f32.mrf.mxu0
  %v1495 = vadd.f32 %v1454, %v1494
  %1496 = vmatmul.f32.gmra.mxu0 %v599
  %v1497 = vpop.f32.mrf.mxu0
  %v1498 = vadd.f32 %v1457, %v1497
  %1499 = vmatmul.f32.gmra.mxu0 %v625
  %v1500 = vpop.f32.mrf.mxu0
  %v1501 = vadd.f32 %v1460, %v1500
  %1502 = vmatmul.f32.gmra.mxu0 %v651
  %v1503 = vpop.f32.mrf.mxu0
  %v1504 = vadd.f32 %v1463, %v1503
  %1505 = vmatmul.f32.gmra.mxu0 %v677
  %v1506 = vpop.f32.mrf.mxu0
  %v1507 = vadd.f32 %v1466, %v1506
  %1508 = vmatmul.f32.gmra.mxu0 %v703
  %v1509 = vpop.f32.mrf.mxu0
  %v1510 = vadd.f32 %v1469, %v1509
  %1511 = vmatmul.f32.gmra.mxu0 %v729
  %v1512 = vpop.f32.mrf.mxu0
  %v1513 = vadd.f32 %v1472, %v1512
  %1514 = vmatmul.f32.gmra.mxu0 %v755
  %v1515 = vpop.f32.mrf.mxu0
  %v1516 = vadd.f32 %v1475, %v1515
  %1517 = vdwg.mxu0
  %1518 = vmatpush.msra.mxu0 %v917
  %1519 = vmatpush.msra.mxu0 %v916
  %1520 = vmatpush.msra.mxu0 %v915
  %1521 = vmatpush.msra.mxu0 %v914
  %1522 = vmatpush.msra.mxu0 %v913
  %1523 = vmatpush.msra.mxu0 %v912
  %1524 = vmatpush.msra.mxu0 %v911
  %1525 = vmatpush.msra.mxu0 %v910
  %1526 = vmatpush.msra.mxu0 %v909
  %1527 = vmatpush.msra.mxu0 %v908
  %1528 = vmatpush.msra.mxu0 %v907
  %1529 = vmatpush.msra.mxu0 %v906
  %1530 = vmatpush.msra.mxu0 %v905
  %1531 = vmatpush.msra.mxu0 %v904
  %1532 = vmatpush.msra.mxu0 %v903
  %1533 = vmatpush.msra.mxu0 %v902
  %1534 = vmatmul.f32.gmra.mxu0 %v574
  %v1535 = vpop.f32.mrf.mxu0
  %v1536 = vadd.f32 %v1495, %v1535
  %1537 = vmatmul.f32.gmra.mxu0 %v600
  %v1538 = vpop.f32.mrf.mxu0
  %v1539 = vadd.f32 %v1498, %v1538
  %1540 = vmatmul.f32.gmra.mxu0 %v626
  %v1541 = vpop.f32.mrf.mxu0
  %v1542 = vadd.f32 %v1501, %v1541
  %1543 = vmatmul.f32.gmra.mxu0 %v652
  %v1544 = vpop.f32.mrf.mxu0
  %v1545 = vadd.f32 %v1504, %v1544
  %1546 = vmatmul.f32.gmra.mxu0 %v678
  %v1547 = vpop.f32.mrf.mxu0
  %v1548 = vadd.f32 %v1507, %v1547
  %1549 = vmatmul.f32.gmra.mxu0 %v704
  %v1550 = vpop.f32.mrf.mxu0
  %v1551 = vadd.f32 %v1510, %v1550
  %1552 = vmatmul.f32.gmra.mxu0 %v730
  %v1553 = vpop.f32.mrf.mxu0
  %v1554 = vadd.f32 %v1513, %v1553
  %1555 = vmatmul.f32.gmra.mxu0 %v756
  %v1556 = vpop.f32.mrf.mxu0
  %v1557 = vadd.f32 %v1516, %v1556
  %1558 = vdwg.mxu0
  %1559 = vmatpush.msra.mxu0 %v933
  %1560 = vmatpush.msra.mxu0 %v932
  %1561 = vmatpush.msra.mxu0 %v931
  %1562 = vmatpush.msra.mxu0 %v930
  %1563 = vmatpush.msra.mxu0 %v929
  %1564 = vmatpush.msra.mxu0 %v928
  %1565 = vmatpush.msra.mxu0 %v927
  %1566 = vmatpush.msra.mxu0 %v926
  %1567 = vmatpush.msra.mxu0 %v925
  %1568 = vmatpush.msra.mxu0 %v924
  %1569 = vmatpush.msra.mxu0 %v923
  %1570 = vmatpush.msra.mxu0 %v922
  %1571 = vmatpush.msra.mxu0 %v921
  %1572 = vmatpush.msra.mxu0 %v920
  %1573 = vmatpush.msra.mxu0 %v919
  %1574 = vmatpush.msra.mxu0 %v918
  %1575 = vmatmul.f32.gmra.mxu0 %v575
  %v1576 = vpop.f32.mrf.mxu0
  %v1577 = vadd.f32 %v1536, %v1576
  %1578 = vmatmul.f32.gmra.mxu0 %v601
  %v1579 = vpop.f32.mrf.mxu0
  %v1580 = vadd.f32 %v1539, %v1579
  %1581 = vmatmul.f32.gmra.mxu0 %v627
  %v1582 = vpop.f32.mrf.mxu0
  %v1583 = vadd.f32 %v1542, %v1582
  %1584 = vmatmul.f32.gmra.mxu0 %v653
  %v1585 = vpop.f32.mrf.mxu0
  %v1586 = vadd.f32 %v1545, %v1585
  %1587 = vmatmul.f32.gmra.mxu0 %v679
  %v1588 = vpop.f32.mrf.mxu0
  %v1589 = vadd.f32 %v1548, %v1588
  %1590 = vmatmul.f32.gmra.mxu0 %v705
  %v1591 = vpop.f32.mrf.mxu0
  %v1592 = vadd.f32 %v1551, %v1591
  %1593 = vmatmul.f32.gmra.mxu0 %v731
  %v1594 = vpop.f32.mrf.mxu0
  %v1595 = vadd.f32 %v1554, %v1594
  %1596 = vmatmul.f32.gmra.mxu0 %v757
  %v1597 = vpop.f32.mrf.mxu0
  %v1598 = vadd.f32 %v1557, %v1597
  %1599 = vdwg.mxu0
  %1600 = vmatpush.msra.mxu0 %v949
  %1601 = vmatpush.msra.mxu0 %v948
  %1602 = vmatpush.msra.mxu0 %v947
  %1603 = vmatpush.msra.mxu0 %v946
  %1604 = vmatpush.msra.mxu0 %v945
  %1605 = vmatpush.msra.mxu0 %v944
  %1606 = vmatpush.msra.mxu0 %v943
  %1607 = vmatpush.msra.mxu0 %v942
  %1608 = vmatpush.msra.mxu0 %v941
  %1609 = vmatpush.msra.mxu0 %v940
  %1610 = vmatpush.msra.mxu0 %v939
  %1611 = vmatpush.msra.mxu0 %v938
  %1612 = vmatpush.msra.mxu0 %v937
  %1613 = vmatpush.msra.mxu0 %v936
  %1614 = vmatpush.msra.mxu0 %v935
  %1615 = vmatpush.msra.mxu0 %v934
  %1616 = vmatmul.f32.gmra.mxu0 %v576
  %v1617 = vpop.f32.mrf.mxu0
  %v1618 = vadd.f32 %v1577, %v1617
  %1619 = vmatmul.f32.gmra.mxu0 %v602
  %v1620 = vpop.f32.mrf.mxu0
  %v1621 = vadd.f32 %v1580, %v1620
  %1622 = vmatmul.f32.gmra.mxu0 %v628
  %v1623 = vpop.f32.mrf.mxu0
  %v1624 = vadd.f32 %v1583, %v1623
  %1625 = vmatmul.f32.gmra.mxu0 %v654
  %v1626 = vpop.f32.mrf.mxu0
  %v1627 = vadd.f32 %v1586, %v1626
  %1628 = vmatmul.f32.gmra.mxu0 %v680
  %v1629 = vpop.f32.mrf.mxu0
  %v1630 = vadd.f32 %v1589, %v1629
  %1631 = vmatmul.f32.gmra.mxu0 %v706
  %v1632 = vpop.f32.mrf.mxu0
  %v1633 = vadd.f32 %v1592, %v1632
  %1634 = vmatmul.f32.gmra.mxu0 %v732
  %v1635 = vpop.f32.mrf.mxu0
  %v1636 = vadd.f32 %v1595, %v1635
  %1637 = vmatmul.f32.gmra.mxu0 %v758
  %v1638 = vpop.f32.mrf.mxu0
  %v1639 = vadd.f32 %v1598, %v1638
  %1640 = vdwg.mxu0
  %1641 = vmatpush.msra.mxu0 %v965
  %1642 = vmatpush.msra.mxu0 %v964
  %1643 = vmatpush.msra.mxu0 %v963
  %1644 = vmatpush.msra.mxu0 %v962
  %1645 = vmatpush.msra.mxu0 %v961
  %1646 = vmatpush.msra.mxu0 %v960
  %1647 = vmatpush.msra.mxu0 %v959
  %1648 = vmatpush.msra.mxu0 %v958
  %1649 = vmatpush.msra.mxu0 %v957
  %1650 = vmatpush.msra.mxu0 %v956
  %1651 = vmatpush.msra.mxu0 %v955
  %1652 = vmatpush.msra.mxu0 %v954
  %1653 = vmatpush.msra.mxu0 %v953
  %1654 = vmatpush.msra.mxu0 %v952
  %1655 = vmatpush.msra.mxu0 %v951
  %1656 = vmatpush.msra.mxu0 %v950
  %1657 = vmatmul.f32.gmra.mxu0 %v577
  %v1658 = vpop.f32.mrf.mxu0
  %v1659 = vadd.f32 %v1618, %v1658
  %1660 = vmatmul.f32.gmra.mxu0 %v603
  %v1661 = vpop.f32.mrf.mxu0
  %v1662 = vadd.f32 %v1621, %v1661
  %1663 = vmatmul.f32.gmra.mxu0 %v629
  %v1664 = vpop.f32.mrf.mxu0
  %v1665 = vadd.f32 %v1624, %v1664
  %1666 = vmatmul.f32.gmra.mxu0 %v655
  %v1667 = vpop.f32.mrf.mxu0
  %v1668 = vadd.f32 %v1627, %v1667
  %1669 = vmatmul.f32.gmra.mxu0 %v681
  %v1670 = vpop.f32.mrf.mxu0
  %v1671 = vadd.f32 %v1630, %v1670
  %1672 = vmatmul.f32.gmra.mxu0 %v707
  %v1673 = vpop.f32.mrf.mxu0
  %v1674 = vadd.f32 %v1633, %v1673
  %1675 = vmatmul.f32.gmra.mxu0 %v733
  %v1676 = vpop.f32.mrf.mxu0
  %v1677 = vadd.f32 %v1636, %v1676
  %1678 = vmatmul.f32.gmra.mxu0 %v759
  %v1679 = vpop.f32.mrf.mxu0
  %v1680 = vadd.f32 %v1639, %v1679
  %1681 = vdwg.mxu0
  %1682 = vmatpush.msra.mxu0 %v981
  %1683 = vmatpush.msra.mxu0 %v980
  %1684 = vmatpush.msra.mxu0 %v979
  %1685 = vmatpush.msra.mxu0 %v978
  %1686 = vmatpush.msra.mxu0 %v977
  %1687 = vmatpush.msra.mxu0 %v976
  %1688 = vmatpush.msra.mxu0 %v975
  %1689 = vmatpush.msra.mxu0 %v974
  %1690 = vmatpush.msra.mxu0 %v973
  %1691 = vmatpush.msra.mxu0 %v972
  %1692 = vmatpush.msra.mxu0 %v971
  %1693 = vmatpush.msra.mxu0 %v970
  %1694 = vmatpush.msra.mxu0 %v969
  %1695 = vmatpush.msra.mxu0 %v968
  %1696 = vmatpush.msra.mxu0 %v967
  %1697 = vmatpush.msra.mxu0 %v966
  %1698 = vmatmul.f32.gmra.mxu0 %v578
  %v1699 = vpop.f32.mrf.mxu0
  %v1700 = vadd.f32 %v1659, %v1699
  %1701 = vmatmul.f32.gmra.mxu0 %v604
  %v1702 = vpop.f32.mrf.mxu0
  %v1703 = vadd.f32 %v1662, %v1702
  %1704 = vmatmul.f32.gmra.mxu0 %v630
  %v1705 = vpop.f32.mrf.mxu0
  %v1706 = vadd.f32 %v1665, %v1705
  %1707 = vmatmul.f32.gmra.mxu0 %v656
  %v1708 = vpop.f32.mrf.mxu0
  %v1709 = vadd.f32 %v1668, %v1708
  %1710 = vmatmul.f32.gmra.mxu0 %v682
  %v1711 = vpop.f32.mrf.mxu0
  %v1712 = vadd.f32 %v1671, %v1711
  %1713 = vmatmul.f32.gmra.mxu0 %v708
  %v1714 = vpop.f32.mrf.mxu0
  %v1715 = vadd.f32 %v1674, %v1714
  %1716 = vmatmul.f32.gmra.mxu0 %v734
  %v1717 = vpop.f32.mrf.mxu0
  %v1718 = vadd.f32 %v1677, %v1717
  %1719 = vmatmul.f32.gmra.mxu0 %v760
  %v1720 = vpop.f32.mrf.mxu0
  %v1721 = vadd.f32 %v1680, %v1720
  %1722 = vdwg.mxu0
  %1723 = vmatpush.msra.mxu0 %v997
  %1724 = vmatpush.msra.mxu0 %v996
  %1725 = vmatpush.msra.mxu0 %v995
  %1726 = vmatpush.msra.mxu0 %v994
  %1727 = vmatpush.msra.mxu0 %v993
  %1728 = vmatpush.msra.mxu0 %v992
  %1729 = vmatpush.msra.mxu0 %v991
  %1730 = vmatpush.msra.mxu0 %v990
  %1731 = vmatpush.msra.mxu0 %v989
  %1732 = vmatpush.msra.mxu0 %v988
  %1733 = vmatpush.msra.mxu0 %v987
  %1734 = vmatpush.msra.mxu0 %v986
  %1735 = vmatpush.msra.mxu0 %v985
  %1736 = vmatpush.msra.mxu0 %v984
  %1737 = vmatpush.msra.mxu0 %v983
  %1738 = vmatpush.msra.mxu0 %v982
  %1739 = vmatmul.f32.gmra.mxu0 %v579
  %v1740 = vpop.f32.mrf.mxu0
  %v1741 = vadd.f32 %v1700, %v1740
  %1742 = vmatmul.f32.gmra.mxu0 %v605
  %v1743 = vpop.f32.mrf.mxu0
  %v1744 = vadd.f32 %v1703, %v1743
  %1745 = vmatmul.f32.gmra.mxu0 %v631
  %v1746 = vpop.f32.mrf.mxu0
  %v1747 = vadd.f32 %v1706, %v1746
  %1748 = vmatmul.f32.gmra.mxu0 %v657
  %v1749 = vpop.f32.mrf.mxu0
  %v1750 = vadd.f32 %v1709, %v1749
  %1751 = vmatmul.f32.gmra.mxu0 %v683
  %v1752 = vpop.f32.mrf.mxu0
  %v1753 = vadd.f32 %v1712, %v1752
  %1754 = vmatmul.f32.gmra.mxu0 %v709
  %v1755 = vpop.f32.mrf.mxu0
  %v1756 = vadd.f32 %v1715, %v1755
  %1757 = vmatmul.f32.gmra.mxu0 %v735
  %v1758 = vpop.f32.mrf.mxu0
  %v1759 = vadd.f32 %v1718, %v1758
  %1760 = vmatmul.f32.gmra.mxu0 %v761
  %v1761 = vpop.f32.mrf.mxu0
  %v1762 = vadd.f32 %v1721, %v1761
  %1763 = vdwg.mxu0
  %1764 = vmatpush.msra.mxu0 %v1013
  %1765 = vmatpush.msra.mxu0 %v1012
  %1766 = vmatpush.msra.mxu0 %v1011
  %1767 = vmatpush.msra.mxu0 %v1010
  %1768 = vmatpush.msra.mxu0 %v1009
  %1769 = vmatpush.msra.mxu0 %v1008
  %1770 = vmatpush.msra.mxu0 %v1007
  %1771 = vmatpush.msra.mxu0 %v1006
  %1772 = vmatpush.msra.mxu0 %v1005
  %1773 = vmatpush.msra.mxu0 %v1004
  %1774 = vmatpush.msra.mxu0 %v1003
  %1775 = vmatpush.msra.mxu0 %v1002
  %1776 = vmatpush.msra.mxu0 %v1001
  %1777 = vmatpush.msra.mxu0 %v1000
  %1778 = vmatpush.msra.mxu0 %v999
  %1779 = vmatpush.msra.mxu0 %v998
  %1780 = vmatmul.f32.gmra.mxu0 %v580
  %v1781 = vpop.f32.mrf.mxu0
  %v1782 = vadd.f32 %v1741, %v1781
  %1783 = vmatmul.f32.gmra.mxu0 %v606
  %v1784 = vpop.f32.mrf.mxu0
  %v1785 = vadd.f32 %v1744, %v1784
  %1786 = vmatmul.f32.gmra.mxu0 %v632
  %v1787 = vpop.f32.mrf.mxu0
  %v1788 = vadd.f32 %v1747, %v1787
  %1789 = vmatmul.f32.gmra.mxu0 %v658
  %v1790 = vpop.f32.mrf.mxu0
  %v1791 = vadd.f32 %v1750, %v1790
  %1792 = vmatmul.f32.gmra.mxu0 %v684
  %v1793 = vpop.f32.mrf.mxu0
  %v1794 = vadd.f32 %v1753, %v1793
  %1795 = vmatmul.f32.gmra.mxu0 %v710
  %v1796 = vpop.f32.mrf.mxu0
  %v1797 = vadd.f32 %v1756, %v1796
  %1798 = vmatmul.f32.gmra.mxu0 %v736
  %v1799 = vpop.f32.mrf.mxu0
  %v1800 = vadd.f32 %v1759, %v1799
  %1801 = vmatmul.f32.gmra.mxu0 %v762
  %v1802 = vpop.f32.mrf.mxu0
  %v1803 = vadd.f32 %v1762, %v1802
  %1804 = vdwg.mxu0
  %1805 = vmatpush.msra.mxu0 %v1029
  %1806 = vmatpush.msra.mxu0 %v1028
  %1807 = vmatpush.msra.mxu0 %v1027
  %1808 = vmatpush.msra.mxu0 %v1026
  %1809 = vmatpush.msra.mxu0 %v1025
  %1810 = vmatpush.msra.mxu0 %v1024
  %1811 = vmatpush.msra.mxu0 %v1023
  %1812 = vmatpush.msra.mxu0 %v1022
  %1813 = vmatpush.msra.mxu0 %v1021
  %1814 = vmatpush.msra.mxu0 %v1020
  %1815 = vmatpush.msra.mxu0 %v1019
  %1816 = vmatpush.msra.mxu0 %v1018
  %1817 = vmatpush.msra.mxu0 %v1017
  %1818 = vmatpush.msra.mxu0 %v1016
  %1819 = vmatpush.msra.mxu0 %v1015
  %1820 = vmatpush.msra.mxu0 %v1014
  %1821 = vmatmul.f32.gmra.mxu0 %v581
  %v1822 = vpop.f32.mrf.mxu0
  %v1823 = vadd.f32 %v1782, %v1822
  %1824 = vmatmul.f32.gmra.mxu0 %v607
  %v1825 = vpop.f32.mrf.mxu0
  %v1826 = vadd.f32 %v1785, %v1825
  %1827 = vmatmul.f32.gmra.mxu0 %v633
  %v1828 = vpop.f32.mrf.mxu0
  %v1829 = vadd.f32 %v1788, %v1828
  %1830 = vmatmul.f32.gmra.mxu0 %v659
  %v1831 = vpop.f32.mrf.mxu0
  %v1832 = vadd.f32 %v1791, %v1831
  %1833 = vmatmul.f32.gmra.mxu0 %v685
  %v1834 = vpop.f32.mrf.mxu0
  %v1835 = vadd.f32 %v1794, %v1834
  %1836 = vmatmul.f32.gmra.mxu0 %v711
  %v1837 = vpop.f32.mrf.mxu0
  %v1838 = vadd.f32 %v1797, %v1837
  %1839 = vmatmul.f32.gmra.mxu0 %v737
  %v1840 = vpop.f32.mrf.mxu0
  %v1841 = vadd.f32 %v1800, %v1840
  %1842 = vmatmul.f32.gmra.mxu0 %v763
  %v1843 = vpop.f32.mrf.mxu0
  %v1844 = vadd.f32 %v1803, %v1843
  %1845 = vdwg.mxu0
  %1846 = vmatpush.msra.mxu0 %v1045
  %1847 = vmatpush.msra.mxu0 %v1044
  %1848 = vmatpush.msra.mxu0 %v1043
  %1849 = vmatpush.msra.mxu0 %v1042
  %1850 = vmatpush.msra.mxu0 %v1041
  %1851 = vmatpush.msra.mxu0 %v1040
  %1852 = vmatpush.msra.mxu0 %v1039
  %1853 = vmatpush.msra.mxu0 %v1038
  %1854 = vmatpush.msra.mxu0 %v1037
  %1855 = vmatpush.msra.mxu0 %v1036
  %1856 = vmatpush.msra.mxu0 %v1035
  %1857 = vmatpush.msra.mxu0 %v1034
  %1858 = vmatpush.msra.mxu0 %v1033
  %1859 = vmatpush.msra.mxu0 %v1032
  %1860 = vmatpush.msra.mxu0 %v1031
  %1861 = vmatpush.msra.mxu0 %v1030
  %1862 = vmatmul.f32.gmra.mxu0 %v582
  %v1863 = vpop.f32.mrf.mxu0
  %v1864 = vadd.f32 %v1823, %v1863
  %1865 = vmatmul.f32.gmra.mxu0 %v608
  %v1866 = vpop.f32.mrf.mxu0
  %v1867 = vadd.f32 %v1826, %v1866
  %1868 = vmatmul.f32.gmra.mxu0 %v634
  %v1869 = vpop.f32.mrf.mxu0
  %v1870 = vadd.f32 %v1829, %v1869
  %1871 = vmatmul.f32.gmra.mxu0 %v660
  %v1872 = vpop.f32.mrf.mxu0
  %v1873 = vadd.f32 %v1832, %v1872
  %1874 = vmatmul.f32.gmra.mxu0 %v686
  %v1875 = vpop.f32.mrf.mxu0
  %v1876 = vadd.f32 %v1835, %v1875
  %1877 = vmatmul.f32.gmra.mxu0 %v712
  %v1878 = vpop.f32.mrf.mxu0
  %v1879 = vadd.f32 %v1838, %v1878
  %1880 = vmatmul.f32.gmra.mxu0 %v738
  %v1881 = vpop.f32.mrf.mxu0
  %v1882 = vadd.f32 %v1841, %v1881
  %1883 = vmatmul.f32.gmra.mxu0 %v764
  %v1884 = vpop.f32.mrf.mxu0
  %v1885 = vadd.f32 %v1844, %v1884
  %1886 = vdwg.mxu0
  %1887 = vmatpush.msra.mxu0 %v1061
  %1888 = vmatpush.msra.mxu0 %v1060
  %1889 = vmatpush.msra.mxu0 %v1059
  %1890 = vmatpush.msra.mxu0 %v1058
  %1891 = vmatpush.msra.mxu0 %v1057
  %1892 = vmatpush.msra.mxu0 %v1056
  %1893 = vmatpush.msra.mxu0 %v1055
  %1894 = vmatpush.msra.mxu0 %v1054
  %1895 = vmatpush.msra.mxu0 %v1053
  %1896 = vmatpush.msra.mxu0 %v1052
  %1897 = vmatpush.msra.mxu0 %v1051
  %1898 = vmatpush.msra.mxu0 %v1050
  %1899 = vmatpush.msra.mxu0 %v1049
  %1900 = vmatpush.msra.mxu0 %v1048
  %1901 = vmatpush.msra.mxu0 %v1047
  %1902 = vmatpush.msra.mxu0 %v1046
  %1903 = vmatmul.f32.gmra.mxu0 %v583
  %v1904 = vpop.f32.mrf.mxu0
  %v1905 = vadd.f32 %v1864, %v1904
  %1906 = vmatmul.f32.gmra.mxu0 %v609
  %v1907 = vpop.f32.mrf.mxu0
  %v1908 = vadd.f32 %v1867, %v1907
  %1909 = vmatmul.f32.gmra.mxu0 %v635
  %v1910 = vpop.f32.mrf.mxu0
  %v1911 = vadd.f32 %v1870, %v1910
  %1912 = vmatmul.f32.gmra.mxu0 %v661
  %v1913 = vpop.f32.mrf.mxu0
  %v1914 = vadd.f32 %v1873, %v1913
  %1915 = vmatmul.f32.gmra.mxu0 %v687
  %v1916 = vpop.f32.mrf.mxu0
  %v1917 = vadd.f32 %v1876, %v1916
  %1918 = vmatmul.f32.gmra.mxu0 %v713
  %v1919 = vpop.f32.mrf.mxu0
  %v1920 = vadd.f32 %v1879, %v1919
  %1921 = vmatmul.f32.gmra.mxu0 %v739
  %v1922 = vpop.f32.mrf.mxu0
  %v1923 = vadd.f32 %v1882, %v1922
  %1924 = vmatmul.f32.gmra.mxu0 %v765
  %v1925 = vpop.f32.mrf.mxu0
  %v1926 = vadd.f32 %v1885, %v1925
  %1927 = vdwg.mxu0
  %1928 = vmatpush.msra.mxu0 %v1077
  %1929 = vmatpush.msra.mxu0 %v1076
  %1930 = vmatpush.msra.mxu0 %v1075
  %1931 = vmatpush.msra.mxu0 %v1074
  %1932 = vmatpush.msra.mxu0 %v1073
  %1933 = vmatpush.msra.mxu0 %v1072
  %1934 = vmatpush.msra.mxu0 %v1071
  %1935 = vmatpush.msra.mxu0 %v1070
  %1936 = vmatpush.msra.mxu0 %v1069
  %1937 = vmatpush.msra.mxu0 %v1068
  %1938 = vmatpush.msra.mxu0 %v1067
  %1939 = vmatpush.msra.mxu0 %v1066
  %1940 = vmatpush.msra.mxu0 %v1065
  %1941 = vmatpush.msra.mxu0 %v1064
  %1942 = vmatpush.msra.mxu0 %v1063
  %1943 = vmatpush.msra.mxu0 %v1062
  %1944 = vmatmul.f32.gmra.mxu0 %v584
  %v1945 = vpop.f32.mrf.mxu0
  %v1946 = vadd.f32 %v1905, %v1945
  %1947 = vmatmul.f32.gmra.mxu0 %v610
  %v1948 = vpop.f32.mrf.mxu0
  %v1949 = vadd.f32 %v1908, %v1948
  %1950 = vmatmul.f32.gmra.mxu0 %v636
  %v1951 = vpop.f32.mrf.mxu0
  %v1952 = vadd.f32 %v1911, %v1951
  %1953 = vmatmul.f32.gmra.mxu0 %v662
  %v1954 = vpop.f32.mrf.mxu0
  %v1955 = vadd.f32 %v1914, %v1954
  %1956 = vmatmul.f32.gmra.mxu0 %v688
  %v1957 = vpop.f32.mrf.mxu0
  %v1958 = vadd.f32 %v1917, %v1957
  %1959 = vmatmul.f32.gmra.mxu0 %v714
  %v1960 = vpop.f32.mrf.mxu0
  %v1961 = vadd.f32 %v1920, %v1960
  %1962 = vmatmul.f32.gmra.mxu0 %v740
  %v1963 = vpop.f32.mrf.mxu0
  %v1964 = vadd.f32 %v1923, %v1963
  %1965 = vmatmul.f32.gmra.mxu0 %v766
  %v1966 = vpop.f32.mrf.mxu0
  %v1967 = vadd.f32 %v1926, %v1966
  %1968 = vdwg.mxu0
  %1969 = vmatpush.msra.mxu0 %v1093
  %1970 = vmatpush.msra.mxu0 %v1092
  %1971 = vmatpush.msra.mxu0 %v1091
  %1972 = vmatpush.msra.mxu0 %v1090
  %1973 = vmatpush.msra.mxu0 %v1089
  %1974 = vmatpush.msra.mxu0 %v1088
  %1975 = vmatpush.msra.mxu0 %v1087
  %1976 = vmatpush.msra.mxu0 %v1086
  %1977 = vmatpush.msra.mxu0 %v1085
  %1978 = vmatpush.msra.mxu0 %v1084
  %1979 = vmatpush.msra.mxu0 %v1083
  %1980 = vmatpush.msra.mxu0 %v1082
  %1981 = vmatpush.msra.mxu0 %v1081
  %1982 = vmatpush.msra.mxu0 %v1080
  %1983 = vmatpush.msra.mxu0 %v1079
  %1984 = vmatpush.msra.mxu0 %v1078
  %1985 = vmatmul.f32.gmra.mxu0 %v585
  %v1986 = vpop.f32.mrf.mxu0
  %v1987 = vadd.f32 %v1946, %v1986
  %1988 = vmatmul.f32.gmra.mxu0 %v611
  %v1989 = vpop.f32.mrf.mxu0
  %v1990 = vadd.f32 %v1949, %v1989
  %1991 = vmatmul.f32.gmra.mxu0 %v637
  %v1992 = vpop.f32.mrf.mxu0
  %v1993 = vadd.f32 %v1952, %v1992
  %1994 = vmatmul.f32.gmra.mxu0 %v663
  %v1995 = vpop.f32.mrf.mxu0
  %v1996 = vadd.f32 %v1955, %v1995
  %1997 = vmatmul.f32.gmra.mxu0 %v689
  %v1998 = vpop.f32.mrf.mxu0
  %v1999 = vadd.f32 %v1958, %v1998
  %2000 = vmatmul.f32.gmra.mxu0 %v715
  %v2001 = vpop.f32.mrf.mxu0
  %v2002 = vadd.f32 %v1961, %v2001
  %2003 = vmatmul.f32.gmra.mxu0 %v741
  %v2004 = vpop.f32.mrf.mxu0
  %v2005 = vadd.f32 %v1964, %v2004
  %2006 = vmatmul.f32.gmra.mxu0 %v767
  %v2007 = vpop.f32.mrf.mxu0
  %v2008 = vadd.f32 %v1967, %v2007
  %2009 = vdwg.mxu0
  %2010 = vmatpush.msra.mxu0 %v1109
  %2011 = vmatpush.msra.mxu0 %v1108
  %2012 = vmatpush.msra.mxu0 %v1107
  %2013 = vmatpush.msra.mxu0 %v1106
  %2014 = vmatpush.msra.mxu0 %v1105
  %2015 = vmatpush.msra.mxu0 %v1104
  %2016 = vmatpush.msra.mxu0 %v1103
  %2017 = vmatpush.msra.mxu0 %v1102
  %2018 = vmatpush.msra.mxu0 %v1101
  %2019 = vmatpush.msra.mxu0 %v1100
  %2020 = vmatpush.msra.mxu0 %v1099
  %2021 = vmatpush.msra.mxu0 %v1098
  %2022 = vmatpush.msra.mxu0 %v1097
  %2023 = vmatpush.msra.mxu0 %v1096
  %2024 = vmatpush.msra.mxu0 %v1095
  %2025 = vmatpush.msra.mxu0 %v1094
  %2026 = vmatmul.f32.gmra.mxu0 %v586
  %v2027 = vpop.f32.mrf.mxu0
  %v2028 = vadd.f32 %v1987, %v2027
  %2029 = vmatmul.f32.gmra.mxu0 %v612
  %v2030 = vpop.f32.mrf.mxu0
  %v2031 = vadd.f32 %v1990, %v2030
  %2032 = vmatmul.f32.gmra.mxu0 %v638
  %v2033 = vpop.f32.mrf.mxu0
  %v2034 = vadd.f32 %v1993, %v2033
  %2035 = vmatmul.f32.gmra.mxu0 %v664
  %v2036 = vpop.f32.mrf.mxu0
  %v2037 = vadd.f32 %v1996, %v2036
  %2038 = vmatmul.f32.gmra.mxu0 %v690
  %v2039 = vpop.f32.mrf.mxu0
  %v2040 = vadd.f32 %v1999, %v2039
  %2041 = vmatmul.f32.gmra.mxu0 %v716
  %v2042 = vpop.f32.mrf.mxu0
  %v2043 = vadd.f32 %v2002, %v2042
  %2044 = vmatmul.f32.gmra.mxu0 %v742
  %v2045 = vpop.f32.mrf.mxu0
  %v2046 = vadd.f32 %v2005, %v2045
  %2047 = vmatmul.f32.gmra.mxu0 %v768
  %v2048 = vpop.f32.mrf.mxu0
  %v2049 = vadd.f32 %v2008, %v2048
  %2050 = vdwg.mxu0
  %2051 = vmatpush.msra.mxu0 %v1125
  %2052 = vmatpush.msra.mxu0 %v1124
  %2053 = vmatpush.msra.mxu0 %v1123
  %2054 = vmatpush.msra.mxu0 %v1122
  %2055 = vmatpush.msra.mxu0 %v1121
  %2056 = vmatpush.msra.mxu0 %v1120
  %2057 = vmatpush.msra.mxu0 %v1119
  %2058 = vmatpush.msra.mxu0 %v1118
  %2059 = vmatpush.msra.mxu0 %v1117
  %2060 = vmatpush.msra.mxu0 %v1116
  %2061 = vmatpush.msra.mxu0 %v1115
  %2062 = vmatpush.msra.mxu0 %v1114
  %2063 = vmatpush.msra.mxu0 %v1113
  %2064 = vmatpush.msra.mxu0 %v1112
  %2065 = vmatpush.msra.mxu0 %v1111
  %2066 = vmatpush.msra.mxu0 %v1110
  %2067 = vmatmul.f32.gmra.mxu0 %v587
  %v2068 = vpop.f32.mrf.mxu0
  %v2069 = vadd.f32 %v2028, %v2068
  %2070 = vmatmul.f32.gmra.mxu0 %v613
  %v2071 = vpop.f32.mrf.mxu0
  %v2072 = vadd.f32 %v2031, %v2071
  %2073 = vmatmul.f32.gmra.mxu0 %v639
  %v2074 = vpop.f32.mrf.mxu0
  %v2075 = vadd.f32 %v2034, %v2074
  %2076 = vmatmul.f32.gmra.mxu0 %v665
  %v2077 = vpop.f32.mrf.mxu0
  %v2078 = vadd.f32 %v2037, %v2077
  %2079 = vmatmul.f32.gmra.mxu0 %v691
  %v2080 = vpop.f32.mrf.mxu0
  %v2081 = vadd.f32 %v2040, %v2080
  %2082 = vmatmul.f32.gmra.mxu0 %v717
  %v2083 = vpop.f32.mrf.mxu0
  %v2084 = vadd.f32 %v2043, %v2083
  %2085 = vmatmul.f32.gmra.mxu0 %v743
  %v2086 = vpop.f32.mrf.mxu0
  %v2087 = vadd.f32 %v2046, %v2086
  %2088 = vmatmul.f32.gmra.mxu0 %v769
  %v2089 = vpop.f32.mrf.mxu0
  %v2090 = vadd.f32 %v2049, %v2089
  %2091 = vdwg.mxu0
  %2092 = vmatpush.msra.mxu0 %v1141
  %2093 = vmatpush.msra.mxu0 %v1140
  %2094 = vmatpush.msra.mxu0 %v1139
  %2095 = vmatpush.msra.mxu0 %v1138
  %2096 = vmatpush.msra.mxu0 %v1137
  %2097 = vmatpush.msra.mxu0 %v1136
  %2098 = vmatpush.msra.mxu0 %v1135
  %2099 = vmatpush.msra.mxu0 %v1134
  %2100 = vmatpush.msra.mxu0 %v1133
  %2101 = vmatpush.msra.mxu0 %v1132
  %2102 = vmatpush.msra.mxu0 %v1131
  %2103 = vmatpush.msra.mxu0 %v1130
  %2104 = vmatpush.msra.mxu0 %v1129
  %2105 = vmatpush.msra.mxu0 %v1128
  %2106 = vmatpush.msra.mxu0 %v1127
  %2107 = vmatpush.msra.mxu0 %v1126
  %2108 = vmatmul.f32.gmra.mxu0 %v588
  %v2109 = vpop.f32.mrf.mxu0
  %v2110 = vadd.f32 %v2069, %v2109
  %2111 = vmatmul.f32.gmra.mxu0 %v614
  %v2112 = vpop.f32.mrf.mxu0
  %v2113 = vadd.f32 %v2072, %v2112
  %2114 = vmatmul.f32.gmra.mxu0 %v640
  %v2115 = vpop.f32.mrf.mxu0
  %v2116 = vadd.f32 %v2075, %v2115
  %2117 = vmatmul.f32.gmra.mxu0 %v666
  %v2118 = vpop.f32.mrf.mxu0
  %v2119 = vadd.f32 %v2078, %v2118
  %2120 = vmatmul.f32.gmra.mxu0 %v692
  %v2121 = vpop.f32.mrf.mxu0
  %v2122 = vadd.f32 %v2081, %v2121
  %2123 = vmatmul.f32.gmra.mxu0 %v718
  %v2124 = vpop.f32.mrf.mxu0
  %v2125 = vadd.f32 %v2084, %v2124
  %2126 = vmatmul.f32.gmra.mxu0 %v744
  %v2127 = vpop.f32.mrf.mxu0
  %v2128 = vadd.f32 %v2087, %v2127
  %2129 = vmatmul.f32.gmra.mxu0 %v770
  %v2130 = vpop.f32.mrf.mxu0
  %v2131 = vadd.f32 %v2090, %v2130
  %2132 = vdwg.mxu0
  %2133 = vmatpush.msra.mxu0 %v1157
  %2134 = vmatpush.msra.mxu0 %v1156
  %2135 = vmatpush.msra.mxu0 %v1155
  %2136 = vmatpush.msra.mxu0 %v1154
  %2137 = vmatpush.msra.mxu0 %v1153
  %2138 = vmatpush.msra.mxu0 %v1152
  %2139 = vmatpush.msra.mxu0 %v1151
  %2140 = vmatpush.msra.mxu0 %v1150
  %2141 = vmatpush.msra.mxu0 %v1149
  %2142 = vmatpush.msra.mxu0 %v1148
  %2143 = vmatpush.msra.mxu0 %v1147
  %2144 = vmatpush.msra.mxu0 %v1146
  %2145 = vmatpush.msra.mxu0 %v1145
  %2146 = vmatpush.msra.mxu0 %v1144
  %2147 = vmatpush.msra.mxu0 %v1143
  %2148 = vmatpush.msra.mxu0 %v1142
  %2149 = vmatmul.f32.gmra.mxu0 %v589
  %v2150 = vpop.f32.mrf.mxu0
  %v2151 = vadd.f32 %v2110, %v2150
  %2152 = vmatmul.f32.gmra.mxu0 %v615
  %v2153 = vpop.f32.mrf.mxu0
  %v2154 = vadd.f32 %v2113, %v2153
  %2155 = vmatmul.f32.gmra.mxu0 %v641
  %v2156 = vpop.f32.mrf.mxu0
  %v2157 = vadd.f32 %v2116, %v2156
  %2158 = vmatmul.f32.gmra.mxu0 %v667
  %v2159 = vpop.f32.mrf.mxu0
  %v2160 = vadd.f32 %v2119, %v2159
  %2161 = vmatmul.f32.gmra.mxu0 %v693
  %v2162 = vpop.f32.mrf.mxu0
  %v2163 = vadd.f32 %v2122, %v2162
  %2164 = vmatmul.f32.gmra.mxu0 %v719
  %v2165 = vpop.f32.mrf.mxu0
  %v2166 = vadd.f32 %v2125, %v2165
  %2167 = vmatmul.f32.gmra.mxu0 %v745
  %v2168 = vpop.f32.mrf.mxu0
  %v2169 = vadd.f32 %v2128, %v2168
  %2170 = vmatmul.f32.gmra.mxu0 %v771
  %v2171 = vpop.f32.mrf.mxu0
  %v2172 = vadd.f32 %v2131, %v2171
  %2173 = vdwg.mxu0
  %2174 = vmatpush.msra.mxu0 %v1173
  %2175 = vmatpush.msra.mxu0 %v1172
  %2176 = vmatpush.msra.mxu0 %v1171
  %2177 = vmatpush.msra.mxu0 %v1170
  %2178 = vmatpush.msra.mxu0 %v1169
  %2179 = vmatpush.msra.mxu0 %v1168
  %2180 = vmatpush.msra.mxu0 %v1167
  %2181 = vmatpush.msra.mxu0 %v1166
  %2182 = vmatpush.msra.mxu0 %v1165
  %2183 = vmatpush.msra.mxu0 %v1164
  %2184 = vmatpush.msra.mxu0 %v1163
  %2185 = vmatpush.msra.mxu0 %v1162
  %2186 = vmatpush.msra.mxu0 %v1161
  %2187 = vmatpush.msra.mxu0 %v1160
  %2188 = vmatpush.msra.mxu0 %v1159
  %2189 = vmatpush.msra.mxu0 %v1158
  %2190 = vmatmul.f32.gmra.mxu0 %v590
  %v2191 = vpop.f32.mrf.mxu0
  %v2192 = vadd.f32 %v2151, %v2191
  %2193 = vmatmul.f32.gmra.mxu0 %v616
  %v2194 = vpop.f32.mrf.mxu0
  %v2195 = vadd.f32 %v2154, %v2194
  %2196 = vmatmul.f32.gmra.mxu0 %v642
  %v2197 = vpop.f32.mrf.mxu0
  %v2198 = vadd.f32 %v2157, %v2197
  %2199 = vmatmul.f32.gmra.mxu0 %v668
  %v2200 = vpop.f32.mrf.mxu0
  %v2201 = vadd.f32 %v2160, %v2200
  %2202 = vmatmul.f32.gmra.mxu0 %v694
  %v2203 = vpop.f32.mrf.mxu0
  %v2204 = vadd.f32 %v2163, %v2203
  %2205 = vmatmul.f32.gmra.mxu0 %v720
  %v2206 = vpop.f32.mrf.mxu0
  %v2207 = vadd.f32 %v2166, %v2206
  %2208 = vmatmul.f32.gmra.mxu0 %v746
  %v2209 = vpop.f32.mrf.mxu0
  %v2210 = vadd.f32 %v2169, %v2209
  %2211 = vmatmul.f32.gmra.mxu0 %v772
  %v2212 = vpop.f32.mrf.mxu0
  %v2213 = vadd.f32 %v2172, %v2212
  %2214 = vdwg.mxu0
  %2215 = vmatpush.msra.mxu0 %v1189
  %2216 = vmatpush.msra.mxu0 %v1188
  %2217 = vmatpush.msra.mxu0 %v1187
  %2218 = vmatpush.msra.mxu0 %v1186
  %2219 = vmatpush.msra.mxu0 %v1185
  %2220 = vmatpush.msra.mxu0 %v1184
  %2221 = vmatpush.msra.mxu0 %v1183
  %2222 = vmatpush.msra.mxu0 %v1182
  %2223 = vmatpush.msra.mxu0 %v1181
  %2224 = vmatpush.msra.mxu0 %v1180
  %2225 = vmatpush.msra.mxu0 %v1179
  %2226 = vmatpush.msra.mxu0 %v1178
  %2227 = vmatpush.msra.mxu0 %v1177
  %2228 = vmatpush.msra.mxu0 %v1176
  %2229 = vmatpush.msra.mxu0 %v1175
  %2230 = vmatpush.msra.mxu0 %v1174
  %2231 = vmatmul.f32.gmra.mxu0 %v591
  %v2232 = vpop.f32.mrf.mxu0
  %v2233 = vadd.f32 %v2192, %v2232
  %2234 = vmatmul.f32.gmra.mxu0 %v617
  %v2235 = vpop.f32.mrf.mxu0
  %v2236 = vadd.f32 %v2195, %v2235
  %2237 = vmatmul.f32.gmra.mxu0 %v643
  %v2238 = vpop.f32.mrf.mxu0
  %v2239 = vadd.f32 %v2198, %v2238
  %2240 = vmatmul.f32.gmra.mxu0 %v669
  %v2241 = vpop.f32.mrf.mxu0
  %v2242 = vadd.f32 %v2201, %v2241
  %2243 = vmatmul.f32.gmra.mxu0 %v695
  %v2244 = vpop.f32.mrf.mxu0
  %v2245 = vadd.f32 %v2204, %v2244
  %2246 = vmatmul.f32.gmra.mxu0 %v721
  %v2247 = vpop.f32.mrf.mxu0
  %v2248 = vadd.f32 %v2207, %v2247
  %2249 = vmatmul.f32.gmra.mxu0 %v747
  %v2250 = vpop.f32.mrf.mxu0
  %v2251 = vadd.f32 %v2210, %v2250
  %2252 = vmatmul.f32.gmra.mxu0 %v773
  %v2253 = vpop.f32.mrf.mxu0
  %v2254 = vadd.f32 %v2213, %v2253
  %2255 = vdwg.mxu0
  %v2256 = vmax.f32 %v2233, 0.0
  %v2257 = vmax.f32 %v2236, 0.0
  %v2258 = vmax.f32 %v2239, 0.0
  %v2259 = vmax.f32 %v2242, 0.0
  %v2260 = vmax.f32 %v2245, 0.0
  %v2261 = vmax.f32 %v2248, 0.0
  %v2262 = vmax.f32 %v2251, 0.0
  %v2263 = vmax.f32 %v2254, 0.0
  %v2264 = vld [vmem:[%s5] sm:$0xff]
  %v2265 = vld [vmem:[%s5 + $0x8] sm:$0xff]
  %v2266 = vld [vmem:[%s5 + $0x10] sm:$0xff]
  %v2267 = vld [vmem:[%s5 + $0x18] sm:$0xff]
  %v2268 = vld [vmem:[%s5 + $0x20] sm:$0xff]
  %v2269 = vld [vmem:[%s5 + $0x28] sm:$0xff]
  %v2270 = vld [vmem:[%s5 + $0x30] sm:$0xff]
  %v2271 = vld [vmem:[%s5 + $0x38] sm:$0xff]
  %2273 = vset.pattern.permute.xlu0 0
  %2274 = vperm.xlu0 %2273, %v2264
  %v2275 = vpop.permute.xlu0 %2274
  %2278 = vset.pattern.permute.xlu0 0
  %2279 = vperm.xlu0 %2278, %v2265
  %v2280 = vpop.permute.xlu0 %2279
  %2283 = vset.pattern.permute.xlu0 0
  %2284 = vperm.xlu0 %2283, %v2266
  %v2285 = vpop.permute.xlu0 %2284
  %2288 = vset.pattern.permute.xlu0 0
  %2289 = vperm.xlu0 %2288, %v2267
  %v2290 = vpop.permute.xlu0 %2289
  %2293 = vset.pattern.permute.xlu0 0
  %2294 = vperm.xlu0 %2293, %v2268
  %v2295 = vpop.permute.xlu0 %2294
  %2298 = vset.pattern.permute.xlu0 0
  %2299 = vperm.xlu0 %2298, %v2269
  %v2300 = vpop.permute.xlu0 %2299
  %2303 = vset.pattern.permute.xlu0 0
  %2304 = vperm.xlu0 %2303, %v2270
  %v2305 = vpop.permute.xlu0 %2304
  %2308 = vset.pattern.permute.xlu0 0
  %2309 = vperm.xlu0 %2308, %v2271
  %v2310 = vpop.permute.xlu0 %2309
  %v2312 = vmul.f32 %v2256, %v2275
  %v2313 = vmul.f32 %v2257, %v2280
  %v2314 = vmul.f32 %v2258, %v2285
  %v2315 = vmul.f32 %v2259, %v2290
  %v2316 = vmul.f32 %v2260, %v2295
  %v2317 = vmul.f32 %v2261, %v2300
  %v2318 = vmul.f32 %v2262, %v2305
  %v2319 = vmul.f32 %v2263, %v2310
  %2320 = vset.pattern.permute.xlu0 1
  %2321 = vperm.xlu0 %2320, %v2264
  %v2322 = vpop.permute.xlu0 %2321
  %2324 = vset.pattern.permute.xlu0 1
  %2325 = vperm.xlu0 %2324, %v2265
  %v2326 = vpop.permute.xlu0 %2325
  %2328 = vset.pattern.permute.xlu0 1
  %2329 = vperm.xlu0 %2328, %v2266
  %v2330 = vpop.permute.xlu0 %2329
  %2332 = vset.pattern.permute.xlu0 1
  %2333 = vperm.xlu0 %2332, %v2267
  %v2334 = vpop.permute.xlu0 %2333
  %2336 = vset.pattern.permute.xlu0 1
  %2337 = vperm.xlu0 %2336, %v2268
  %v2338 = vpop.permute.xlu0 %2337
  %2340 = vset.pattern.permute.xlu0 1
  %2341 = vperm.xlu0 %2340, %v2269
  %v2342 = vpop.permute.xlu0 %2341
  %2344 = vset.pattern.permute.xlu0 1
  %2345 = vperm.xlu0 %2344, %v2270
  %v2346 = vpop.permute.xlu0 %2345
  %2348 = vset.pattern.permute.xlu0 1
  %2349 = vperm.xlu0 %2348, %v2271
  %v2350 = vpop.permute.xlu0 %2349
  %v2352 = vadd.f32 %v2312, %v2322
  %v2353 = vadd.f32 %v2313, %v2326
  %v2354 = vadd.f32 %v2314, %v2330
  %v2355 = vadd.f32 %v2315, %v2334
  %v2356 = vadd.f32 %v2316, %v2338
  %v2357 = vadd.f32 %v2317, %v2342
  %v2358 = vadd.f32 %v2318, %v2346
  %v2359 = vadd.f32 %v2319, %v2350
  %vm2360 = vcmask 146432
  %2361 = vst.msk [vmem:[%s7] sm:$0xff] %vm2360, %v2352
  %2362 = vst.msk [vmem:[%s7 + $0x8] sm:$0xff] %vm2360, %v2353
  %2363 = vst.msk [vmem:[%s7 + $0x10] sm:$0xff] %vm2360, %v2354
  %2364 = vst.msk [vmem:[%s7 + $0x18] sm:$0xff] %vm2360, %v2355
  %2365 = vst.msk [vmem:[%s7 + $0x20] sm:$0xff] %vm2360, %v2356
  %2366 = vst.msk [vmem:[%s7 + $0x28] sm:$0xff] %vm2360, %v2357
  %2367 = vst.msk [vmem:[%s7 + $0x30] sm:$0xff] %vm2360, %v2358
  %2368 = vst.msk [vmem:[%s7 + $0x38] sm:$0xff] %vm2360, %v2359
  // Predicated region
  $region26: #{hsi_e_forward.4} parent=0 // pred_check
    _
  $region27: #{hsi_e_forward.4} parent=0 // pred_check_branch
    %2370 = sbr.rel (0) target = $region29
  $region28: #{hsi_e_forward.4} parent=0 // pred_region
    _
  $region29: #{hsi_e_forward.4} parent=0 // pred_fallthru
    _
  // Predicated region
  $region30: #{hsi_e_forward.4} parent=0 // pred_check
    _
  $region31: #{hsi_e_forward.4} parent=0 // pred_check_branch
    %2372 = sbr.rel (0) target = $region33
  $region32: #{hsi_e_forward.4} parent=0 // pred_region
    _
  $region33: #{hsi_e_forward.4} parent=0 // pred_fallthru
    _
  // Predicated region
  $region34: #{hsi_e_forward.4} parent=0 // pred_check
    _
  $region35: #{hsi_e_forward.4} parent=0 // pred_check_branch
    %2374 = sbr.rel (0) target = $region37
  $region36: #{hsi_e_forward.4} parent=0 // pred_region
    _
  $region37: #{hsi_e_forward.4} parent=0 // pred_fallthru
    _
  // Predicated region
  $region38: #{hsi_e_forward.4} parent=0 // pred_check
    _
  $region39: #{hsi_e_forward.4} parent=0 // pred_check_branch
    %2376 = sbr.rel (0) target = $region41
  $region40: #{hsi_e_forward.4} parent=0 // pred_region
    _
  $region41: #{hsi_e_forward.4} parent=0 // pred_fallthru
    _

// kernel: hsi_e_forward.5
$region0: #{hsi_e_forward.5}
  #allocation0 [shape = 'u32[]', space=smem, size = 0x4, offset = 0x4, fixed_abs, tag = 'smem constant byte address 0x4 - core index']
  #allocation1 [shape = 'u32[72,128]{1,0:T(1,128)}', space=vmem, size = 0x9000, scoped, tag = 'internal scratch']
  %s0 = inlined_call_operand.vmem [shape: f32[32,512], index: 0, kind: input, shape index: {}]
  %s1 = inlined_call_operand.vmem [shape: f32[512,216], index: 1, kind: input, shape index: {}]
  %s2 = inlined_call_operand.vmem [shape: f32[32,2], index: 2, kind: input, shape index: {}]
  %s3 = inlined_call_operand.vmem [shape: f32[64,2048], index: 3, kind: input, shape index: {}]
  %s4 = inlined_call_operand.vmem [shape: f32[2048,18], index: 4, kind: input, shape index: {}]
  %s5 = inlined_call_operand.vmem [shape: f32[64,2], index: 5, kind: input, shape index: {}]
  %s6 = inlined_call_operand.vmem [shape: f32[12,64,32], index: 6, kind: input, shape index: {}]
  %s7 = inlined_call_operand.vmem [shape: f32[64,3], index: 7, kind: input, shape index: {}]
  %s8 = inlined_call_operand.vmem [shape: f32[64,18], index: 8, kind: output, shape index: {0}]
  %s9 = inlined_call_operand.vmem [shape: f32[64,18], index: 9, kind: output, shape index: {1}]
  %10 = xla_tuple %s8, %s9
  %s11 = sld [smem:[#allocation0]]
  $region50: #{hsi_e_forward.5} parent=0
    _
  %s13 = ssub.s32 1, %s11
  %s14 = scalar_select 0, %s13, %s11
  // Predicated region
  $region2: #{hsi_e_forward.5} parent=0 // pred_check
    _
  $region3: #{hsi_e_forward.5} parent=0 // pred_check_branch
    %16 = sbr.rel (0) target = $region5
  $region4: #{hsi_e_forward.5} parent=0 // pred_region
    _
  $region5: #{hsi_e_forward.5} parent=0 // pred_fallthru
    _
  // Predicated region
  $region6: #{hsi_e_forward.5} parent=0 // pred_check
    _
  $region7: #{hsi_e_forward.5} parent=0 // pred_check_branch
    %18 = sbr.rel (0) target = $region9
  $region8: #{hsi_e_forward.5} parent=0 // pred_region
    _
  $region9: #{hsi_e_forward.5} parent=0 // pred_fallthru
    _
  // Predicated region
  $region10: #{hsi_e_forward.5} parent=0 // pred_check
    _
  $region11: #{hsi_e_forward.5} parent=0 // pred_check_branch
    %20 = sbr.rel (0) target = $region13
  $region12: #{hsi_e_forward.5} parent=0 // pred_region
    _
  $region13: #{hsi_e_forward.5} parent=0 // pred_fallthru
    _
  // Predicated region
  $region14: #{hsi_e_forward.5} parent=0 // pred_check
    _
  $region15: #{hsi_e_forward.5} parent=0 // pred_check_branch
    %22 = sbr.rel (0) target = $region17
  $region16: #{hsi_e_forward.5} parent=0 // pred_region
    _
  $region17: #{hsi_e_forward.5} parent=0 // pred_fallthru
    _
  // Predicated region
  $region18: #{hsi_e_forward.5} parent=0 // pred_check
    _
  $region19: #{hsi_e_forward.5} parent=0 // pred_check_branch
    %24 = sbr.rel (0) target = $region21
  $region20: #{hsi_e_forward.5} parent=0 // pred_region
    _
  $region21: #{hsi_e_forward.5} parent=0 // pred_fallthru
    _
  // Predicated region
  $region22: #{hsi_e_forward.5} parent=0 // pred_check
    _
  $region23: #{hsi_e_forward.5} parent=0 // pred_check_branch
    %26 = sbr.rel (0) target = $region25
  $region24: #{hsi_e_forward.5} parent=0 // pred_region
    _
  $region25: #{hsi_e_forward.5} parent=0 // pred_fallthru
    _
  // Predicated region
  $region26: #{hsi_e_forward.5} parent=0 // pred_check
    _
  $region27: #{hsi_e_forward.5} parent=0 // pred_check_branch
    %28 = sbr.rel (0) target = $region29
  $region28: #{hsi_e_forward.5} parent=0 // pred_region
    _
  $region29: #{hsi_e_forward.5} parent=0 // pred_fallthru
    _
  // Predicated region
  $region30: #{hsi_e_forward.5} parent=0 // pred_check
    _
  $region31: #{hsi_e_forward.5} parent=0 // pred_check_branch
    %30 = sbr.rel (0) target = $region33
  $region32: #{hsi_e_forward.5} parent=0 // pred_region
    _
  $region33: #{hsi_e_forward.5} parent=0 // pred_fallthru
    _
  %v31 = vld [vmem:[%s0] sm:$0xff]
  %v32 = vld [vmem:[%s0 + $0x8] sm:$0xff]
  %v33 = vld [vmem:[%s0 + $0x10] sm:$0xff]
  %v34 = vld [vmem:[%s0 + $0x18] sm:$0xff]
  %v35 = vld [vmem:[%s0 + $0x20] sm:$0xff]
  %v36 = vld [vmem:[%s0 + $0x28] sm:$0xff]
  %v37 = vld [vmem:[%s0 + $0x30] sm:$0xff]
  %v38 = vld [vmem:[%s0 + $0x38] sm:$0xff]
  %v39 = vld [vmem:[%s0 + $0x40] sm:$0xff]
  %v40 = vld [vmem:[%s0 + $0x48] sm:$0xff]
  %v41 = vld [vmem:[%s0 + $0x50] sm:$0xff]
  %v42 = vld [vmem:[%s0 + $0x58] sm:$0xff]
  %v43 = vld [vmem:[%s0 + $0x60] sm:$0xff]
  %v44 = vld [vmem:[%s0 + $0x68] sm:$0xff]
  %v45 = vld [vmem:[%s0 + $0x70] sm:$0xff]
  %v46 = vld [vmem:[%s0 + $0x78] sm:$0xff]
  %v47 = vld [vmem:[%s1] sm:$0xff]
  %v48 = vld [vmem:[%s1 + $0x8] sm:$0xff]
  %v49 = vld [vmem:[%s1 + $0x10] sm:$0xff]
  %v50 = vld [vmem:[%s1 + $0x18] sm:$0xff]
  %v51 = vld [vmem:[%s1 + $0x20] sm:$0xff]
  %v52 = vld [vmem:[%s1 + $0x28] sm:$0xff]
  %v53 = vld [vmem:[%s1 + $0x30] sm:$0xff]
  %v54 = vld [vmem:[%s1 + $0x38] sm:$0xff]
  %v55 = vld [vmem:[%s1 + $0x40] sm:$0xff]
  %v56 = vld [vmem:[%s1 + $0x48] sm:$0xff]
  %v57 = vld [vmem:[%s1 + $0x50] sm:$0xff]
  %v58 = vld [vmem:[%s1 + $0x58] sm:$0xff]
  %v59 = vld [vmem:[%s1 + $0x60] sm:$0xff]
  %v60 = vld [vmem:[%s1 + $0x68] sm:$0xff]
  %v61 = vld [vmem:[%s1 + $0x70] sm:$0xff]
  %v62 = vld [vmem:[%s1 + $0x78] sm:$0xff]
  %v63 = vld [vmem:[%s1 + $0x80] sm:$0xff]
  %v64 = vld [vmem:[%s1 + $0x88] sm:$0xff]
  %v65 = vld [vmem:[%s1 + $0x90] sm:$0xff]
  %v66 = vld [vmem:[%s1 + $0x98] sm:$0xff]
  %v67 = vld [vmem:[%s1 + $0xa0] sm:$0xff]
  %v68 = vld [vmem:[%s1 + $0xa8] sm:$0xff]
  %v69 = vld [vmem:[%s1 + $0xb0] sm:$0xff]
  %v70 = vld [vmem:[%s1 + $0xb8] sm:$0xff]
  %v71 = vld [vmem:[%s1 + $0xc0] sm:$0xff]
  %v72 = vld [vmem:[%s1 + $0xc8] sm:$0xff]
  %v73 = vld [vmem:[%s1 + $0xd0] sm:$0xff]
  %v74 = vld [vmem:[%s1 + $0xd8] sm:$0xff]
  %v75 = vld [vmem:[%s1 + $0xe0] sm:$0xff]
  %v76 = vld [vmem:[%s1 + $0xe8] sm:$0xff]
  %v77 = vld [vmem:[%s1 + $0xf0] sm:$0xff]
  %v78 = vld [vmem:[%s1 + $0xf8] sm:$0xff]
  %v79 = vld [vmem:[%s1 + $0x100] sm:$0xff]
  %v80 = vld [vmem:[%s1 + $0x108] sm:$0xff]
  %v81 = vld [vmem:[%s1 + $0x110] sm:$0xff]
  %v82 = vld [vmem:[%s1 + $0x118] sm:$0xff]
  %v83 = vld [vmem:[%s1 + $0x120] sm:$0xff]
  %v84 = vld [vmem:[%s1 + $0x128] sm:$0xff]
  %v85 = vld [vmem:[%s1 + $0x130] sm:$0xff]
  %v86 = vld [vmem:[%s1 + $0x138] sm:$0xff]
  %v87 = vld [vmem:[%s1 + $0x140] sm:$0xff]
  %v88 = vld [vmem:[%s1 + $0x148] sm:$0xff]
  %v89 = vld [vmem:[%s1 + $0x150] sm:$0xff]
  %v90 = vld [vmem:[%s1 + $0x158] sm:$0xff]
  %v91 = vld [vmem:[%s1 + $0x160] sm:$0xff]
  %v92 = vld [vmem:[%s1 + $0x168] sm:$0xff]
  %v93 = vld [vmem:[%s1 + $0x170] sm:$0xff]
  %v94 = vld [vmem:[%s1 + $0x178] sm:$0xff]
  %v95 = vld [vmem:[%s1 + $0x180] sm:$0xff]
  %v96 = vld [vmem:[%s1 + $0x188] sm:$0xff]
  %v97 = vld [vmem:[%s1 + $0x190] sm:$0xff]
  %v98 = vld [vmem:[%s1 + $0x198] sm:$0xff]
  %v99 = vld [vmem:[%s1 + $0x1a0] sm:$0xff]
  %v100 = vld [vmem:[%s1 + $0x1a8] sm:$0xff]
  %v101 = vld [vmem:[%s1 + $0x1b0] sm:$0xff]
  %v102 = vld [vmem:[%s1 + $0x1b8] sm:$0xff]
  %v103 = vld [vmem:[%s1 + $0x1c0] sm:$0xff]
  %v104 = vld [vmem:[%s1 + $0x1c8] sm:$0xff]
  %v105 = vld [vmem:[%s1 + $0x1d0] sm:$0xff]
  %v106 = vld [vmem:[%s1 + $0x1d8] sm:$0xff]
  %v107 = vld [vmem:[%s1 + $0x1e0] sm:$0xff]
  %v108 = vld [vmem:[%s1 + $0x1e8] sm:$0xff]
  %v109 = vld [vmem:[%s1 + $0x1f0] sm:$0xff]
  %v110 = vld [vmem:[%s1 + $0x1f8] sm:$0xff]
  %v111 = vld [vmem:[%s1 + $0x200] sm:$0xff]
  %v112 = vld [vmem:[%s1 + $0x208] sm:$0xff]
  %v113 = vld [vmem:[%s1 + $0x210] sm:$0xff]
  %v114 = vld [vmem:[%s1 + $0x218] sm:$0xff]
  %v115 = vld [vmem:[%s1 + $0x220] sm:$0xff]
  %v116 = vld [vmem:[%s1 + $0x228] sm:$0xff]
  %v117 = vld [vmem:[%s1 + $0x230] sm:$0xff]
  %v118 = vld [vmem:[%s1 + $0x238] sm:$0xff]
  %v119 = vld [vmem:[%s1 + $0x240] sm:$0xff]
  %v120 = vld [vmem:[%s1 + $0x248] sm:$0xff]
  %v121 = vld [vmem:[%s1 + $0x250] sm:$0xff]
  %v122 = vld [vmem:[%s1 + $0x258] sm:$0xff]
  %v123 = vld [vmem:[%s1 + $0x260] sm:$0xff]
  %v124 = vld [vmem:[%s1 + $0x268] sm:$0xff]
  %v125 = vld [vmem:[%s1 + $0x270] sm:$0xff]
  %v126 = vld [vmem:[%s1 + $0x278] sm:$0xff]
  %v127 = vld [vmem:[%s1 + $0x280] sm:$0xff]
  %v128 = vld [vmem:[%s1 + $0x288] sm:$0xff]
  %v129 = vld [vmem:[%s1 + $0x290] sm:$0xff]
  %v130 = vld [vmem:[%s1 + $0x298] sm:$0xff]
  %v131 = vld [vmem:[%s1 + $0x2a0] sm:$0xff]
  %v132 = vld [vmem:[%s1 + $0x2a8] sm:$0xff]
  %v133 = vld [vmem:[%s1 + $0x2b0] sm:$0xff]
  %v134 = vld [vmem:[%s1 + $0x2b8] sm:$0xff]
  %v135 = vld [vmem:[%s1 + $0x2c0] sm:$0xff]
  %v136 = vld [vmem:[%s1 + $0x2c8] sm:$0xff]
  %v137 = vld [vmem:[%s1 + $0x2d0] sm:$0xff]
  %v138 = vld [vmem:[%s1 + $0x2d8] sm:$0xff]
  %v139 = vld [vmem:[%s1 + $0x2e0] sm:$0xff]
  %v140 = vld [vmem:[%s1 + $0x2e8] sm:$0xff]
  %v141 = vld [vmem:[%s1 + $0x2f0] sm:$0xff]
  %v142 = vld [vmem:[%s1 + $0x2f8] sm:$0xff]
  %v143 = vld [vmem:[%s1 + $0x300] sm:$0xff]
  %v144 = vld [vmem:[%s1 + $0x308] sm:$0xff]
  %v145 = vld [vmem:[%s1 + $0x310] sm:$0xff]
  %v146 = vld [vmem:[%s1 + $0x318] sm:$0xff]
  %v147 = vld [vmem:[%s1 + $0x320] sm:$0xff]
  %v148 = vld [vmem:[%s1 + $0x328] sm:$0xff]
  %v149 = vld [vmem:[%s1 + $0x330] sm:$0xff]
  %v150 = vld [vmem:[%s1 + $0x338] sm:$0xff]
  %v151 = vld [vmem:[%s1 + $0x340] sm:$0xff]
  %v152 = vld [vmem:[%s1 + $0x348] sm:$0xff]
  %v153 = vld [vmem:[%s1 + $0x350] sm:$0xff]
  %v154 = vld [vmem:[%s1 + $0x358] sm:$0xff]
  %v155 = vld [vmem:[%s1 + $0x360] sm:$0xff]
  %v156 = vld [vmem:[%s1 + $0x368] sm:$0xff]
  %v157 = vld [vmem:[%s1 + $0x370] sm:$0xff]
  %v158 = vld [vmem:[%s1 + $0x378] sm:$0xff]
  %v159 = vld [vmem:[%s1 + $0x380] sm:$0xff]
  %v160 = vld [vmem:[%s1 + $0x388] sm:$0xff]
  %v161 = vld [vmem:[%s1 + $0x390] sm:$0xff]
  %v162 = vld [vmem:[%s1 + $0x398] sm:$0xff]
  %v163 = vld [vmem:[%s1 + $0x3a0] sm:$0xff]
  %v164 = vld [vmem:[%s1 + $0x3a8] sm:$0xff]
  %v165 = vld [vmem:[%s1 + $0x3b0] sm:$0xff]
  %v166 = vld [vmem:[%s1 + $0x3b8] sm:$0xff]
  %v167 = vld [vmem:[%s1 + $0x3c0] sm:$0xff]
  %v168 = vld [vmem:[%s1 + $0x3c8] sm:$0xff]
  %v169 = vld [vmem:[%s1 + $0x3d0] sm:$0xff]
  %v170 = vld [vmem:[%s1 + $0x3d8] sm:$0xff]
  %v171 = vld [vmem:[%s1 + $0x3e0] sm:$0xff]
  %v172 = vld [vmem:[%s1 + $0x3e8] sm:$0xff]
  %v173 = vld [vmem:[%s1 + $0x3f0] sm:$0xff]
  %v174 = vld [vmem:[%s1 + $0x3f8] sm:$0xff]
  %175 = vmatpush.msra.mxu0 %v77
  %176 = vmatpush.msra.mxu0 %v75
  %177 = vmatpush.msra.mxu0 %v73
  %178 = vmatpush.msra.mxu0 %v71
  %179 = vmatpush.msra.mxu0 %v69
  %180 = vmatpush.msra.mxu0 %v67
  %181 = vmatpush.msra.mxu0 %v65
  %182 = vmatpush.msra.mxu0 %v63
  %183 = vmatpush.msra.mxu0 %v61
  %184 = vmatpush.msra.mxu0 %v59
  %185 = vmatpush.msra.mxu0 %v57
  %186 = vmatpush.msra.mxu0 %v55
  %187 = vmatpush.msra.mxu0 %v53
  %188 = vmatpush.msra.mxu0 %v51
  %189 = vmatpush.msra.mxu0 %v49
  %190 = vmatpush.msra.mxu0 %v47
  %191 = vmatmul.f32.gmra.mxu0 %v31
  %v192 = vpop.f32.mrf.mxu0
  %v193 = vadd.f32 0.0, %v192
  %194 = vmatmul.f32.gmra.mxu0 %v35
  %v195 = vpop.f32.mrf.mxu0
  %v196 = vadd.f32 0.0, %v195
  %197 = vmatmul.f32.gmra.mxu0 %v39
  %v198 = vpop.f32.mrf.mxu0
  %v199 = vadd.f32 0.0, %v198
  %200 = vmatmul.f32.gmra.mxu0 %v43
  %v201 = vpop.f32.mrf.mxu0
  %v202 = vadd.f32 0.0, %v201
  %203 = vdwg.mxu0
  %204 = vmatpush.msra.mxu0 %v109
  %205 = vmatpush.msra.mxu0 %v107
  %206 = vmatpush.msra.mxu0 %v105
  %207 = vmatpush.msra.mxu0 %v103
  %208 = vmatpush.msra.mxu0 %v101
  %209 = vmatpush.msra.mxu0 %v99
  %210 = vmatpush.msra.mxu0 %v97
  %211 = vmatpush.msra.mxu0 %v95
  %212 = vmatpush.msra.mxu0 %v93
  %213 = vmatpush.msra.mxu0 %v91
  %214 = vmatpush.msra.mxu0 %v89
  %215 = vmatpush.msra.mxu0 %v87
  %216 = vmatpush.msra.mxu0 %v85
  %217 = vmatpush.msra.mxu0 %v83
  %218 = vmatpush.msra.mxu0 %v81
  %219 = vmatpush.msra.mxu0 %v79
  %220 = vmatmul.f32.gmra.mxu0 %v32
  %v221 = vpop.f32.mrf.mxu0
  %v222 = vadd.f32 %v193, %v221
  %223 = vmatmul.f32.gmra.mxu0 %v36
  %v224 = vpop.f32.mrf.mxu0
  %v225 = vadd.f32 %v196, %v224
  %226 = vmatmul.f32.gmra.mxu0 %v40
  %v227 = vpop.f32.mrf.mxu0
  %v228 = vadd.f32 %v199, %v227
  %229 = vmatmul.f32.gmra.mxu0 %v44
  %v230 = vpop.f32.mrf.mxu0
  %v231 = vadd.f32 %v202, %v230
  %232 = vdwg.mxu0
  %233 = vmatpush.msra.mxu0 %v141
  %234 = vmatpush.msra.mxu0 %v139
  %235 = vmatpush.msra.mxu0 %v137
  %236 = vmatpush.msra.mxu0 %v135
  %237 = vmatpush.msra.mxu0 %v133
  %238 = vmatpush.msra.mxu0 %v131
  %239 = vmatpush.msra.mxu0 %v129
  %240 = vmatpush.msra.mxu0 %v127
  %241 = vmatpush.msra.mxu0 %v125
  %242 = vmatpush.msra.mxu0 %v123
  %243 = vmatpush.msra.mxu0 %v121
  %244 = vmatpush.msra.mxu0 %v119
  %245 = vmatpush.msra.mxu0 %v117
  %246 = vmatpush.msra.mxu0 %v115
  %247 = vmatpush.msra.mxu0 %v113
  %248 = vmatpush.msra.mxu0 %v111
  %249 = vmatmul.f32.gmra.mxu0 %v33
  %v250 = vpop.f32.mrf.mxu0
  %v251 = vadd.f32 %v222, %v250
  %252 = vmatmul.f32.gmra.mxu0 %v37
  %v253 = vpop.f32.mrf.mxu0
  %v254 = vadd.f32 %v225, %v253
  %255 = vmatmul.f32.gmra.mxu0 %v41
  %v256 = vpop.f32.mrf.mxu0
  %v257 = vadd.f32 %v228, %v256
  %258 = vmatmul.f32.gmra.mxu0 %v45
  %v259 = vpop.f32.mrf.mxu0
  %v260 = vadd.f32 %v231, %v259
  %261 = vdwg.mxu0
  %262 = vmatpush.msra.mxu0 %v173
  %263 = vmatpush.msra.mxu0 %v171
  %264 = vmatpush.msra.mxu0 %v169
  %265 = vmatpush.msra.mxu0 %v167
  %266 = vmatpush.msra.mxu0 %v165
  %267 = vmatpush.msra.mxu0 %v163
  %268 = vmatpush.msra.mxu0 %v161
  %269 = vmatpush.msra.mxu0 %v159
  %270 = vmatpush.msra.mxu0 %v157
  %271 = vmatpush.msra.mxu0 %v155
  %272 = vmatpush.msra.mxu0 %v153
  %273 = vmatpush.msra.mxu0 %v151
  %274 = vmatpush.msra.mxu0 %v149
  %275 = vmatpush.msra.mxu0 %v147
  %276 = vmatpush.msra.mxu0 %v145
  %277 = vmatpush.msra.mxu0 %v143
  %278 = vmatmul.f32.gmra.mxu0 %v34
  %v279 = vpop.f32.mrf.mxu0
  %v280 = vadd.f32 %v251, %v279
  %281 = vmatmul.f32.gmra.mxu0 %v38
  %v282 = vpop.f32.mrf.mxu0
  %v283 = vadd.f32 %v254, %v282
  %284 = vmatmul.f32.gmra.mxu0 %v42
  %v285 = vpop.f32.mrf.mxu0
  %v286 = vadd.f32 %v257, %v285
  %287 = vmatmul.f32.gmra.mxu0 %v46
  %v288 = vpop.f32.mrf.mxu0
  %v289 = vadd.f32 %v260, %v288
  %290 = vdwg.mxu0
  %291 = vmatpush.msra.mxu0 %v78
  %292 = vmatpush.msra.mxu0 %v76
  %293 = vmatpush.msra.mxu0 %v74
  %294 = vmatpush.msra.mxu0 %v72
  %295 = vmatpush.msra.mxu0 %v70
  %296 = vmatpush.msra.mxu0 %v68
  %297 = vmatpush.msra.mxu0 %v66
  %298 = vmatpush.msra.mxu0 %v64
  %299 = vmatpush.msra.mxu0 %v62
  %300 = vmatpush.msra.mxu0 %v60
  %301 = vmatpush.msra.mxu0 %v58
  %302 = vmatpush.msra.mxu0 %v56
  %303 = vmatpush.msra.mxu0 %v54
  %304 = vmatpush.msra.mxu0 %v52
  %305 = vmatpush.msra.mxu0 %v50
  %306 = vmatpush.msra.mxu0 %v48
  %307 = vmatmul.f32.gmra.mxu0 %v31
  %v308 = vpop.f32.mrf.mxu0
  %v309 = vadd.f32 0.0, %v308
  %310 = vmatmul.f32.gmra.mxu0 %v35
  %v311 = vpop.f32.mrf.mxu0
  %v312 = vadd.f32 0.0, %v311
  %313 = vmatmul.f32.gmra.mxu0 %v39
  %v314 = vpop.f32.mrf.mxu0
  %v315 = vadd.f32 0.0, %v314
  %316 = vmatmul.f32.gmra.mxu0 %v43
  %v317 = vpop.f32.mrf.mxu0
  %v318 = vadd.f32 0.0, %v317
  %319 = vdwg.mxu0
  %320 = vmatpush.msra.mxu0 %v110
  %321 = vmatpush.msra.mxu0 %v108
  %322 = vmatpush.msra.mxu0 %v106
  %323 = vmatpush.msra.mxu0 %v104
  %324 = vmatpush.msra.mxu0 %v102
  %325 = vmatpush.msra.mxu0 %v100
  %326 = vmatpush.msra.mxu0 %v98
  %327 = vmatpush.msra.mxu0 %v96
  %328 = vmatpush.msra.mxu0 %v94
  %329 = vmatpush.msra.mxu0 %v92
  %330 = vmatpush.msra.mxu0 %v90
  %331 = vmatpush.msra.mxu0 %v88
  %332 = vmatpush.msra.mxu0 %v86
  %333 = vmatpush.msra.mxu0 %v84
  %334 = vmatpush.msra.mxu0 %v82
  %335 = vmatpush.msra.mxu0 %v80
  %336 = vmatmul.f32.gmra.mxu0 %v32
  %v337 = vpop.f32.mrf.mxu0
  %v338 = vadd.f32 %v309, %v337
  %339 = vmatmul.f32.gmra.mxu0 %v36
  %v340 = vpop.f32.mrf.mxu0
  %v341 = vadd.f32 %v312, %v340
  %342 = vmatmul.f32.gmra.mxu0 %v40
  %v343 = vpop.f32.mrf.mxu0
  %v344 = vadd.f32 %v315, %v343
  %345 = vmatmul.f32.gmra.mxu0 %v44
  %v346 = vpop.f32.mrf.mxu0
  %v347 = vadd.f32 %v318, %v346
  %348 = vdwg.mxu0
  %349 = vmatpush.msra.mxu0 %v142
  %350 = vmatpush.msra.mxu0 %v140
  %351 = vmatpush.msra.mxu0 %v138
  %352 = vmatpush.msra.mxu0 %v136
  %353 = vmatpush.msra.mxu0 %v134
  %354 = vmatpush.msra.mxu0 %v132
  %355 = vmatpush.msra.mxu0 %v130
  %356 = vmatpush.msra.mxu0 %v128
  %357 = vmatpush.msra.mxu0 %v126
  %358 = vmatpush.msra.mxu0 %v124
  %359 = vmatpush.msra.mxu0 %v122
  %360 = vmatpush.msra.mxu0 %v120
  %361 = vmatpush.msra.mxu0 %v118
  %362 = vmatpush.msra.mxu0 %v116
  %363 = vmatpush.msra.mxu0 %v114
  %364 = vmatpush.msra.mxu0 %v112
  %365 = vmatmul.f32.gmra.mxu0 %v33
  %v366 = vpop.f32.mrf.mxu0
  %v367 = vadd.f32 %v338, %v366
  %368 = vmatmul.f32.gmra.mxu0 %v37
  %v369 = vpop.f32.mrf.mxu0
  %v370 = vadd.f32 %v341, %v369
  %371 = vmatmul.f32.gmra.mxu0 %v41
  %v372 = vpop.f32.mrf.mxu0
  %v373 = vadd.f32 %v344, %v372
  %374 = vmatmul.f32.gmra.mxu0 %v45
  %v375 = vpop.f32.mrf.mxu0
  %v376 = vadd.f32 %v347, %v375
  %377 = vdwg.mxu0
  %378 = vmatpush.msra.mxu0 %v174
  %379 = vmatpush.msra.mxu0 %v172
  %380 = vmatpush.msra.mxu0 %v170
  %381 = vmatpush.msra.mxu0 %v168
  %382 = vmatpush.msra.mxu0 %v166
  %383 = vmatpush.msra.mxu0 %v164
  %384 = vmatpush.msra.mxu0 %v162
  %385 = vmatpush.msra.mxu0 %v160
  %386 = vmatpush.msra.mxu0 %v158
  %387 = vmatpush.msra.mxu0 %v156
  %388 = vmatpush.msra.mxu0 %v154
  %389 = vmatpush.msra.mxu0 %v152
  %390 = vmatpush.msra.mxu0 %v150
  %391 = vmatpush.msra.mxu0 %v148
  %392 = vmatpush.msra.mxu0 %v146
  %393 = vmatpush.msra.mxu0 %v144
  %394 = vmatmul.f32.gmra.mxu0 %v34
  %v395 = vpop.f32.mrf.mxu0
  %v396 = vadd.f32 %v367, %v395
  %397 = vmatmul.f32.gmra.mxu0 %v38
  %v398 = vpop.f32.mrf.mxu0
  %v399 = vadd.f32 %v370, %v398
  %400 = vmatmul.f32.gmra.mxu0 %v42
  %v401 = vpop.f32.mrf.mxu0
  %v402 = vadd.f32 %v373, %v401
  %403 = vmatmul.f32.gmra.mxu0 %v46
  %v404 = vpop.f32.mrf.mxu0
  %v405 = vadd.f32 %v376, %v404
  %406 = vdwg.mxu0
  %v407 = vmax.f32 %v280, 0.0
  %v408 = vmax.f32 %v396, 0.0
  %v409 = vmax.f32 %v283, 0.0
  %v410 = vmax.f32 %v399, 0.0
  %v411 = vmax.f32 %v286, 0.0
  %v412 = vmax.f32 %v402, 0.0
  %v413 = vmax.f32 %v289, 0.0
  %v414 = vmax.f32 %v405, 0.0
  %v415 = vld [vmem:[%s2] sm:$0xff]
  %v416 = vld [vmem:[%s2 + $0x8] sm:$0xff]
  %v417 = vld [vmem:[%s2 + $0x10] sm:$0xff]
  %v418 = vld [vmem:[%s2 + $0x18] sm:$0xff]
  %420 = vset.pattern.permute.xlu0 0
  %421 = vperm.xlu0 %420, %v415
  %v422 = vpop.permute.xlu0 %421
  %425 = vset.pattern.permute.xlu0 0
  %426 = vperm.xlu0 %425, %v416
  %v427 = vpop.permute.xlu0 %426
  %430 = vset.pattern.permute.xlu0 0
  %431 = vperm.xlu0 %430, %v417
  %v432 = vpop.permute.xlu0 %431
  %435 = vset.pattern.permute.xlu0 0
  %436 = vperm.xlu0 %435, %v418
  %v437 = vpop.permute.xlu0 %436
  %v439 = vmul.f32 %v407, %v422
  %v440 = vmul.f32 %v408, %v422
  %v441 = vmul.f32 %v409, %v427
  %v442 = vmul.f32 %v410, %v427
  %v443 = vmul.f32 %v411, %v432
  %v444 = vmul.f32 %v412, %v432
  %v445 = vmul.f32 %v413, %v437
  %v446 = vmul.f32 %v414, %v437
  %447 = vset.pattern.permute.xlu0 1
  %448 = vperm.xlu0 %447, %v415
  %v449 = vpop.permute.xlu0 %448
  %451 = vset.pattern.permute.xlu0 1
  %452 = vperm.xlu0 %451, %v416
  %v453 = vpop.permute.xlu0 %452
  %455 = vset.pattern.permute.xlu0 1
  %456 = vperm.xlu0 %455, %v417
  %v457 = vpop.permute.xlu0 %456
  %459 = vset.pattern.permute.xlu0 1
  %460 = vperm.xlu0 %459, %v418
  %v461 = vpop.permute.xlu0 %460
  %v463 = vadd.f32 %v439, %v449
  %v464 = vadd.f32 %v440, %v449
  %v465 = vadd.f32 %v441, %v453
  %v466 = vadd.f32 %v442, %v453
  %v467 = vadd.f32 %v443, %v457
  %v468 = vadd.f32 %v444, %v457
  %v469 = vadd.f32 %v445, %v461
  %v470 = vadd.f32 %v446, %v461
  %v471 = vld [vmem:[%s3] sm:$0xff]
  %v472 = vld [vmem:[%s3 + $0x8] sm:$0xff]
  %v473 = vld [vmem:[%s3 + $0x10] sm:$0xff]
  %v474 = vld [vmem:[%s3 + $0x18] sm:$0xff]
  %v475 = vld [vmem:[%s3 + $0x20] sm:$0xff]
  %v476 = vld [vmem:[%s3 + $0x28] sm:$0xff]
  %v477 = vld [vmem:[%s3 + $0x30] sm:$0xff]
  %v478 = vld [vmem:[%s3 + $0x38] sm:$0xff]
  %v479 = vld [vmem:[%s3 + $0x40] sm:$0xff]
  %v480 = vld [vmem:[%s3 + $0x48] sm:$0xff]
  %v481 = vld [vmem:[%s3 + $0x50] sm:$0xff]
  %v482 = vld [vmem:[%s3 + $0x58] sm:$0xff]
  %v483 = vld [vmem:[%s3 + $0x60] sm:$0xff]
  %v484 = vld [vmem:[%s3 + $0x68] sm:$0xff]
  %v485 = vld [vmem:[%s3 + $0x70] sm:$0xff]
  %v486 = vld [vmem:[%s3 + $0x78] sm:$0xff]
  %v487 = vld [vmem:[%s3 + $0x80] sm:$0xff]
  %v488 = vld [vmem:[%s3 + $0x88] sm:$0xff]
  %v489 = vld [vmem:[%s3 + $0x90] sm:$0xff]
  %v490 = vld [vmem:[%s3 + $0x98] sm:$0xff]
  %v491 = vld [vmem:[%s3 + $0xa0] sm:$0xff]
  %v492 = vld [vmem:[%s3 + $0xa8] sm:$0xff]
  %v493 = vld [vmem:[%s3 + $0xb0] sm:$0xff]
  %v494 = vld [vmem:[%s3 + $0xb8] sm:$0xff]
  %v495 = vld [vmem:[%s3 + $0xc0] sm:$0xff]
  %v496 = vld [vmem:[%s3 + $0xc8] sm:$0xff]
  %v497 = vld [vmem:[%s3 + $0xd0] sm:$0xff]
  %v498 = vld [vmem:[%s3 + $0xd8] sm:$0xff]
  %v499 = vld [vmem:[%s3 + $0xe0] sm:$0xff]
  %v500 = vld [vmem:[%s3 + $0xe8] sm:$0xff]
  %v501 = vld [vmem:[%s3 + $0xf0] sm:$0xff]
  %v502 = vld [vmem:[%s3 + $0xf8] sm:$0xff]
  %v503 = vld [vmem:[%s3 + $0x100] sm:$0xff]
  %v504 = vld [vmem:[%s3 + $0x108] sm:$0xff]
  %v505 = vld [vmem:[%s3 + $0x110] sm:$0xff]
  %v506 = vld [vmem:[%s3 + $0x118] sm:$0xff]
  %v507 = vld [vmem:[%s3 + $0x120] sm:$0xff]
  %v508 = vld [vmem:[%s3 + $0x128] sm:$0xff]
  %v509 = vld [vmem:[%s3 + $0x130] sm:$0xff]
  %v510 = vld [vmem:[%s3 + $0x138] sm:$0xff]
  %v511 = vld [vmem:[%s3 + $0x140] sm:$0xff]
  %v512 = vld [vmem:[%s3 + $0x148] sm:$0xff]
  %v513 = vld [vmem:[%s3 + $0x150] sm:$0xff]
  %v514 = vld [vmem:[%s3 + $0x158] sm:$0xff]
  %v515 = vld [vmem:[%s3 + $0x160] sm:$0xff]
  %v516 = vld [vmem:[%s3 + $0x168] sm:$0xff]
  %v517 = vld [vmem:[%s3 + $0x170] sm:$0xff]
  %v518 = vld [vmem:[%s3 + $0x178] sm:$0xff]
  %v519 = vld [vmem:[%s3 + $0x180] sm:$0xff]
  %v520 = vld [vmem:[%s3 + $0x188] sm:$0xff]
  %v521 = vld [vmem:[%s3 + $0x190] sm:$0xff]
  %v522 = vld [vmem:[%s3 + $0x198] sm:$0xff]
  %v523 = vld [vmem:[%s3 + $0x1a0] sm:$0xff]
  %v524 = vld [vmem:[%s3 + $0x1a8] sm:$0xff]
  %v525 = vld [vmem:[%s3 + $0x1b0] sm:$0xff]
  %v526 = vld [vmem:[%s3 + $0x1b8] sm:$0xff]
  %v527 = vld [vmem:[%s3 + $0x1c0] sm:$0xff]
  %v528 = vld [vmem:[%s3 + $0x1c8] sm:$0xff]
  %v529 = vld [vmem:[%s3 + $0x1d0] sm:$0xff]
  %v530 = vld [vmem:[%s3 + $0x1d8] sm:$0xff]
  %v531 = vld [vmem:[%s3 + $0x1e0] sm:$0xff]
  %v532 = vld [vmem:[%s3 + $0x1e8] sm:$0xff]
  %v533 = vld [vmem:[%s3 + $0x1f0] sm:$0xff]
  %v534 = vld [vmem:[%s3 + $0x1f8] sm:$0xff]
  %v535 = vld [vmem:[%s3 + $0x200] sm:$0xff]
  %v536 = vld [vmem:[%s3 + $0x208] sm:$0xff]
  %v537 = vld [vmem:[%s3 + $0x210] sm:$0xff]
  %v538 = vld [vmem:[%s3 + $0x218] sm:$0xff]
  %v539 = vld [vmem:[%s3 + $0x220] sm:$0xff]
  %v540 = vld [vmem:[%s3 + $0x228] sm:$0xff]
  %v541 = vld [vmem:[%s3 + $0x230] sm:$0xff]
  %v542 = vld [vmem:[%s3 + $0x238] sm:$0xff]
  %v543 = vld [vmem:[%s3 + $0x240] sm:$0xff]
  %v544 = vld [vmem:[%s3 + $0x248] sm:$0xff]
  %v545 = vld [vmem:[%s3 + $0x250] sm:$0xff]
  %v546 = vld [vmem:[%s3 + $0x258] sm:$0xff]
  %v547 = vld [vmem:[%s3 + $0x260] sm:$0xff]
  %v548 = vld [vmem:[%s3 + $0x268] sm:$0xff]
  %v549 = vld [vmem:[%s3 + $0x270] sm:$0xff]
  %v550 = vld [vmem:[%s3 + $0x278] sm:$0xff]
  %v551 = vld [vmem:[%s3 + $0x280] sm:$0xff]
  %v552 = vld [vmem:[%s3 + $0x288] sm:$0xff]
  %v553 = vld [vmem:[%s3 + $0x290] sm:$0xff]
  %v554 = vld [vmem:[%s3 + $0x298] sm:$0xff]
  %v555 = vld [vmem:[%s3 + $0x2a0] sm:$0xff]
  %v556 = vld [vmem:[%s3 + $0x2a8] sm:$0xff]
  %v557 = vld [vmem:[%s3 + $0x2b0] sm:$0xff]
  %v558 = vld [vmem:[%s3 + $0x2b8] sm:$0xff]
  %v559 = vld [vmem:[%s3 + $0x2c0] sm:$0xff]
  %v560 = vld [vmem:[%s3 + $0x2c8] sm:$0xff]
  %v561 = vld [vmem:[%s3 + $0x2d0] sm:$0xff]
  %v562 = vld [vmem:[%s3 + $0x2d8] sm:$0xff]
  %v563 = vld [vmem:[%s3 + $0x2e0] sm:$0xff]
  %v564 = vld [vmem:[%s3 + $0x2e8] sm:$0xff]
  %v565 = vld [vmem:[%s3 + $0x2f0] sm:$0xff]
  %v566 = vld [vmem:[%s3 + $0x2f8] sm:$0xff]
  %v567 = vld [vmem:[%s3 + $0x300] sm:$0xff]
  %v568 = vld [vmem:[%s3 + $0x308] sm:$0xff]
  %v569 = vld [vmem:[%s3 + $0x310] sm:$0xff]
  %v570 = vld [vmem:[%s3 + $0x318] sm:$0xff]
  %v571 = vld [vmem:[%s3 + $0x320] sm:$0xff]
  %v572 = vld [vmem:[%s3 + $0x328] sm:$0xff]
  %v573 = vld [vmem:[%s3 + $0x330] sm:$0xff]
  %v574 = vld [vmem:[%s3 + $0x338] sm:$0xff]
  %v575 = vld [vmem:[%s3 + $0x340] sm:$0xff]
  %v576 = vld [vmem:[%s3 + $0x348] sm:$0xff]
  %v577 = vld [vmem:[%s3 + $0x350] sm:$0xff]
  %v578 = vld [vmem:[%s3 + $0x358] sm:$0xff]
  %v579 = vld [vmem:[%s3 + $0x360] sm:$0xff]
  %v580 = vld [vmem:[%s3 + $0x368] sm:$0xff]
  %v581 = vld [vmem:[%s3 + $0x370] sm:$0xff]
  %v582 = vld [vmem:[%s3 + $0x378] sm:$0xff]
  %v583 = vld [vmem:[%s3 + $0x380] sm:$0xff]
  %v584 = vld [vmem:[%s3 + $0x388] sm:$0xff]
  %v585 = vld [vmem:[%s3 + $0x390] sm:$0xff]
  %v586 = vld [vmem:[%s3 + $0x398] sm:$0xff]
  %v587 = vld [vmem:[%s3 + $0x3a0] sm:$0xff]
  %v588 = vld [vmem:[%s3 + $0x3a8] sm:$0xff]
  %v589 = vld [vmem:[%s3 + $0x3b0] sm:$0xff]
  %v590 = vld [vmem:[%s3 + $0x3b8] sm:$0xff]
  %v591 = vld [vmem:[%s3 + $0x3c0] sm:$0xff]
  %v592 = vld [vmem:[%s3 + $0x3c8] sm:$0xff]
  %v593 = vld [vmem:[%s3 + $0x3d0] sm:$0xff]
  %v594 = vld [vmem:[%s3 + $0x3d8] sm:$0xff]
  %v595 = vld [vmem:[%s3 + $0x3e0] sm:$0xff]
  %v596 = vld [vmem:[%s3 + $0x3e8] sm:$0xff]
  %v597 = vld [vmem:[%s3 + $0x3f0] sm:$0xff]
  %v598 = vld [vmem:[%s3 + $0x3f8] sm:$0xff]
  %v599 = vld [vmem:[%s4] sm:$0xff]
  %v600 = vld [vmem:[%s4 + $0x8] sm:$0xff]
  %v601 = vld [vmem:[%s4 + $0x10] sm:$0xff]
  %v602 = vld [vmem:[%s4 + $0x18] sm:$0xff]
  %v603 = vld [vmem:[%s4 + $0x20] sm:$0xff]
  %v604 = vld [vmem:[%s4 + $0x28] sm:$0xff]
  %v605 = vld [vmem:[%s4 + $0x30] sm:$0xff]
  %v606 = vld [vmem:[%s4 + $0x38] sm:$0xff]
  %v607 = vld [vmem:[%s4 + $0x40] sm:$0xff]
  %v608 = vld [vmem:[%s4 + $0x48] sm:$0xff]
  %v609 = vld [vmem:[%s4 + $0x50] sm:$0xff]
  %v610 = vld [vmem:[%s4 + $0x58] sm:$0xff]
  %v611 = vld [vmem:[%s4 + $0x60] sm:$0xff]
  %v612 = vld [vmem:[%s4 + $0x68] sm:$0xff]
  %v613 = vld [vmem:[%s4 + $0x70] sm:$0xff]
  %v614 = vld [vmem:[%s4 + $0x78] sm:$0xff]
  %v615 = vld [vmem:[%s4 + $0x80] sm:$0xff]
  %v616 = vld [vmem:[%s4 + $0x88] sm:$0xff]
  %v617 = vld [vmem:[%s4 + $0x90] sm:$0xff]
  %v618 = vld [vmem:[%s4 + $0x98] sm:$0xff]
  %v619 = vld [vmem:[%s4 + $0xa0] sm:$0xff]
  %v620 = vld [vmem:[%s4 + $0xa8] sm:$0xff]
  %v621 = vld [vmem:[%s4 + $0xb0] sm:$0xff]
  %v622 = vld [vmem:[%s4 + $0xb8] sm:$0xff]
  %v623 = vld [vmem:[%s4 + $0xc0] sm:$0xff]
  %v624 = vld [vmem:[%s4 + $0xc8] sm:$0xff]
  %v625 = vld [vmem:[%s4 + $0xd0] sm:$0xff]
  %v626 = vld [vmem:[%s4 + $0xd8] sm:$0xff]
  %v627 = vld [vmem:[%s4 + $0xe0] sm:$0xff]
  %v628 = vld [vmem:[%s4 + $0xe8] sm:$0xff]
  %v629 = vld [vmem:[%s4 + $0xf0] sm:$0xff]
  %v630 = vld [vmem:[%s4 + $0xf8] sm:$0xff]
  %v631 = vld [vmem:[%s4 + $0x100] sm:$0xff]
  %v632 = vld [vmem:[%s4 + $0x108] sm:$0xff]
  %v633 = vld [vmem:[%s4 + $0x110] sm:$0xff]
  %v634 = vld [vmem:[%s4 + $0x118] sm:$0xff]
  %v635 = vld [vmem:[%s4 + $0x120] sm:$0xff]
  %v636 = vld [vmem:[%s4 + $0x128] sm:$0xff]
  %v637 = vld [vmem:[%s4 + $0x130] sm:$0xff]
  %v638 = vld [vmem:[%s4 + $0x138] sm:$0xff]
  %v639 = vld [vmem:[%s4 + $0x140] sm:$0xff]
  %v640 = vld [vmem:[%s4 + $0x148] sm:$0xff]
  %v641 = vld [vmem:[%s4 + $0x150] sm:$0xff]
  %v642 = vld [vmem:[%s4 + $0x158] sm:$0xff]
  %v643 = vld [vmem:[%s4 + $0x160] sm:$0xff]
  %v644 = vld [vmem:[%s4 + $0x168] sm:$0xff]
  %v645 = vld [vmem:[%s4 + $0x170] sm:$0xff]
  %v646 = vld [vmem:[%s4 + $0x178] sm:$0xff]
  %v647 = vld [vmem:[%s4 + $0x180] sm:$0xff]
  %v648 = vld [vmem:[%s4 + $0x188] sm:$0xff]
  %v649 = vld [vmem:[%s4 + $0x190] sm:$0xff]
  %v650 = vld [vmem:[%s4 + $0x198] sm:$0xff]
  %v651 = vld [vmem:[%s4 + $0x1a0] sm:$0xff]
  %v652 = vld [vmem:[%s4 + $0x1a8] sm:$0xff]
  %v653 = vld [vmem:[%s4 + $0x1b0] sm:$0xff]
  %v654 = vld [vmem:[%s4 + $0x1b8] sm:$0xff]
  %v655 = vld [vmem:[%s4 + $0x1c0] sm:$0xff]
  %v656 = vld [vmem:[%s4 + $0x1c8] sm:$0xff]
  %v657 = vld [vmem:[%s4 + $0x1d0] sm:$0xff]
  %v658 = vld [vmem:[%s4 + $0x1d8] sm:$0xff]
  %v659 = vld [vmem:[%s4 + $0x1e0] sm:$0xff]
  %v660 = vld [vmem:[%s4 + $0x1e8] sm:$0xff]
  %v661 = vld [vmem:[%s4 + $0x1f0] sm:$0xff]
  %v662 = vld [vmem:[%s4 + $0x1f8] sm:$0xff]
  %v663 = vld [vmem:[%s4 + $0x200] sm:$0xff]
  %v664 = vld [vmem:[%s4 + $0x208] sm:$0xff]
  %v665 = vld [vmem:[%s4 + $0x210] sm:$0xff]
  %v666 = vld [vmem:[%s4 + $0x218] sm:$0xff]
  %v667 = vld [vmem:[%s4 + $0x220] sm:$0xff]
  %v668 = vld [vmem:[%s4 + $0x228] sm:$0xff]
  %v669 = vld [vmem:[%s4 + $0x230] sm:$0xff]
  %v670 = vld [vmem:[%s4 + $0x238] sm:$0xff]
  %v671 = vld [vmem:[%s4 + $0x240] sm:$0xff]
  %v672 = vld [vmem:[%s4 + $0x248] sm:$0xff]
  %v673 = vld [vmem:[%s4 + $0x250] sm:$0xff]
  %v674 = vld [vmem:[%s4 + $0x258] sm:$0xff]
  %v675 = vld [vmem:[%s4 + $0x260] sm:$0xff]
  %v676 = vld [vmem:[%s4 + $0x268] sm:$0xff]
  %v677 = vld [vmem:[%s4 + $0x270] sm:$0xff]
  %v678 = vld [vmem:[%s4 + $0x278] sm:$0xff]
  %v679 = vld [vmem:[%s4 + $0x280] sm:$0xff]
  %v680 = vld [vmem:[%s4 + $0x288] sm:$0xff]
  %v681 = vld [vmem:[%s4 + $0x290] sm:$0xff]
  %v682 = vld [vmem:[%s4 + $0x298] sm:$0xff]
  %v683 = vld [vmem:[%s4 + $0x2a0] sm:$0xff]
  %v684 = vld [vmem:[%s4 + $0x2a8] sm:$0xff]
  %v685 = vld [vmem:[%s4 + $0x2b0] sm:$0xff]
  %v686 = vld [vmem:[%s4 + $0x2b8] sm:$0xff]
  %v687 = vld [vmem:[%s4 + $0x2c0] sm:$0xff]
  %v688 = vld [vmem:[%s4 + $0x2c8] sm:$0xff]
  %v689 = vld [vmem:[%s4 + $0x2d0] sm:$0xff]
  %v690 = vld [vmem:[%s4 + $0x2d8] sm:$0xff]
  %v691 = vld [vmem:[%s4 + $0x2e0] sm:$0xff]
  %v692 = vld [vmem:[%s4 + $0x2e8] sm:$0xff]
  %v693 = vld [vmem:[%s4 + $0x2f0] sm:$0xff]
  %v694 = vld [vmem:[%s4 + $0x2f8] sm:$0xff]
  %v695 = vld [vmem:[%s4 + $0x300] sm:$0xff]
  %v696 = vld [vmem:[%s4 + $0x308] sm:$0xff]
  %v697 = vld [vmem:[%s4 + $0x310] sm:$0xff]
  %v698 = vld [vmem:[%s4 + $0x318] sm:$0xff]
  %v699 = vld [vmem:[%s4 + $0x320] sm:$0xff]
  %v700 = vld [vmem:[%s4 + $0x328] sm:$0xff]
  %v701 = vld [vmem:[%s4 + $0x330] sm:$0xff]
  %v702 = vld [vmem:[%s4 + $0x338] sm:$0xff]
  %v703 = vld [vmem:[%s4 + $0x340] sm:$0xff]
  %v704 = vld [vmem:[%s4 + $0x348] sm:$0xff]
  %v705 = vld [vmem:[%s4 + $0x350] sm:$0xff]
  %v706 = vld [vmem:[%s4 + $0x358] sm:$0xff]
  %v707 = vld [vmem:[%s4 + $0x360] sm:$0xff]
  %v708 = vld [vmem:[%s4 + $0x368] sm:$0xff]
  %v709 = vld [vmem:[%s4 + $0x370] sm:$0xff]
  %v710 = vld [vmem:[%s4 + $0x378] sm:$0xff]
  %v711 = vld [vmem:[%s4 + $0x380] sm:$0xff]
  %v712 = vld [vmem:[%s4 + $0x388] sm:$0xff]
  %v713 = vld [vmem:[%s4 + $0x390] sm:$0xff]
  %v714 = vld [vmem:[%s4 + $0x398] sm:$0xff]
  %v715 = vld [vmem:[%s4 + $0x3a0] sm:$0xff]
  %v716 = vld [vmem:[%s4 + $0x3a8] sm:$0xff]
  %v717 = vld [vmem:[%s4 + $0x3b0] sm:$0xff]
  %v718 = vld [vmem:[%s4 + $0x3b8] sm:$0xff]
  %v719 = vld [vmem:[%s4 + $0x3c0] sm:$0xff]
  %v720 = vld [vmem:[%s4 + $0x3c8] sm:$0xff]
  %v721 = vld [vmem:[%s4 + $0x3d0] sm:$0xff]
  %v722 = vld [vmem:[%s4 + $0x3d8] sm:$0xff]
  %v723 = vld [vmem:[%s4 + $0x3e0] sm:$0xff]
  %v724 = vld [vmem:[%s4 + $0x3e8] sm:$0xff]
  %v725 = vld [vmem:[%s4 + $0x3f0] sm:$0xff]
  %v726 = vld [vmem:[%s4 + $0x3f8] sm:$0xff]
  %v727 = vld [vmem:[%s4 + $0x400] sm:$0xff]
  %v728 = vld [vmem:[%s4 + $0x408] sm:$0xff]
  %v729 = vld [vmem:[%s4 + $0x410] sm:$0xff]
  %v730 = vld [vmem:[%s4 + $0x418] sm:$0xff]
  %v731 = vld [vmem:[%s4 + $0x420] sm:$0xff]
  %v732 = vld [vmem:[%s4 + $0x428] sm:$0xff]
  %v733 = vld [vmem:[%s4 + $0x430] sm:$0xff]
  %v734 = vld [vmem:[%s4 + $0x438] sm:$0xff]
  %v735 = vld [vmem:[%s4 + $0x440] sm:$0xff]
  %v736 = vld [vmem:[%s4 + $0x448] sm:$0xff]
  %v737 = vld [vmem:[%s4 + $0x450] sm:$0xff]
  %v738 = vld [vmem:[%s4 + $0x458] sm:$0xff]
  %v739 = vld [vmem:[%s4 + $0x460] sm:$0xff]
  %v740 = vld [vmem:[%s4 + $0x468] sm:$0xff]
  %v741 = vld [vmem:[%s4 + $0x470] sm:$0xff]
  %v742 = vld [vmem:[%s4 + $0x478] sm:$0xff]
  %v743 = vld [vmem:[%s4 + $0x480] sm:$0xff]
  %v744 = vld [vmem:[%s4 + $0x488] sm:$0xff]
  %v745 = vld [vmem:[%s4 + $0x490] sm:$0xff]
  %v746 = vld [vmem:[%s4 + $0x498] sm:$0xff]
  %v747 = vld [vmem:[%s4 + $0x4a0] sm:$0xff]
  %v748 = vld [vmem:[%s4 + $0x4a8] sm:$0xff]
  %v749 = vld [vmem:[%s4 + $0x4b0] sm:$0xff]
  %v750 = vld [vmem:[%s4 + $0x4b8] sm:$0xff]
  %v751 = vld [vmem:[%s4 + $0x4c0] sm:$0xff]
  %v752 = vld [vmem:[%s4 + $0x4c8] sm:$0xff]
  %v753 = vld [vmem:[%s4 + $0x4d0] sm:$0xff]
  %v754 = vld [vmem:[%s4 + $0x4d8] sm:$0xff]
  %v755 = vld [vmem:[%s4 + $0x4e0] sm:$0xff]
  %v756 = vld [vmem:[%s4 + $0x4e8] sm:$0xff]
  %v757 = vld [vmem:[%s4 + $0x4f0] sm:$0xff]
  %v758 = vld [vmem:[%s4 + $0x4f8] sm:$0xff]
  %v759 = vld [vmem:[%s4 + $0x500] sm:$0xff]
  %v760 = vld [vmem:[%s4 + $0x508] sm:$0xff]
  %v761 = vld [vmem:[%s4 + $0x510] sm:$0xff]
  %v762 = vld [vmem:[%s4 + $0x518] sm:$0xff]
  %v763 = vld [vmem:[%s4 + $0x520] sm:$0xff]
  %v764 = vld [vmem:[%s4 + $0x528] sm:$0xff]
  %v765 = vld [vmem:[%s4 + $0x530] sm:$0xff]
  %v766 = vld [vmem:[%s4 + $0x538] sm:$0xff]
  %v767 = vld [vmem:[%s4 + $0x540] sm:$0xff]
  %v768 = vld [vmem:[%s4 + $0x548] sm:$0xff]
  %v769 = vld [vmem:[%s4 + $0x550] sm:$0xff]
  %v770 = vld [vmem:[%s4 + $0x558] sm:$0xff]
  %v771 = vld [vmem:[%s4 + $0x560] sm:$0xff]
  %v772 = vld [vmem:[%s4 + $0x568] sm:$0xff]
  %v773 = vld [vmem:[%s4 + $0x570] sm:$0xff]
  %v774 = vld [vmem:[%s4 + $0x578] sm:$0xff]
  %v775 = vld [vmem:[%s4 + $0x580] sm:$0xff]
  %v776 = vld [vmem:[%s4 + $0x588] sm:$0xff]
  %v777 = vld [vmem:[%s4 + $0x590] sm:$0xff]
  %v778 = vld [vmem:[%s4 + $0x598] sm:$0xff]
  %v779 = vld [vmem:[%s4 + $0x5a0] sm:$0xff]
  %v780 = vld [vmem:[%s4 + $0x5a8] sm:$0xff]
  %v781 = vld [vmem:[%s4 + $0x5b0] sm:$0xff]
  %v782 = vld [vmem:[%s4 + $0x5b8] sm:$0xff]
  %v783 = vld [vmem:[%s4 + $0x5c0] sm:$0xff]
  %v784 = vld [vmem:[%s4 + $0x5c8] sm:$0xff]
  %v785 = vld [vmem:[%s4 + $0x5d0] sm:$0xff]
  %v786 = vld [vmem:[%s4 + $0x5d8] sm:$0xff]
  %v787 = vld [vmem:[%s4 + $0x5e0] sm:$0xff]
  %v788 = vld [vmem:[%s4 + $0x5e8] sm:$0xff]
  %v789 = vld [vmem:[%s4 + $0x5f0] sm:$0xff]
  %v790 = vld [vmem:[%s4 + $0x5f8] sm:$0xff]
  %v791 = vld [vmem:[%s4 + $0x600] sm:$0xff]
  %v792 = vld [vmem:[%s4 + $0x608] sm:$0xff]
  %v793 = vld [vmem:[%s4 + $0x610] sm:$0xff]
  %v794 = vld [vmem:[%s4 + $0x618] sm:$0xff]
  %v795 = vld [vmem:[%s4 + $0x620] sm:$0xff]
  %v796 = vld [vmem:[%s4 + $0x628] sm:$0xff]
  %v797 = vld [vmem:[%s4 + $0x630] sm:$0xff]
  %v798 = vld [vmem:[%s4 + $0x638] sm:$0xff]
  %v799 = vld [vmem:[%s4 + $0x640] sm:$0xff]
  %v800 = vld [vmem:[%s4 + $0x648] sm:$0xff]
  %v801 = vld [vmem:[%s4 + $0x650] sm:$0xff]
  %v802 = vld [vmem:[%s4 + $0x658] sm:$0xff]
  %v803 = vld [vmem:[%s4 + $0x660] sm:$0xff]
  %v804 = vld [vmem:[%s4 + $0x668] sm:$0xff]
  %v805 = vld [vmem:[%s4 + $0x670] sm:$0xff]
  %v806 = vld [vmem:[%s4 + $0x678] sm:$0xff]
  %v807 = vld [vmem:[%s4 + $0x680] sm:$0xff]
  %v808 = vld [vmem:[%s4 + $0x688] sm:$0xff]
  %v809 = vld [vmem:[%s4 + $0x690] sm:$0xff]
  %v810 = vld [vmem:[%s4 + $0x698] sm:$0xff]
  %v811 = vld [vmem:[%s4 + $0x6a0] sm:$0xff]
  %v812 = vld [vmem:[%s4 + $0x6a8] sm:$0xff]
  %v813 = vld [vmem:[%s4 + $0x6b0] sm:$0xff]
  %v814 = vld [vmem:[%s4 + $0x6b8] sm:$0xff]
  %v815 = vld [vmem:[%s4 + $0x6c0] sm:$0xff]
  %v816 = vld [vmem:[%s4 + $0x6c8] sm:$0xff]
  %v817 = vld [vmem:[%s4 + $0x6d0] sm:$0xff]
  %v818 = vld [vmem:[%s4 + $0x6d8] sm:$0xff]
  %v819 = vld [vmem:[%s4 + $0x6e0] sm:$0xff]
  %v820 = vld [vmem:[%s4 + $0x6e8] sm:$0xff]
  %v821 = vld [vmem:[%s4 + $0x6f0] sm:$0xff]
  %v822 = vld [vmem:[%s4 + $0x6f8] sm:$0xff]
  %v823 = vld [vmem:[%s4 + $0x700] sm:$0xff]
  %v824 = vld [vmem:[%s4 + $0x708] sm:$0xff]
  %v825 = vld [vmem:[%s4 + $0x710] sm:$0xff]
  %v826 = vld [vmem:[%s4 + $0x718] sm:$0xff]
  %v827 = vld [vmem:[%s4 + $0x720] sm:$0xff]
  %v828 = vld [vmem:[%s4 + $0x728] sm:$0xff]
  %v829 = vld [vmem:[%s4 + $0x730] sm:$0xff]
  %v830 = vld [vmem:[%s4 + $0x738] sm:$0xff]
  %v831 = vld [vmem:[%s4 + $0x740] sm:$0xff]
  %v832 = vld [vmem:[%s4 + $0x748] sm:$0xff]
  %v833 = vld [vmem:[%s4 + $0x750] sm:$0xff]
  %v834 = vld [vmem:[%s4 + $0x758] sm:$0xff]
  %v835 = vld [vmem:[%s4 + $0x760] sm:$0xff]
  %v836 = vld [vmem:[%s4 + $0x768] sm:$0xff]
  %v837 = vld [vmem:[%s4 + $0x770] sm:$0xff]
  %v838 = vld [vmem:[%s4 + $0x778] sm:$0xff]
  %v839 = vld [vmem:[%s4 + $0x780] sm:$0xff]
  %v840 = vld [vmem:[%s4 + $0x788] sm:$0xff]
  %v841 = vld [vmem:[%s4 + $0x790] sm:$0xff]
  %v842 = vld [vmem:[%s4 + $0x798] sm:$0xff]
  %v843 = vld [vmem:[%s4 + $0x7a0] sm:$0xff]
  %v844 = vld [vmem:[%s4 + $0x7a8] sm:$0xff]
  %v845 = vld [vmem:[%s4 + $0x7b0] sm:$0xff]
  %v846 = vld [vmem:[%s4 + $0x7b8] sm:$0xff]
  %v847 = vld [vmem:[%s4 + $0x7c0] sm:$0xff]
  %v848 = vld [vmem:[%s4 + $0x7c8] sm:$0xff]
  %v849 = vld [vmem:[%s4 + $0x7d0] sm:$0xff]
  %v850 = vld [vmem:[%s4 + $0x7d8] sm:$0xff]
  %v851 = vld [vmem:[%s4 + $0x7e0] sm:$0xff]
  %v852 = vld [vmem:[%s4 + $0x7e8] sm:$0xff]
  %v853 = vld [vmem:[%s4 + $0x7f0] sm:$0xff]
  %v854 = vld [vmem:[%s4 + $0x7f8] sm:$0xff]
  %855 = vmatpush.msra.mxu0 %v614
  %856 = vmatpush.msra.mxu0 %v613
  %857 = vmatpush.msra.mxu0 %v612
  %858 = vmatpush.msra.mxu0 %v611
  %859 = vmatpush.msra.mxu0 %v610
  %860 = vmatpush.msra.mxu0 %v609
  %861 = vmatpush.msra.mxu0 %v608
  %862 = vmatpush.msra.mxu0 %v607
  %863 = vmatpush.msra.mxu0 %v606
  %864 = vmatpush.msra.mxu0 %v605
  %865 = vmatpush.msra.mxu0 %v604
  %866 = vmatpush.msra.mxu0 %v603
  %867 = vmatpush.msra.mxu0 %v602
  %868 = vmatpush.msra.mxu0 %v601
  %869 = vmatpush.msra.mxu0 %v600
  %870 = vmatpush.msra.mxu0 %v599
  %871 = vmatmul.f32.gmra.mxu0 %v471
  %v872 = vpop.f32.mrf.mxu0
  %v873 = vadd.f32 0.0, %v872
  %874 = vmatmul.f32.gmra.mxu0 %v487
  %v875 = vpop.f32.mrf.mxu0
  %v876 = vadd.f32 0.0, %v875
  %877 = vmatmul.f32.gmra.mxu0 %v503
  %v878 = vpop.f32.mrf.mxu0
  %v879 = vadd.f32 0.0, %v878
  %880 = vmatmul.f32.gmra.mxu0 %v519
  %v881 = vpop.f32.mrf.mxu0
  %v882 = vadd.f32 0.0, %v881
  %883 = vmatmul.f32.gmra.mxu0 %v535
  %v884 = vpop.f32.mrf.mxu0
  %v885 = vadd.f32 0.0, %v884
  %886 = vmatmul.f32.gmra.mxu0 %v551
  %v887 = vpop.f32.mrf.mxu0
  %v888 = vadd.f32 0.0, %v887
  %889 = vmatmul.f32.gmra.mxu0 %v567
  %v890 = vpop.f32.mrf.mxu0
  %v891 = vadd.f32 0.0, %v890
  %892 = vmatmul.f32.gmra.mxu0 %v583
  %v893 = vpop.f32.mrf.mxu0
  %v894 = vadd.f32 0.0, %v893
  %895 = vdwg.mxu0
  %896 = vmatpush.msra.mxu0 %v630
  %897 = vmatpush.msra.mxu0 %v629
  %898 = vmatpush.msra.mxu0 %v628
  %899 = vmatpush.msra.mxu0 %v627
  %900 = vmatpush.msra.mxu0 %v626
  %901 = vmatpush.msra.mxu0 %v625
  %902 = vmatpush.msra.mxu0 %v624
  %903 = vmatpush.msra.mxu0 %v623
  %904 = vmatpush.msra.mxu0 %v622
  %905 = vmatpush.msra.mxu0 %v621
  %906 = vmatpush.msra.mxu0 %v620
  %907 = vmatpush.msra.mxu0 %v619
  %908 = vmatpush.msra.mxu0 %v618
  %909 = vmatpush.msra.mxu0 %v617
  %910 = vmatpush.msra.mxu0 %v616
  %911 = vmatpush.msra.mxu0 %v615
  %912 = vmatmul.f32.gmra.mxu0 %v472
  %v913 = vpop.f32.mrf.mxu0
  %v914 = vadd.f32 %v873, %v913
  %915 = vmatmul.f32.gmra.mxu0 %v488
  %v916 = vpop.f32.mrf.mxu0
  %v917 = vadd.f32 %v876, %v916
  %918 = vmatmul.f32.gmra.mxu0 %v504
  %v919 = vpop.f32.mrf.mxu0
  %v920 = vadd.f32 %v879, %v919
  %921 = vmatmul.f32.gmra.mxu0 %v520
  %v922 = vpop.f32.mrf.mxu0
  %v923 = vadd.f32 %v882, %v922
  %924 = vmatmul.f32.gmra.mxu0 %v536
  %v925 = vpop.f32.mrf.mxu0
  %v926 = vadd.f32 %v885, %v925
  %927 = vmatmul.f32.gmra.mxu0 %v552
  %v928 = vpop.f32.mrf.mxu0
  %v929 = vadd.f32 %v888, %v928
  %930 = vmatmul.f32.gmra.mxu0 %v568
  %v931 = vpop.f32.mrf.mxu0
  %v932 = vadd.f32 %v891, %v931
  %933 = vmatmul.f32.gmra.mxu0 %v584
  %v934 = vpop.f32.mrf.mxu0
  %v935 = vadd.f32 %v894, %v934
  %936 = vdwg.mxu0
  %937 = vmatpush.msra.mxu0 %v646
  %938 = vmatpush.msra.mxu0 %v645
  %939 = vmatpush.msra.mxu0 %v644
  %940 = vmatpush.msra.mxu0 %v643
  %941 = vmatpush.msra.mxu0 %v642
  %942 = vmatpush.msra.mxu0 %v641
  %943 = vmatpush.msra.mxu0 %v640
  %944 = vmatpush.msra.mxu0 %v639
  %945 = vmatpush.msra.mxu0 %v638
  %946 = vmatpush.msra.mxu0 %v637
  %947 = vmatpush.msra.mxu0 %v636
  %948 = vmatpush.msra.mxu0 %v635
  %949 = vmatpush.msra.mxu0 %v634
  %950 = vmatpush.msra.mxu0 %v633
  %951 = vmatpush.msra.mxu0 %v632
  %952 = vmatpush.msra.mxu0 %v631
  %953 = vmatmul.f32.gmra.mxu0 %v473
  %v954 = vpop.f32.mrf.mxu0
  %v955 = vadd.f32 %v914, %v954
  %956 = vmatmul.f32.gmra.mxu0 %v489
  %v957 = vpop.f32.mrf.mxu0
  %v958 = vadd.f32 %v917, %v957
  %959 = vmatmul.f32.gmra.mxu0 %v505
  %v960 = vpop.f32.mrf.mxu0
  %v961 = vadd.f32 %v920, %v960
  %962 = vmatmul.f32.gmra.mxu0 %v521
  %v963 = vpop.f32.mrf.mxu0
  %v964 = vadd.f32 %v923, %v963
  %965 = vmatmul.f32.gmra.mxu0 %v537
  %v966 = vpop.f32.mrf.mxu0
  %v967 = vadd.f32 %v926, %v966
  %968 = vmatmul.f32.gmra.mxu0 %v553
  %v969 = vpop.f32.mrf.mxu0
  %v970 = vadd.f32 %v929, %v969
  %971 = vmatmul.f32.gmra.mxu0 %v569
  %v972 = vpop.f32.mrf.mxu0
  %v973 = vadd.f32 %v932, %v972
  %974 = vmatmul.f32.gmra.mxu0 %v585
  %v975 = vpop.f32.mrf.mxu0
  %v976 = vadd.f32 %v935, %v975
  %977 = vdwg.mxu0
  %978 = vmatpush.msra.mxu0 %v662
  %979 = vmatpush.msra.mxu0 %v661
  %980 = vmatpush.msra.mxu0 %v660
  %981 = vmatpush.msra.mxu0 %v659
  %982 = vmatpush.msra.mxu0 %v658
  %983 = vmatpush.msra.mxu0 %v657
  %984 = vmatpush.msra.mxu0 %v656
  %985 = vmatpush.msra.mxu0 %v655
  %986 = vmatpush.msra.mxu0 %v654
  %987 = vmatpush.msra.mxu0 %v653
  %988 = vmatpush.msra.mxu0 %v652
  %989 = vmatpush.msra.mxu0 %v651
  %990 = vmatpush.msra.mxu0 %v650
  %991 = vmatpush.msra.mxu0 %v649
  %992 = vmatpush.msra.mxu0 %v648
  %993 = vmatpush.msra.mxu0 %v647
  %994 = vmatmul.f32.gmra.mxu0 %v474
  %v995 = vpop.f32.mrf.mxu0
  %v996 = vadd.f32 %v955, %v995
  %997 = vmatmul.f32.gmra.mxu0 %v490
  %v998 = vpop.f32.mrf.mxu0
  %v999 = vadd.f32 %v958, %v998
  %1000 = vmatmul.f32.gmra.mxu0 %v506
  %v1001 = vpop.f32.mrf.mxu0
  %v1002 = vadd.f32 %v961, %v1001
  %1003 = vmatmul.f32.gmra.mxu0 %v522
  %v1004 = vpop.f32.mrf.mxu0
  %v1005 = vadd.f32 %v964, %v1004
  %1006 = vmatmul.f32.gmra.mxu0 %v538
  %v1007 = vpop.f32.mrf.mxu0
  %v1008 = vadd.f32 %v967, %v1007
  %1009 = vmatmul.f32.gmra.mxu0 %v554
  %v1010 = vpop.f32.mrf.mxu0
  %v1011 = vadd.f32 %v970, %v1010
  %1012 = vmatmul.f32.gmra.mxu0 %v570
  %v1013 = vpop.f32.mrf.mxu0
  %v1014 = vadd.f32 %v973, %v1013
  %1015 = vmatmul.f32.gmra.mxu0 %v586
  %v1016 = vpop.f32.mrf.mxu0
  %v1017 = vadd.f32 %v976, %v1016
  %1018 = vdwg.mxu0
  %1019 = vmatpush.msra.mxu0 %v678
  %1020 = vmatpush.msra.mxu0 %v677
  %1021 = vmatpush.msra.mxu0 %v676
  %1022 = vmatpush.msra.mxu0 %v675
  %1023 = vmatpush.msra.mxu0 %v674
  %1024 = vmatpush.msra.mxu0 %v673
  %1025 = vmatpush.msra.mxu0 %v672
  %1026 = vmatpush.msra.mxu0 %v671
  %1027 = vmatpush.msra.mxu0 %v670
  %1028 = vmatpush.msra.mxu0 %v669
  %1029 = vmatpush.msra.mxu0 %v668
  %1030 = vmatpush.msra.mxu0 %v667
  %1031 = vmatpush.msra.mxu0 %v666
  %1032 = vmatpush.msra.mxu0 %v665
  %1033 = vmatpush.msra.mxu0 %v664
  %1034 = vmatpush.msra.mxu0 %v663
  %1035 = vmatmul.f32.gmra.mxu0 %v475
  %v1036 = vpop.f32.mrf.mxu0
  %v1037 = vadd.f32 %v996, %v1036
  %1038 = vmatmul.f32.gmra.mxu0 %v491
  %v1039 = vpop.f32.mrf.mxu0
  %v1040 = vadd.f32 %v999, %v1039
  %1041 = vmatmul.f32.gmra.mxu0 %v507
  %v1042 = vpop.f32.mrf.mxu0
  %v1043 = vadd.f32 %v1002, %v1042
  %1044 = vmatmul.f32.gmra.mxu0 %v523
  %v1045 = vpop.f32.mrf.mxu0
  %v1046 = vadd.f32 %v1005, %v1045
  %1047 = vmatmul.f32.gmra.mxu0 %v539
  %v1048 = vpop.f32.mrf.mxu0
  %v1049 = vadd.f32 %v1008, %v1048
  %1050 = vmatmul.f32.gmra.mxu0 %v555
  %v1051 = vpop.f32.mrf.mxu0
  %v1052 = vadd.f32 %v1011, %v1051
  %1053 = vmatmul.f32.gmra.mxu0 %v571
  %v1054 = vpop.f32.mrf.mxu0
  %v1055 = vadd.f32 %v1014, %v1054
  %1056 = vmatmul.f32.gmra.mxu0 %v587
  %v1057 = vpop.f32.mrf.mxu0
  %v1058 = vadd.f32 %v1017, %v1057
  %1059 = vdwg.mxu0
  %1060 = vmatpush.msra.mxu0 %v694
  %1061 = vmatpush.msra.mxu0 %v693
  %1062 = vmatpush.msra.mxu0 %v692
  %1063 = vmatpush.msra.mxu0 %v691
  %1064 = vmatpush.msra.mxu0 %v690
  %1065 = vmatpush.msra.mxu0 %v689
  %1066 = vmatpush.msra.mxu0 %v688
  %1067 = vmatpush.msra.mxu0 %v687
  %1068 = vmatpush.msra.mxu0 %v686
  %1069 = vmatpush.msra.mxu0 %v685
  %1070 = vmatpush.msra.mxu0 %v684
  %1071 = vmatpush.msra.mxu0 %v683
  %1072 = vmatpush.msra.mxu0 %v682
  %1073 = vmatpush.msra.mxu0 %v681
  %1074 = vmatpush.msra.mxu0 %v680
  %1075 = vmatpush.msra.mxu0 %v679
  %1076 = vmatmul.f32.gmra.mxu0 %v476
  %v1077 = vpop.f32.mrf.mxu0
  %v1078 = vadd.f32 %v1037, %v1077
  %1079 = vmatmul.f32.gmra.mxu0 %v492
  %v1080 = vpop.f32.mrf.mxu0
  %v1081 = vadd.f32 %v1040, %v1080
  %1082 = vmatmul.f32.gmra.mxu0 %v508
  %v1083 = vpop.f32.mrf.mxu0
  %v1084 = vadd.f32 %v1043, %v1083
  %1085 = vmatmul.f32.gmra.mxu0 %v524
  %v1086 = vpop.f32.mrf.mxu0
  %v1087 = vadd.f32 %v1046, %v1086
  %1088 = vmatmul.f32.gmra.mxu0 %v540
  %v1089 = vpop.f32.mrf.mxu0
  %v1090 = vadd.f32 %v1049, %v1089
  %1091 = vmatmul.f32.gmra.mxu0 %v556
  %v1092 = vpop.f32.mrf.mxu0
  %v1093 = vadd.f32 %v1052, %v1092
  %1094 = vmatmul.f32.gmra.mxu0 %v572
  %v1095 = vpop.f32.mrf.mxu0
  %v1096 = vadd.f32 %v1055, %v1095
  %1097 = vmatmul.f32.gmra.mxu0 %v588
  %v1098 = vpop.f32.mrf.mxu0
  %v1099 = vadd.f32 %v1058, %v1098
  %1100 = vdwg.mxu0
  %1101 = vmatpush.msra.mxu0 %v710
  %1102 = vmatpush.msra.mxu0 %v709
  %1103 = vmatpush.msra.mxu0 %v708
  %1104 = vmatpush.msra.mxu0 %v707
  %1105 = vmatpush.msra.mxu0 %v706
  %1106 = vmatpush.msra.mxu0 %v705
  %1107 = vmatpush.msra.mxu0 %v704
  %1108 = vmatpush.msra.mxu0 %v703
  %1109 = vmatpush.msra.mxu0 %v702
  %1110 = vmatpush.msra.mxu0 %v701
  %1111 = vmatpush.msra.mxu0 %v700
  %1112 = vmatpush.msra.mxu0 %v699
  %1113 = vmatpush.msra.mxu0 %v698
  %1114 = vmatpush.msra.mxu0 %v697
  %1115 = vmatpush.msra.mxu0 %v696
  %1116 = vmatpush.msra.mxu0 %v695
  %1117 = vmatmul.f32.gmra.mxu0 %v477
  %v1118 = vpop.f32.mrf.mxu0
  %v1119 = vadd.f32 %v1078, %v1118
  %1120 = vmatmul.f32.gmra.mxu0 %v493
  %v1121 = vpop.f32.mrf.mxu0
  %v1122 = vadd.f32 %v1081, %v1121
  %1123 = vmatmul.f32.gmra.mxu0 %v509
  %v1124 = vpop.f32.mrf.mxu0
  %v1125 = vadd.f32 %v1084, %v1124
  %1126 = vmatmul.f32.gmra.mxu0 %v525
  %v1127 = vpop.f32.mrf.mxu0
  %v1128 = vadd.f32 %v1087, %v1127
  %1129 = vmatmul.f32.gmra.mxu0 %v541
  %v1130 = vpop.f32.mrf.mxu0
  %v1131 = vadd.f32 %v1090, %v1130
  %1132 = vmatmul.f32.gmra.mxu0 %v557
  %v1133 = vpop.f32.mrf.mxu0
  %v1134 = vadd.f32 %v1093, %v1133
  %1135 = vmatmul.f32.gmra.mxu0 %v573
  %v1136 = vpop.f32.mrf.mxu0
  %v1137 = vadd.f32 %v1096, %v1136
  %1138 = vmatmul.f32.gmra.mxu0 %v589
  %v1139 = vpop.f32.mrf.mxu0
  %v1140 = vadd.f32 %v1099, %v1139
  %1141 = vdwg.mxu0
  %1142 = vmatpush.msra.mxu0 %v726
  %1143 = vmatpush.msra.mxu0 %v725
  %1144 = vmatpush.msra.mxu0 %v724
  %1145 = vmatpush.msra.mxu0 %v723
  %1146 = vmatpush.msra.mxu0 %v722
  %1147 = vmatpush.msra.mxu0 %v721
  %1148 = vmatpush.msra.mxu0 %v720
  %1149 = vmatpush.msra.mxu0 %v719
  %1150 = vmatpush.msra.mxu0 %v718
  %1151 = vmatpush.msra.mxu0 %v717
  %1152 = vmatpush.msra.mxu0 %v716
  %1153 = vmatpush.msra.mxu0 %v715
  %1154 = vmatpush.msra.mxu0 %v714
  %1155 = vmatpush.msra.mxu0 %v713
  %1156 = vmatpush.msra.mxu0 %v712
  %1157 = vmatpush.msra.mxu0 %v711
  %1158 = vmatmul.f32.gmra.mxu0 %v478
  %v1159 = vpop.f32.mrf.mxu0
  %v1160 = vadd.f32 %v1119, %v1159
  %1161 = vmatmul.f32.gmra.mxu0 %v494
  %v1162 = vpop.f32.mrf.mxu0
  %v1163 = vadd.f32 %v1122, %v1162
  %1164 = vmatmul.f32.gmra.mxu0 %v510
  %v1165 = vpop.f32.mrf.mxu0
  %v1166 = vadd.f32 %v1125, %v1165
  %1167 = vmatmul.f32.gmra.mxu0 %v526
  %v1168 = vpop.f32.mrf.mxu0
  %v1169 = vadd.f32 %v1128, %v1168
  %1170 = vmatmul.f32.gmra.mxu0 %v542
  %v1171 = vpop.f32.mrf.mxu0
  %v1172 = vadd.f32 %v1131, %v1171
  %1173 = vmatmul.f32.gmra.mxu0 %v558
  %v1174 = vpop.f32.mrf.mxu0
  %v1175 = vadd.f32 %v1134, %v1174
  %1176 = vmatmul.f32.gmra.mxu0 %v574
  %v1177 = vpop.f32.mrf.mxu0
  %v1178 = vadd.f32 %v1137, %v1177
  %1179 = vmatmul.f32.gmra.mxu0 %v590
  %v1180 = vpop.f32.mrf.mxu0
  %v1181 = vadd.f32 %v1140, %v1180
  %1182 = vdwg.mxu0
  %1183 = vmatpush.msra.mxu0 %v742
  %1184 = vmatpush.msra.mxu0 %v741
  %1185 = vmatpush.msra.mxu0 %v740
  %1186 = vmatpush.msra.mxu0 %v739
  %1187 = vmatpush.msra.mxu0 %v738
  %1188 = vmatpush.msra.mxu0 %v737
  %1189 = vmatpush.msra.mxu0 %v736
  %1190 = vmatpush.msra.mxu0 %v735
  %1191 = vmatpush.msra.mxu0 %v734
  %1192 = vmatpush.msra.mxu0 %v733
  %1193 = vmatpush.msra.mxu0 %v732
  %1194 = vmatpush.msra.mxu0 %v731
  %1195 = vmatpush.msra.mxu0 %v730
  %1196 = vmatpush.msra.mxu0 %v729
  %1197 = vmatpush.msra.mxu0 %v728
  %1198 = vmatpush.msra.mxu0 %v727
  %1199 = vmatmul.f32.gmra.mxu0 %v479
  %v1200 = vpop.f32.mrf.mxu0
  %v1201 = vadd.f32 %v1160, %v1200
  %1202 = vmatmul.f32.gmra.mxu0 %v495
  %v1203 = vpop.f32.mrf.mxu0
  %v1204 = vadd.f32 %v1163, %v1203
  %1205 = vmatmul.f32.gmra.mxu0 %v511
  %v1206 = vpop.f32.mrf.mxu0
  %v1207 = vadd.f32 %v1166, %v1206
  %1208 = vmatmul.f32.gmra.mxu0 %v527
  %v1209 = vpop.f32.mrf.mxu0
  %v1210 = vadd.f32 %v1169, %v1209
  %1211 = vmatmul.f32.gmra.mxu0 %v543
  %v1212 = vpop.f32.mrf.mxu0
  %v1213 = vadd.f32 %v1172, %v1212
  %1214 = vmatmul.f32.gmra.mxu0 %v559
  %v1215 = vpop.f32.mrf.mxu0
  %v1216 = vadd.f32 %v1175, %v1215
  %1217 = vmatmul.f32.gmra.mxu0 %v575
  %v1218 = vpop.f32.mrf.mxu0
  %v1219 = vadd.f32 %v1178, %v1218
  %1220 = vmatmul.f32.gmra.mxu0 %v591
  %v1221 = vpop.f32.mrf.mxu0
  %v1222 = vadd.f32 %v1181, %v1221
  %1223 = vdwg.mxu0
  %1224 = vmatpush.msra.mxu0 %v758
  %1225 = vmatpush.msra.mxu0 %v757
  %1226 = vmatpush.msra.mxu0 %v756
  %1227 = vmatpush.msra.mxu0 %v755
  %1228 = vmatpush.msra.mxu0 %v754
  %1229 = vmatpush.msra.mxu0 %v753
  %1230 = vmatpush.msra.mxu0 %v752
  %1231 = vmatpush.msra.mxu0 %v751
  %1232 = vmatpush.msra.mxu0 %v750
  %1233 = vmatpush.msra.mxu0 %v749
  %1234 = vmatpush.msra.mxu0 %v748
  %1235 = vmatpush.msra.mxu0 %v747
  %1236 = vmatpush.msra.mxu0 %v746
  %1237 = vmatpush.msra.mxu0 %v745
  %1238 = vmatpush.msra.mxu0 %v744
  %1239 = vmatpush.msra.mxu0 %v743
  %1240 = vmatmul.f32.gmra.mxu0 %v480
  %v1241 = vpop.f32.mrf.mxu0
  %v1242 = vadd.f32 %v1201, %v1241
  %1243 = vmatmul.f32.gmra.mxu0 %v496
  %v1244 = vpop.f32.mrf.mxu0
  %v1245 = vadd.f32 %v1204, %v1244
  %1246 = vmatmul.f32.gmra.mxu0 %v512
  %v1247 = vpop.f32.mrf.mxu0
  %v1248 = vadd.f32 %v1207, %v1247
  %1249 = vmatmul.f32.gmra.mxu0 %v528
  %v1250 = vpop.f32.mrf.mxu0
  %v1251 = vadd.f32 %v1210, %v1250
  %1252 = vmatmul.f32.gmra.mxu0 %v544
  %v1253 = vpop.f32.mrf.mxu0
  %v1254 = vadd.f32 %v1213, %v1253
  %1255 = vmatmul.f32.gmra.mxu0 %v560
  %v1256 = vpop.f32.mrf.mxu0
  %v1257 = vadd.f32 %v1216, %v1256
  %1258 = vmatmul.f32.gmra.mxu0 %v576
  %v1259 = vpop.f32.mrf.mxu0
  %v1260 = vadd.f32 %v1219, %v1259
  %1261 = vmatmul.f32.gmra.mxu0 %v592
  %v1262 = vpop.f32.mrf.mxu0
  %v1263 = vadd.f32 %v1222, %v1262
  %1264 = vdwg.mxu0
  %1265 = vmatpush.msra.mxu0 %v774
  %1266 = vmatpush.msra.mxu0 %v773
  %1267 = vmatpush.msra.mxu0 %v772
  %1268 = vmatpush.msra.mxu0 %v771
  %1269 = vmatpush.msra.mxu0 %v770
  %1270 = vmatpush.msra.mxu0 %v769
  %1271 = vmatpush.msra.mxu0 %v768
  %1272 = vmatpush.msra.mxu0 %v767
  %1273 = vmatpush.msra.mxu0 %v766
  %1274 = vmatpush.msra.mxu0 %v765
  %1275 = vmatpush.msra.mxu0 %v764
  %1276 = vmatpush.msra.mxu0 %v763
  %1277 = vmatpush.msra.mxu0 %v762
  %1278 = vmatpush.msra.mxu0 %v761
  %1279 = vmatpush.msra.mxu0 %v760
  %1280 = vmatpush.msra.mxu0 %v759
  %1281 = vmatmul.f32.gmra.mxu0 %v481
  %v1282 = vpop.f32.mrf.mxu0
  %v1283 = vadd.f32 %v1242, %v1282
  %1284 = vmatmul.f32.gmra.mxu0 %v497
  %v1285 = vpop.f32.mrf.mxu0
  %v1286 = vadd.f32 %v1245, %v1285
  %1287 = vmatmul.f32.gmra.mxu0 %v513
  %v1288 = vpop.f32.mrf.mxu0
  %v1289 = vadd.f32 %v1248, %v1288
  %1290 = vmatmul.f32.gmra.mxu0 %v529
  %v1291 = vpop.f32.mrf.mxu0
  %v1292 = vadd.f32 %v1251, %v1291
  %1293 = vmatmul.f32.gmra.mxu0 %v545
  %v1294 = vpop.f32.mrf.mxu0
  %v1295 = vadd.f32 %v1254, %v1294
  %1296 = vmatmul.f32.gmra.mxu0 %v561
  %v1297 = vpop.f32.mrf.mxu0
  %v1298 = vadd.f32 %v1257, %v1297
  %1299 = vmatmul.f32.gmra.mxu0 %v577
  %v1300 = vpop.f32.mrf.mxu0
  %v1301 = vadd.f32 %v1260, %v1300
  %1302 = vmatmul.f32.gmra.mxu0 %v593
  %v1303 = vpop.f32.mrf.mxu0
  %v1304 = vadd.f32 %v1263, %v1303
  %1305 = vdwg.mxu0
  %1306 = vmatpush.msra.mxu0 %v790
  %1307 = vmatpush.msra.mxu0 %v789
  %1308 = vmatpush.msra.mxu0 %v788
  %1309 = vmatpush.msra.mxu0 %v787
  %1310 = vmatpush.msra.mxu0 %v786
  %1311 = vmatpush.msra.mxu0 %v785
  %1312 = vmatpush.msra.mxu0 %v784
  %1313 = vmatpush.msra.mxu0 %v783
  %1314 = vmatpush.msra.mxu0 %v782
  %1315 = vmatpush.msra.mxu0 %v781
  %1316 = vmatpush.msra.mxu0 %v780
  %1317 = vmatpush.msra.mxu0 %v779
  %1318 = vmatpush.msra.mxu0 %v778
  %1319 = vmatpush.msra.mxu0 %v777
  %1320 = vmatpush.msra.mxu0 %v776
  %1321 = vmatpush.msra.mxu0 %v775
  %1322 = vmatmul.f32.gmra.mxu0 %v482
  %v1323 = vpop.f32.mrf.mxu0
  %v1324 = vadd.f32 %v1283, %v1323
  %1325 = vmatmul.f32.gmra.mxu0 %v498
  %v1326 = vpop.f32.mrf.mxu0
  %v1327 = vadd.f32 %v1286, %v1326
  %1328 = vmatmul.f32.gmra.mxu0 %v514
  %v1329 = vpop.f32.mrf.mxu0
  %v1330 = vadd.f32 %v1289, %v1329
  %1331 = vmatmul.f32.gmra.mxu0 %v530
  %v1332 = vpop.f32.mrf.mxu0
  %v1333 = vadd.f32 %v1292, %v1332
  %1334 = vmatmul.f32.gmra.mxu0 %v546
  %v1335 = vpop.f32.mrf.mxu0
  %v1336 = vadd.f32 %v1295, %v1335
  %1337 = vmatmul.f32.gmra.mxu0 %v562
  %v1338 = vpop.f32.mrf.mxu0
  %v1339 = vadd.f32 %v1298, %v1338
  %1340 = vmatmul.f32.gmra.mxu0 %v578
  %v1341 = vpop.f32.mrf.mxu0
  %v1342 = vadd.f32 %v1301, %v1341
  %1343 = vmatmul.f32.gmra.mxu0 %v594
  %v1344 = vpop.f32.mrf.mxu0
  %v1345 = vadd.f32 %v1304, %v1344
  %1346 = vdwg.mxu0
  %1347 = vmatpush.msra.mxu0 %v806
  %1348 = vmatpush.msra.mxu0 %v805
  %1349 = vmatpush.msra.mxu0 %v804
  %1350 = vmatpush.msra.mxu0 %v803
  %1351 = vmatpush.msra.mxu0 %v802
  %1352 = vmatpush.msra.mxu0 %v801
  %1353 = vmatpush.msra.mxu0 %v800
  %1354 = vmatpush.msra.mxu0 %v799
  %1355 = vmatpush.msra.mxu0 %v798
  %1356 = vmatpush.msra.mxu0 %v797
  %1357 = vmatpush.msra.mxu0 %v796
  %1358 = vmatpush.msra.mxu0 %v795
  %1359 = vmatpush.msra.mxu0 %v794
  %1360 = vmatpush.msra.mxu0 %v793
  %1361 = vmatpush.msra.mxu0 %v792
  %1362 = vmatpush.msra.mxu0 %v791
  %1363 = vmatmul.f32.gmra.mxu0 %v483
  %v1364 = vpop.f32.mrf.mxu0
  %v1365 = vadd.f32 %v1324, %v1364
  %1366 = vmatmul.f32.gmra.mxu0 %v499
  %v1367 = vpop.f32.mrf.mxu0
  %v1368 = vadd.f32 %v1327, %v1367
  %1369 = vmatmul.f32.gmra.mxu0 %v515
  %v1370 = vpop.f32.mrf.mxu0
  %v1371 = vadd.f32 %v1330, %v1370
  %1372 = vmatmul.f32.gmra.mxu0 %v531
  %v1373 = vpop.f32.mrf.mxu0
  %v1374 = vadd.f32 %v1333, %v1373
  %1375 = vmatmul.f32.gmra.mxu0 %v547
  %v1376 = vpop.f32.mrf.mxu0
  %v1377 = vadd.f32 %v1336, %v1376
  %1378 = vmatmul.f32.gmra.mxu0 %v563
  %v1379 = vpop.f32.mrf.mxu0
  %v1380 = vadd.f32 %v1339, %v1379
  %1381 = vmatmul.f32.gmra.mxu0 %v579
  %v1382 = vpop.f32.mrf.mxu0
  %v1383 = vadd.f32 %v1342, %v1382
  %1384 = vmatmul.f32.gmra.mxu0 %v595
  %v1385 = vpop.f32.mrf.mxu0
  %v1386 = vadd.f32 %v1345, %v1385
  %1387 = vdwg.mxu0
  %1388 = vmatpush.msra.mxu0 %v822
  %1389 = vmatpush.msra.mxu0 %v821
  %1390 = vmatpush.msra.mxu0 %v820
  %1391 = vmatpush.msra.mxu0 %v819
  %1392 = vmatpush.msra.mxu0 %v818
  %1393 = vmatpush.msra.mxu0 %v817
  %1394 = vmatpush.msra.mxu0 %v816
  %1395 = vmatpush.msra.mxu0 %v815
  %1396 = vmatpush.msra.mxu0 %v814
  %1397 = vmatpush.msra.mxu0 %v813
  %1398 = vmatpush.msra.mxu0 %v812
  %1399 = vmatpush.msra.mxu0 %v811
  %1400 = vmatpush.msra.mxu0 %v810
  %1401 = vmatpush.msra.mxu0 %v809
  %1402 = vmatpush.msra.mxu0 %v808
  %1403 = vmatpush.msra.mxu0 %v807
  %1404 = vmatmul.f32.gmra.mxu0 %v484
  %v1405 = vpop.f32.mrf.mxu0
  %v1406 = vadd.f32 %v1365, %v1405
  %1407 = vmatmul.f32.gmra.mxu0 %v500
  %v1408 = vpop.f32.mrf.mxu0
  %v1409 = vadd.f32 %v1368, %v1408
  %1410 = vmatmul.f32.gmra.mxu0 %v516
  %v1411 = vpop.f32.mrf.mxu0
  %v1412 = vadd.f32 %v1371, %v1411
  %1413 = vmatmul.f32.gmra.mxu0 %v532
  %v1414 = vpop.f32.mrf.mxu0
  %v1415 = vadd.f32 %v1374, %v1414
  %1416 = vmatmul.f32.gmra.mxu0 %v548
  %v1417 = vpop.f32.mrf.mxu0
  %v1418 = vadd.f32 %v1377, %v1417
  %1419 = vmatmul.f32.gmra.mxu0 %v564
  %v1420 = vpop.f32.mrf.mxu0
  %v1421 = vadd.f32 %v1380, %v1420
  %1422 = vmatmul.f32.gmra.mxu0 %v580
  %v1423 = vpop.f32.mrf.mxu0
  %v1424 = vadd.f32 %v1383, %v1423
  %1425 = vmatmul.f32.gmra.mxu0 %v596
  %v1426 = vpop.f32.mrf.mxu0
  %v1427 = vadd.f32 %v1386, %v1426
  %1428 = vdwg.mxu0
  %1429 = vmatpush.msra.mxu0 %v838
  %1430 = vmatpush.msra.mxu0 %v837
  %1431 = vmatpush.msra.mxu0 %v836
  %1432 = vmatpush.msra.mxu0 %v835
  %1433 = vmatpush.msra.mxu0 %v834
  %1434 = vmatpush.msra.mxu0 %v833
  %1435 = vmatpush.msra.mxu0 %v832
  %1436 = vmatpush.msra.mxu0 %v831
  %1437 = vmatpush.msra.mxu0 %v830
  %1438 = vmatpush.msra.mxu0 %v829
  %1439 = vmatpush.msra.mxu0 %v828
  %1440 = vmatpush.msra.mxu0 %v827
  %1441 = vmatpush.msra.mxu0 %v826
  %1442 = vmatpush.msra.mxu0 %v825
  %1443 = vmatpush.msra.mxu0 %v824
  %1444 = vmatpush.msra.mxu0 %v823
  %1445 = vmatmul.f32.gmra.mxu0 %v485
  %v1446 = vpop.f32.mrf.mxu0
  %v1447 = vadd.f32 %v1406, %v1446
  %1448 = vmatmul.f32.gmra.mxu0 %v501
  %v1449 = vpop.f32.mrf.mxu0
  %v1450 = vadd.f32 %v1409, %v1449
  %1451 = vmatmul.f32.gmra.mxu0 %v517
  %v1452 = vpop.f32.mrf.mxu0
  %v1453 = vadd.f32 %v1412, %v1452
  %1454 = vmatmul.f32.gmra.mxu0 %v533
  %v1455 = vpop.f32.mrf.mxu0
  %v1456 = vadd.f32 %v1415, %v1455
  %1457 = vmatmul.f32.gmra.mxu0 %v549
  %v1458 = vpop.f32.mrf.mxu0
  %v1459 = vadd.f32 %v1418, %v1458
  %1460 = vmatmul.f32.gmra.mxu0 %v565
  %v1461 = vpop.f32.mrf.mxu0
  %v1462 = vadd.f32 %v1421, %v1461
  %1463 = vmatmul.f32.gmra.mxu0 %v581
  %v1464 = vpop.f32.mrf.mxu0
  %v1465 = vadd.f32 %v1424, %v1464
  %1466 = vmatmul.f32.gmra.mxu0 %v597
  %v1467 = vpop.f32.mrf.mxu0
  %v1468 = vadd.f32 %v1427, %v1467
  %1469 = vdwg.mxu0
  %1470 = vmatpush.msra.mxu0 %v854
  %1471 = vmatpush.msra.mxu0 %v853
  %1472 = vmatpush.msra.mxu0 %v852
  %1473 = vmatpush.msra.mxu0 %v851
  %1474 = vmatpush.msra.mxu0 %v850
  %1475 = vmatpush.msra.mxu0 %v849
  %1476 = vmatpush.msra.mxu0 %v848
  %1477 = vmatpush.msra.mxu0 %v847
  %1478 = vmatpush.msra.mxu0 %v846
  %1479 = vmatpush.msra.mxu0 %v845
  %1480 = vmatpush.msra.mxu0 %v844
  %1481 = vmatpush.msra.mxu0 %v843
  %1482 = vmatpush.msra.mxu0 %v842
  %1483 = vmatpush.msra.mxu0 %v841
  %1484 = vmatpush.msra.mxu0 %v840
  %1485 = vmatpush.msra.mxu0 %v839
  %1486 = vmatmul.f32.gmra.mxu0 %v486
  %v1487 = vpop.f32.mrf.mxu0
  %v1488 = vadd.f32 %v1447, %v1487
  %1489 = vmatmul.f32.gmra.mxu0 %v502
  %v1490 = vpop.f32.mrf.mxu0
  %v1491 = vadd.f32 %v1450, %v1490
  %1492 = vmatmul.f32.gmra.mxu0 %v518
  %v1493 = vpop.f32.mrf.mxu0
  %v1494 = vadd.f32 %v1453, %v1493
  %1495 = vmatmul.f32.gmra.mxu0 %v534
  %v1496 = vpop.f32.mrf.mxu0
  %v1497 = vadd.f32 %v1456, %v1496
  %1498 = vmatmul.f32.gmra.mxu0 %v550
  %v1499 = vpop.f32.mrf.mxu0
  %v1500 = vadd.f32 %v1459, %v1499
  %1501 = vmatmul.f32.gmra.mxu0 %v566
  %v1502 = vpop.f32.mrf.mxu0
  %v1503 = vadd.f32 %v1462, %v1502
  %1504 = vmatmul.f32.gmra.mxu0 %v582
  %v1505 = vpop.f32.mrf.mxu0
  %v1506 = vadd.f32 %v1465, %v1505
  %1507 = vmatmul.f32.gmra.mxu0 %v598
  %v1508 = vpop.f32.mrf.mxu0
  %v1509 = vadd.f32 %v1468, %v1508
  %1510 = vdwg.mxu0
  %v1511 = vmax.f32 %v1488, 0.0
  %v1512 = vmax.f32 %v1491, 0.0
  %v1513 = vmax.f32 %v1494, 0.0
  %v1514 = vmax.f32 %v1497, 0.0
  %v1515 = vmax.f32 %v1500, 0.0
  %v1516 = vmax.f32 %v1503, 0.0
  %v1517 = vmax.f32 %v1506, 0.0
  %v1518 = vmax.f32 %v1509, 0.0
  %v1519 = vld [vmem:[%s5] sm:$0xff]
  %v1520 = vld [vmem:[%s5 + $0x8] sm:$0xff]
  %v1521 = vld [vmem:[%s5 + $0x10] sm:$0xff]
  %v1522 = vld [vmem:[%s5 + $0x18] sm:$0xff]
  %v1523 = vld [vmem:[%s5 + $0x20] sm:$0xff]
  %v1524 = vld [vmem:[%s5 + $0x28] sm:$0xff]
  %v1525 = vld [vmem:[%s5 + $0x30] sm:$0xff]
  %v1526 = vld [vmem:[%s5 + $0x38] sm:$0xff]
  %1528 = vset.pattern.permute.xlu0 0
  %1529 = vperm.xlu0 %1528, %v1519
  %v1530 = vpop.permute.xlu0 %1529
  %1533 = vset.pattern.permute.xlu0 0
  %1534 = vperm.xlu0 %1533, %v1520
  %v1535 = vpop.permute.xlu0 %1534
  %1538 = vset.pattern.permute.xlu0 0
  %1539 = vperm.xlu0 %1538, %v1521
  %v1540 = vpop.permute.xlu0 %1539
  %1543 = vset.pattern.permute.xlu0 0
  %1544 = vperm.xlu0 %1543, %v1522
  %v1545 = vpop.permute.xlu0 %1544
  %1548 = vset.pattern.permute.xlu0 0
  %1549 = vperm.xlu0 %1548, %v1523
  %v1550 = vpop.permute.xlu0 %1549
  %1553 = vset.pattern.permute.xlu0 0
  %1554 = vperm.xlu0 %1553, %v1524
  %v1555 = vpop.permute.xlu0 %1554
  %1558 = vset.pattern.permute.xlu0 0
  %1559 = vperm.xlu0 %1558, %v1525
  %v1560 = vpop.permute.xlu0 %1559
  %1563 = vset.pattern.permute.xlu0 0
  %1564 = vperm.xlu0 %1563, %v1526
  %v1565 = vpop.permute.xlu0 %1564
  %v1567 = vmul.f32 %v1511, %v1530
  %v1568 = vmul.f32 %v1512, %v1535
  %v1569 = vmul.f32 %v1513, %v1540
  %v1570 = vmul.f32 %v1514, %v1545
  %v1571 = vmul.f32 %v1515, %v1550
  %v1572 = vmul.f32 %v1516, %v1555
  %v1573 = vmul.f32 %v1517, %v1560
  %v1574 = vmul.f32 %v1518, %v1565
  %1575 = vset.pattern.permute.xlu0 1
  %1576 = vperm.xlu0 %1575, %v1519
  %v1577 = vpop.permute.xlu0 %1576
  %1579 = vset.pattern.permute.xlu0 1
  %1580 = vperm.xlu0 %1579, %v1520
  %v1581 = vpop.permute.xlu0 %1580
  %1583 = vset.pattern.permute.xlu0 1
  %1584 = vperm.xlu0 %1583, %v1521
  %v1585 = vpop.permute.xlu0 %1584
  %1587 = vset.pattern.permute.xlu0 1
  %1588 = vperm.xlu0 %1587, %v1522
  %v1589 = vpop.permute.xlu0 %1588
  %1591 = vset.pattern.permute.xlu0 1
  %1592 = vperm.xlu0 %1591, %v1523
  %v1593 = vpop.permute.xlu0 %1592
  %1595 = vset.pattern.permute.xlu0 1
  %1596 = vperm.xlu0 %1595, %v1524
  %v1597 = vpop.permute.xlu0 %1596
  %1599 = vset.pattern.permute.xlu0 1
  %1600 = vperm.xlu0 %1599, %v1525
  %v1601 = vpop.permute.xlu0 %1600
  %1603 = vset.pattern.permute.xlu0 1
  %1604 = vperm.xlu0 %1603, %v1526
  %v1605 = vpop.permute.xlu0 %1604
  %v1607 = vadd.f32 %v1567, %v1577
  %v1608 = vadd.f32 %v1568, %v1581
  %v1609 = vadd.f32 %v1569, %v1585
  %v1610 = vadd.f32 %v1570, %v1589
  %v1611 = vadd.f32 %v1571, %v1593
  %v1612 = vadd.f32 %v1572, %v1597
  %v1613 = vadd.f32 %v1573, %v1601
  %v1614 = vadd.f32 %v1574, %v1605
  %vm1615 = vcmask 146432
  %1616 = vst.msk [vmem:[%s8] sm:$0xff] %vm1615, %v1607
  %1617 = vst.msk [vmem:[%s8 + $0x8] sm:$0xff] %vm1615, %v1608
  %1618 = vst.msk [vmem:[%s8 + $0x10] sm:$0xff] %vm1615, %v1609
  %1619 = vst.msk [vmem:[%s8 + $0x18] sm:$0xff] %vm1615, %v1610
  %1620 = vst.msk [vmem:[%s8 + $0x20] sm:$0xff] %vm1615, %v1611
  %1621 = vst.msk [vmem:[%s8 + $0x28] sm:$0xff] %vm1615, %v1612
  %1622 = vst.msk [vmem:[%s8 + $0x30] sm:$0xff] %vm1615, %v1613
  %1623 = vst.msk [vmem:[%s8 + $0x38] sm:$0xff] %vm1615, %v1614
  %v1624 = vld [vmem:[%s6] sm:$0xff]
  %v1625 = vld [vmem:[%s6 + $0x8] sm:$0xff]
  %v1626 = vld [vmem:[%s6 + $0x10] sm:$0xff]
  %v1627 = vld [vmem:[%s6 + $0x18] sm:$0xff]
  %v1628 = vld [vmem:[%s6 + $0x20] sm:$0xff]
  %v1629 = vld [vmem:[%s6 + $0x28] sm:$0xff]
  %v1630 = vld [vmem:[%s6 + $0x30] sm:$0xff]
  %v1631 = vld [vmem:[%s6 + $0x38] sm:$0xff]
  %s1632 = scalar_lea.vmem %s6, 64
  %v1633 = vld [vmem:[%s1632] sm:$0xff]
  %v1634 = vld [vmem:[%s1632 + $0x8] sm:$0xff]
  %v1635 = vld [vmem:[%s1632 + $0x10] sm:$0xff]
  %v1636 = vld [vmem:[%s1632 + $0x18] sm:$0xff]
  %v1637 = vld [vmem:[%s1632 + $0x20] sm:$0xff]
  %v1638 = vld [vmem:[%s1632 + $0x28] sm:$0xff]
  %v1639 = vld [vmem:[%s1632 + $0x30] sm:$0xff]
  %v1640 = vld [vmem:[%s1632 + $0x38] sm:$0xff]
  %1645 = vrot.lane.b32.xlu0 %v463, 110
  %v1646 = vpop.permute.xlu0 %1645
  %1647 = vrot.lane.b32.xlu0 %v465, 110
  %v1648 = vpop.permute.xlu0 %1647
  %1649 = vrot.lane.b32.xlu0 %v467, 110
  %v1650 = vpop.permute.xlu0 %1649
  %1651 = vrot.lane.b32.xlu0 %v469, 110
  %v1652 = vpop.permute.xlu0 %1651
  %vm1657 = vcmask 261120
  %v1659 = vsel %vm1657, %v1633, 0
  %v1662 = vsel %vm1657, %v1634, 0
  %v1665 = vsel %vm1657, %v1635, 0
  %v1668 = vsel %vm1657, %v1636, 0
  %v1671 = vsel %vm1657, %v1637, 0
  %v1674 = vsel %vm1657, %v1638, 0
  %v1677 = vsel %vm1657, %v1639, 0
  %v1680 = vsel %vm1657, %v1640, 0
  %1682 = vmatpush.msra.mxu0 0.0
  %1683 = vmatpush.msra.mxu0 0.0
  %1684 = vmatpush.msra.mxu0 0.0
  %1685 = vmatpush.msra.mxu0 0.0
  %1686 = vmatpush.msra.mxu0 0.0
  %1687 = vmatpush.msra.mxu0 0.0
  %1688 = vmatpush.msra.mxu0 0.0
  %1689 = vmatpush.msra.mxu0 0.0
  %1690 = vmatpush.msra.mxu0 0.0
  %1691 = vmatpush.msra.mxu0 0.0
  %1692 = vmatpush.msra.mxu0 0.0
  %1693 = vmatpush.msra.mxu0 0.0
  %1694 = vmatpush.msra.mxu0 %v1652
  %1695 = vmatpush.msra.mxu0 %v1650
  %1696 = vmatpush.msra.mxu0 %v1648
  %1697 = vmatpush.msra.mxu0 %v1646
  %1698 = vmatmul.f32.gmra.mxu0 %v1659
  %v1699 = vpop.f32.mrf.mxu0
  %v1700 = vadd.f32 0.0, %v1699
  %1701 = vmatmul.f32.gmra.mxu0 %v1662
  %v1702 = vpop.f32.mrf.mxu0
  %v1703 = vadd.f32 0.0, %v1702
  %1704 = vmatmul.f32.gmra.mxu0 %v1665
  %v1705 = vpop.f32.mrf.mxu0
  %v1706 = vadd.f32 0.0, %v1705
  %1707 = vmatmul.f32.gmra.mxu0 %v1668
  %v1708 = vpop.f32.mrf.mxu0
  %v1709 = vadd.f32 0.0, %v1708
  %1710 = vmatmul.f32.gmra.mxu0 %v1671
  %v1711 = vpop.f32.mrf.mxu0
  %v1712 = vadd.f32 0.0, %v1711
  %1713 = vmatmul.f32.gmra.mxu0 %v1674
  %v1714 = vpop.f32.mrf.mxu0
  %v1715 = vadd.f32 0.0, %v1714
  %1716 = vmatmul.f32.gmra.mxu0 %v1677
  %v1717 = vpop.f32.mrf.mxu0
  %v1718 = vadd.f32 0.0, %v1717
  %1719 = vmatmul.f32.gmra.mxu0 %v1680
  %v1720 = vpop.f32.mrf.mxu0
  %v1721 = vadd.f32 0.0, %v1720
  %1722 = vdwg.mxu0
  %v1724 = vsel %vm1657, %v1624, 0
  %v1727 = vsel %vm1657, %v1625, 0
  %v1730 = vsel %vm1657, %v1626, 0
  %v1733 = vsel %vm1657, %v1627, 0
  %v1736 = vsel %vm1657, %v1628, 0
  %v1739 = vsel %vm1657, %v1629, 0
  %v1742 = vsel %vm1657, %v1630, 0
  %v1745 = vsel %vm1657, %v1631, 0
  %1747 = vmatpush.msra.mxu0 0.0
  %1748 = vmatpush.msra.mxu0 0.0
  %1749 = vmatpush.msra.mxu0 0.0
  %1750 = vmatpush.msra.mxu0 0.0
  %1751 = vmatpush.msra.mxu0 0.0
  %1752 = vmatpush.msra.mxu0 0.0
  %1753 = vmatpush.msra.mxu0 0.0
  %1754 = vmatpush.msra.mxu0 0.0
  %1755 = vmatpush.msra.mxu0 0.0
  %1756 = vmatpush.msra.mxu0 0.0
  %1757 = vmatpush.msra.mxu0 0.0
  %1758 = vmatpush.msra.mxu0 0.0
  %1759 = vmatpush.msra.mxu0 %v469
  %1760 = vmatpush.msra.mxu0 %v467
  %1761 = vmatpush.msra.mxu0 %v465
  %1762 = vmatpush.msra.mxu0 %v463
  %1763 = vmatmul.f32.gmra.mxu0 %v1724
  %v1764 = vpop.f32.mrf.mxu0
  %v1765 = vadd.f32 %v1700, %v1764
  %1766 = vmatmul.f32.gmra.mxu0 %v1727
  %v1767 = vpop.f32.mrf.mxu0
  %v1768 = vadd.f32 %v1703, %v1767
  %1769 = vmatmul.f32.gmra.mxu0 %v1730
  %v1770 = vpop.f32.mrf.mxu0
  %v1771 = vadd.f32 %v1706, %v1770
  %1772 = vmatmul.f32.gmra.mxu0 %v1733
  %v1773 = vpop.f32.mrf.mxu0
  %v1774 = vadd.f32 %v1709, %v1773
  %1775 = vmatmul.f32.gmra.mxu0 %v1736
  %v1776 = vpop.f32.mrf.mxu0
  %v1777 = vadd.f32 %v1712, %v1776
  %1778 = vmatmul.f32.gmra.mxu0 %v1739
  %v1779 = vpop.f32.mrf.mxu0
  %v1780 = vadd.f32 %v1715, %v1779
  %1781 = vmatmul.f32.gmra.mxu0 %v1742
  %v1782 = vpop.f32.mrf.mxu0
  %v1783 = vadd.f32 %v1718, %v1782
  %1784 = vmatmul.f32.gmra.mxu0 %v1745
  %v1785 = vpop.f32.mrf.mxu0
  %v1786 = vadd.f32 %v1721, %v1785
  %1787 = vdwg.mxu0
  %s1788 = scalar_lea.vmem %s6, 128
  %v1789 = vld [vmem:[%s1788] sm:$0xff]
  %v1790 = vld [vmem:[%s1788 + $0x8] sm:$0xff]
  %v1791 = vld [vmem:[%s1788 + $0x10] sm:$0xff]
  %v1792 = vld [vmem:[%s1788 + $0x18] sm:$0xff]
  %v1793 = vld [vmem:[%s1788 + $0x20] sm:$0xff]
  %v1794 = vld [vmem:[%s1788 + $0x28] sm:$0xff]
  %v1795 = vld [vmem:[%s1788 + $0x30] sm:$0xff]
  %v1796 = vld [vmem:[%s1788 + $0x38] sm:$0xff]
  %1797 = vrot.lane.b32.xlu0 %v463, 92
  %v1798 = vpop.permute.xlu0 %1797
  %1799 = vrot.lane.b32.xlu0 %v465, 92
  %v1800 = vpop.permute.xlu0 %1799
  %1801 = vrot.lane.b32.xlu0 %v467, 92
  %v1802 = vpop.permute.xlu0 %1801
  %1803 = vrot.lane.b32.xlu0 %v469, 92
  %v1804 = vpop.permute.xlu0 %1803
  %v1810 = vsel %vm1657, %v1789, 0
  %v1813 = vsel %vm1657, %v1790, 0
  %v1816 = vsel %vm1657, %v1791, 0
  %v1819 = vsel %vm1657, %v1792, 0
  %v1822 = vsel %vm1657, %v1793, 0
  %v1825 = vsel %vm1657, %v1794, 0
  %v1828 = vsel %vm1657, %v1795, 0
  %v1831 = vsel %vm1657, %v1796, 0
  %1833 = vmatpush.msra.mxu0 0.0
  %1834 = vmatpush.msra.mxu0 0.0
  %1835 = vmatpush.msra.mxu0 0.0
  %1836 = vmatpush.msra.mxu0 0.0
  %1837 = vmatpush.msra.mxu0 0.0
  %1838 = vmatpush.msra.mxu0 0.0
  %1839 = vmatpush.msra.mxu0 0.0
  %1840 = vmatpush.msra.mxu0 0.0
  %1841 = vmatpush.msra.mxu0 0.0
  %1842 = vmatpush.msra.mxu0 0.0
  %1843 = vmatpush.msra.mxu0 0.0
  %1844 = vmatpush.msra.mxu0 0.0
  %1845 = vmatpush.msra.mxu0 %v1804
  %1846 = vmatpush.msra.mxu0 %v1802
  %1847 = vmatpush.msra.mxu0 %v1800
  %1848 = vmatpush.msra.mxu0 %v1798
  %1849 = vmatmul.f32.gmra.mxu0 %v1810
  %v1850 = vpop.f32.mrf.mxu0
  %v1851 = vadd.f32 0.0, %v1850
  %1852 = vmatmul.f32.gmra.mxu0 %v1813
  %v1853 = vpop.f32.mrf.mxu0
  %v1854 = vadd.f32 0.0, %v1853
  %1855 = vmatmul.f32.gmra.mxu0 %v1816
  %v1856 = vpop.f32.mrf.mxu0
  %v1857 = vadd.f32 0.0, %v1856
  %1858 = vmatmul.f32.gmra.mxu0 %v1819
  %v1859 = vpop.f32.mrf.mxu0
  %v1860 = vadd.f32 0.0, %v1859
  %1861 = vmatmul.f32.gmra.mxu0 %v1822
  %v1862 = vpop.f32.mrf.mxu0
  %v1863 = vadd.f32 0.0, %v1862
  %1864 = vmatmul.f32.gmra.mxu0 %v1825
  %v1865 = vpop.f32.mrf.mxu0
  %v1866 = vadd.f32 0.0, %v1865
  %1867 = vmatmul.f32.gmra.mxu0 %v1828
  %v1868 = vpop.f32.mrf.mxu0
  %v1869 = vadd.f32 0.0, %v1868
  %1870 = vmatmul.f32.gmra.mxu0 %v1831
  %v1871 = vpop.f32.mrf.mxu0
  %v1872 = vadd.f32 0.0, %v1871
  %1873 = vdwg.mxu0
  %v1874 = vadd.f32 %v1765, %v1851
  %v1875 = vadd.f32 %v1768, %v1854
  %v1876 = vadd.f32 %v1771, %v1857
  %v1877 = vadd.f32 %v1774, %v1860
  %v1878 = vadd.f32 %v1777, %v1863
  %v1879 = vadd.f32 %v1780, %v1866
  %v1880 = vadd.f32 %v1783, %v1869
  %v1881 = vadd.f32 %v1786, %v1872
  %s1882 = scalar_lea.vmem %s6, 192
  %v1883 = vld [vmem:[%s1882] sm:$0xff]
  %v1884 = vld [vmem:[%s1882 + $0x8] sm:$0xff]
  %v1885 = vld [vmem:[%s1882 + $0x10] sm:$0xff]
  %v1886 = vld [vmem:[%s1882 + $0x18] sm:$0xff]
  %v1887 = vld [vmem:[%s1882 + $0x20] sm:$0xff]
  %v1888 = vld [vmem:[%s1882 + $0x28] sm:$0xff]
  %v1889 = vld [vmem:[%s1882 + $0x30] sm:$0xff]
  %v1890 = vld [vmem:[%s1882 + $0x38] sm:$0xff]
  %1891 = vrot.lane.b32.xlu0 %v463, 74
  %v1892 = vpop.permute.xlu0 %1891
  %1893 = vrot.lane.b32.xlu0 %v465, 74
  %v1894 = vpop.permute.xlu0 %1893
  %1895 = vrot.lane.b32.xlu0 %v467, 74
  %v1896 = vpop.permute.xlu0 %1895
  %1897 = vrot.lane.b32.xlu0 %v469, 74
  %v1898 = vpop.permute.xlu0 %1897
  %v1904 = vsel %vm1657, %v1883, 0
  %v1907 = vsel %vm1657, %v1884, 0
  %v1910 = vsel %vm1657, %v1885, 0
  %v1913 = vsel %vm1657, %v1886, 0
  %v1916 = vsel %vm1657, %v1887, 0
  %v1919 = vsel %vm1657, %v1888, 0
  %v1922 = vsel %vm1657, %v1889, 0
  %v1925 = vsel %vm1657, %v1890, 0
  %1927 = vmatpush.msra.mxu0 0.0
  %1928 = vmatpush.msra.mxu0 0.0
  %1929 = vmatpush.msra.mxu0 0.0
  %1930 = vmatpush.msra.mxu0 0.0
  %1931 = vmatpush.msra.mxu0 0.0
  %1932 = vmatpush.msra.mxu0 0.0
  %1933 = vmatpush.msra.mxu0 0.0
  %1934 = vmatpush.msra.mxu0 0.0
  %1935 = vmatpush.msra.mxu0 0.0
  %1936 = vmatpush.msra.mxu0 0.0
  %1937 = vmatpush.msra.mxu0 0.0
  %1938 = vmatpush.msra.mxu0 0.0
  %1939 = vmatpush.msra.mxu0 %v1898
  %1940 = vmatpush.msra.mxu0 %v1896
  %1941 = vmatpush.msra.mxu0 %v1894
  %1942 = vmatpush.msra.mxu0 %v1892
  %1943 = vmatmul.f32.gmra.mxu0 %v1904
  %v1944 = vpop.f32.mrf.mxu0
  %v1945 = vadd.f32 0.0, %v1944
  %1946 = vmatmul.f32.gmra.mxu0 %v1907
  %v1947 = vpop.f32.mrf.mxu0
  %v1948 = vadd.f32 0.0, %v1947
  %1949 = vmatmul.f32.gmra.mxu0 %v1910
  %v1950 = vpop.f32.mrf.mxu0
  %v1951 = vadd.f32 0.0, %v1950
  %1952 = vmatmul.f32.gmra.mxu0 %v1913
  %v1953 = vpop.f32.mrf.mxu0
  %v1954 = vadd.f32 0.0, %v1953
  %1955 = vmatmul.f32.gmra.mxu0 %v1916
  %v1956 = vpop.f32.mrf.mxu0
  %v1957 = vadd.f32 0.0, %v1956
  %1958 = vmatmul.f32.gmra.mxu0 %v1919
  %v1959 = vpop.f32.mrf.mxu0
  %v1960 = vadd.f32 0.0, %v1959
  %1961 = vmatmul.f32.gmra.mxu0 %v1922
  %v1962 = vpop.f32.mrf.mxu0
  %v1963 = vadd.f32 0.0, %v1962
  %1964 = vmatmul.f32.gmra.mxu0 %v1925
  %v1965 = vpop.f32.mrf.mxu0
  %v1966 = vadd.f32 0.0, %v1965
  %1967 = vdwg.mxu0
  %v1968 = vadd.f32 %v1874, %v1945
  %v1969 = vadd.f32 %v1875, %v1948
  %v1970 = vadd.f32 %v1876, %v1951
  %v1971 = vadd.f32 %v1877, %v1954
  %v1972 = vadd.f32 %v1878, %v1957
  %v1973 = vadd.f32 %v1879, %v1960
  %v1974 = vadd.f32 %v1880, %v1963
  %v1975 = vadd.f32 %v1881, %v1966
  %s1976 = scalar_lea.vmem %s6, 256
  %v1977 = vld [vmem:[%s1976] sm:$0xff]
  %v1978 = vld [vmem:[%s1976 + $0x8] sm:$0xff]
  %v1979 = vld [vmem:[%s1976 + $0x10] sm:$0xff]
  %v1980 = vld [vmem:[%s1976 + $0x18] sm:$0xff]
  %v1981 = vld [vmem:[%s1976 + $0x20] sm:$0xff]
  %v1982 = vld [vmem:[%s1976 + $0x28] sm:$0xff]
  %v1983 = vld [vmem:[%s1976 + $0x30] sm:$0xff]
  %v1984 = vld [vmem:[%s1976 + $0x38] sm:$0xff]
  %1985 = vrot.lane.b32.xlu0 %v463, 56
  %v1986 = vpop.permute.xlu0 %1985
  %1987 = vrot.lane.b32.xlu0 %v465, 56
  %v1988 = vpop.permute.xlu0 %1987
  %1989 = vrot.lane.b32.xlu0 %v467, 56
  %v1990 = vpop.permute.xlu0 %1989
  %1991 = vrot.lane.b32.xlu0 %v469, 56
  %v1992 = vpop.permute.xlu0 %1991
  %v1998 = vsel %vm1657, %v1977, 0
  %v2001 = vsel %vm1657, %v1978, 0
  %v2004 = vsel %vm1657, %v1979, 0
  %v2007 = vsel %vm1657, %v1980, 0
  %v2010 = vsel %vm1657, %v1981, 0
  %v2013 = vsel %vm1657, %v1982, 0
  %v2016 = vsel %vm1657, %v1983, 0
  %v2019 = vsel %vm1657, %v1984, 0
  %2021 = vmatpush.msra.mxu0 0.0
  %2022 = vmatpush.msra.mxu0 0.0
  %2023 = vmatpush.msra.mxu0 0.0
  %2024 = vmatpush.msra.mxu0 0.0
  %2025 = vmatpush.msra.mxu0 0.0
  %2026 = vmatpush.msra.mxu0 0.0
  %2027 = vmatpush.msra.mxu0 0.0
  %2028 = vmatpush.msra.mxu0 0.0
  %2029 = vmatpush.msra.mxu0 0.0
  %2030 = vmatpush.msra.mxu0 0.0
  %2031 = vmatpush.msra.mxu0 0.0
  %2032 = vmatpush.msra.mxu0 0.0
  %2033 = vmatpush.msra.mxu0 %v1992
  %2034 = vmatpush.msra.mxu0 %v1990
  %2035 = vmatpush.msra.mxu0 %v1988
  %2036 = vmatpush.msra.mxu0 %v1986
  %2037 = vmatmul.f32.gmra.mxu0 %v1998
  %v2038 = vpop.f32.mrf.mxu0
  %v2039 = vadd.f32 0.0, %v2038
  %2040 = vmatmul.f32.gmra.mxu0 %v2001
  %v2041 = vpop.f32.mrf.mxu0
  %v2042 = vadd.f32 0.0, %v2041
  %2043 = vmatmul.f32.gmra.mxu0 %v2004
  %v2044 = vpop.f32.mrf.mxu0
  %v2045 = vadd.f32 0.0, %v2044
  %2046 = vmatmul.f32.gmra.mxu0 %v2007
  %v2047 = vpop.f32.mrf.mxu0
  %v2048 = vadd.f32 0.0, %v2047
  %2049 = vmatmul.f32.gmra.mxu0 %v2010
  %v2050 = vpop.f32.mrf.mxu0
  %v2051 = vadd.f32 0.0, %v2050
  %2052 = vmatmul.f32.gmra.mxu0 %v2013
  %v2053 = vpop.f32.mrf.mxu0
  %v2054 = vadd.f32 0.0, %v2053
  %2055 = vmatmul.f32.gmra.mxu0 %v2016
  %v2056 = vpop.f32.mrf.mxu0
  %v2057 = vadd.f32 0.0, %v2056
  %2058 = vmatmul.f32.gmra.mxu0 %v2019
  %v2059 = vpop.f32.mrf.mxu0
  %v2060 = vadd.f32 0.0, %v2059
  %2061 = vdwg.mxu0
  %v2062 = vadd.f32 %v1968, %v2039
  %v2063 = vadd.f32 %v1969, %v2042
  %v2064 = vadd.f32 %v1970, %v2045
  %v2065 = vadd.f32 %v1971, %v2048
  %v2066 = vadd.f32 %v1972, %v2051
  %v2067 = vadd.f32 %v1973, %v2054
  %v2068 = vadd.f32 %v1974, %v2057
  %v2069 = vadd.f32 %v1975, %v2060
  %s2070 = scalar_lea.vmem %s6, 320
  %v2071 = vld [vmem:[%s2070] sm:$0xff]
  %v2072 = vld [vmem:[%s2070 + $0x8] sm:$0xff]
  %v2073 = vld [vmem:[%s2070 + $0x10] sm:$0xff]
  %v2074 = vld [vmem:[%s2070 + $0x18] sm:$0xff]
  %v2075 = vld [vmem:[%s2070 + $0x20] sm:$0xff]
  %v2076 = vld [vmem:[%s2070 + $0x28] sm:$0xff]
  %v2077 = vld [vmem:[%s2070 + $0x30] sm:$0xff]
  %v2078 = vld [vmem:[%s2070 + $0x38] sm:$0xff]
  %2079 = vrot.lane.b32.xlu0 %v463, 38
  %v2080 = vpop.permute.xlu0 %2079
  %2081 = vrot.lane.b32.xlu0 %v465, 38
  %v2082 = vpop.permute.xlu0 %2081
  %2083 = vrot.lane.b32.xlu0 %v467, 38
  %v2084 = vpop.permute.xlu0 %2083
  %2085 = vrot.lane.b32.xlu0 %v469, 38
  %v2086 = vpop.permute.xlu0 %2085
  %v2092 = vsel %vm1657, %v2071, 0
  %v2095 = vsel %vm1657, %v2072, 0
  %v2098 = vsel %vm1657, %v2073, 0
  %v2101 = vsel %vm1657, %v2074, 0
  %v2104 = vsel %vm1657, %v2075, 0
  %v2107 = vsel %vm1657, %v2076, 0
  %v2110 = vsel %vm1657, %v2077, 0
  %v2113 = vsel %vm1657, %v2078, 0
  %2115 = vmatpush.msra.mxu0 0.0
  %2116 = vmatpush.msra.mxu0 0.0
  %2117 = vmatpush.msra.mxu0 0.0
  %2118 = vmatpush.msra.mxu0 0.0
  %2119 = vmatpush.msra.mxu0 0.0
  %2120 = vmatpush.msra.mxu0 0.0
  %2121 = vmatpush.msra.mxu0 0.0
  %2122 = vmatpush.msra.mxu0 0.0
  %2123 = vmatpush.msra.mxu0 0.0
  %2124 = vmatpush.msra.mxu0 0.0
  %2125 = vmatpush.msra.mxu0 0.0
  %2126 = vmatpush.msra.mxu0 0.0
  %2127 = vmatpush.msra.mxu0 %v2086
  %2128 = vmatpush.msra.mxu0 %v2084
  %2129 = vmatpush.msra.mxu0 %v2082
  %2130 = vmatpush.msra.mxu0 %v2080
  %2131 = vmatmul.f32.gmra.mxu0 %v2092
  %v2132 = vpop.f32.mrf.mxu0
  %v2133 = vadd.f32 0.0, %v2132
  %2134 = vmatmul.f32.gmra.mxu0 %v2095
  %v2135 = vpop.f32.mrf.mxu0
  %v2136 = vadd.f32 0.0, %v2135
  %2137 = vmatmul.f32.gmra.mxu0 %v2098
  %v2138 = vpop.f32.mrf.mxu0
  %v2139 = vadd.f32 0.0, %v2138
  %2140 = vmatmul.f32.gmra.mxu0 %v2101
  %v2141 = vpop.f32.mrf.mxu0
  %v2142 = vadd.f32 0.0, %v2141
  %2143 = vmatmul.f32.gmra.mxu0 %v2104
  %v2144 = vpop.f32.mrf.mxu0
  %v2145 = vadd.f32 0.0, %v2144
  %2146 = vmatmul.f32.gmra.mxu0 %v2107
  %v2147 = vpop.f32.mrf.mxu0
  %v2148 = vadd.f32 0.0, %v2147
  %2149 = vmatmul.f32.gmra.mxu0 %v2110
  %v2150 = vpop.f32.mrf.mxu0
  %v2151 = vadd.f32 0.0, %v2150
  %2152 = vmatmul.f32.gmra.mxu0 %v2113
  %v2153 = vpop.f32.mrf.mxu0
  %v2154 = vadd.f32 0.0, %v2153
  %2155 = vdwg.mxu0
  %v2156 = vadd.f32 %v2062, %v2133
  %v2157 = vadd.f32 %v2063, %v2136
  %v2158 = vadd.f32 %v2064, %v2139
  %v2159 = vadd.f32 %v2065, %v2142
  %v2160 = vadd.f32 %v2066, %v2145
  %v2161 = vadd.f32 %v2067, %v2148
  %v2162 = vadd.f32 %v2068, %v2151
  %v2163 = vadd.f32 %v2069, %v2154
  %s2164 = scalar_lea.vmem %s6, 384
  %v2165 = vld [vmem:[%s2164] sm:$0xff]
  %v2166 = vld [vmem:[%s2164 + $0x8] sm:$0xff]
  %v2167 = vld [vmem:[%s2164 + $0x10] sm:$0xff]
  %v2168 = vld [vmem:[%s2164 + $0x18] sm:$0xff]
  %v2169 = vld [vmem:[%s2164 + $0x20] sm:$0xff]
  %v2170 = vld [vmem:[%s2164 + $0x28] sm:$0xff]
  %v2171 = vld [vmem:[%s2164 + $0x30] sm:$0xff]
  %v2172 = vld [vmem:[%s2164 + $0x38] sm:$0xff]
  %2173 = vrot.lane.b32.xlu0 %v463, 20
  %v2174 = vpop.permute.xlu0 %2173
  %2175 = vrot.lane.b32.xlu0 %v465, 20
  %v2176 = vpop.permute.xlu0 %2175
  %2177 = vrot.lane.b32.xlu0 %v467, 20
  %v2178 = vpop.permute.xlu0 %2177
  %2179 = vrot.lane.b32.xlu0 %v469, 20
  %v2180 = vpop.permute.xlu0 %2179
  %v2186 = vsel %vm1657, %v2165, 0
  %v2189 = vsel %vm1657, %v2166, 0
  %v2192 = vsel %vm1657, %v2167, 0
  %v2195 = vsel %vm1657, %v2168, 0
  %v2198 = vsel %vm1657, %v2169, 0
  %v2201 = vsel %vm1657, %v2170, 0
  %v2204 = vsel %vm1657, %v2171, 0
  %v2207 = vsel %vm1657, %v2172, 0
  %2209 = vmatpush.msra.mxu0 0.0
  %2210 = vmatpush.msra.mxu0 0.0
  %2211 = vmatpush.msra.mxu0 0.0
  %2212 = vmatpush.msra.mxu0 0.0
  %2213 = vmatpush.msra.mxu0 0.0
  %2214 = vmatpush.msra.mxu0 0.0
  %2215 = vmatpush.msra.mxu0 0.0
  %2216 = vmatpush.msra.mxu0 0.0
  %2217 = vmatpush.msra.mxu0 0.0
  %2218 = vmatpush.msra.mxu0 0.0
  %2219 = vmatpush.msra.mxu0 0.0
  %2220 = vmatpush.msra.mxu0 0.0
  %2221 = vmatpush.msra.mxu0 %v2180
  %2222 = vmatpush.msra.mxu0 %v2178
  %2223 = vmatpush.msra.mxu0 %v2176
  %2224 = vmatpush.msra.mxu0 %v2174
  %2225 = vmatmul.f32.gmra.mxu0 %v2186
  %v2226 = vpop.f32.mrf.mxu0
  %v2227 = vadd.f32 0.0, %v2226
  %2228 = vmatmul.f32.gmra.mxu0 %v2189
  %v2229 = vpop.f32.mrf.mxu0
  %v2230 = vadd.f32 0.0, %v2229
  %2231 = vmatmul.f32.gmra.mxu0 %v2192
  %v2232 = vpop.f32.mrf.mxu0
  %v2233 = vadd.f32 0.0, %v2232
  %2234 = vmatmul.f32.gmra.mxu0 %v2195
  %v2235 = vpop.f32.mrf.mxu0
  %v2236 = vadd.f32 0.0, %v2235
  %2237 = vmatmul.f32.gmra.mxu0 %v2198
  %v2238 = vpop.f32.mrf.mxu0
  %v2239 = vadd.f32 0.0, %v2238
  %2240 = vmatmul.f32.gmra.mxu0 %v2201
  %v2241 = vpop.f32.mrf.mxu0
  %v2242 = vadd.f32 0.0, %v2241
  %2243 = vmatmul.f32.gmra.mxu0 %v2204
  %v2244 = vpop.f32.mrf.mxu0
  %v2245 = vadd.f32 0.0, %v2244
  %2246 = vmatmul.f32.gmra.mxu0 %v2207
  %v2247 = vpop.f32.mrf.mxu0
  %v2248 = vadd.f32 0.0, %v2247
  %2249 = vdwg.mxu0
  %v2250 = vadd.f32 %v2156, %v2227
  %v2251 = vadd.f32 %v2157, %v2230
  %v2252 = vadd.f32 %v2158, %v2233
  %v2253 = vadd.f32 %v2159, %v2236
  %v2254 = vadd.f32 %v2160, %v2239
  %v2255 = vadd.f32 %v2161, %v2242
  %v2256 = vadd.f32 %v2162, %v2245
  %v2257 = vadd.f32 %v2163, %v2248
  %s2258 = scalar_lea.vmem %s6, 448
  %v2259 = vld [vmem:[%s2258] sm:$0xff]
  %v2260 = vld [vmem:[%s2258 + $0x8] sm:$0xff]
  %v2261 = vld [vmem:[%s2258 + $0x10] sm:$0xff]
  %v2262 = vld [vmem:[%s2258 + $0x18] sm:$0xff]
  %v2263 = vld [vmem:[%s2258 + $0x20] sm:$0xff]
  %v2264 = vld [vmem:[%s2258 + $0x28] sm:$0xff]
  %v2265 = vld [vmem:[%s2258 + $0x30] sm:$0xff]
  %v2266 = vld [vmem:[%s2258 + $0x38] sm:$0xff]
  %2271 = vrot.lane.b32.xlu0 %v463, 2
  %v2272 = vpop.permute.xlu0 %2271
  %2273 = vrot.lane.b32.xlu0 %v464, 2
  %v2274 = vpop.permute.xlu0 %2273
  %2275 = vrot.lane.b32.xlu0 %v465, 2
  %v2276 = vpop.permute.xlu0 %2275
  %2277 = vrot.lane.b32.xlu0 %v466, 2
  %v2278 = vpop.permute.xlu0 %2277
  %2279 = vrot.lane.b32.xlu0 %v467, 2
  %v2280 = vpop.permute.xlu0 %2279
  %2281 = vrot.lane.b32.xlu0 %v468, 2
  %v2282 = vpop.permute.xlu0 %2281
  %2283 = vrot.lane.b32.xlu0 %v469, 2
  %v2284 = vpop.permute.xlu0 %2283
  %2285 = vrot.lane.b32.xlu0 %v470, 2
  %v2286 = vpop.permute.xlu0 %2285
  %vm2287 = vcmask 15360
  %v2288 = vsel %vm2287, %v2272, %v2274
  %v2289 = vsel %vm2287, %v2276, %v2278
  %v2290 = vsel %vm2287, %v2280, %v2282
  %v2291 = vsel %vm2287, %v2284, %v2286
  %v2297 = vsel %vm1657, %v2259, 0
  %v2300 = vsel %vm1657, %v2260, 0
  %v2303 = vsel %vm1657, %v2261, 0
  %v2306 = vsel %vm1657, %v2262, 0
  %v2309 = vsel %vm1657, %v2263, 0
  %v2312 = vsel %vm1657, %v2264, 0
  %v2315 = vsel %vm1657, %v2265, 0
  %v2318 = vsel %vm1657, %v2266, 0
  %2320 = vmatpush.msra.mxu0 0.0
  %2321 = vmatpush.msra.mxu0 0.0
  %2322 = vmatpush.msra.mxu0 0.0
  %2323 = vmatpush.msra.mxu0 0.0
  %2324 = vmatpush.msra.mxu0 0.0
  %2325 = vmatpush.msra.mxu0 0.0
  %2326 = vmatpush.msra.mxu0 0.0
  %2327 = vmatpush.msra.mxu0 0.0
  %2328 = vmatpush.msra.mxu0 0.0
  %2329 = vmatpush.msra.mxu0 0.0
  %2330 = vmatpush.msra.mxu0 0.0
  %2331 = vmatpush.msra.mxu0 0.0
  %2332 = vmatpush.msra.mxu0 %v2291
  %2333 = vmatpush.msra.mxu0 %v2290
  %2334 = vmatpush.msra.mxu0 %v2289
  %2335 = vmatpush.msra.mxu0 %v2288
  %2336 = vmatmul.f32.gmra.mxu0 %v2297
  %v2337 = vpop.f32.mrf.mxu0
  %v2338 = vadd.f32 0.0, %v2337
  %2339 = vmatmul.f32.gmra.mxu0 %v2300
  %v2340 = vpop.f32.mrf.mxu0
  %v2341 = vadd.f32 0.0, %v2340
  %2342 = vmatmul.f32.gmra.mxu0 %v2303
  %v2343 = vpop.f32.mrf.mxu0
  %v2344 = vadd.f32 0.0, %v2343
  %2345 = vmatmul.f32.gmra.mxu0 %v2306
  %v2346 = vpop.f32.mrf.mxu0
  %v2347 = vadd.f32 0.0, %v2346
  %2348 = vmatmul.f32.gmra.mxu0 %v2309
  %v2349 = vpop.f32.mrf.mxu0
  %v2350 = vadd.f32 0.0, %v2349
  %2351 = vmatmul.f32.gmra.mxu0 %v2312
  %v2352 = vpop.f32.mrf.mxu0
  %v2353 = vadd.f32 0.0, %v2352
  %2354 = vmatmul.f32.gmra.mxu0 %v2315
  %v2355 = vpop.f32.mrf.mxu0
  %v2356 = vadd.f32 0.0, %v2355
  %2357 = vmatmul.f32.gmra.mxu0 %v2318
  %v2358 = vpop.f32.mrf.mxu0
  %v2359 = vadd.f32 0.0, %v2358
  %2360 = vdwg.mxu0
  %v2361 = vadd.f32 %v2250, %v2338
  %v2362 = vadd.f32 %v2251, %v2341
  %v2363 = vadd.f32 %v2252, %v2344
  %v2364 = vadd.f32 %v2253, %v2347
  %v2365 = vadd.f32 %v2254, %v2350
  %v2366 = vadd.f32 %v2255, %v2353
  %v2367 = vadd.f32 %v2256, %v2356
  %v2368 = vadd.f32 %v2257, %v2359
  %s2369 = scalar_lea.vmem %s6, 512
  %v2370 = vld [vmem:[%s2369] sm:$0xff]
  %v2371 = vld [vmem:[%s2369 + $0x8] sm:$0xff]
  %v2372 = vld [vmem:[%s2369 + $0x10] sm:$0xff]
  %v2373 = vld [vmem:[%s2369 + $0x18] sm:$0xff]
  %v2374 = vld [vmem:[%s2369 + $0x20] sm:$0xff]
  %v2375 = vld [vmem:[%s2369 + $0x28] sm:$0xff]
  %v2376 = vld [vmem:[%s2369 + $0x30] sm:$0xff]
  %v2377 = vld [vmem:[%s2369 + $0x38] sm:$0xff]
  %2378 = vrot.lane.b32.xlu0 %v464, 112
  %v2379 = vpop.permute.xlu0 %2378
  %2380 = vrot.lane.b32.xlu0 %v466, 112
  %v2381 = vpop.permute.xlu0 %2380
  %2382 = vrot.lane.b32.xlu0 %v468, 112
  %v2383 = vpop.permute.xlu0 %2382
  %2384 = vrot.lane.b32.xlu0 %v470, 112
  %v2385 = vpop.permute.xlu0 %2384
  %v2391 = vsel %vm1657, %v2370, 0
  %v2394 = vsel %vm1657, %v2371, 0
  %v2397 = vsel %vm1657, %v2372, 0
  %v2400 = vsel %vm1657, %v2373, 0
  %v2403 = vsel %vm1657, %v2374, 0
  %v2406 = vsel %vm1657, %v2375, 0
  %v2409 = vsel %vm1657, %v2376, 0
  %v2412 = vsel %vm1657, %v2377, 0
  %2414 = vmatpush.msra.mxu0 0.0
  %2415 = vmatpush.msra.mxu0 0.0
  %2416 = vmatpush.msra.mxu0 0.0
  %2417 = vmatpush.msra.mxu0 0.0
  %2418 = vmatpush.msra.mxu0 0.0
  %2419 = vmatpush.msra.mxu0 0.0
  %2420 = vmatpush.msra.mxu0 0.0
  %2421 = vmatpush.msra.mxu0 0.0
  %2422 = vmatpush.msra.mxu0 0.0
  %2423 = vmatpush.msra.mxu0 0.0
  %2424 = vmatpush.msra.mxu0 0.0
  %2425 = vmatpush.msra.mxu0 0.0
  %2426 = vmatpush.msra.mxu0 %v2385
  %2427 = vmatpush.msra.mxu0 %v2383
  %2428 = vmatpush.msra.mxu0 %v2381
  %2429 = vmatpush.msra.mxu0 %v2379
  %2430 = vmatmul.f32.gmra.mxu0 %v2391
  %v2431 = vpop.f32.mrf.mxu0
  %v2432 = vadd.f32 0.0, %v2431
  %2433 = vmatmul.f32.gmra.mxu0 %v2394
  %v2434 = vpop.f32.mrf.mxu0
  %v2435 = vadd.f32 0.0, %v2434
  %2436 = vmatmul.f32.gmra.mxu0 %v2397
  %v2437 = vpop.f32.mrf.mxu0
  %v2438 = vadd.f32 0.0, %v2437
  %2439 = vmatmul.f32.gmra.mxu0 %v2400
  %v2440 = vpop.f32.mrf.mxu0
  %v2441 = vadd.f32 0.0, %v2440
  %2442 = vmatmul.f32.gmra.mxu0 %v2403
  %v2443 = vpop.f32.mrf.mxu0
  %v2444 = vadd.f32 0.0, %v2443
  %2445 = vmatmul.f32.gmra.mxu0 %v2406
  %v2446 = vpop.f32.mrf.mxu0
  %v2447 = vadd.f32 0.0, %v2446
  %2448 = vmatmul.f32.gmra.mxu0 %v2409
  %v2449 = vpop.f32.mrf.mxu0
  %v2450 = vadd.f32 0.0, %v2449
  %2451 = vmatmul.f32.gmra.mxu0 %v2412
  %v2452 = vpop.f32.mrf.mxu0
  %v2453 = vadd.f32 0.0, %v2452
  %2454 = vdwg.mxu0
  %v2455 = vadd.f32 %v2361, %v2432
  %v2456 = vadd.f32 %v2362, %v2435
  %v2457 = vadd.f32 %v2363, %v2438
  %v2458 = vadd.f32 %v2364, %v2441
  %v2459 = vadd.f32 %v2365, %v2444
  %v2460 = vadd.f32 %v2366, %v2447
  %v2461 = vadd.f32 %v2367, %v2450
  %v2462 = vadd.f32 %v2368, %v2453
  %s2463 = scalar_lea.vmem %s6, 576
  %v2464 = vld [vmem:[%s2463] sm:$0xff]
  %v2465 = vld [vmem:[%s2463 + $0x8] sm:$0xff]
  %v2466 = vld [vmem:[%s2463 + $0x10] sm:$0xff]
  %v2467 = vld [vmem:[%s2463 + $0x18] sm:$0xff]
  %v2468 = vld [vmem:[%s2463 + $0x20] sm:$0xff]
  %v2469 = vld [vmem:[%s2463 + $0x28] sm:$0xff]
  %v2470 = vld [vmem:[%s2463 + $0x30] sm:$0xff]
  %v2471 = vld [vmem:[%s2463 + $0x38] sm:$0xff]
  %2472 = vrot.lane.b32.xlu0 %v464, 94
  %v2473 = vpop.permute.xlu0 %2472
  %2474 = vrot.lane.b32.xlu0 %v466, 94
  %v2475 = vpop.permute.xlu0 %2474
  %2476 = vrot.lane.b32.xlu0 %v468, 94
  %v2477 = vpop.permute.xlu0 %2476
  %2478 = vrot.lane.b32.xlu0 %v470, 94
  %v2479 = vpop.permute.xlu0 %2478
  %v2485 = vsel %vm1657, %v2464, 0
  %v2488 = vsel %vm1657, %v2465, 0
  %v2491 = vsel %vm1657, %v2466, 0
  %v2494 = vsel %vm1657, %v2467, 0
  %v2497 = vsel %vm1657, %v2468, 0
  %v2500 = vsel %vm1657, %v2469, 0
  %v2503 = vsel %vm1657, %v2470, 0
  %v2506 = vsel %vm1657, %v2471, 0
  %2508 = vmatpush.msra.mxu0 0.0
  %2509 = vmatpush.msra.mxu0 0.0
  %2510 = vmatpush.msra.mxu0 0.0
  %2511 = vmatpush.msra.mxu0 0.0
  %2512 = vmatpush.msra.mxu0 0.0
  %2513 = vmatpush.msra.mxu0 0.0
  %2514 = vmatpush.msra.mxu0 0.0
  %2515 = vmatpush.msra.mxu0 0.0
  %2516 = vmatpush.msra.mxu0 0.0
  %2517 = vmatpush.msra.mxu0 0.0
  %2518 = vmatpush.msra.mxu0 0.0
  %2519 = vmatpush.msra.mxu0 0.0
  %2520 = vmatpush.msra.mxu0 %v2479
  %2521 = vmatpush.msra.mxu0 %v2477
  %2522 = vmatpush.msra.mxu0 %v2475
  %2523 = vmatpush.msra.mxu0 %v2473
  %2524 = vmatmul.f32.gmra.mxu0 %v2485
  %v2525 = vpop.f32.mrf.mxu0
  %v2526 = vadd.f32 0.0, %v2525
  %2527 = vmatmul.f32.gmra.mxu0 %v2488
  %v2528 = vpop.f32.mrf.mxu0
  %v2529 = vadd.f32 0.0, %v2528
  %2530 = vmatmul.f32.gmra.mxu0 %v2491
  %v2531 = vpop.f32.mrf.mxu0
  %v2532 = vadd.f32 0.0, %v2531
  %2533 = vmatmul.f32.gmra.mxu0 %v2494
  %v2534 = vpop.f32.mrf.mxu0
  %v2535 = vadd.f32 0.0, %v2534
  %2536 = vmatmul.f32.gmra.mxu0 %v2497
  %v2537 = vpop.f32.mrf.mxu0
  %v2538 = vadd.f32 0.0, %v2537
  %2539 = vmatmul.f32.gmra.mxu0 %v2500
  %v2540 = vpop.f32.mrf.mxu0
  %v2541 = vadd.f32 0.0, %v2540
  %2542 = vmatmul.f32.gmra.mxu0 %v2503
  %v2543 = vpop.f32.mrf.mxu0
  %v2544 = vadd.f32 0.0, %v2543
  %2545 = vmatmul.f32.gmra.mxu0 %v2506
  %v2546 = vpop.f32.mrf.mxu0
  %v2547 = vadd.f32 0.0, %v2546
  %2548 = vdwg.mxu0
  %v2549 = vadd.f32 %v2455, %v2526
  %v2550 = vadd.f32 %v2456, %v2529
  %v2551 = vadd.f32 %v2457, %v2532
  %v2552 = vadd.f32 %v2458, %v2535
  %v2553 = vadd.f32 %v2459, %v2538
  %v2554 = vadd.f32 %v2460, %v2541
  %v2555 = vadd.f32 %v2461, %v2544
  %v2556 = vadd.f32 %v2462, %v2547
  %s2557 = scalar_lea.vmem %s6, 640
  %v2558 = vld [vmem:[%s2557] sm:$0xff]
  %v2559 = vld [vmem:[%s2557 + $0x8] sm:$0xff]
  %v2560 = vld [vmem:[%s2557 + $0x10] sm:$0xff]
  %v2561 = vld [vmem:[%s2557 + $0x18] sm:$0xff]
  %v2562 = vld [vmem:[%s2557 + $0x20] sm:$0xff]
  %v2563 = vld [vmem:[%s2557 + $0x28] sm:$0xff]
  %v2564 = vld [vmem:[%s2557 + $0x30] sm:$0xff]
  %v2565 = vld [vmem:[%s2557 + $0x38] sm:$0xff]
  %2566 = vrot.lane.b32.xlu0 %v464, 76
  %v2567 = vpop.permute.xlu0 %2566
  %2568 = vrot.lane.b32.xlu0 %v466, 76
  %v2569 = vpop.permute.xlu0 %2568
  %2570 = vrot.lane.b32.xlu0 %v468, 76
  %v2571 = vpop.permute.xlu0 %2570
  %2572 = vrot.lane.b32.xlu0 %v470, 76
  %v2573 = vpop.permute.xlu0 %2572
  %v2579 = vsel %vm1657, %v2558, 0
  %v2582 = vsel %vm1657, %v2559, 0
  %v2585 = vsel %vm1657, %v2560, 0
  %v2588 = vsel %vm1657, %v2561, 0
  %v2591 = vsel %vm1657, %v2562, 0
  %v2594 = vsel %vm1657, %v2563, 0
  %v2597 = vsel %vm1657, %v2564, 0
  %v2600 = vsel %vm1657, %v2565, 0
  %2602 = vmatpush.msra.mxu0 0.0
  %2603 = vmatpush.msra.mxu0 0.0
  %2604 = vmatpush.msra.mxu0 0.0
  %2605 = vmatpush.msra.mxu0 0.0
  %2606 = vmatpush.msra.mxu0 0.0
  %2607 = vmatpush.msra.mxu0 0.0
  %2608 = vmatpush.msra.mxu0 0.0
  %2609 = vmatpush.msra.mxu0 0.0
  %2610 = vmatpush.msra.mxu0 0.0
  %2611 = vmatpush.msra.mxu0 0.0
  %2612 = vmatpush.msra.mxu0 0.0
  %2613 = vmatpush.msra.mxu0 0.0
  %2614 = vmatpush.msra.mxu0 %v2573
  %2615 = vmatpush.msra.mxu0 %v2571
  %2616 = vmatpush.msra.mxu0 %v2569
  %2617 = vmatpush.msra.mxu0 %v2567
  %2618 = vmatmul.f32.gmra.mxu0 %v2579
  %v2619 = vpop.f32.mrf.mxu0
  %v2620 = vadd.f32 0.0, %v2619
  %2621 = vmatmul.f32.gmra.mxu0 %v2582
  %v2622 = vpop.f32.mrf.mxu0
  %v2623 = vadd.f32 0.0, %v2622
  %2624 = vmatmul.f32.gmra.mxu0 %v2585
  %v2625 = vpop.f32.mrf.mxu0
  %v2626 = vadd.f32 0.0, %v2625
  %2627 = vmatmul.f32.gmra.mxu0 %v2588
  %v2628 = vpop.f32.mrf.mxu0
  %v2629 = vadd.f32 0.0, %v2628
  %2630 = vmatmul.f32.gmra.mxu0 %v2591
  %v2631 = vpop.f32.mrf.mxu0
  %v2632 = vadd.f32 0.0, %v2631
  %2633 = vmatmul.f32.gmra.mxu0 %v2594
  %v2634 = vpop.f32.mrf.mxu0
  %v2635 = vadd.f32 0.0, %v2634
  %2636 = vmatmul.f32.gmra.mxu0 %v2597
  %v2637 = vpop.f32.mrf.mxu0
  %v2638 = vadd.f32 0.0, %v2637
  %2639 = vmatmul.f32.gmra.mxu0 %v2600
  %v2640 = vpop.f32.mrf.mxu0
  %v2641 = vadd.f32 0.0, %v2640
  %2642 = vdwg.mxu0
  %v2643 = vadd.f32 %v2549, %v2620
  %v2644 = vadd.f32 %v2550, %v2623
  %v2645 = vadd.f32 %v2551, %v2626
  %v2646 = vadd.f32 %v2552, %v2629
  %v2647 = vadd.f32 %v2553, %v2632
  %v2648 = vadd.f32 %v2554, %v2635
  %v2649 = vadd.f32 %v2555, %v2638
  %v2650 = vadd.f32 %v2556, %v2641
  %s2651 = scalar_lea.vmem %s6, 704
  %v2652 = vld [vmem:[%s2651] sm:$0xff]
  %v2653 = vld [vmem:[%s2651 + $0x8] sm:$0xff]
  %v2654 = vld [vmem:[%s2651 + $0x10] sm:$0xff]
  %v2655 = vld [vmem:[%s2651 + $0x18] sm:$0xff]
  %v2656 = vld [vmem:[%s2651 + $0x20] sm:$0xff]
  %v2657 = vld [vmem:[%s2651 + $0x28] sm:$0xff]
  %v2658 = vld [vmem:[%s2651 + $0x30] sm:$0xff]
  %v2659 = vld [vmem:[%s2651 + $0x38] sm:$0xff]
  %2660 = vrot.lane.b32.xlu0 %v464, 58
  %v2661 = vpop.permute.xlu0 %2660
  %2662 = vrot.lane.b32.xlu0 %v466, 58
  %v2663 = vpop.permute.xlu0 %2662
  %2664 = vrot.lane.b32.xlu0 %v468, 58
  %v2665 = vpop.permute.xlu0 %2664
  %2666 = vrot.lane.b32.xlu0 %v470, 58
  %v2667 = vpop.permute.xlu0 %2666
  %v2673 = vsel %vm1657, %v2652, 0
  %v2676 = vsel %vm1657, %v2653, 0
  %v2679 = vsel %vm1657, %v2654, 0
  %v2682 = vsel %vm1657, %v2655, 0
  %v2685 = vsel %vm1657, %v2656, 0
  %v2688 = vsel %vm1657, %v2657, 0
  %v2691 = vsel %vm1657, %v2658, 0
  %v2694 = vsel %vm1657, %v2659, 0
  %2696 = vmatpush.msra.mxu0 0.0
  %2697 = vmatpush.msra.mxu0 0.0
  %2698 = vmatpush.msra.mxu0 0.0
  %2699 = vmatpush.msra.mxu0 0.0
  %2700 = vmatpush.msra.mxu0 0.0
  %2701 = vmatpush.msra.mxu0 0.0
  %2702 = vmatpush.msra.mxu0 0.0
  %2703 = vmatpush.msra.mxu0 0.0
  %2704 = vmatpush.msra.mxu0 0.0
  %2705 = vmatpush.msra.mxu0 0.0
  %2706 = vmatpush.msra.mxu0 0.0
  %2707 = vmatpush.msra.mxu0 0.0
  %2708 = vmatpush.msra.mxu0 %v2667
  %2709 = vmatpush.msra.mxu0 %v2665
  %2710 = vmatpush.msra.mxu0 %v2663
  %2711 = vmatpush.msra.mxu0 %v2661
  %2712 = vmatmul.f32.gmra.mxu0 %v2673
  %v2713 = vpop.f32.mrf.mxu0
  %v2714 = vadd.f32 0.0, %v2713
  %2715 = vmatmul.f32.gmra.mxu0 %v2676
  %v2716 = vpop.f32.mrf.mxu0
  %v2717 = vadd.f32 0.0, %v2716
  %2718 = vmatmul.f32.gmra.mxu0 %v2679
  %v2719 = vpop.f32.mrf.mxu0
  %v2720 = vadd.f32 0.0, %v2719
  %2721 = vmatmul.f32.gmra.mxu0 %v2682
  %v2722 = vpop.f32.mrf.mxu0
  %v2723 = vadd.f32 0.0, %v2722
  %2724 = vmatmul.f32.gmra.mxu0 %v2685
  %v2725 = vpop.f32.mrf.mxu0
  %v2726 = vadd.f32 0.0, %v2725
  %2727 = vmatmul.f32.gmra.mxu0 %v2688
  %v2728 = vpop.f32.mrf.mxu0
  %v2729 = vadd.f32 0.0, %v2728
  %2730 = vmatmul.f32.gmra.mxu0 %v2691
  %v2731 = vpop.f32.mrf.mxu0
  %v2732 = vadd.f32 0.0, %v2731
  %2733 = vmatmul.f32.gmra.mxu0 %v2694
  %v2734 = vpop.f32.mrf.mxu0
  %v2735 = vadd.f32 0.0, %v2734
  %2736 = vdwg.mxu0
  %v2737 = vadd.f32 %v2643, %v2714
  %v2738 = vadd.f32 %v2644, %v2717
  %v2739 = vadd.f32 %v2645, %v2720
  %v2740 = vadd.f32 %v2646, %v2723
  %v2741 = vadd.f32 %v2647, %v2726
  %v2742 = vadd.f32 %v2648, %v2729
  %v2743 = vadd.f32 %v2649, %v2732
  %v2744 = vadd.f32 %v2650, %v2735
  %v2745 = vld [vmem:[%s7] sm:$0xff]
  %v2746 = vld [vmem:[%s7 + $0x8] sm:$0xff]
  %v2747 = vld [vmem:[%s7 + $0x10] sm:$0xff]
  %v2748 = vld [vmem:[%s7 + $0x18] sm:$0xff]
  %v2749 = vld [vmem:[%s7 + $0x20] sm:$0xff]
  %v2750 = vld [vmem:[%s7 + $0x28] sm:$0xff]
  %v2751 = vld [vmem:[%s7 + $0x30] sm:$0xff]
  %v2752 = vld [vmem:[%s7 + $0x38] sm:$0xff]
  %2754 = vset.pattern.permute.xlu0 0
  %2755 = vperm.xlu0 %2754, %v2745
  %v2756 = vpop.permute.xlu0 %2755
  %2759 = vset.pattern.permute.xlu0 0
  %2760 = vperm.xlu0 %2759, %v2746
  %v2761 = vpop.permute.xlu0 %2760
  %2764 = vset.pattern.permute.xlu0 0
  %2765 = vperm.xlu0 %2764, %v2747
  %v2766 = vpop.permute.xlu0 %2765
  %2769 = vset.pattern.permute.xlu0 0
  %2770 = vperm.xlu0 %2769, %v2748
  %v2771 = vpop.permute.xlu0 %2770
  %2774 = vset.pattern.permute.xlu0 0
  %2775 = vperm.xlu0 %2774, %v2749
  %v2776 = vpop.permute.xlu0 %2775
  %2779 = vset.pattern.permute.xlu0 0
  %2780 = vperm.xlu0 %2779, %v2750
  %v2781 = vpop.permute.xlu0 %2780
  %2784 = vset.pattern.permute.xlu0 0
  %2785 = vperm.xlu0 %2784, %v2751
  %v2786 = vpop.permute.xlu0 %2785
  %2789 = vset.pattern.permute.xlu0 0
  %2790 = vperm.xlu0 %2789, %v2752
  %v2791 = vpop.permute.xlu0 %2790
  %v2793 = vadd.f32 %v2737, %v2756
  %v2794 = vadd.f32 %v2738, %v2761
  %v2795 = vadd.f32 %v2739, %v2766
  %v2796 = vadd.f32 %v2740, %v2771
  %v2797 = vadd.f32 %v2741, %v2776
  %v2798 = vadd.f32 %v2742, %v2781
  %v2799 = vadd.f32 %v2743, %v2786
  %v2800 = vadd.f32 %v2744, %v2791
  %v2801 = vmax.f32 %v2793, 0.0
  %v2802 = vmax.f32 %v2794, 0.0
  %v2803 = vmax.f32 %v2795, 0.0
  %v2804 = vmax.f32 %v2796, 0.0
  %v2805 = vmax.f32 %v2797, 0.0
  %v2806 = vmax.f32 %v2798, 0.0
  %v2807 = vmax.f32 %v2799, 0.0
  %v2808 = vmax.f32 %v2800, 0.0
  %2809 = vset.pattern.permute.xlu0 1
  %2810 = vperm.xlu0 %2809, %v2745
  %v2811 = vpop.permute.xlu0 %2810
  %2813 = vset.pattern.permute.xlu0 1
  %2814 = vperm.xlu0 %2813, %v2746
  %v2815 = vpop.permute.xlu0 %2814
  %2817 = vset.pattern.permute.xlu0 1
  %2818 = vperm.xlu0 %2817, %v2747
  %v2819 = vpop.permute.xlu0 %2818
  %2821 = vset.pattern.permute.xlu0 1
  %2822 = vperm.xlu0 %2821, %v2748
  %v2823 = vpop.permute.xlu0 %2822
  %2825 = vset.pattern.permute.xlu0 1
  %2826 = vperm.xlu0 %2825, %v2749
  %v2827 = vpop.permute.xlu0 %2826
  %2829 = vset.pattern.permute.xlu0 1
  %2830 = vperm.xlu0 %2829, %v2750
  %v2831 = vpop.permute.xlu0 %2830
  %2833 = vset.pattern.permute.xlu0 1
  %2834 = vperm.xlu0 %2833, %v2751
  %v2835 = vpop.permute.xlu0 %2834
  %2837 = vset.pattern.permute.xlu0 1
  %2838 = vperm.xlu0 %2837, %v2752
  %v2839 = vpop.permute.xlu0 %2838
  %v2841 = vmul.f32 %v2801, %v2811
  %v2842 = vmul.f32 %v2802, %v2815
  %v2843 = vmul.f32 %v2803, %v2819
  %v2844 = vmul.f32 %v2804, %v2823
  %v2845 = vmul.f32 %v2805, %v2827
  %v2846 = vmul.f32 %v2806, %v2831
  %v2847 = vmul.f32 %v2807, %v2835
  %v2848 = vmul.f32 %v2808, %v2839
  %2849 = vset.pattern.permute.xlu0 2
  %2850 = vperm.xlu0 %2849, %v2745
  %v2851 = vpop.permute.xlu0 %2850
  %2853 = vset.pattern.permute.xlu0 2
  %2854 = vperm.xlu0 %2853, %v2746
  %v2855 = vpop.permute.xlu0 %2854
  %2857 = vset.pattern.permute.xlu0 2
  %2858 = vperm.xlu0 %2857, %v2747
  %v2859 = vpop.permute.xlu0 %2858
  %2861 = vset.pattern.permute.xlu0 2
  %2862 = vperm.xlu0 %2861, %v2748
  %v2863 = vpop.permute.xlu0 %2862
  %2865 = vset.pattern.permute.xlu0 2
  %2866 = vperm.xlu0 %2865, %v2749
  %v2867 = vpop.permute.xlu0 %2866
  %2869 = vset.pattern.permute.xlu0 2
  %2870 = vperm.xlu0 %2869, %v2750
  %v2871 = vpop.permute.xlu0 %2870
  %2873 = vset.pattern.permute.xlu0 2
  %2874 = vperm.xlu0 %2873, %v2751
  %v2875 = vpop.permute.xlu0 %2874
  %2877 = vset.pattern.permute.xlu0 2
  %2878 = vperm.xlu0 %2877, %v2752
  %v2879 = vpop.permute.xlu0 %2878
  %v2881 = vadd.f32 %v2841, %v2851
  %v2882 = vadd.f32 %v2842, %v2855
  %v2883 = vadd.f32 %v2843, %v2859
  %v2884 = vadd.f32 %v2844, %v2863
  %v2885 = vadd.f32 %v2845, %v2867
  %v2886 = vadd.f32 %v2846, %v2871
  %v2887 = vadd.f32 %v2847, %v2875
  %v2888 = vadd.f32 %v2848, %v2879
  %2889 = vst.msk [vmem:[%s9] sm:$0xff] %vm1615, %v2881
  %2890 = vst.msk [vmem:[%s9 + $0x8] sm:$0xff] %vm1615, %v2882
  %2891 = vst.msk [vmem:[%s9 + $0x10] sm:$0xff] %vm1615, %v2883
  %2892 = vst.msk [vmem:[%s9 + $0x18] sm:$0xff] %vm1615, %v2884
  %2893 = vst.msk [vmem:[%s9 + $0x20] sm:$0xff] %vm1615, %v2885
  %2894 = vst.msk [vmem:[%s9 + $0x28] sm:$0xff] %vm1615, %v2886
  %2895 = vst.msk [vmem:[%s9 + $0x30] sm:$0xff] %vm1615, %v2887
  %2896 = vst.msk [vmem:[%s9 + $0x38] sm:$0xff] %vm1615, %v2888
  // Predicated region
  $region34: #{hsi_e_forward.5} parent=0 // pred_check
    _
  $region35: #{hsi_e_forward.5} parent=0 // pred_check_branch
    %2898 = sbr.rel (0) target = $region37
  $region36: #{hsi_e_forward.5} parent=0 // pred_region
    _
  $region37: #{hsi_e_forward.5} parent=0 // pred_fallthru
    _
  // Predicated region
  $region38: #{hsi_e_forward.5} parent=0 // pred_check
    _
  $region39: #{hsi_e_forward.5} parent=0 // pred_check_branch
    %2900 = sbr.rel (0) target = $region41
  $region40: #{hsi_e_forward.5} parent=0 // pred_region
    _
  $region41: #{hsi_e_forward.5} parent=0 // pred_fallthru
    _
  // Predicated region
  $region42: #{hsi_e_forward.5} parent=0 // pred_check
    _
  $region43: #{hsi_e_forward.5} parent=0 // pred_check_branch
    %2902 = sbr.rel (0) target = $region45
  $region44: #{hsi_e_forward.5} parent=0 // pred_region
    _
  $region45: #{hsi_e_forward.5} parent=0 // pred_fallthru
    _
  // Predicated region
  $region46: #{hsi_e_forward.5} parent=0 // pred_check
    _
  $region47: #{hsi_e_forward.5} parent=0 // pred_check_branch
    %2904 = sbr.rel (0) target = $region49
  $region48: #{hsi_e_forward.5} parent=0 // pred_region
    _
  $region49: #{hsi_e_forward.5} parent=0 // pred_fallthru
    _

</llo_original>
